<compile_context>
chip_gen: v7x
topology: tpu7x:2x2x1
jax: 0.10.0
libtpu: 0.0.40
codegen_flags: <defaults>
</compile_context>

<pallas_src>
import functools

import jax
import jax.numpy as jnp
from jax.experimental import pallas as pl
from jax.experimental.pallas import tpu as pltpu

EPS = 1e-6
NUM_GROUPS = 32
GS_PAD = 16          # >= group_size - 1  (supports channels <= 32*(GS_PAD+1))


def _silu(h):
    # sigmoid(x) == 0.5*(1 + tanh(x/2)); tanh runs on the EUP slot (no VALU
    # divide).  Shared by the kernel and the reference so they match closely.
    return h * (0.5 * (1.0 + jnp.tanh(0.5 * h)))


def _resblock_kernel(*refs, H, W, has_nin, pad_rows, pixel_major):
    if has_nin:
        (x_ref, g1_ref, be1_ref, w1_ref, b1_ref,
         g2_ref, be2_ref, w2_ref, b2_ref, ninw_ref, ninb_ref,
         o_ref, patch_ref, stat_ref) = refs
    else:
        (x_ref, g1_ref, be1_ref, w1_ref, b1_ref,
         g2_ref, be2_ref, w2_ref, b2_ref,
         o_ref, patch_ref, stat_ref) = refs
        ninw_ref = ninb_ref = None

    HW = H * W
    P = pad_rows

    if pixel_major:
        xf = x_ref[0].astype(jnp.float32)                          # (HW, Cin)
    else:
        # NCHW block (1, Cin, HW): lane-dense load, one in-register transpose to
        # pixel-major (HW, Cin) for the channel-contracting matmuls.
        xf = jnp.transpose(x_ref[0].astype(jnp.float32), (1, 0))   # (HW, Cin)

    # Column-wrap masks shared by both convs: zero source pixels that would wrap
    # across an image row under the flattened +/-1 pixel shift.
    col = jax.lax.broadcasted_iota(jnp.int32, (HW, 1), 0) % W
    mask_kw0 = col != W - 1      # taps reading column j-1
    mask_kw2 = col != 0          # taps reading column j+1

    def group_combine(v, gs):
        """Sum each GroupNorm group's `gs` adjacent channels, broadcast back.

        v: (1, C) f32 per-channel partial statistics.  Pure VPU + a tiny VMEM
        round trip -- no MXU.
        # TODO(synk): move the shifted-window sum onto the XLU with pltpu.roll
        # and drop stat_ref (kept here for interpret-mode robustness).
        """
        if gs == 1:
            return v
        C = v.shape[-1]
        stat_ref[:, :] = jnp.zeros((1, stat_ref.shape[1]), jnp.float32)
        stat_ref[:, GS_PAD:GS_PAD + C] = v
        r = jax.lax.broadcasted_iota(jnp.int32, (1, C), 1) % gs    # index within group
        acc = v
        for d in range(1, gs):
            plus = stat_ref[:, GS_PAD + d:GS_PAD + d + C]          # v[c + d]
            minus = stat_ref[:, GS_PAD - d:GS_PAD - d + C]         # v[c - d]
            acc = acc + jnp.where(r < gs - d, plus, 0.0) + jnp.where(r >= d, minus, 0.0)
        return acc

    def group_norm(hf, gamma, beta):
        C = hf.shape[-1]
        gs = C // NUM_GROUPS
        inv_n = 1.0 / float(HW * gs)
        s = jnp.sum(hf, axis=0, keepdims=True)                     # (1, C) sublane reduce
        mean = group_combine(s, gs) * inv_n                        # per-channel group mean
        d = hf - mean
        ss = jnp.sum(d * d, axis=0, keepdims=True)                 # (1, C)
        var = group_combine(ss, gs) * inv_n
        return d * jax.lax.rsqrt(var + EPS) * gamma + beta

    def conv3x3(hf, w_ref, bias):
        """SAME 3x3 conv as one im2col MXU matmul (K = 9*C, bf16 operands).

        Patches live in the shared bf16 scratch; only the halo strips actually
        read by off-image taps are zeroed (taps 0..3 top, taps 5..8 bottom).
        """
        C = hf.shape[-1]
        hb = hf.astype(jnp.bfloat16)                               # one cast per conv
        zeros = jnp.zeros((W + 1, 4 * C), jnp.bfloat16)
        patch_ref[P:P + W + 1, 0:4 * C] = zeros
        patch_ref[P + HW - (W + 1):P + HW, 5 * C:9 * C] = zeros
        zb = jnp.zeros_like(hb)
        hm = (jnp.where(mask_kw0, hb, zb), hb, jnp.where(mask_kw2, hb, zb))
        for kh in range(3):
            for kw in range(3):
                t = kh * 3 + kw
                off = (kh - 1) * W + (kw - 1)     # flattened-pixel shift of this tap
                patch_ref[P - off:P - off + HW, t * C:(t + 1) * C] = hm[kw]
        patches = patch_ref[P:P + HW, 0:9 * C]                     # (HW, 9C) bf16
        return jnp.dot(patches, w_ref[...],
                       preferred_element_type=jnp.float32) + bias

    h = group_norm(xf, g1_ref[...], be1_ref[...])
    h = _silu(h)
    h = conv3x3(h, w1_ref, b1_ref[...])
    h = group_norm(h, g2_ref[...], be2_ref[...])
    h = _silu(h)
    # dropout: identity at inference (module used in eval mode)
    h = conv3x3(h, w2_ref, b2_ref[...])

    if has_nin:                                                    # 1x1 nin_shortcut
        res = jnp.dot(xf.astype(jnp.bfloat16), ninw_ref[...],
                      preferred_element_type=jnp.float32) + ninb_ref[...]
    else:                                                          # identity shortcut
        res = xf

    out = (res + h).astype(o_ref.dtype)                            # (HW, Cout)
    if pixel_major:
        o_ref[0] = out
    else:
        o_ref[0] = jnp.transpose(out, (1, 0))


def _vmem_limit_bytes():
    # 128 MiB parts (v4/v5e/v6e) can take a higher scoped-VMEM limit; v7x has
    # only 64 MiB physical VMEM per core, so stay conservative there (and on
    # unknown / CPU-interpret backends).
    try:
        kind = jax.devices()[0].device_kind.lower()
    except Exception:
        kind = ""
    if any(v in kind for v in ("v4", "v5", "v6")):
        return 96 * 1024 * 1024
    return 48 * 1024 * 1024


def chameleon_resnet_block(x_nchw, params):
    """Forward pass of ChameleonVQVAEEncoderResnetBlock (inference).

    x_nchw: (B, Cin, H, W) float32  ->  (B, Cout, H, W) float32.
    """
    B, Cin, H, W = x_nchw.shape
    Cout = params["conv1_w"].shape[-1]
    HW = H * W
    Cmax = max(Cin, Cout)
    has_nin = (Cin != Cout)
    # TODO(synk): use_conv_shortcut=True (3x3 shortcut conv) variant not implemented.

    assert Cin % NUM_GROUPS == 0 and Cout % NUM_GROUPS == 0
    assert Cmax // NUM_GROUPS <= GS_PAD + 1
    assert H >= 3 and W >= 2

    # Pixel-major blocks remove the in-kernel transposes; only worthwhile when
    # the channel minor dim is lane-dense (multiple of 128), i.e. production
    # channel counts.  Toy C=32/64 keeps the NCHW-native lane-dense layout.
    pixel_major = (Cin % 128 == 0) and (Cout % 128 == 0)

    pad_rows = ((W + 1 + 7) // 8) * 8      # halo rows, 8-aligned so the matmul LHS
    patch_rows = HW + 2 * pad_rows         # read from the patch scratch is aligned

    f32, bf16 = jnp.float32, jnp.bfloat16
    if pixel_major:
        x = jnp.transpose(x_nchw.reshape(B, Cin, HW), (0, 2, 1)).astype(f32)
        x_spec = pl.BlockSpec((1, HW, Cin), lambda b: (b, 0, 0))
        out_shape = jax.ShapeDtypeStruct((B, HW, Cout), f32)
        out_spec = pl.BlockSpec((1, HW, Cout), lambda b: (b, 0, 0))
    else:
        x = x_nchw.reshape(B, Cin, HW).astype(f32)    # NCHW-native, minor dim = H*W
        x_spec = pl.BlockSpec((1, Cin, HW), lambda b: (b, 0, 0))
        out_shape = jax.ShapeDtypeStruct((B, Cout, HW), f32)
        out_spec = pl.BlockSpec((1, Cout, HW), lambda b: (b, 0, 0))

    g1 = params["g1"].reshape(1, Cin).astype(f32)
    be1 = params["be1"].reshape(1, Cin).astype(f32)
    g2 = params["g2"].reshape(1, Cout).astype(f32)
    be2 = params["be2"].reshape(1, Cout).astype(f32)
    # im2col weight layout: (kh, kw, cin) fused into a single K axis; bf16 halves DMA.
    w1 = params["conv1_w"].reshape(9 * Cin, Cout).astype(bf16)
    b1 = params["conv1_b"].reshape(1, Cout).astype(f32)
    w2 = params["conv2_w"].reshape(9 * Cout, Cout).astype(bf16)
    b2 = params["conv2_b"].reshape(1, Cout).astype(f32)

    const = lambda b: (0, 0)
    inputs = [x, g1, be1, w1, b1, g2, be2, w2, b2]
    in_specs = [
        x_spec,
        pl.BlockSpec((1, Cin), const),
        pl.BlockSpec((1, Cin), const),
        pl.BlockSpec((9 * Cin, Cout), const),
        pl.BlockSpec((1, Cout), const),
        pl.BlockSpec((1, Cout), const),
        pl.BlockSpec((1, Cout), const),
        pl.BlockSpec((9 * Cout, Cout), const),
        pl.BlockSpec((1, Cout), const),
    ]
    if has_nin:
        inputs += [params["nin_w"].astype(bf16),
                   params["nin_b"].reshape(1, Cout).astype(f32)]
        in_specs += [pl.BlockSpec((Cin, Cout), const),
                     pl.BlockSpec((1, Cout), const)]

    kernel = functools.partial(_resblock_kernel, H=H, W=W, has_nin=has_nin,
                               pad_rows=pad_rows, pixel_major=pixel_major)

    out = pl.pallas_call(
        kernel,
        out_shape=out_shape,
        grid=(B,),
        in_specs=in_specs,
        out_specs=out_spec,
        scratch_shapes=[
            # one bf16 im2col scratch shared by both convs (conv1's patches are
            # dead after its matmul)
            pltpu.VMEM((patch_rows, 9 * Cmax), bf16),
            pltpu.VMEM((1, 2 * GS_PAD + Cmax), f32),   # GroupNorm group combine
        ],
        compiler_params=pltpu.CompilerParams(
            # batch elements are independent: v7x shards the grid on both TCs
            dimension_semantics=("parallel",),
            vmem_limit_bytes=_vmem_limit_bytes()),
    )(*inputs)

    if pixel_major:
        return jnp.transpose(out, (0, 2, 1)).reshape(B, Cout, H, W)
    return out.reshape(B, Cout, H, W)


def _reference(x, p, has_nin):
    """Pure-JAX reference of the PyTorch forward (NCHW).  Conv/matmul operands
    are rounded to bf16 and contracted in f32 -- same math as the MXU's
    bf16-operand / f32-accumulate path, and supported on every backend."""
    f32, bf16 = jnp.float32, jnp.bfloat16
    rnd = lambda a: a.astype(bf16).astype(f32)

    def gn(h, gamma, beta):
        b, c, hh, ww = h.shape
        hr = h.reshape(b, NUM_GROUPS, c // NUM_GROUPS, hh, ww)
        mean = hr.mean(axis=(2, 3, 4), keepdims=True)
        var = hr.var(axis=(2, 3, 4), keepdims=True)
        hn = ((hr - mean) / jnp.sqrt(var + EPS)).reshape(b, c, hh, ww)
        return hn * gamma[None, :, None, None] + beta[None, :, None, None]

    def conv(h, w, bias):
        out = jax.lax.conv_general_dilated(
            rnd(h), rnd(w), window_strides=(1, 1), padding="SAME",
            dimension_numbers=("NCHW", "HWIO", "NCHW"))
        return out + bias[None, :, None, None]

    h = gn(x, p["g1"], p["be1"])
    h = _silu(h)
    h = conv(h, p["conv1_w"], p["conv1_b"])
    h = gn(h, p["g2"], p["be2"])
    h = _silu(h)
    # dropout: identity at inference
    h = conv(h, p["conv2_w"], p["conv2_b"])
    if has_nin:
        res = jnp.einsum("bchw,cd->bdhw", rnd(x), rnd(p["nin_w"]))
        res = res + p["nin_b"][None, :, None, None]
    else:
        res = x
    return res + h


def _make_params(key, cin, cout):
    ks = jax.random.split(key, 10)
    p = {
        "g1": 1.0 + 0.1 * jax.random.normal(ks[0], (cin,), jnp.float32),
        "be1": 0.02 * jax.random.normal(ks[1], (cin,), jnp.float32),
        "conv1_w": 0.05 * jax.random.normal(ks[2], (3, 3, cin, cout), jnp.float32),
        "conv1_b": 0.02 * jax.random.normal(ks[3], (cout,), jnp.float32),
        "g2": 1.0 + 0.1 * jax.random.normal(ks[4], (cout,), jnp.float32),
        "be2": 0.02 * jax.random.normal(ks[5], (cout,), jnp.float32),
        "conv2_w": 0.05 * jax.random.normal(ks[6], (3, 3, cout, cout), jnp.float32),
        "conv2_b": 0.02 * jax.random.normal(ks[7], (cout,), jnp.float32),
    }
    if cin != cout:
        p["nin_w"] = 0.05 * jax.random.normal(ks[8], (cin, cout), jnp.float32)
        p["nin_b"] = 0.02 * jax.random.normal(ks[9], (cout,), jnp.float32)
    return p


if __name__ == "__main__":
    B, H, W = 2, 16, 16
    root = jax.random.PRNGKey(0)
    # three configs: nin-shortcut path (32 -> 64), identity-shortcut path
    # (64 -> 64), and a lane-dense config (128 -> 128) exercising the
    # transpose-free pixel-major path.
    for cin, cout in ((32, 64), (64, 64), (128, 128)):
        root, kp, kx = jax.random.split(root, 3)
        params = _make_params(kp, cin, cout)
        x = jax.random.normal(kx, (B, cin, H, W), jnp.float32)

        out = jax.block_until_ready(chameleon_resnet_block(x, params))
        ref = jax.block_until_ready(_reference(x, params, cin != cout))

        assert out.shape == (B, cout, H, W), out.shape
        err = float(jnp.max(jnp.abs(out - ref)))
        assert jnp.allclose(out, ref, rtol=3e-3, atol=3e-3), f"max abs err {err}"
    print("KERNEL_OK")
</pallas_src>

<mosaic_0001>
module attributes {stable_mosaic.version = 11 : i64} {
  func.func @_resblock_kernel(%arg0: i32, %arg1: memref<1x32x256xf32, #tpu.memory_space<vmem>>, %arg2: memref<1x32xf32, #tpu.memory_space<vmem>>, %arg3: memref<1x32xf32, #tpu.memory_space<vmem>>, %arg4: memref<288x64xbf16, #tpu.memory_space<vmem>>, %arg5: memref<1x64xf32, #tpu.memory_space<vmem>>, %arg6: memref<1x64xf32, #tpu.memory_space<vmem>>, %arg7: memref<1x64xf32, #tpu.memory_space<vmem>>, %arg8: memref<576x64xbf16, #tpu.memory_space<vmem>>, %arg9: memref<1x64xf32, #tpu.memory_space<vmem>>, %arg10: memref<32x64xbf16, #tpu.memory_space<vmem>>, %arg11: memref<1x64xf32, #tpu.memory_space<vmem>>, %arg12: memref<1x64x256xf32, #tpu.memory_space<vmem>>, %arg13: memref<304x576xbf16, #tpu.memory_space<vmem>>, %arg14: memref<1x96xf32, #tpu.memory_space<vmem>>) attributes {dimension_semantics = [#tpu.dimension_semantics<parallel>], iteration_bounds = array<i64: 2>, scalar_prefetch = 0 : i64, scratch_operands = 2 : i64, tpu.core_type = #tpu.core_type<tc>, window_params = [{transform_indices = @transform_0, window_bounds = array<i64: 1, 32, 256>}, {pipeline_mode = #tpu.pipeline_mode<synchronous>, transform_indices = @transform_1, window_bounds = array<i64: 1, 32>}, {pipeline_mode = #tpu.pipeline_mode<synchronous>, transform_indices = @transform_2, window_bounds = array<i64: 1, 32>}, {pipeline_mode = #tpu.pipeline_mode<synchronous>, transform_indices = @transform_3, window_bounds = array<i64: 288, 64>}, {pipeline_mode = #tpu.pipeline_mode<synchronous>, transform_indices = @transform_4, window_bounds = array<i64: 1, 64>}, {pipeline_mode = #tpu.pipeline_mode<synchronous>, transform_indices = @transform_5, window_bounds = array<i64: 1, 64>}, {pipeline_mode = #tpu.pipeline_mode<synchronous>, transform_indices = @transform_6, window_bounds = array<i64: 1, 64>}, {pipeline_mode = #tpu.pipeline_mode<synchronous>, transform_indices = @transform_7, window_bounds = array<i64: 576, 64>}, {pipeline_mode = #tpu.pipeline_mode<synchronous>, transform_indices = @transform_8, window_bounds = array<i64: 1, 64>}, {pipeline_mode = #tpu.pipeline_mode<synchronous>, transform_indices = @transform_9, window_bounds = array<i64: 32, 64>}, {pipeline_mode = #tpu.pipeline_mode<synchronous>, transform_indices = @transform_10, window_bounds = array<i64: 1, 64>}, {transform_indices = @transform_11, window_bounds = array<i64: 1, 64, 256>}]} {
    %c0 = arith.constant 0 : index
    %c0_0 = arith.constant 0 : index
    %c0_1 = arith.constant 0 : index
    %0 = vector.load %arg1[%c0, %c0_0, %c0_1] : memref<1x32x256xf32, #tpu.memory_space<vmem>>, vector<1x32x256xf32>
    %1 = vector.shape_cast %0 : vector<1x32x256xf32> to vector<32x256xf32>
    %2 = tpu.transpose %1, [1, 0] : vector<32x256xf32> -> vector<256x32xf32>
    %3 = tpu.iota {dimensions = array<i32: 0>} : vector<256x1xi32>
    %c16_i32 = arith.constant 16 : i32
    %c0_i32 = arith.constant 0 : i32
    %4 = arith.cmpi eq, %c16_i32, %c0_i32 : i32
    %c1_i32 = arith.constant 1 : i32
    %5 = arith.select %4, %c1_i32, %c16_i32 : i32
    %6 = vector.broadcast %5 : i32 to vector<256x1xi32>
    %7 = arith.remsi %3, %6 : vector<256x1xi32>
    %c0_i32_2 = arith.constant 0 : i32
    %8 = vector.broadcast %c0_i32_2 : i32 to vector<256x1xi32>
    %9 = arith.cmpi ne, %7, %8 : vector<256x1xi32>
    %c0_i32_3 = arith.constant 0 : i32
    %10 = vector.broadcast %c0_i32_3 : i32 to vector<256x1xi32>
    %11 = arith.cmpi slt, %7, %10 : vector<256x1xi32>
    %c0_i32_4 = arith.constant 0 : i32
    %12 = arith.cmpi slt, %5, %c0_i32_4 : i32
    %13 = vector.broadcast %12 : i1 to vector<256x1xi1>
    %14 = vector.broadcast %13 : vector<256x1xi1> to vector<256x1xi1>
    %15 = arith.xori %11, %14 : vector<256x1xi1>
    %16 = arith.andi %15, %9 : vector<256x1xi1>
    %17 = vector.broadcast %5 : i32 to vector<256x1xi32>
    %18 = arith.addi %7, %17 : vector<256x1xi32>
    %19 = arith.select %16, %18, %7 : vector<256x1xi1>, vector<256x1xi32>
    %c15_i32 = arith.constant 15 : i32
    %20 = vector.broadcast %c15_i32 : i32 to vector<256x1xi32>
    %21 = arith.cmpi ne, %19, %20 : vector<256x1xi32>
    %c0_i32_5 = arith.constant 0 : i32
    %22 = vector.broadcast %c0_i32_5 : i32 to vector<256x1xi32>
    %23 = arith.cmpi ne, %19, %22 : vector<256x1xi32>
    %c0_6 = arith.constant 0 : index
    %c0_7 = arith.constant 0 : index
    %24 = vector.load %arg2[%c0_6, %c0_7] : memref<1x32xf32, #tpu.memory_space<vmem>>, vector<1x32xf32>
    %c0_8 = arith.constant 0 : index
    %c0_9 = arith.constant 0 : index
    %25 = vector.load %arg3[%c0_8, %c0_9] : memref<1x32xf32, #tpu.memory_space<vmem>>, vector<1x32xf32>
    %cst = arith.constant dense<0.000000e+00> : vector<32xf32>
    %26 = vector.multi_reduction <add>, %2, %cst [0] : vector<256x32xf32> to vector<32xf32>
    %27 = vector.shape_cast %26 : vector<32xf32> to vector<1x32xf32>
    %cst_10 = arith.constant 3.906250e-03 : f32
    %28 = vector.broadcast %cst_10 : f32 to vector<1x32xf32>
    %29 = arith.mulf %27, %28 : vector<1x32xf32>
    %30 = vector.broadcast %29 : vector<1x32xf32> to vector<256x32xf32>
    %31 = arith.subf %2, %30 : vector<256x32xf32>
    %32 = arith.mulf %31, %31 : vector<256x32xf32>
    %cst_11 = arith.constant dense<0.000000e+00> : vector<32xf32>
    %33 = vector.multi_reduction <add>, %32, %cst_11 [0] : vector<256x32xf32> to vector<32xf32>
    %34 = vector.shape_cast %33 : vector<32xf32> to vector<1x32xf32>
    %cst_12 = arith.constant 3.906250e-03 : f32
    %35 = vector.broadcast %cst_12 : f32 to vector<1x32xf32>
    %36 = arith.mulf %34, %35 : vector<1x32xf32>
    %cst_13 = arith.constant 9.99999997E-7 : f32
    %37 = vector.broadcast %cst_13 : f32 to vector<1x32xf32>
    %38 = arith.addf %36, %37 : vector<1x32xf32>
    %39 = math.rsqrt %38 : vector<1x32xf32>
    %40 = vector.broadcast %39 : vector<1x32xf32> to vector<256x32xf32>
    %41 = arith.mulf %31, %40 : vector<256x32xf32>
    %42 = vector.broadcast %24 : vector<1x32xf32> to vector<256x32xf32>
    %43 = arith.mulf %41, %42 : vector<256x32xf32>
    %44 = vector.broadcast %25 : vector<1x32xf32> to vector<256x32xf32>
    %45 = arith.addf %43, %44 : vector<256x32xf32>
    %cst_14 = arith.constant 5.000000e-01 : f32
    %46 = vector.broadcast %cst_14 : f32 to vector<256x32xf32>
    %47 = arith.mulf %46, %45 : vector<256x32xf32>
    %48 = math.tanh %47 : vector<256x32xf32>
    %cst_15 = arith.constant 1.000000e+00 : f32
    %49 = vector.broadcast %cst_15 : f32 to vector<256x32xf32>
    %50 = arith.addf %49, %48 : vector<256x32xf32>
    %cst_16 = arith.constant 5.000000e-01 : f32
    %51 = vector.broadcast %cst_16 : f32 to vector<256x32xf32>
    %52 = arith.mulf %51, %50 : vector<256x32xf32>
    %53 = arith.mulf %45, %52 : vector<256x32xf32>
    %c0_17 = arith.constant 0 : index
    %c0_18 = arith.constant 0 : index
    %54 = vector.load %arg5[%c0_17, %c0_18] : memref<1x64xf32, #tpu.memory_space<vmem>>, vector<1x64xf32>
    %55 = arith.truncf %53 : vector<256x32xf32> to vector<256x32xbf16>
    %cst_19 = arith.constant 0.000000e+00 : bf16
    %56 = vector.broadcast %cst_19 : bf16 to vector<17x128xbf16>
    %c24 = arith.constant 24 : index
    %c0_20 = arith.constant 0 : index
    %57 = vector.load %arg13[%c24, %c0_20] : memref<304x576xbf16, #tpu.memory_space<vmem>>, vector<17x128xbf16>
    tpu.vector_store %arg13[%c24, %c0_20], %56 {strides = array<i32>} : memref<304x576xbf16, #tpu.memory_space<vmem>>, vector<17x128xbf16>,
    %c263 = arith.constant 263 : index
    %c160 = arith.constant 160 : index
    %58 = vector.load %arg13[%c263, %c160] : memref<304x576xbf16, #tpu.memory_space<vmem>>, vector<17x128xbf16>
    tpu.vector_store %arg13[%c263, %c160], %56 {strides = array<i32>} : memref<304x576xbf16, #tpu.memory_space<vmem>>, vector<17x128xbf16>,
    %cst_21 = arith.constant 0.000000e+00 : bf16
    %59 = vector.broadcast %cst_21 : bf16 to vector<256x32xbf16>
    %60 = vector.shape_cast %21 : vector<256x1xi1> to vector<256x1xi1>
    %61 = vector.broadcast %60 : vector<256x1xi1> to vector<256x32xi1>
    %62 = arith.select %61, %55, %59 : vector<256x32xi1>, vector<256x32xbf16>
    %63 = vector.shape_cast %23 : vector<256x1xi1> to vector<256x1xi1>
    %64 = vector.broadcast %63 : vector<256x1xi1> to vector<256x32xi1>
    %65 = arith.select %64, %55, %59 : vector<256x32xi1>, vector<256x32xbf16>
    %c41 = arith.constant 41 : index
    %c0_22 = arith.constant 0 : index
    %66 = vector.load %arg13[%c41, %c0_22] : memref<304x576xbf16, #tpu.memory_space<vmem>>, vector<256x32xbf16>
    tpu.vector_store %arg13[%c41, %c0_22], %62 {strides = array<i32>} : memref<304x576xbf16, #tpu.memory_space<vmem>>, vector<256x32xbf16>,
    %c40 = arith.constant 40 : index
    %c32 = arith.constant 32 : index
    %67 = vector.load %arg13[%c40, %c32] : memref<304x576xbf16, #tpu.memory_space<vmem>>, vector<256x32xbf16>
    tpu.vector_store %arg13[%c40, %c32], %55 {strides = array<i32>} : memref<304x576xbf16, #tpu.memory_space<vmem>>, vector<256x32xbf16>,
    %c39 = arith.constant 39 : index
    %c64 = arith.constant 64 : index
    %68 = vector.load %arg13[%c39, %c64] : memref<304x576xbf16, #tpu.memory_space<vmem>>, vector<256x32xbf16>
    tpu.vector_store %arg13[%c39, %c64], %65 {strides = array<i32>} : memref<304x576xbf16, #tpu.memory_space<vmem>>, vector<256x32xbf16>,
    %c25 = arith.constant 25 : index
    %c96 = arith.constant 96 : index
    %69 = vector.load %arg13[%c25, %c96] : memref<304x576xbf16, #tpu.memory_space<vmem>>, vector<256x32xbf16>
    tpu.vector_store %arg13[%c25, %c96], %62 {strides = array<i32>} : memref<304x576xbf16, #tpu.memory_space<vmem>>, vector<256x32xbf16>,
    %c24_23 = arith.constant 24 : index
    %c128 = arith.constant 128 : index
    %70 = vector.load %arg13[%c24_23, %c128] : memref<304x576xbf16, #tpu.memory_space<vmem>>, vector<256x32xbf16>
    tpu.vector_store %arg13[%c24_23, %c128], %55 {strides = array<i32>} : memref<304x576xbf16, #tpu.memory_space<vmem>>, vector<256x32xbf16>,
    %c23 = arith.constant 23 : index
    %c160_24 = arith.constant 160 : index
    %71 = vector.load %arg13[%c23, %c160_24] : memref<304x576xbf16, #tpu.memory_space<vmem>>, vector<256x32xbf16>
    tpu.vector_store %arg13[%c23, %c160_24], %65 {strides = array<i32>} : memref<304x576xbf16, #tpu.memory_space<vmem>>, vector<256x32xbf16>,
    %c9 = arith.constant 9 : index
    %c192 = arith.constant 192 : index
    %72 = vector.load %arg13[%c9, %c192] : memref<304x576xbf16, #tpu.memory_space<vmem>>, vector<256x32xbf16>
    tpu.vector_store %arg13[%c9, %c192], %62 {strides = array<i32>} : memref<304x576xbf16, #tpu.memory_space<vmem>>, vector<256x32xbf16>,
    %c8 = arith.constant 8 : index
    %c224 = arith.constant 224 : index
    %73 = vector.load %arg13[%c8, %c224] : memref<304x576xbf16, #tpu.memory_space<vmem>>, vector<256x32xbf16>
    tpu.vector_store %arg13[%c8, %c224], %55 {strides = array<i32>} : memref<304x576xbf16, #tpu.memory_space<vmem>>, vector<256x32xbf16>,
    %c7 = arith.constant 7 : index
    %c256 = arith.constant 256 : index
    %74 = vector.load %arg13[%c7, %c256] : memref<304x576xbf16, #tpu.memory_space<vmem>>, vector<256x32xbf16>
    tpu.vector_store %arg13[%c7, %c256], %65 {strides = array<i32>} : memref<304x576xbf16, #tpu.memory_space<vmem>>, vector<256x32xbf16>,
    %c24_25 = arith.constant 24 : index
    %c0_26 = arith.constant 0 : index
    %75 = vector.load %arg13[%c24_25, %c0_26] : memref<304x576xbf16, #tpu.memory_space<vmem>>, vector<256x288xbf16>
    %c0_27 = arith.constant 0 : index
    %c0_28 = arith.constant 0 : index
    %76 = vector.load %arg4[%c0_27, %c0_28] : memref<288x64xbf16, #tpu.memory_space<vmem>>, vector<288x64xbf16>
    %cst_29 = arith.constant dense<0.000000e+00> : vector<256x64xf32>
    %77 = tpu.matmul %75, %76, %cst_29 {dimension_numbers = #tpu.dot_dimension_numbers<[1], [0], [0], [1], [0, 0, 1, 1], [], []>} : vector<256x288xbf16>, vector<288x64xbf16>, vector<256x64xf32> -> vector<256x64xf32>
    %78 = vector.broadcast %54 : vector<1x64xf32> to vector<256x64xf32>
    %79 = arith.addf %77, %78 : vector<256x64xf32>
    %c0_30 = arith.constant 0 : index
    %c0_31 = arith.constant 0 : index
    %80 = vector.load %arg6[%c0_30, %c0_31] : memref<1x64xf32, #tpu.memory_space<vmem>>, vector<1x64xf32>
    %c0_32 = arith.constant 0 : index
    %c0_33 = arith.constant 0 : index
    %81 = vector.load %arg7[%c0_32, %c0_33] : memref<1x64xf32, #tpu.memory_space<vmem>>, vector<1x64xf32>
    %cst_34 = arith.constant dense<0.000000e+00> : vector<64xf32>
    %82 = vector.multi_reduction <add>, %79, %cst_34 [0] : vector<256x64xf32> to vector<64xf32>
    %83 = vector.shape_cast %82 : vector<64xf32> to vector<1x64xf32>
    %cst_35 = arith.constant 0.000000e+00 : f32
    %84 = vector.broadcast %cst_35 : f32 to vector<1x96xf32>
    %c0_36 = arith.constant 0 : index
    %c0_37 = arith.constant 0 : index
    %85 = vector.load %arg14[%c0_36, %c0_37] : memref<1x96xf32, #tpu.memory_space<vmem>>, vector<1x96xf32>
    tpu.vector_store %arg14[%c0_36, %c0_37], %84 {strides = array<i32>} : memref<1x96xf32, #tpu.memory_space<vmem>>, vector<1x96xf32>,
    %c0_38 = arith.constant 0 : index
    %c16 = arith.constant 16 : index
    %86 = vector.load %arg14[%c0_38, %c16] : memref<1x96xf32, #tpu.memory_space<vmem>>, vector<1x64xf32>
    tpu.vector_store %arg14[%c0_38, %c16], %83 {strides = array<i32>} : memref<1x96xf32, #tpu.memory_space<vmem>>, vector<1x64xf32>,
    %87 = tpu.iota {dimensions = array<i32: 1>} : vector<1x64xi32>
    %c2_i32 = arith.constant 2 : i32
    %c0_i32_39 = arith.constant 0 : i32
    %88 = arith.cmpi eq, %c2_i32, %c0_i32_39 : i32
    %c1_i32_40 = arith.constant 1 : i32
    %89 = arith.select %88, %c1_i32_40, %c2_i32 : i32
    %90 = vector.broadcast %89 : i32 to vector<1x64xi32>
    %91 = arith.remsi %87, %90 : vector<1x64xi32>
    %c0_i32_41 = arith.constant 0 : i32
    %92 = vector.broadcast %c0_i32_41 : i32 to vector<1x64xi32>
    %93 = arith.cmpi ne, %91, %92 : vector<1x64xi32>
    %c0_i32_42 = arith.constant 0 : i32
    %94 = vector.broadcast %c0_i32_42 : i32 to vector<1x64xi32>
    %95 = arith.cmpi slt, %91, %94 : vector<1x64xi32>
    %c0_i32_43 = arith.constant 0 : i32
    %96 = arith.cmpi slt, %89, %c0_i32_43 : i32
    %97 = vector.broadcast %96 : i1 to vector<1x64xi1>
    %98 = vector.broadcast %97 : vector<1x64xi1> to vector<1x64xi1>
    %99 = arith.xori %95, %98 : vector<1x64xi1>
    %100 = arith.andi %99, %93 : vector<1x64xi1>
    %101 = vector.broadcast %89 : i32 to vector<1x64xi32>
    %102 = arith.addi %91, %101 : vector<1x64xi32>
    %103 = arith.select %100, %102, %91 : vector<1x64xi1>, vector<1x64xi32>
    %c0_44 = arith.constant 0 : index
    %c17 = arith.constant 17 : index
    %104 = vector.load %arg14[%c0_44, %c17] : memref<1x96xf32, #tpu.memory_space<vmem>>, vector<1x64xf32>
    %c0_45 = arith.constant 0 : index
    %c15 = arith.constant 15 : index
    %105 = vector.load %arg14[%c0_45, %c15] : memref<1x96xf32, #tpu.memory_space<vmem>>, vector<1x64xf32>
    %c1_i32_46 = arith.constant 1 : i32
    %106 = vector.broadcast %c1_i32_46 : i32 to vector<1x64xi32>
    %107 = arith.cmpi slt, %103, %106 : vector<1x64xi32>
    %cst_47 = arith.constant 0.000000e+00 : f32
    %108 = vector.broadcast %cst_47 : f32 to vector<1x64xf32>
    %109 = arith.select %107, %104, %108 : vector<1x64xi1>, vector<1x64xf32>
    %110 = arith.addf %83, %109 : vector<1x64xf32>
    %c1_i32_48 = arith.constant 1 : i32
    %111 = vector.broadcast %c1_i32_48 : i32 to vector<1x64xi32>
    %112 = arith.cmpi sge, %103, %111 : vector<1x64xi32>
    %cst_49 = arith.constant 0.000000e+00 : f32
    %113 = vector.broadcast %cst_49 : f32 to vector<1x64xf32>
    %114 = arith.select %112, %105, %113 : vector<1x64xi1>, vector<1x64xf32>
    %115 = arith.addf %110, %114 : vector<1x64xf32>
    %cst_50 = arith.constant 0.001953125 : f32
    %116 = vector.broadcast %cst_50 : f32 to vector<1x64xf32>
    %117 = arith.mulf %115, %116 : vector<1x64xf32>
    %118 = vector.broadcast %117 : vector<1x64xf32> to vector<256x64xf32>
    %119 = arith.subf %79, %118 : vector<256x64xf32>
    %120 = arith.mulf %119, %119 : vector<256x64xf32>
    %cst_51 = arith.constant dense<0.000000e+00> : vector<64xf32>
    %121 = vector.multi_reduction <add>, %120, %cst_51 [0] : vector<256x64xf32> to vector<64xf32>
    %122 = vector.shape_cast %121 : vector<64xf32> to vector<1x64xf32>
    %cst_52 = arith.constant 0.000000e+00 : f32
    %123 = vector.broadcast %cst_52 : f32 to vector<1x96xf32>
    %c0_53 = arith.constant 0 : index
    %c0_54 = arith.constant 0 : index
    %124 = vector.load %arg14[%c0_53, %c0_54] : memref<1x96xf32, #tpu.memory_space<vmem>>, vector<1x96xf32>
    tpu.vector_store %arg14[%c0_53, %c0_54], %123 {strides = array<i32>} : memref<1x96xf32, #tpu.memory_space<vmem>>, vector<1x96xf32>,
    %c0_55 = arith.constant 0 : index
    %c16_56 = arith.constant 16 : index
    %125 = vector.load %arg14[%c0_55, %c16_56] : memref<1x96xf32, #tpu.memory_space<vmem>>, vector<1x64xf32>
    tpu.vector_store %arg14[%c0_55, %c16_56], %122 {strides = array<i32>} : memref<1x96xf32, #tpu.memory_space<vmem>>, vector<1x64xf32>,
    %126 = tpu.iota {dimensions = array<i32: 1>} : vector<1x64xi32>
    %c2_i32_57 = arith.constant 2 : i32
    %c0_i32_58 = arith.constant 0 : i32
    %127 = arith.cmpi eq, %c2_i32_57, %c0_i32_58 : i32
    %c1_i32_59 = arith.constant 1 : i32
    %128 = arith.select %127, %c1_i32_59, %c2_i32_57 : i32
    %129 = vector.broadcast %128 : i32 to vector<1x64xi32>
    %130 = arith.remsi %126, %129 : vector<1x64xi32>
    %c0_i32_60 = arith.constant 0 : i32
    %131 = vector.broadcast %c0_i32_60 : i32 to vector<1x64xi32>
    %132 = arith.cmpi ne, %130, %131 : vector<1x64xi32>
    %c0_i32_61 = arith.constant 0 : i32
    %133 = vector.broadcast %c0_i32_61 : i32 to vector<1x64xi32>
    %134 = arith.cmpi slt, %130, %133 : vector<1x64xi32>
    %c0_i32_62 = arith.constant 0 : i32
    %135 = arith.cmpi slt, %128, %c0_i32_62 : i32
    %136 = vector.broadcast %135 : i1 to vector<1x64xi1>
    %137 = vector.broadcast %136 : vector<1x64xi1> to vector<1x64xi1>
    %138 = arith.xori %134, %137 : vector<1x64xi1>
    %139 = arith.andi %138, %132 : vector<1x64xi1>
    %140 = vector.broadcast %128 : i32 to vector<1x64xi32>
    %141 = arith.addi %130, %140 : vector<1x64xi32>
    %142 = arith.select %139, %141, %130 : vector<1x64xi1>, vector<1x64xi32>
    %c0_63 = arith.constant 0 : index
    %c17_64 = arith.constant 17 : index
    %143 = vector.load %arg14[%c0_63, %c17_64] : memref<1x96xf32, #tpu.memory_space<vmem>>, vector<1x64xf32>
    %c0_65 = arith.constant 0 : index
    %c15_66 = arith.constant 15 : index
    %144 = vector.load %arg14[%c0_65, %c15_66] : memref<1x96xf32, #tpu.memory_space<vmem>>, vector<1x64xf32>
    %c1_i32_67 = arith.constant 1 : i32
    %145 = vector.broadcast %c1_i32_67 : i32 to vector<1x64xi32>
    %146 = arith.cmpi slt, %142, %145 : vector<1x64xi32>
    %cst_68 = arith.constant 0.000000e+00 : f32
    %147 = vector.broadcast %cst_68 : f32 to vector<1x64xf32>
    %148 = arith.select %146, %143, %147 : vector<1x64xi1>, vector<1x64xf32>
    %149 = arith.addf %122, %148 : vector<1x64xf32>
    %c1_i32_69 = arith.constant 1 : i32
    %150 = vector.broadcast %c1_i32_69 : i32 to vector<1x64xi32>
    %151 = arith.cmpi sge, %142, %150 : vector<1x64xi32>
    %cst_70 = arith.constant 0.000000e+00 : f32
    %152 = vector.broadcast %cst_70 : f32 to vector<1x64xf32>
    %153 = arith.select %151, %144, %152 : vector<1x64xi1>, vector<1x64xf32>
    %154 = arith.addf %149, %153 : vector<1x64xf32>
    %cst_71 = arith.constant 0.001953125 : f32
    %155 = vector.broadcast %cst_71 : f32 to vector<1x64xf32>
    %156 = arith.mulf %154, %155 : vector<1x64xf32>
    %cst_72 = arith.constant 9.99999997E-7 : f32
    %157 = vector.broadcast %cst_72 : f32 to vector<1x64xf32>
    %158 = arith.addf %156, %157 : vector<1x64xf32>
    %159 = math.rsqrt %158 : vector<1x64xf32>
    %160 = vector.broadcast %159 : vector<1x64xf32> to vector<256x64xf32>
    %161 = arith.mulf %119, %160 : vector<256x64xf32>
    %162 = vector.broadcast %80 : vector<1x64xf32> to vector<256x64xf32>
    %163 = arith.mulf %161, %162 : vector<256x64xf32>
    %164 = vector.broadcast %81 : vector<1x64xf32> to vector<256x64xf32>
    %165 = arith.addf %163, %164 : vector<256x64xf32>
    %cst_73 = arith.constant 5.000000e-01 : f32
    %166 = vector.broadcast %cst_73 : f32 to vector<256x64xf32>
    %167 = arith.mulf %166, %165 : vector<256x64xf32>
    %168 = math.tanh %167 : vector<256x64xf32>
    %cst_74 = arith.constant 1.000000e+00 : f32
    %169 = vector.broadcast %cst_74 : f32 to vector<256x64xf32>
    %170 = arith.addf %169, %168 : vector<256x64xf32>
    %cst_75 = arith.constant 5.000000e-01 : f32
    %171 = vector.broadcast %cst_75 : f32 to vector<256x64xf32>
    %172 = arith.mulf %171, %170 : vector<256x64xf32>
    %173 = arith.mulf %165, %172 : vector<256x64xf32>
    %c0_76 = arith.constant 0 : index
    %c0_77 = arith.constant 0 : index
    %174 = vector.load %arg9[%c0_76, %c0_77] : memref<1x64xf32, #tpu.memory_space<vmem>>, vector<1x64xf32>
    %175 = arith.truncf %173 : vector<256x64xf32> to vector<256x64xbf16>
    %cst_78 = arith.constant 0.000000e+00 : bf16
    %176 = vector.broadcast %cst_78 : bf16 to vector<17x256xbf16>
    %c24_79 = arith.constant 24 : index
    %c0_80 = arith.constant 0 : index
    %177 = vector.load %arg13[%c24_79, %c0_80] : memref<304x576xbf16, #tpu.memory_space<vmem>>, vector<17x256xbf16>
    tpu.vector_store %arg13[%c24_79, %c0_80], %176 {strides = array<i32>} : memref<304x576xbf16, #tpu.memory_space<vmem>>, vector<17x256xbf16>,
    %c263_81 = arith.constant 263 : index
    %c320 = arith.constant 320 : index
    %178 = vector.load %arg13[%c263_81, %c320] : memref<304x576xbf16, #tpu.memory_space<vmem>>, vector<17x256xbf16>
    tpu.vector_store %arg13[%c263_81, %c320], %176 {strides = array<i32>} : memref<304x576xbf16, #tpu.memory_space<vmem>>, vector<17x256xbf16>,
    %cst_82 = arith.constant 0.000000e+00 : bf16
    %179 = vector.broadcast %cst_82 : bf16 to vector<256x64xbf16>
    %180 = vector.shape_cast %21 : vector<256x1xi1> to vector<256x1xi1>
    %181 = vector.broadcast %180 : vector<256x1xi1> to vector<256x64xi1>
    %182 = arith.select %181, %175, %179 : vector<256x64xi1>, vector<256x64xbf16>
    %183 = vector.shape_cast %23 : vector<256x1xi1> to vector<256x1xi1>
    %184 = vector.broadcast %183 : vector<256x1xi1> to vector<256x64xi1>
    %185 = arith.select %184, %175, %179 : vector<256x64xi1>, vector<256x64xbf16>
    %c41_83 = arith.constant 41 : index
    %c0_84 = arith.constant 0 : index
    %186 = vector.load %arg13[%c41_83, %c0_84] : memref<304x576xbf16, #tpu.memory_space<vmem>>, vector<256x64xbf16>
    tpu.vector_store %arg13[%c41_83, %c0_84], %182 {strides = array<i32>} : memref<304x576xbf16, #tpu.memory_space<vmem>>, vector<256x64xbf16>,
    %c40_85 = arith.constant 40 : index
    %c64_86 = arith.constant 64 : index
    %187 = vector.load %arg13[%c40_85, %c64_86] : memref<304x576xbf16, #tpu.memory_space<vmem>>, vector<256x64xbf16>
    tpu.vector_store %arg13[%c40_85, %c64_86], %175 {strides = array<i32>} : memref<304x576xbf16, #tpu.memory_space<vmem>>, vector<256x64xbf16>,
    %c39_87 = arith.constant 39 : index
    %c128_88 = arith.constant 128 : index
    %188 = vector.load %arg13[%c39_87, %c128_88] : memref<304x576xbf16, #tpu.memory_space<vmem>>, vector<256x64xbf16>
    tpu.vector_store %arg13[%c39_87, %c128_88], %185 {strides = array<i32>} : memref<304x576xbf16, #tpu.memory_space<vmem>>, vector<256x64xbf16>,
    %c25_89 = arith.constant 25 : index
    %c192_90 = arith.constant 192 : index
    %189 = vector.load %arg13[%c25_89, %c192_90] : memref<304x576xbf16, #tpu.memory_space<vmem>>, vector<256x64xbf16>
    tpu.vector_store %arg13[%c25_89, %c192_90], %182 {strides = array<i32>} : memref<304x576xbf16, #tpu.memory_space<vmem>>, vector<256x64xbf16>,
    %c24_91 = arith.constant 24 : index
    %c256_92 = arith.constant 256 : index
    %190 = vector.load %arg13[%c24_91, %c256_92] : memref<304x576xbf16, #tpu.memory_space<vmem>>, vector<256x64xbf16>
    tpu.vector_store %arg13[%c24_91, %c256_92], %175 {strides = array<i32>} : memref<304x576xbf16, #tpu.memory_space<vmem>>, vector<256x64xbf16>,
    %c23_93 = arith.constant 23 : index
    %c320_94 = arith.constant 320 : index
    %191 = vector.load %arg13[%c23_93, %c320_94] : memref<304x576xbf16, #tpu.memory_space<vmem>>, vector<256x64xbf16>
    tpu.vector_store %arg13[%c23_93, %c320_94], %185 {strides = array<i32>} : memref<304x576xbf16, #tpu.memory_space<vmem>>, vector<256x64xbf16>,
    %c9_95 = arith.constant 9 : index
    %c384 = arith.constant 384 : index
    %192 = vector.load %arg13[%c9_95, %c384] : memref<304x576xbf16, #tpu.memory_space<vmem>>, vector<256x64xbf16>
    tpu.vector_store %arg13[%c9_95, %c384], %182 {strides = array<i32>} : memref<304x576xbf16, #tpu.memory_space<vmem>>, vector<256x64xbf16>,
    %c8_96 = arith.constant 8 : index
    %c448 = arith.constant 448 : index
    %193 = vector.load %arg13[%c8_96, %c448] : memref<304x576xbf16, #tpu.memory_space<vmem>>, vector<256x64xbf16>
    tpu.vector_store %arg13[%c8_96, %c448], %175 {strides = array<i32>} : memref<304x576xbf16, #tpu.memory_space<vmem>>, vector<256x64xbf16>,
    %c7_97 = arith.constant 7 : index
    %c512 = arith.constant 512 : index
    %194 = vector.load %arg13[%c7_97, %c512] : memref<304x576xbf16, #tpu.memory_space<vmem>>, vector<256x64xbf16>
    tpu.vector_store %arg13[%c7_97, %c512], %185 {strides = array<i32>} : memref<304x576xbf16, #tpu.memory_space<vmem>>, vector<256x64xbf16>,
    %c24_98 = arith.constant 24 : index
    %c0_99 = arith.constant 0 : index
    %195 = vector.load %arg13[%c24_98, %c0_99] : memref<304x576xbf16, #tpu.memory_space<vmem>>, vector<256x576xbf16>
    %c0_100 = arith.constant 0 : index
    %c0_101 = arith.constant 0 : index
    %196 = vector.load %arg8[%c0_100, %c0_101] : memref<576x64xbf16, #tpu.memory_space<vmem>>, vector<576x64xbf16>
    %cst_102 = arith.constant dense<0.000000e+00> : vector<256x64xf32>
    %197 = tpu.matmul %195, %196, %cst_102 {dimension_numbers = #tpu.dot_dimension_numbers<[1], [0], [0], [1], [0, 0, 1, 1], [], []>} : vector<256x576xbf16>, vector<576x64xbf16>, vector<256x64xf32> -> vector<256x64xf32>
    %198 = vector.broadcast %174 : vector<1x64xf32> to vector<256x64xf32>
    %199 = arith.addf %197, %198 : vector<256x64xf32>
    %200 = arith.truncf %2 : vector<256x32xf32> to vector<256x32xbf16>
    %c0_103 = arith.constant 0 : index
    %c0_104 = arith.constant 0 : index
    %201 = vector.load %arg10[%c0_103, %c0_104] : memref<32x64xbf16, #tpu.memory_space<vmem>>, vector<32x64xbf16>
    %cst_105 = arith.constant dense<0.000000e+00> : vector<256x64xf32>
    %202 = tpu.matmul %200, %201, %cst_105 {dimension_numbers = #tpu.dot_dimension_numbers<[1], [0], [0], [1], [0, 0, 1, 1], [], []>} : vector<256x32xbf16>, vector<32x64xbf16>, vector<256x64xf32> -> vector<256x64xf32>
    %c0_106 = arith.constant 0 : index
    %c0_107 = arith.constant 0 : index
    %203 = vector.load %arg11[%c0_106, %c0_107] : memref<1x64xf32, #tpu.memory_space<vmem>>, vector<1x64xf32>
    %204 = vector.broadcast %203 : vector<1x64xf32> to vector<256x64xf32>
    %205 = arith.addf %202, %204 : vector<256x64xf32>
    %206 = arith.addf %205, %199 : vector<256x64xf32>
    %207 = tpu.transpose %206, [1, 0] : vector<256x64xf32> -> vector<64x256xf32>
    %c0_108 = arith.constant 0 : index
    %c0_109 = arith.constant 0 : index
    %c0_110 = arith.constant 0 : index
    %208 = vector.load %arg12[%c0_108, %c0_109, %c0_110] : memref<1x64x256xf32, #tpu.memory_space<vmem>>, vector<1x64x256xf32>
    %209 = vector.shape_cast %208 : vector<1x64x256xf32> to vector<64x256xf32>
    %210 = vector.shape_cast %207 : vector<64x256xf32> to vector<1x64x256xf32>
    tpu.vector_store %arg12[%c0_108, %c0_109, %c0_110], %210 {strides = array<i32>} : memref<1x64x256xf32, #tpu.memory_space<vmem>>, vector<1x64x256xf32>,
    return
  }
  func.func @transform_0(%arg0: i32) -> (i32, i32, i32) {
    %c0_i32 = arith.constant 0 : i32
    %c0_i32_0 = arith.constant 0 : i32
    %c0_i32_1 = arith.constant 0 : i32
    return %arg0, %c0_i32, %c0_i32_0 : i32, i32, i32
  }
  func.func @transform_1(%arg0: i32) -> (i32, i32) {
    %c0_i32 = arith.constant 0 : i32
    %c0_i32_0 = arith.constant 0 : i32
    %c0_i32_1 = arith.constant 0 : i32
    return %c0_i32, %c0_i32_0 : i32, i32
  }
  func.func @transform_2(%arg0: i32) -> (i32, i32) {
    %c0_i32 = arith.constant 0 : i32
    %c0_i32_0 = arith.constant 0 : i32
    %c0_i32_1 = arith.constant 0 : i32
    return %c0_i32, %c0_i32_0 : i32, i32
  }
  func.func @transform_3(%arg0: i32) -> (i32, i32) {
    %c0_i32 = arith.constant 0 : i32
    %c0_i32_0 = arith.constant 0 : i32
    %c0_i32_1 = arith.constant 0 : i32
    return %c0_i32, %c0_i32_0 : i32, i32
  }
  func.func @transform_4(%arg0: i32) -> (i32, i32) {
    %c0_i32 = arith.constant 0 : i32
    %c0_i32_0 = arith.constant 0 : i32
    %c0_i32_1 = arith.constant 0 : i32
    return %c0_i32, %c0_i32_0 : i32, i32
  }
  func.func @transform_5(%arg0: i32) -> (i32, i32) {
    %c0_i32 = arith.constant 0 : i32
    %c0_i32_0 = arith.constant 0 : i32
    %c0_i32_1 = arith.constant 0 : i32
    return %c0_i32, %c0_i32_0 : i32, i32
  }
  func.func @transform_6(%arg0: i32) -> (i32, i32) {
    %c0_i32 = arith.constant 0 : i32
    %c0_i32_0 = arith.constant 0 : i32
    %c0_i32_1 = arith.constant 0 : i32
    return %c0_i32, %c0_i32_0 : i32, i32
  }
  func.func @transform_7(%arg0: i32) -> (i32, i32) {
    %c0_i32 = arith.constant 0 : i32
    %c0_i32_0 = arith.constant 0 : i32
    %c0_i32_1 = arith.constant 0 : i32
    return %c0_i32, %c0_i32_0 : i32, i32
  }
  func.func @transform_8(%arg0: i32) -> (i32, i32) {
    %c0_i32 = arith.constant 0 : i32
    %c0_i32_0 = arith.constant 0 : i32
    %c0_i32_1 = arith.constant 0 : i32
    return %c0_i32, %c0_i32_0 : i32, i32
  }
  func.func @transform_9(%arg0: i32) -> (i32, i32) {
    %c0_i32 = arith.constant 0 : i32
    %c0_i32_0 = arith.constant 0 : i32
    %c0_i32_1 = arith.constant 0 : i32
    return %c0_i32, %c0_i32_0 : i32, i32
  }
  func.func @transform_10(%arg0: i32) -> (i32, i32) {
    %c0_i32 = arith.constant 0 : i32
    %c0_i32_0 = arith.constant 0 : i32
    %c0_i32_1 = arith.constant 0 : i32
    return %c0_i32, %c0_i32_0 : i32, i32
  }
  func.func @transform_11(%arg0: i32) -> (i32, i32, i32) {
    %c0_i32 = arith.constant 0 : i32
    %c0_i32_0 = arith.constant 0 : i32
    %c0_i32_1 = arith.constant 0 : i32
    return %arg0, %c0_i32, %c0_i32_0 : i32, i32, i32
  }
}

</mosaic_0001>

<llo_original>
// kernel: tpu_custom_call.1
$region0: #{tpu_custom_call.1}
  #allocation0 [shape = 'u32[]', space=smem, size = 0x4, offset = 0x4, fixed_abs, tag = 'smem constant byte address 0x4 - core index']
  #allocation1 [shape = 'u32[144,128]{1,0:T(1,128)}', space=vmem, size = 0x12000, scoped, tag = 'internal scratch']
  #allocation2 [shape = 'bf16[304,576]{1,0:T(16,128)(2,1)}', space=vmem, size = 0x5f000, scoped, tag = 'scratch operand']
  #allocation3 [shape = 'f32[1,96]{1,0:T(1,128)}', space=vmem, size = 0x200, scoped, tag = 'scratch operand']
  %s0 = inlined_call_operand.vmem [shape: f32[2,32,256], index: 0, kind: input, shape index: {}]
  %s1 = inlined_call_operand.vmem [shape: f32[1,32], index: 1, kind: input, shape index: {}]
  %s2 = inlined_call_operand.vmem [shape: f32[1,32], index: 2, kind: input, shape index: {}]
  %s3 = inlined_call_operand.vmem [shape: bf16[288,64], index: 3, kind: input, shape index: {}]
  %s4 = inlined_call_operand.vmem [shape: f32[1,64], index: 4, kind: input, shape index: {}]
  %s5 = inlined_call_operand.vmem [shape: f32[1,64], index: 5, kind: input, shape index: {}]
  %s6 = inlined_call_operand.vmem [shape: f32[1,64], index: 6, kind: input, shape index: {}]
  %s7 = inlined_call_operand.vmem [shape: bf16[576,64], index: 7, kind: input, shape index: {}]
  %s8 = inlined_call_operand.vmem [shape: f32[1,64], index: 8, kind: input, shape index: {}]
  %s9 = inlined_call_operand.vmem [shape: bf16[32,64], index: 9, kind: input, shape index: {}]
  %s10 = inlined_call_operand.vmem [shape: f32[1,64], index: 10, kind: input, shape index: {}]
  %s11 = inlined_call_operand.hbm [shape: f32[2,64,256], index: 11, kind: output, shape index: {}]
  %s12 = sld [smem:[#allocation0]]
  $region77: #{tpu_custom_call.1} parent=0
    _
  %s14 = ssub.s32 1, %s12
  %s15 = scalar_select 0, %s14, %s12
  $region1: #{tpu_custom_call.1} parent=0
    #allocation4 [shape = 'u8[131072]{0}', space=vmem, size = 0x20000, scoped, tag = 'output window, operand 0']
    #allocation5 [shape = 's32[2]{0}', space=sflag, size = 0x8, scoped, tag = 'scoped memory for tpu_custom_call.1']
    %16 = vsyncpa [#allocation5], 0
    %s17 = scalar_lea.sflag [#allocation5], 1
    %18 = vsyncpa %s17, 0
    loop: start=0, step=1, limit=4
    $region2: #{tpu_custom_call.1} parent=1 // loop_pre_header
      _
    $region3: #{tpu_custom_call.1} parent=1 // loop_header
      %s20 = sphi 0, %s24
      %p21 = scmp.ge.s32.totalorder %s20, 4
      %s30 = sphi 0, %s32
      %s33 = sphi 0, %s30
      %s34 = sphi 0, %s33
      %s50 = sphi 0, %s34
      %s54 = sphi 0, %s54
      %s56 = sphi 0, %s54
      %s57 = sphi 0, %s56
      %s71 = sphi 0, %s57
      %s75 = sphi 0, %s75
      %s77 = sphi 0, %s75
      %s78 = sphi 0, %s77
      %s92 = sphi 0, %s78
      %s96 = sphi 0, %s96
      %s98 = sphi 0, %s96
      %s99 = sphi 0, %s98
      %s113 = sphi 0, %s99
      %s117 = sphi 0, %s117
      %s119 = sphi 0, %s117
      %s120 = sphi 0, %s119
      %s134 = sphi 0, %s120
      %s138 = sphi 0, %s138
      %s140 = sphi 0, %s138
      %s141 = sphi 0, %s140
      %s155 = sphi 0, %s141
      %s159 = sphi 0, %s159
      %s161 = sphi 0, %s159
      %s162 = sphi 0, %s161
      %s176 = sphi 0, %s162
      %s180 = sphi 0, %s180
      %s182 = sphi 0, %s180
      %s183 = sphi 0, %s182
      %s197 = sphi 0, %s183
      %s201 = sphi 0, %s201
      %s203 = sphi 0, %s201
      %s204 = sphi 0, %s203
      %s218 = sphi 0, %s204
      %s222 = sphi 0, %s222
      %s224 = sphi 0, %s222
      %s225 = sphi 0, %s224
      %s239 = sphi 0, %s225
      %s243 = sphi 0, %s243
      %s245 = sphi 0, %s243
      %s246 = sphi 0, %s245
      %s260 = sphi 0, %s246
      %s266 = sphi 0, %s268
      %s269 = sphi 0, %s266
      %s270 = sphi 0, %s269
      %s286 = sphi 0, %s270
    $region4: #{tpu_custom_call.1} parent=1 // loop_header_branch
      %23 = sbr.rel (%p21) target = $region8
    $region5: #{tpu_custom_call.1} parent=1 // loop_body
      %s25 = ssub.s32 %s20, 1
      %s26 = ssub.s32 %s20, 2
      %s27 = sadd.s32 %s20, 1
      %s28 = ssub.s32 %s20, %s27
      %p29 = scmp.eq.s32.totalorder %s28, 0
      %s31 = sadd.s32 %s30, 1
      %s32 = scalar_select %p29, %s30, %s31
      %p35 = pneg %p29
      %p36 = scmp.eq.s32.totalorder %s20, 1
      %p37 = por %p35, %p36
      %p38 = scmp.ne.s32.totalorder %s30, %s33
      %p39 = scmp.eq.s32.totalorder %s20, 0
      %p40 = por %p38, %p39
      %p41 = scmp.ne.s32.totalorder %s30, %s33
      %p42 = scmp.eq.s32.totalorder %s25, 1
      %p43 = por %p41, %p42
      %p44 = scmp.ne.s32.totalorder %s33, %s34
      %p45 = scmp.eq.s32.totalorder %s25, 0
      %p46 = por %p44, %p45
      %p47 = scmp.ne.s32.totalorder %s33, %s34
      %p48 = scmp.eq.s32.totalorder %s26, 1
      %p49 = por %p47, %p48
      %p51 = scmp.ne.s32.totalorder %s34, %s50
      %p52 = scmp.eq.s32.totalorder %s26, 0
      %p53 = por %p51, %p52
      %s55 = sadd.s32 %s54, 1
      %p58 = scmp.eq.s32.totalorder %s20, 1
      %p59 = scmp.ne.s32.totalorder %s54, %s56
      %p60 = scmp.eq.s32.totalorder %s20, 0
      %p61 = por %p59, %p60
      %p62 = scmp.ne.s32.totalorder %s54, %s56
      %p63 = scmp.eq.s32.totalorder %s25, 1
      %p64 = por %p62, %p63
      %p65 = scmp.ne.s32.totalorder %s56, %s57
      %p66 = scmp.eq.s32.totalorder %s25, 0
      %p67 = por %p65, %p66
      %p68 = scmp.ne.s32.totalorder %s56, %s57
      %p69 = scmp.eq.s32.totalorder %s26, 1
      %p70 = por %p68, %p69
      %p72 = scmp.ne.s32.totalorder %s57, %s71
      %p73 = scmp.eq.s32.totalorder %s26, 0
      %p74 = por %p72, %p73
      %s76 = sadd.s32 %s75, 1
      %p79 = scmp.eq.s32.totalorder %s20, 1
      %p80 = scmp.ne.s32.totalorder %s75, %s77
      %p81 = scmp.eq.s32.totalorder %s20, 0
      %p82 = por %p80, %p81
      %p83 = scmp.ne.s32.totalorder %s75, %s77
      %p84 = scmp.eq.s32.totalorder %s25, 1
      %p85 = por %p83, %p84
      %p86 = scmp.ne.s32.totalorder %s77, %s78
      %p87 = scmp.eq.s32.totalorder %s25, 0
      %p88 = por %p86, %p87
      %p89 = scmp.ne.s32.totalorder %s77, %s78
      %p90 = scmp.eq.s32.totalorder %s26, 1
      %p91 = por %p89, %p90
      %p93 = scmp.ne.s32.totalorder %s78, %s92
      %p94 = scmp.eq.s32.totalorder %s26, 0
      %p95 = por %p93, %p94
      %s97 = sadd.s32 %s96, 1
      %p100 = scmp.eq.s32.totalorder %s20, 1
      %p101 = scmp.ne.s32.totalorder %s96, %s98
      %p102 = scmp.eq.s32.totalorder %s20, 0
      %p103 = por %p101, %p102
      %p104 = scmp.ne.s32.totalorder %s96, %s98
      %p105 = scmp.eq.s32.totalorder %s25, 1
      %p106 = por %p104, %p105
      %p107 = scmp.ne.s32.totalorder %s98, %s99
      %p108 = scmp.eq.s32.totalorder %s25, 0
      %p109 = por %p107, %p108
      %p110 = scmp.ne.s32.totalorder %s98, %s99
      %p111 = scmp.eq.s32.totalorder %s26, 1
      %p112 = por %p110, %p111
      %p114 = scmp.ne.s32.totalorder %s99, %s113
      %p115 = scmp.eq.s32.totalorder %s26, 0
      %p116 = por %p114, %p115
      %s118 = sadd.s32 %s117, 1
      %p121 = scmp.eq.s32.totalorder %s20, 1
      %p122 = scmp.ne.s32.totalorder %s117, %s119
      %p123 = scmp.eq.s32.totalorder %s20, 0
      %p124 = por %p122, %p123
      %p125 = scmp.ne.s32.totalorder %s117, %s119
      %p126 = scmp.eq.s32.totalorder %s25, 1
      %p127 = por %p125, %p126
      %p128 = scmp.ne.s32.totalorder %s119, %s120
      %p129 = scmp.eq.s32.totalorder %s25, 0
      %p130 = por %p128, %p129
      %p131 = scmp.ne.s32.totalorder %s119, %s120
      %p132 = scmp.eq.s32.totalorder %s26, 1
      %p133 = por %p131, %p132
      %p135 = scmp.ne.s32.totalorder %s120, %s134
      %p136 = scmp.eq.s32.totalorder %s26, 0
      %p137 = por %p135, %p136
      %s139 = sadd.s32 %s138, 1
      %p142 = scmp.eq.s32.totalorder %s20, 1
      %p143 = scmp.ne.s32.totalorder %s138, %s140
      %p144 = scmp.eq.s32.totalorder %s20, 0
      %p145 = por %p143, %p144
      %p146 = scmp.ne.s32.totalorder %s138, %s140
      %p147 = scmp.eq.s32.totalorder %s25, 1
      %p148 = por %p146, %p147
      %p149 = scmp.ne.s32.totalorder %s140, %s141
      %p150 = scmp.eq.s32.totalorder %s25, 0
      %p151 = por %p149, %p150
      %p152 = scmp.ne.s32.totalorder %s140, %s141
      %p153 = scmp.eq.s32.totalorder %s26, 1
      %p154 = por %p152, %p153
      %p156 = scmp.ne.s32.totalorder %s141, %s155
      %p157 = scmp.eq.s32.totalorder %s26, 0
      %p158 = por %p156, %p157
      %s160 = sadd.s32 %s159, 1
      %p163 = scmp.eq.s32.totalorder %s20, 1
      %p164 = scmp.ne.s32.totalorder %s159, %s161
      %p165 = scmp.eq.s32.totalorder %s20, 0
      %p166 = por %p164, %p165
      %p167 = scmp.ne.s32.totalorder %s159, %s161
      %p168 = scmp.eq.s32.totalorder %s25, 1
      %p169 = por %p167, %p168
      %p170 = scmp.ne.s32.totalorder %s161, %s162
      %p171 = scmp.eq.s32.totalorder %s25, 0
      %p172 = por %p170, %p171
      %p173 = scmp.ne.s32.totalorder %s161, %s162
      %p174 = scmp.eq.s32.totalorder %s26, 1
      %p175 = por %p173, %p174
      %p177 = scmp.ne.s32.totalorder %s162, %s176
      %p178 = scmp.eq.s32.totalorder %s26, 0
      %p179 = por %p177, %p178
      %s181 = sadd.s32 %s180, 1
      %p184 = scmp.eq.s32.totalorder %s20, 1
      %p185 = scmp.ne.s32.totalorder %s180, %s182
      %p186 = scmp.eq.s32.totalorder %s20, 0
      %p187 = por %p185, %p186
      %p188 = scmp.ne.s32.totalorder %s180, %s182
      %p189 = scmp.eq.s32.totalorder %s25, 1
      %p190 = por %p188, %p189
      %p191 = scmp.ne.s32.totalorder %s182, %s183
      %p192 = scmp.eq.s32.totalorder %s25, 0
      %p193 = por %p191, %p192
      %p194 = scmp.ne.s32.totalorder %s182, %s183
      %p195 = scmp.eq.s32.totalorder %s26, 1
      %p196 = por %p194, %p195
      %p198 = scmp.ne.s32.totalorder %s183, %s197
      %p199 = scmp.eq.s32.totalorder %s26, 0
      %p200 = por %p198, %p199
      %s202 = sadd.s32 %s201, 1
      %p205 = scmp.eq.s32.totalorder %s20, 1
      %p206 = scmp.ne.s32.totalorder %s201, %s203
      %p207 = scmp.eq.s32.totalorder %s20, 0
      %p208 = por %p206, %p207
      %p209 = scmp.ne.s32.totalorder %s201, %s203
      %p210 = scmp.eq.s32.totalorder %s25, 1
      %p211 = por %p209, %p210
      %p212 = scmp.ne.s32.totalorder %s203, %s204
      %p213 = scmp.eq.s32.totalorder %s25, 0
      %p214 = por %p212, %p213
      %p215 = scmp.ne.s32.totalorder %s203, %s204
      %p216 = scmp.eq.s32.totalorder %s26, 1
      %p217 = por %p215, %p216
      %p219 = scmp.ne.s32.totalorder %s204, %s218
      %p220 = scmp.eq.s32.totalorder %s26, 0
      %p221 = por %p219, %p220
      %s223 = sadd.s32 %s222, 1
      %p226 = scmp.eq.s32.totalorder %s20, 1
      %p227 = scmp.ne.s32.totalorder %s222, %s224
      %p228 = scmp.eq.s32.totalorder %s20, 0
      %p229 = por %p227, %p228
      %p230 = scmp.ne.s32.totalorder %s222, %s224
      %p231 = scmp.eq.s32.totalorder %s25, 1
      %p232 = por %p230, %p231
      %p233 = scmp.ne.s32.totalorder %s224, %s225
      %p234 = scmp.eq.s32.totalorder %s25, 0
      %p235 = por %p233, %p234
      %p236 = scmp.ne.s32.totalorder %s224, %s225
      %p237 = scmp.eq.s32.totalorder %s26, 1
      %p238 = por %p236, %p237
      %p240 = scmp.ne.s32.totalorder %s225, %s239
      %p241 = scmp.eq.s32.totalorder %s26, 0
      %p242 = por %p240, %p241
      %s244 = sadd.s32 %s243, 1
      %p247 = scmp.eq.s32.totalorder %s20, 1
      %p248 = scmp.ne.s32.totalorder %s243, %s245
      %p249 = scmp.eq.s32.totalorder %s20, 0
      %p250 = por %p248, %p249
      %p251 = scmp.ne.s32.totalorder %s243, %s245
      %p252 = scmp.eq.s32.totalorder %s25, 1
      %p253 = por %p251, %p252
      %p254 = scmp.ne.s32.totalorder %s245, %s246
      %p255 = scmp.eq.s32.totalorder %s25, 0
      %p256 = por %p254, %p255
      %p257 = scmp.ne.s32.totalorder %s245, %s246
      %p258 = scmp.eq.s32.totalorder %s26, 1
      %p259 = por %p257, %p258
      %p261 = scmp.ne.s32.totalorder %s246, %s260
      %p262 = scmp.eq.s32.totalorder %s26, 0
      %p263 = por %p261, %p262
      %s264 = ssub.s32 %s20, %s27
      %p265 = scmp.eq.s32.totalorder %s264, 0
      %s267 = sadd.s32 %s266, 1
      %s268 = scalar_select %p265, %s266, %s267
      %p271 = pneg %p265
      %p272 = scmp.eq.s32.totalorder %s20, 1
      %p273 = por %p271, %p272
      %p274 = scmp.ne.s32.totalorder %s266, %s269
      %p275 = scmp.eq.s32.totalorder %s20, 0
      %p276 = por %p274, %p275
      %p277 = scmp.ne.s32.totalorder %s266, %s269
      %p278 = scmp.eq.s32.totalorder %s25, 1
      %p279 = por %p277, %p278
      %p280 = scmp.ne.s32.totalorder %s269, %s270
      %p281 = scmp.eq.s32.totalorder %s25, 0
      %p282 = por %p280, %p281
      %p283 = scmp.ne.s32.totalorder %s269, %s270
      %p284 = scmp.eq.s32.totalorder %s26, 1
      %p285 = por %p283, %p284
      %p287 = scmp.ne.s32.totalorder %s270, %s286
      %p288 = scmp.eq.s32.totalorder %s26, 0
      %p289 = por %p287, %p288
      %p290 = scmp.le.s32.totalorder 1, %s20
      %p291 = scmp.lt.s32.totalorder %s20, 3
      %p292 = pnand %p290, %p291
      %p293 = pneg %p292
      // Predicated region
      $region9: #{tpu_custom_call.1} parent=5 // pred_check
        _
      $region10: #{tpu_custom_call.1} parent=5 // pred_check_branch
        %295 = sbr.rel (%p292) target = $region12
      $region11: #{tpu_custom_call.1} parent=5 // pred_region
        %s296 = ssub.s32 %s20, 1
        // Predicated region
        $region13: #{tpu_custom_call.1} parent=11 // pred_check
          %p297 = pneg %p67
        $region14: #{tpu_custom_call.1} parent=11 // pred_check_branch
          %299 = sbr.rel (%p297) target = $region16
        $region15: #{tpu_custom_call.1} parent=11 // pred_region
          _
        $region16: #{tpu_custom_call.1} parent=11 // pred_fallthru
          _
        // Predicated region
        $region17: #{tpu_custom_call.1} parent=11 // pred_check
          %p300 = pneg %p88
        $region18: #{tpu_custom_call.1} parent=11 // pred_check_branch
          %302 = sbr.rel (%p300) target = $region20
        $region19: #{tpu_custom_call.1} parent=11 // pred_region
          _
        $region20: #{tpu_custom_call.1} parent=11 // pred_fallthru
          _
        // Predicated region
        $region21: #{tpu_custom_call.1} parent=11 // pred_check
          %p303 = pneg %p109
        $region22: #{tpu_custom_call.1} parent=11 // pred_check_branch
          %305 = sbr.rel (%p303) target = $region24
        $region23: #{tpu_custom_call.1} parent=11 // pred_region
          _
        $region24: #{tpu_custom_call.1} parent=11 // pred_fallthru
          _
        // Predicated region
        $region25: #{tpu_custom_call.1} parent=11 // pred_check
          %p306 = pneg %p130
        $region26: #{tpu_custom_call.1} parent=11 // pred_check_branch
          %308 = sbr.rel (%p306) target = $region28
        $region27: #{tpu_custom_call.1} parent=11 // pred_region
          _
        $region28: #{tpu_custom_call.1} parent=11 // pred_fallthru
          _
        // Predicated region
        $region29: #{tpu_custom_call.1} parent=11 // pred_check
          %p309 = pneg %p151
        $region30: #{tpu_custom_call.1} parent=11 // pred_check_branch
          %311 = sbr.rel (%p309) target = $region32
        $region31: #{tpu_custom_call.1} parent=11 // pred_region
          _
        $region32: #{tpu_custom_call.1} parent=11 // pred_fallthru
          _
        // Predicated region
        $region33: #{tpu_custom_call.1} parent=11 // pred_check
          %p312 = pneg %p172
        $region34: #{tpu_custom_call.1} parent=11 // pred_check_branch
          %314 = sbr.rel (%p312) target = $region36
        $region35: #{tpu_custom_call.1} parent=11 // pred_region
          _
        $region36: #{tpu_custom_call.1} parent=11 // pred_fallthru
          _
        // Predicated region
        $region37: #{tpu_custom_call.1} parent=11 // pred_check
          %p315 = pneg %p193
        $region38: #{tpu_custom_call.1} parent=11 // pred_check_branch
          %317 = sbr.rel (%p315) target = $region40
        $region39: #{tpu_custom_call.1} parent=11 // pred_region
          _
        $region40: #{tpu_custom_call.1} parent=11 // pred_fallthru
          _
        // Predicated region
        $region41: #{tpu_custom_call.1} parent=11 // pred_check
          %p318 = pneg %p214
        $region42: #{tpu_custom_call.1} parent=11 // pred_check_branch
          %320 = sbr.rel (%p318) target = $region44
        $region43: #{tpu_custom_call.1} parent=11 // pred_region
          _
        $region44: #{tpu_custom_call.1} parent=11 // pred_fallthru
          _
        // Predicated region
        $region45: #{tpu_custom_call.1} parent=11 // pred_check
          %p321 = pneg %p235
        $region46: #{tpu_custom_call.1} parent=11 // pred_check_branch
          %323 = sbr.rel (%p321) target = $region48
        $region47: #{tpu_custom_call.1} parent=11 // pred_region
          _
        $region48: #{tpu_custom_call.1} parent=11 // pred_fallthru
          _
        // Predicated region
        $region49: #{tpu_custom_call.1} parent=11 // pred_check
          %p324 = pneg %p256
        $region50: #{tpu_custom_call.1} parent=11 // pred_check_branch
          %326 = sbr.rel (%p324) target = $region52
        $region51: #{tpu_custom_call.1} parent=11 // pred_region
          _
        $region52: #{tpu_custom_call.1} parent=11 // pred_fallthru
          _
      $region12: #{tpu_custom_call.1} parent=5 // pred_fallthru
        _
      %p327 = scmp.lt.s32.totalorder %s20, 2
      // Predicated region
      $region53: #{tpu_custom_call.1} parent=5 // pred_check
        %p328 = pneg %p327
      $region54: #{tpu_custom_call.1} parent=5 // pred_check_branch
        %330 = sbr.rel (%p328) target = $region56
      $region55: #{tpu_custom_call.1} parent=5 // pred_region
        // Predicated region
        $region57: #{tpu_custom_call.1} parent=55 // pred_check
          %p331 = pneg %p40
        $region58: #{tpu_custom_call.1} parent=55 // pred_check_branch
          %333 = sbr.rel (%p331) target = $region60
        $region59: #{tpu_custom_call.1} parent=55 // pred_region
          %p334 = scmp.lt.s32.totalorder %s20, 1
          %s335 = scalar_select %p334, %s20, 1
          %s336 = smul.addr %s335, 8
          %s337 = smul.addr %s336, 8
          %s338 = scalar_lea.vmem %s0, %s337
        $region60: #{tpu_custom_call.1} parent=55 // pred_fallthru
          _
      $region56: #{tpu_custom_call.1} parent=5 // pred_fallthru
        _
      %p339 = scmp.le.s32.totalorder 1, %s20
      %p340 = scmp.lt.s32.totalorder %s20, 3
      %p341 = pnand %p339, %p340
      %p342 = pneg %p341
      // Predicated region
      $region61: #{tpu_custom_call.1} parent=5 // pred_check
        _
      $region62: #{tpu_custom_call.1} parent=5 // pred_check_branch
        %344 = sbr.rel (%p341) target = $region64
      $region63: #{tpu_custom_call.1} parent=5 // pred_region
        %s345 = ssub.s32 %s20, 1
        %p346 = scmp.lt.s32.totalorder %s25, 1
        %s347 = scalar_select %p346, %s25, 1
        %s348 = smul.addr %s347, 8
        %s349 = smul.addr %s348, 8
        %s350 = scalar_lea.vmem %s0, %s349
        %p351 = pneg %p46
        %p352 = pneg %p43
        %p353 = pneg %p67
        %p354 = pneg %p64
        %p355 = pneg %p88
        %p356 = pneg %p85
        %p357 = pneg %p109
        %p358 = pneg %p106
        %p359 = pneg %p130
        %p360 = pneg %p127
        %p361 = pneg %p151
        %p362 = pneg %p148
        %p363 = pneg %p172
        %p364 = pneg %p169
        %p365 = pneg %p193
        %p366 = pneg %p190
        %p367 = pneg %p214
        %p368 = pneg %p211
        %p369 = pneg %p235
        %p370 = pneg %p232
        %p371 = pneg %p256
        %p372 = pneg %p253
        %p373 = pneg %p282
        %p374 = pneg %p279
        %s375 = sand.u32 %s269, 1
        %s376 = scalar_lea.sflag [#allocation5], %s375
        %s377 = sand.u32 %s269, 1
        %s378 = smul.addr %s377, 128
        %s379 = scalar_lea.vmem [#allocation4], %s378
        %p380 = scmp.lt.s32.totalorder %s25, 1
        %s381 = scalar_select %p380, %s25, 1
        %s382 = smul.addr %s381, 8
        %s383 = smul.addr %s382, 8
        %s384 = scalar_lea.vmem %s0, %s383
        %v388 = vld [vmem:[%s384] sm:$0xff]
        %v389 = vld [vmem:[%s384 + $0x8] sm:$0xff]
        %v390 = vld [vmem:[%s384 + $0x10] sm:$0xff]
        %v391 = vld [vmem:[%s384 + $0x18] sm:$0xff]
        %v392 = vld [vmem:[%s384 + $0x20] sm:$0xff]
        %v393 = vld [vmem:[%s384 + $0x28] sm:$0xff]
        %v394 = vld [vmem:[%s384 + $0x30] sm:$0xff]
        %v395 = vld [vmem:[%s384 + $0x38] sm:$0xff]
        %396 = vxpose.xlu0.b32.start [1/16] %v388, 128
        %397 = vxpose.xlu0.b32.cont [2/16] %v390, 128
        %398 = vxpose.xlu0.b32.cont [3/16] %v392, 128
        %399 = vxpose.xlu0.b32.cont [4/16] %v394, 128
        %400 = vxpose.xlu0.b32.cont [5/16] 0.0, 128
        %401 = vxpose.xlu0.b32.cont [6/16] 0.0, 128
        %402 = vxpose.xlu0.b32.cont [7/16] 0.0, 128
        %403 = vxpose.xlu0.b32.cont [8/16] 0.0, 128
        %404 = vxpose.xlu0.b32.cont [9/16] 0.0, 128
        %405 = vxpose.xlu0.b32.cont [10/16] 0.0, 128
        %406 = vxpose.xlu0.b32.cont [11/16] 0.0, 128
        %407 = vxpose.xlu0.b32.cont [12/16] 0.0, 128
        %408 = vxpose.xlu0.b32.cont [13/16] 0.0, 128
        %409 = vxpose.xlu0.b32.cont [14/16] 0.0, 128
        %410 = vxpose.xlu0.b32.cont [15/16] 0.0, 128
        %411 = vxpose.xlu0.b32.end [16/16] 0.0, 128
        %v412 = vpop.trf.xlu0
        %v413 = vpop.trf.xlu0
        %v414 = vpop.trf.xlu0
        %v415 = vpop.trf.xlu0
        %v416 = vpop.trf.xlu0
        %v417 = vpop.trf.xlu0
        %v418 = vpop.trf.xlu0
        %v419 = vpop.trf.xlu0
        %v420 = vpop.trf.xlu0
        %v421 = vpop.trf.xlu0
        %v422 = vpop.trf.xlu0
        %v423 = vpop.trf.xlu0
        %v424 = vpop.trf.xlu0
        %v425 = vpop.trf.xlu0
        %v426 = vpop.trf.xlu0
        %v427 = vpop.trf.xlu0
        %428 = vxpose.xlu0.b32.start [1/16] %v389, 128
        %429 = vxpose.xlu0.b32.cont [2/16] %v391, 128
        %430 = vxpose.xlu0.b32.cont [3/16] %v393, 128
        %431 = vxpose.xlu0.b32.cont [4/16] %v395, 128
        %432 = vxpose.xlu0.b32.cont [5/16] 0.0, 128
        %433 = vxpose.xlu0.b32.cont [6/16] 0.0, 128
        %434 = vxpose.xlu0.b32.cont [7/16] 0.0, 128
        %435 = vxpose.xlu0.b32.cont [8/16] 0.0, 128
        %436 = vxpose.xlu0.b32.cont [9/16] 0.0, 128
        %437 = vxpose.xlu0.b32.cont [10/16] 0.0, 128
        %438 = vxpose.xlu0.b32.cont [11/16] 0.0, 128
        %439 = vxpose.xlu0.b32.cont [12/16] 0.0, 128
        %440 = vxpose.xlu0.b32.cont [13/16] 0.0, 128
        %441 = vxpose.xlu0.b32.cont [14/16] 0.0, 128
        %442 = vxpose.xlu0.b32.cont [15/16] 0.0, 128
        %443 = vxpose.xlu0.b32.end [16/16] 0.0, 128
        %v444 = vpop.trf.xlu0
        %v445 = vpop.trf.xlu0
        %v446 = vpop.trf.xlu0
        %v447 = vpop.trf.xlu0
        %v448 = vpop.trf.xlu0
        %v449 = vpop.trf.xlu0
        %v450 = vpop.trf.xlu0
        %v451 = vpop.trf.xlu0
        %v452 = vpop.trf.xlu0
        %v453 = vpop.trf.xlu0
        %v454 = vpop.trf.xlu0
        %v455 = vpop.trf.xlu0
        %v456 = vpop.trf.xlu0
        %v457 = vpop.trf.xlu0
        %v458 = vpop.trf.xlu0
        %v459 = vpop.trf.xlu0
        %v460 = vlaneseq
        %v461 = vshrl.u32 %v460, 7
        %v462 = vadd.s32 %v461, 8
        %v463 = vadd.s32 %v461, 16
        %v464 = vadd.s32 %v461, 24
        %v465 = vadd.s32 %v461, 32
        %v466 = vadd.s32 %v461, 40
        %v467 = vadd.s32 %v461, 48
        %v468 = vadd.s32 %v461, 56
        %v469 = vadd.s32 %v461, 64
        %v470 = vadd.s32 %v461, 72
        %v471 = vadd.s32 %v461, 80
        %v472 = vadd.s32 %v461, 88
        %v473 = vadd.s32 %v461, 96
        %v474 = vadd.s32 %v461, 104
        %v475 = vadd.s32 %v461, 112
        %v476 = vadd.s32 %v461, 120
        %v477 = vadd.s32 %v461, 128
        %v478 = vadd.s32 %v461, 136
        %v479 = vadd.s32 %v461, 144
        %v480 = vadd.s32 %v461, 152
        %v481 = vadd.s32 %v461, 160
        %v482 = vadd.s32 %v461, 168
        %v483 = vadd.s32 %v461, 176
        %v484 = vadd.s32 %v461, 184
        %v485 = vadd.s32 %v461, 192
        %v486 = vadd.s32 %v461, 200
        %v487 = vadd.s32 %v461, 208
        %v488 = vadd.s32 %v461, 216
        %v489 = vadd.s32 %v461, 224
        %v490 = vadd.s32 %v461, 232
        %v491 = vadd.s32 %v461, 240
        %v492 = vadd.s32 %v461, 248
        %vm493 = vcmp.lt.s32.totalorder %v461, 0
        %v494 = vsub.s32 0, %v461
        %v495 = vsel %vm493, %v494, %v461
        %v496 = vshrl.u32 %v495, 4
        %v497 = vand.u32 %v495, 15
        %v498 = vsub.s32 0, %v497
        %v499 = vsel %vm493, %v498, %v497
        %vm500 = vcmp.lt.s32.totalorder %v462, 0
        %v501 = vsub.s32 0, %v462
        %v502 = vsel %vm500, %v501, %v462
        %v503 = vshrl.u32 %v502, 4
        %v504 = vand.u32 %v502, 15
        %v505 = vsub.s32 0, %v504
        %v506 = vsel %vm500, %v505, %v504
        %vm507 = vcmp.lt.s32.totalorder %v463, 0
        %v508 = vsub.s32 0, %v463
        %v509 = vsel %vm507, %v508, %v463
        %v510 = vshrl.u32 %v509, 4
        %v511 = vand.u32 %v509, 15
        %v512 = vsub.s32 0, %v511
        %v513 = vsel %vm507, %v512, %v511
        %vm514 = vcmp.lt.s32.totalorder %v464, 0
        %v515 = vsub.s32 0, %v464
        %v516 = vsel %vm514, %v515, %v464
        %v517 = vshrl.u32 %v516, 4
        %v518 = vand.u32 %v516, 15
        %v519 = vsub.s32 0, %v518
        %v520 = vsel %vm514, %v519, %v518
        %vm521 = vcmp.lt.s32.totalorder %v465, 0
        %v522 = vsub.s32 0, %v465
        %v523 = vsel %vm521, %v522, %v465
        %v524 = vshrl.u32 %v523, 4
        %v525 = vand.u32 %v523, 15
        %v526 = vsub.s32 0, %v525
        %v527 = vsel %vm521, %v526, %v525
        %vm528 = vcmp.lt.s32.totalorder %v466, 0
        %v529 = vsub.s32 0, %v466
        %v530 = vsel %vm528, %v529, %v466
        %v531 = vshrl.u32 %v530, 4
        %v532 = vand.u32 %v530, 15
        %v533 = vsub.s32 0, %v532
        %v534 = vsel %vm528, %v533, %v532
        %vm535 = vcmp.lt.s32.totalorder %v467, 0
        %v536 = vsub.s32 0, %v467
        %v537 = vsel %vm535, %v536, %v467
        %v538 = vshrl.u32 %v537, 4
        %v539 = vand.u32 %v537, 15
        %v540 = vsub.s32 0, %v539
        %v541 = vsel %vm535, %v540, %v539
        %vm542 = vcmp.lt.s32.totalorder %v468, 0
        %v543 = vsub.s32 0, %v468
        %v544 = vsel %vm542, %v543, %v468
        %v545 = vshrl.u32 %v544, 4
        %v546 = vand.u32 %v544, 15
        %v547 = vsub.s32 0, %v546
        %v548 = vsel %vm542, %v547, %v546
        %vm549 = vcmp.lt.s32.totalorder %v469, 0
        %v550 = vsub.s32 0, %v469
        %v551 = vsel %vm549, %v550, %v469
        %v552 = vshrl.u32 %v551, 4
        %v553 = vand.u32 %v551, 15
        %v554 = vsub.s32 0, %v553
        %v555 = vsel %vm549, %v554, %v553
        %vm556 = vcmp.lt.s32.totalorder %v470, 0
        %v557 = vsub.s32 0, %v470
        %v558 = vsel %vm556, %v557, %v470
        %v559 = vshrl.u32 %v558, 4
        %v560 = vand.u32 %v558, 15
        %v561 = vsub.s32 0, %v560
        %v562 = vsel %vm556, %v561, %v560
        %vm563 = vcmp.lt.s32.totalorder %v471, 0
        %v564 = vsub.s32 0, %v471
        %v565 = vsel %vm563, %v564, %v471
        %v566 = vshrl.u32 %v565, 4
        %v567 = vand.u32 %v565, 15
        %v568 = vsub.s32 0, %v567
        %v569 = vsel %vm563, %v568, %v567
        %vm570 = vcmp.lt.s32.totalorder %v472, 0
        %v571 = vsub.s32 0, %v472
        %v572 = vsel %vm570, %v571, %v472
        %v573 = vshrl.u32 %v572, 4
        %v574 = vand.u32 %v572, 15
        %v575 = vsub.s32 0, %v574
        %v576 = vsel %vm570, %v575, %v574
        %vm577 = vcmp.lt.s32.totalorder %v473, 0
        %v578 = vsub.s32 0, %v473
        %v579 = vsel %vm577, %v578, %v473
        %v580 = vshrl.u32 %v579, 4
        %v581 = vand.u32 %v579, 15
        %v582 = vsub.s32 0, %v581
        %v583 = vsel %vm577, %v582, %v581
        %vm584 = vcmp.lt.s32.totalorder %v474, 0
        %v585 = vsub.s32 0, %v474
        %v586 = vsel %vm584, %v585, %v474
        %v587 = vshrl.u32 %v586, 4
        %v588 = vand.u32 %v586, 15
        %v589 = vsub.s32 0, %v588
        %v590 = vsel %vm584, %v589, %v588
        %vm591 = vcmp.lt.s32.totalorder %v475, 0
        %v592 = vsub.s32 0, %v475
        %v593 = vsel %vm591, %v592, %v475
        %v594 = vshrl.u32 %v593, 4
        %v595 = vand.u32 %v593, 15
        %v596 = vsub.s32 0, %v595
        %v597 = vsel %vm591, %v596, %v595
        %vm598 = vcmp.lt.s32.totalorder %v476, 0
        %v599 = vsub.s32 0, %v476
        %v600 = vsel %vm598, %v599, %v476
        %v601 = vshrl.u32 %v600, 4
        %v602 = vand.u32 %v600, 15
        %v603 = vsub.s32 0, %v602
        %v604 = vsel %vm598, %v603, %v602
        %vm605 = vcmp.lt.s32.totalorder %v477, 0
        %v606 = vsub.s32 0, %v477
        %v607 = vsel %vm605, %v606, %v477
        %v608 = vshrl.u32 %v607, 4
        %v609 = vand.u32 %v607, 15
        %v610 = vsub.s32 0, %v609
        %v611 = vsel %vm605, %v610, %v609
        %vm612 = vcmp.lt.s32.totalorder %v478, 0
        %v613 = vsub.s32 0, %v478
        %v614 = vsel %vm612, %v613, %v478
        %v615 = vshrl.u32 %v614, 4
        %v616 = vand.u32 %v614, 15
        %v617 = vsub.s32 0, %v616
        %v618 = vsel %vm612, %v617, %v616
        %vm619 = vcmp.lt.s32.totalorder %v479, 0
        %v620 = vsub.s32 0, %v479
        %v621 = vsel %vm619, %v620, %v479
        %v622 = vshrl.u32 %v621, 4
        %v623 = vand.u32 %v621, 15
        %v624 = vsub.s32 0, %v623
        %v625 = vsel %vm619, %v624, %v623
        %vm626 = vcmp.lt.s32.totalorder %v480, 0
        %v627 = vsub.s32 0, %v480
        %v628 = vsel %vm626, %v627, %v480
        %v629 = vshrl.u32 %v628, 4
        %v630 = vand.u32 %v628, 15
        %v631 = vsub.s32 0, %v630
        %v632 = vsel %vm626, %v631, %v630
        %vm633 = vcmp.lt.s32.totalorder %v481, 0
        %v634 = vsub.s32 0, %v481
        %v635 = vsel %vm633, %v634, %v481
        %v636 = vshrl.u32 %v635, 4
        %v637 = vand.u32 %v635, 15
        %v638 = vsub.s32 0, %v637
        %v639 = vsel %vm633, %v638, %v637
        %vm640 = vcmp.lt.s32.totalorder %v482, 0
        %v641 = vsub.s32 0, %v482
        %v642 = vsel %vm640, %v641, %v482
        %v643 = vshrl.u32 %v642, 4
        %v644 = vand.u32 %v642, 15
        %v645 = vsub.s32 0, %v644
        %v646 = vsel %vm640, %v645, %v644
        %vm647 = vcmp.lt.s32.totalorder %v483, 0
        %v648 = vsub.s32 0, %v483
        %v649 = vsel %vm647, %v648, %v483
        %v650 = vshrl.u32 %v649, 4
        %v651 = vand.u32 %v649, 15
        %v652 = vsub.s32 0, %v651
        %v653 = vsel %vm647, %v652, %v651
        %vm654 = vcmp.lt.s32.totalorder %v484, 0
        %v655 = vsub.s32 0, %v484
        %v656 = vsel %vm654, %v655, %v484
        %v657 = vshrl.u32 %v656, 4
        %v658 = vand.u32 %v656, 15
        %v659 = vsub.s32 0, %v658
        %v660 = vsel %vm654, %v659, %v658
        %vm661 = vcmp.lt.s32.totalorder %v485, 0
        %v662 = vsub.s32 0, %v485
        %v663 = vsel %vm661, %v662, %v485
        %v664 = vshrl.u32 %v663, 4
        %v665 = vand.u32 %v663, 15
        %v666 = vsub.s32 0, %v665
        %v667 = vsel %vm661, %v666, %v665
        %vm668 = vcmp.lt.s32.totalorder %v486, 0
        %v669 = vsub.s32 0, %v486
        %v670 = vsel %vm668, %v669, %v486
        %v671 = vshrl.u32 %v670, 4
        %v672 = vand.u32 %v670, 15
        %v673 = vsub.s32 0, %v672
        %v674 = vsel %vm668, %v673, %v672
        %vm675 = vcmp.lt.s32.totalorder %v487, 0
        %v676 = vsub.s32 0, %v487
        %v677 = vsel %vm675, %v676, %v487
        %v678 = vshrl.u32 %v677, 4
        %v679 = vand.u32 %v677, 15
        %v680 = vsub.s32 0, %v679
        %v681 = vsel %vm675, %v680, %v679
        %vm682 = vcmp.lt.s32.totalorder %v488, 0
        %v683 = vsub.s32 0, %v488
        %v684 = vsel %vm682, %v683, %v488
        %v685 = vshrl.u32 %v684, 4
        %v686 = vand.u32 %v684, 15
        %v687 = vsub.s32 0, %v686
        %v688 = vsel %vm682, %v687, %v686
        %vm689 = vcmp.lt.s32.totalorder %v489, 0
        %v690 = vsub.s32 0, %v489
        %v691 = vsel %vm689, %v690, %v489
        %v692 = vshrl.u32 %v691, 4
        %v693 = vand.u32 %v691, 15
        %v694 = vsub.s32 0, %v693
        %v695 = vsel %vm689, %v694, %v693
        %vm696 = vcmp.lt.s32.totalorder %v490, 0
        %v697 = vsub.s32 0, %v490
        %v698 = vsel %vm696, %v697, %v490
        %v699 = vshrl.u32 %v698, 4
        %v700 = vand.u32 %v698, 15
        %v701 = vsub.s32 0, %v700
        %v702 = vsel %vm696, %v701, %v700
        %vm703 = vcmp.lt.s32.totalorder %v491, 0
        %v704 = vsub.s32 0, %v491
        %v705 = vsel %vm703, %v704, %v491
        %v706 = vshrl.u32 %v705, 4
        %v707 = vand.u32 %v705, 15
        %v708 = vsub.s32 0, %v707
        %v709 = vsel %vm703, %v708, %v707
        %vm710 = vcmp.lt.s32.totalorder %v492, 0
        %v711 = vsub.s32 0, %v492
        %v712 = vsel %vm710, %v711, %v492
        %v713 = vshrl.u32 %v712, 4
        %v714 = vand.u32 %v712, 15
        %v715 = vsub.s32 0, %v714
        %v716 = vsel %vm710, %v715, %v714
        %vm717 = vcmp.ne.s32.totalorder %v499, 0
        %vm718 = vcmp.ne.s32.totalorder %v506, 0
        %vm719 = vcmp.ne.s32.totalorder %v513, 0
        %vm720 = vcmp.ne.s32.totalorder %v520, 0
        %vm721 = vcmp.ne.s32.totalorder %v527, 0
        %vm722 = vcmp.ne.s32.totalorder %v534, 0
        %vm723 = vcmp.ne.s32.totalorder %v541, 0
        %vm724 = vcmp.ne.s32.totalorder %v548, 0
        %vm725 = vcmp.ne.s32.totalorder %v555, 0
        %vm726 = vcmp.ne.s32.totalorder %v562, 0
        %vm727 = vcmp.ne.s32.totalorder %v569, 0
        %vm728 = vcmp.ne.s32.totalorder %v576, 0
        %vm729 = vcmp.ne.s32.totalorder %v583, 0
        %vm730 = vcmp.ne.s32.totalorder %v590, 0
        %vm731 = vcmp.ne.s32.totalorder %v597, 0
        %vm732 = vcmp.ne.s32.totalorder %v604, 0
        %vm733 = vcmp.ne.s32.totalorder %v611, 0
        %vm734 = vcmp.ne.s32.totalorder %v618, 0
        %vm735 = vcmp.ne.s32.totalorder %v625, 0
        %vm736 = vcmp.ne.s32.totalorder %v632, 0
        %vm737 = vcmp.ne.s32.totalorder %v639, 0
        %vm738 = vcmp.ne.s32.totalorder %v646, 0
        %vm739 = vcmp.ne.s32.totalorder %v653, 0
        %vm740 = vcmp.ne.s32.totalorder %v660, 0
        %vm741 = vcmp.ne.s32.totalorder %v667, 0
        %vm742 = vcmp.ne.s32.totalorder %v674, 0
        %vm743 = vcmp.ne.s32.totalorder %v681, 0
        %vm744 = vcmp.ne.s32.totalorder %v688, 0
        %vm745 = vcmp.ne.s32.totalorder %v695, 0
        %vm746 = vcmp.ne.s32.totalorder %v702, 0
        %vm747 = vcmp.ne.s32.totalorder %v709, 0
        %vm748 = vcmp.ne.s32.totalorder %v716, 0
        %vm749 = vcmp.lt.s32.totalorder %v499, 0
        %vm750 = vcmp.lt.s32.totalorder %v506, 0
        %vm751 = vcmp.lt.s32.totalorder %v513, 0
        %vm752 = vcmp.lt.s32.totalorder %v520, 0
        %vm753 = vcmp.lt.s32.totalorder %v527, 0
        %vm754 = vcmp.lt.s32.totalorder %v534, 0
        %vm755 = vcmp.lt.s32.totalorder %v541, 0
        %vm756 = vcmp.lt.s32.totalorder %v548, 0
        %vm757 = vcmp.lt.s32.totalorder %v555, 0
        %vm758 = vcmp.lt.s32.totalorder %v562, 0
        %vm759 = vcmp.lt.s32.totalorder %v569, 0
        %vm760 = vcmp.lt.s32.totalorder %v576, 0
        %vm761 = vcmp.lt.s32.totalorder %v583, 0
        %vm762 = vcmp.lt.s32.totalorder %v590, 0
        %vm763 = vcmp.lt.s32.totalorder %v597, 0
        %vm764 = vcmp.lt.s32.totalorder %v604, 0
        %vm765 = vcmp.lt.s32.totalorder %v611, 0
        %vm766 = vcmp.lt.s32.totalorder %v618, 0
        %vm767 = vcmp.lt.s32.totalorder %v625, 0
        %vm768 = vcmp.lt.s32.totalorder %v632, 0
        %vm769 = vcmp.lt.s32.totalorder %v639, 0
        %vm770 = vcmp.lt.s32.totalorder %v646, 0
        %vm771 = vcmp.lt.s32.totalorder %v653, 0
        %vm772 = vcmp.lt.s32.totalorder %v660, 0
        %vm773 = vcmp.lt.s32.totalorder %v667, 0
        %vm774 = vcmp.lt.s32.totalorder %v674, 0
        %vm775 = vcmp.lt.s32.totalorder %v681, 0
        %vm776 = vcmp.lt.s32.totalorder %v688, 0
        %vm777 = vcmp.lt.s32.totalorder %v695, 0
        %vm778 = vcmp.lt.s32.totalorder %v702, 0
        %vm779 = vcmp.lt.s32.totalorder %v709, 0
        %vm780 = vcmp.lt.s32.totalorder %v716, 0
        %vm781 = vmand %vm749, %vm717
        %vm782 = vmand %vm750, %vm718
        %vm783 = vmand %vm751, %vm719
        %vm784 = vmand %vm752, %vm720
        %vm785 = vmand %vm753, %vm721
        %vm786 = vmand %vm754, %vm722
        %vm787 = vmand %vm755, %vm723
        %vm788 = vmand %vm756, %vm724
        %vm789 = vmand %vm757, %vm725
        %vm790 = vmand %vm758, %vm726
        %vm791 = vmand %vm759, %vm727
        %vm792 = vmand %vm760, %vm728
        %vm793 = vmand %vm761, %vm729
        %vm794 = vmand %vm762, %vm730
        %vm795 = vmand %vm763, %vm731
        %vm796 = vmand %vm764, %vm732
        %vm797 = vmand %vm765, %vm733
        %vm798 = vmand %vm766, %vm734
        %vm799 = vmand %vm767, %vm735
        %vm800 = vmand %vm768, %vm736
        %vm801 = vmand %vm769, %vm737
        %vm802 = vmand %vm770, %vm738
        %vm803 = vmand %vm771, %vm739
        %vm804 = vmand %vm772, %vm740
        %vm805 = vmand %vm773, %vm741
        %vm806 = vmand %vm774, %vm742
        %vm807 = vmand %vm775, %vm743
        %vm808 = vmand %vm776, %vm744
        %vm809 = vmand %vm777, %vm745
        %vm810 = vmand %vm778, %vm746
        %vm811 = vmand %vm779, %vm747
        %vm812 = vmand %vm780, %vm748
        %v813 = vadd.s32 %v499, 16
        %v814 = vadd.s32 %v506, 16
        %v815 = vadd.s32 %v513, 16
        %v816 = vadd.s32 %v520, 16
        %v817 = vadd.s32 %v527, 16
        %v818 = vadd.s32 %v534, 16
        %v819 = vadd.s32 %v541, 16
        %v820 = vadd.s32 %v548, 16
        %v821 = vadd.s32 %v555, 16
        %v822 = vadd.s32 %v562, 16
        %v823 = vadd.s32 %v569, 16
        %v824 = vadd.s32 %v576, 16
        %v825 = vadd.s32 %v583, 16
        %v826 = vadd.s32 %v590, 16
        %v827 = vadd.s32 %v597, 16
        %v828 = vadd.s32 %v604, 16
        %v829 = vadd.s32 %v611, 16
        %v830 = vadd.s32 %v618, 16
        %v831 = vadd.s32 %v625, 16
        %v832 = vadd.s32 %v632, 16
        %v833 = vadd.s32 %v639, 16
        %v834 = vadd.s32 %v646, 16
        %v835 = vadd.s32 %v653, 16
        %v836 = vadd.s32 %v660, 16
        %v837 = vadd.s32 %v667, 16
        %v838 = vadd.s32 %v674, 16
        %v839 = vadd.s32 %v681, 16
        %v840 = vadd.s32 %v688, 16
        %v841 = vadd.s32 %v695, 16
        %v842 = vadd.s32 %v702, 16
        %v843 = vadd.s32 %v709, 16
        %v844 = vadd.s32 %v716, 16
        %v845 = vsel %vm781, %v813, %v499
        %v846 = vsel %vm782, %v814, %v506
        %v847 = vsel %vm783, %v815, %v513
        %v848 = vsel %vm784, %v816, %v520
        %v849 = vsel %vm785, %v817, %v527
        %v850 = vsel %vm786, %v818, %v534
        %v851 = vsel %vm787, %v819, %v541
        %v852 = vsel %vm788, %v820, %v548
        %v853 = vsel %vm789, %v821, %v555
        %v854 = vsel %vm790, %v822, %v562
        %v855 = vsel %vm791, %v823, %v569
        %v856 = vsel %vm792, %v824, %v576
        %v857 = vsel %vm793, %v825, %v583
        %v858 = vsel %vm794, %v826, %v590
        %v859 = vsel %vm795, %v827, %v597
        %v860 = vsel %vm796, %v828, %v604
        %v861 = vsel %vm797, %v829, %v611
        %v862 = vsel %vm798, %v830, %v618
        %v863 = vsel %vm799, %v831, %v625
        %v864 = vsel %vm800, %v832, %v632
        %v865 = vsel %vm801, %v833, %v639
        %v866 = vsel %vm802, %v834, %v646
        %v867 = vsel %vm803, %v835, %v653
        %v868 = vsel %vm804, %v836, %v660
        %v869 = vsel %vm805, %v837, %v667
        %v870 = vsel %vm806, %v838, %v674
        %v871 = vsel %vm807, %v839, %v681
        %v872 = vsel %vm808, %v840, %v688
        %v873 = vsel %vm809, %v841, %v695
        %v874 = vsel %vm810, %v842, %v702
        %v875 = vsel %vm811, %v843, %v709
        %v876 = vsel %vm812, %v844, %v716
        %vm877 = vcmp.ne.s32.totalorder %v845, 15
        %vm878 = vcmp.ne.s32.totalorder %v846, 15
        %vm879 = vcmp.ne.s32.totalorder %v847, 15
        %vm880 = vcmp.ne.s32.totalorder %v848, 15
        %vm881 = vcmp.ne.s32.totalorder %v849, 15
        %vm882 = vcmp.ne.s32.totalorder %v850, 15
        %vm883 = vcmp.ne.s32.totalorder %v851, 15
        %vm884 = vcmp.ne.s32.totalorder %v852, 15
        %vm885 = vcmp.ne.s32.totalorder %v853, 15
        %vm886 = vcmp.ne.s32.totalorder %v854, 15
        %vm887 = vcmp.ne.s32.totalorder %v855, 15
        %vm888 = vcmp.ne.s32.totalorder %v856, 15
        %vm889 = vcmp.ne.s32.totalorder %v857, 15
        %vm890 = vcmp.ne.s32.totalorder %v858, 15
        %vm891 = vcmp.ne.s32.totalorder %v859, 15
        %vm892 = vcmp.ne.s32.totalorder %v860, 15
        %vm893 = vcmp.ne.s32.totalorder %v861, 15
        %vm894 = vcmp.ne.s32.totalorder %v862, 15
        %vm895 = vcmp.ne.s32.totalorder %v863, 15
        %vm896 = vcmp.ne.s32.totalorder %v864, 15
        %vm897 = vcmp.ne.s32.totalorder %v865, 15
        %vm898 = vcmp.ne.s32.totalorder %v866, 15
        %vm899 = vcmp.ne.s32.totalorder %v867, 15
        %vm900 = vcmp.ne.s32.totalorder %v868, 15
        %vm901 = vcmp.ne.s32.totalorder %v869, 15
        %vm902 = vcmp.ne.s32.totalorder %v870, 15
        %vm903 = vcmp.ne.s32.totalorder %v871, 15
        %vm904 = vcmp.ne.s32.totalorder %v872, 15
        %vm905 = vcmp.ne.s32.totalorder %v873, 15
        %vm906 = vcmp.ne.s32.totalorder %v874, 15
        %vm907 = vcmp.ne.s32.totalorder %v875, 15
        %vm908 = vcmp.ne.s32.totalorder %v876, 15
        %vm909 = vcmp.ne.s32.totalorder %v845, 0
        %vm910 = vcmp.ne.s32.totalorder %v846, 0
        %vm911 = vcmp.ne.s32.totalorder %v847, 0
        %vm912 = vcmp.ne.s32.totalorder %v848, 0
        %vm913 = vcmp.ne.s32.totalorder %v849, 0
        %vm914 = vcmp.ne.s32.totalorder %v850, 0
        %vm915 = vcmp.ne.s32.totalorder %v851, 0
        %vm916 = vcmp.ne.s32.totalorder %v852, 0
        %vm917 = vcmp.ne.s32.totalorder %v853, 0
        %vm918 = vcmp.ne.s32.totalorder %v854, 0
        %vm919 = vcmp.ne.s32.totalorder %v855, 0
        %vm920 = vcmp.ne.s32.totalorder %v856, 0
        %vm921 = vcmp.ne.s32.totalorder %v857, 0
        %vm922 = vcmp.ne.s32.totalorder %v858, 0
        %vm923 = vcmp.ne.s32.totalorder %v859, 0
        %vm924 = vcmp.ne.s32.totalorder %v860, 0
        %vm925 = vcmp.ne.s32.totalorder %v861, 0
        %vm926 = vcmp.ne.s32.totalorder %v862, 0
        %vm927 = vcmp.ne.s32.totalorder %v863, 0
        %vm928 = vcmp.ne.s32.totalorder %v864, 0
        %vm929 = vcmp.ne.s32.totalorder %v865, 0
        %vm930 = vcmp.ne.s32.totalorder %v866, 0
        %vm931 = vcmp.ne.s32.totalorder %v867, 0
        %vm932 = vcmp.ne.s32.totalorder %v868, 0
        %vm933 = vcmp.ne.s32.totalorder %v869, 0
        %vm934 = vcmp.ne.s32.totalorder %v870, 0
        %vm935 = vcmp.ne.s32.totalorder %v871, 0
        %vm936 = vcmp.ne.s32.totalorder %v872, 0
        %vm937 = vcmp.ne.s32.totalorder %v873, 0
        %vm938 = vcmp.ne.s32.totalorder %v874, 0
        %vm939 = vcmp.ne.s32.totalorder %v875, 0
        %vm940 = vcmp.ne.s32.totalorder %v876, 0
        %v941 = vld [vmem:[%s1] sm:$0x1]
        %v942 = vld [vmem:[%s2] sm:$0x1]
        %vm943 = vcmask 261120
        %v944 = vsel %vm943, %v412, 0.0
        %v945 = vsel %vm943, %v413, 0.0
        %v946 = vadd.f32 %v944, %v945
        %v947 = vsel %vm943, %v414, 0.0
        %v948 = vadd.f32 %v946, %v947
        %v949 = vsel %vm943, %v415, 0.0
        %v950 = vadd.f32 %v948, %v949
        %v951 = vsel %vm943, %v416, 0.0
        %v952 = vadd.f32 %v950, %v951
        %v953 = vsel %vm943, %v417, 0.0
        %v954 = vadd.f32 %v952, %v953
        %v955 = vsel %vm943, %v418, 0.0
        %v956 = vadd.f32 %v954, %v955
        %v957 = vsel %vm943, %v419, 0.0
        %v958 = vadd.f32 %v956, %v957
        %v959 = vsel %vm943, %v420, 0.0
        %v960 = vadd.f32 %v958, %v959
        %v961 = vsel %vm943, %v421, 0.0
        %v962 = vadd.f32 %v960, %v961
        %v963 = vsel %vm943, %v422, 0.0
        %v964 = vadd.f32 %v962, %v963
        %v965 = vsel %vm943, %v423, 0.0
        %v966 = vadd.f32 %v964, %v965
        %v967 = vsel %vm943, %v424, 0.0
        %v968 = vadd.f32 %v966, %v967
        %v969 = vsel %vm943, %v425, 0.0
        %v970 = vadd.f32 %v968, %v969
        %v971 = vsel %vm943, %v426, 0.0
        %v972 = vadd.f32 %v970, %v971
        %v973 = vsel %vm943, %v427, 0.0
        %v974 = vadd.f32 %v972, %v973
        %v975 = vsel %vm943, %v444, 0.0
        %v976 = vadd.f32 %v974, %v975
        %v977 = vsel %vm943, %v445, 0.0
        %v978 = vadd.f32 %v976, %v977
        %v979 = vsel %vm943, %v446, 0.0
        %v980 = vadd.f32 %v978, %v979
        %v981 = vsel %vm943, %v447, 0.0
        %v982 = vadd.f32 %v980, %v981
        %v983 = vsel %vm943, %v448, 0.0
        %v984 = vadd.f32 %v982, %v983
        %v985 = vsel %vm943, %v449, 0.0
        %v986 = vadd.f32 %v984, %v985
        %v987 = vsel %vm943, %v450, 0.0
        %v988 = vadd.f32 %v986, %v987
        %v989 = vsel %vm943, %v451, 0.0
        %v990 = vadd.f32 %v988, %v989
        %v991 = vsel %vm943, %v452, 0.0
        %v992 = vadd.f32 %v990, %v991
        %v993 = vsel %vm943, %v453, 0.0
        %v994 = vadd.f32 %v992, %v993
        %v995 = vsel %vm943, %v454, 0.0
        %v996 = vadd.f32 %v994, %v995
        %v997 = vsel %vm943, %v455, 0.0
        %v998 = vadd.f32 %v996, %v997
        %v999 = vsel %vm943, %v456, 0.0
        %v1000 = vadd.f32 %v998, %v999
        %v1001 = vsel %vm943, %v457, 0.0
        %v1002 = vadd.f32 %v1000, %v1001
        %v1003 = vsel %vm943, %v458, 0.0
        %v1004 = vadd.f32 %v1002, %v1003
        %v1005 = vsel %vm943, %v459, 0.0
        %v1006 = vadd.f32 %v1004, %v1005
        %v1007 = vrot.slane %v1006, 4
        %v1008 = vadd.f32 %v1006, %v1007
        %v1009 = vrot.slane %v1008, 2
        %v1010 = vadd.f32 %v1008, %v1009
        %v1011 = vrot.slane %v1010, 1
        %v1012 = vadd.f32 %v1010, %v1011
        %v1013 = vmul.f32 %v1012, 0.00390625
        %v1014 = vsub.f32 %v412, %v1013
        %v1015 = vsub.f32 %v413, %v1013
        %v1016 = vsub.f32 %v414, %v1013
        %v1017 = vsub.f32 %v415, %v1013
        %v1018 = vsub.f32 %v416, %v1013
        %v1019 = vsub.f32 %v417, %v1013
        %v1020 = vsub.f32 %v418, %v1013
        %v1021 = vsub.f32 %v419, %v1013
        %v1022 = vsub.f32 %v420, %v1013
        %v1023 = vsub.f32 %v421, %v1013
        %v1024 = vsub.f32 %v422, %v1013
        %v1025 = vsub.f32 %v423, %v1013
        %v1026 = vsub.f32 %v424, %v1013
        %v1027 = vsub.f32 %v425, %v1013
        %v1028 = vsub.f32 %v426, %v1013
        %v1029 = vsub.f32 %v427, %v1013
        %v1030 = vsub.f32 %v444, %v1013
        %v1031 = vsub.f32 %v445, %v1013
        %v1032 = vsub.f32 %v446, %v1013
        %v1033 = vsub.f32 %v447, %v1013
        %v1034 = vsub.f32 %v448, %v1013
        %v1035 = vsub.f32 %v449, %v1013
        %v1036 = vsub.f32 %v450, %v1013
        %v1037 = vsub.f32 %v451, %v1013
        %v1038 = vsub.f32 %v452, %v1013
        %v1039 = vsub.f32 %v453, %v1013
        %v1040 = vsub.f32 %v454, %v1013
        %v1041 = vsub.f32 %v455, %v1013
        %v1042 = vsub.f32 %v456, %v1013
        %v1043 = vsub.f32 %v457, %v1013
        %v1044 = vsub.f32 %v458, %v1013
        %v1045 = vsub.f32 %v459, %v1013
        %v1046 = vmul.f32 %v1014, %v1014
        %v1047 = vmul.f32 %v1015, %v1015
        %v1048 = vmul.f32 %v1016, %v1016
        %v1049 = vmul.f32 %v1017, %v1017
        %v1050 = vmul.f32 %v1018, %v1018
        %v1051 = vmul.f32 %v1019, %v1019
        %v1052 = vmul.f32 %v1020, %v1020
        %v1053 = vmul.f32 %v1021, %v1021
        %v1054 = vmul.f32 %v1022, %v1022
        %v1055 = vmul.f32 %v1023, %v1023
        %v1056 = vmul.f32 %v1024, %v1024
        %v1057 = vmul.f32 %v1025, %v1025
        %v1058 = vmul.f32 %v1026, %v1026
        %v1059 = vmul.f32 %v1027, %v1027
        %v1060 = vmul.f32 %v1028, %v1028
        %v1061 = vmul.f32 %v1029, %v1029
        %v1062 = vmul.f32 %v1030, %v1030
        %v1063 = vmul.f32 %v1031, %v1031
        %v1064 = vmul.f32 %v1032, %v1032
        %v1065 = vmul.f32 %v1033, %v1033
        %v1066 = vmul.f32 %v1034, %v1034
        %v1067 = vmul.f32 %v1035, %v1035
        %v1068 = vmul.f32 %v1036, %v1036
        %v1069 = vmul.f32 %v1037, %v1037
        %v1070 = vmul.f32 %v1038, %v1038
        %v1071 = vmul.f32 %v1039, %v1039
        %v1072 = vmul.f32 %v1040, %v1040
        %v1073 = vmul.f32 %v1041, %v1041
        %v1074 = vmul.f32 %v1042, %v1042
        %v1075 = vmul.f32 %v1043, %v1043
        %v1076 = vmul.f32 %v1044, %v1044
        %v1077 = vmul.f32 %v1045, %v1045
        %v1078 = vsel %vm943, %v1046, 0.0
        %v1079 = vsel %vm943, %v1047, 0.0
        %v1080 = vadd.f32 %v1078, %v1079
        %v1081 = vsel %vm943, %v1048, 0.0
        %v1082 = vadd.f32 %v1080, %v1081
        %v1083 = vsel %vm943, %v1049, 0.0
        %v1084 = vadd.f32 %v1082, %v1083
        %v1085 = vsel %vm943, %v1050, 0.0
        %v1086 = vadd.f32 %v1084, %v1085
        %v1087 = vsel %vm943, %v1051, 0.0
        %v1088 = vadd.f32 %v1086, %v1087
        %v1089 = vsel %vm943, %v1052, 0.0
        %v1090 = vadd.f32 %v1088, %v1089
        %v1091 = vsel %vm943, %v1053, 0.0
        %v1092 = vadd.f32 %v1090, %v1091
        %v1093 = vsel %vm943, %v1054, 0.0
        %v1094 = vadd.f32 %v1092, %v1093
        %v1095 = vsel %vm943, %v1055, 0.0
        %v1096 = vadd.f32 %v1094, %v1095
        %v1097 = vsel %vm943, %v1056, 0.0
        %v1098 = vadd.f32 %v1096, %v1097
        %v1099 = vsel %vm943, %v1057, 0.0
        %v1100 = vadd.f32 %v1098, %v1099
        %v1101 = vsel %vm943, %v1058, 0.0
        %v1102 = vadd.f32 %v1100, %v1101
        %v1103 = vsel %vm943, %v1059, 0.0
        %v1104 = vadd.f32 %v1102, %v1103
        %v1105 = vsel %vm943, %v1060, 0.0
        %v1106 = vadd.f32 %v1104, %v1105
        %v1107 = vsel %vm943, %v1061, 0.0
        %v1108 = vadd.f32 %v1106, %v1107
        %v1109 = vsel %vm943, %v1062, 0.0
        %v1110 = vadd.f32 %v1108, %v1109
        %v1111 = vsel %vm943, %v1063, 0.0
        %v1112 = vadd.f32 %v1110, %v1111
        %v1113 = vsel %vm943, %v1064, 0.0
        %v1114 = vadd.f32 %v1112, %v1113
        %v1115 = vsel %vm943, %v1065, 0.0
        %v1116 = vadd.f32 %v1114, %v1115
        %v1117 = vsel %vm943, %v1066, 0.0
        %v1118 = vadd.f32 %v1116, %v1117
        %v1119 = vsel %vm943, %v1067, 0.0
        %v1120 = vadd.f32 %v1118, %v1119
        %v1121 = vsel %vm943, %v1068, 0.0
        %v1122 = vadd.f32 %v1120, %v1121
        %v1123 = vsel %vm943, %v1069, 0.0
        %v1124 = vadd.f32 %v1122, %v1123
        %v1125 = vsel %vm943, %v1070, 0.0
        %v1126 = vadd.f32 %v1124, %v1125
        %v1127 = vsel %vm943, %v1071, 0.0
        %v1128 = vadd.f32 %v1126, %v1127
        %v1129 = vsel %vm943, %v1072, 0.0
        %v1130 = vadd.f32 %v1128, %v1129
        %v1131 = vsel %vm943, %v1073, 0.0
        %v1132 = vadd.f32 %v1130, %v1131
        %v1133 = vsel %vm943, %v1074, 0.0
        %v1134 = vadd.f32 %v1132, %v1133
        %v1135 = vsel %vm943, %v1075, 0.0
        %v1136 = vadd.f32 %v1134, %v1135
        %v1137 = vsel %vm943, %v1076, 0.0
        %v1138 = vadd.f32 %v1136, %v1137
        %v1139 = vsel %vm943, %v1077, 0.0
        %v1140 = vadd.f32 %v1138, %v1139
        %v1141 = vrot.slane %v1140, 4
        %v1142 = vadd.f32 %v1140, %v1141
        %v1143 = vrot.slane %v1142, 2
        %v1144 = vadd.f32 %v1142, %v1143
        %v1145 = vrot.slane %v1144, 1
        %v1146 = vadd.f32 %v1144, %v1145
        %v1147 = vmul.f32 %v1146, 0.00390625
        %v1148 = vadd.f32 %v1147, 1e-06
        %v1149 = vrsqrt.pop %v1148
        %v1150 = vmul.f32 %v1014, %v1149
        %v1151 = vmul.f32 %v1015, %v1149
        %v1152 = vmul.f32 %v1016, %v1149
        %v1153 = vmul.f32 %v1017, %v1149
        %v1154 = vmul.f32 %v1018, %v1149
        %v1155 = vmul.f32 %v1019, %v1149
        %v1156 = vmul.f32 %v1020, %v1149
        %v1157 = vmul.f32 %v1021, %v1149
        %v1158 = vmul.f32 %v1022, %v1149
        %v1159 = vmul.f32 %v1023, %v1149
        %v1160 = vmul.f32 %v1024, %v1149
        %v1161 = vmul.f32 %v1025, %v1149
        %v1162 = vmul.f32 %v1026, %v1149
        %v1163 = vmul.f32 %v1027, %v1149
        %v1164 = vmul.f32 %v1028, %v1149
        %v1165 = vmul.f32 %v1029, %v1149
        %v1166 = vmul.f32 %v1030, %v1149
        %v1167 = vmul.f32 %v1031, %v1149
        %v1168 = vmul.f32 %v1032, %v1149
        %v1169 = vmul.f32 %v1033, %v1149
        %v1170 = vmul.f32 %v1034, %v1149
        %v1171 = vmul.f32 %v1035, %v1149
        %v1172 = vmul.f32 %v1036, %v1149
        %v1173 = vmul.f32 %v1037, %v1149
        %v1174 = vmul.f32 %v1038, %v1149
        %v1175 = vmul.f32 %v1039, %v1149
        %v1176 = vmul.f32 %v1040, %v1149
        %v1177 = vmul.f32 %v1041, %v1149
        %v1178 = vmul.f32 %v1042, %v1149
        %v1179 = vmul.f32 %v1043, %v1149
        %v1180 = vmul.f32 %v1044, %v1149
        %v1181 = vmul.f32 %v1045, %v1149
        %v1183 = vlaneseq
        %v1184 = vshrl.u32 %v1183, 7
        %v1185 = vsub.s32 0, %v1184
        %v1186 = vrot.slane %v941, %v1185
        %v1188 = vmul.f32 %v1150, %v1186
        %v1189 = vmul.f32 %v1151, %v1186
        %v1190 = vmul.f32 %v1152, %v1186
        %v1191 = vmul.f32 %v1153, %v1186
        %v1192 = vmul.f32 %v1154, %v1186
        %v1193 = vmul.f32 %v1155, %v1186
        %v1194 = vmul.f32 %v1156, %v1186
        %v1195 = vmul.f32 %v1157, %v1186
        %v1196 = vmul.f32 %v1158, %v1186
        %v1197 = vmul.f32 %v1159, %v1186
        %v1198 = vmul.f32 %v1160, %v1186
        %v1199 = vmul.f32 %v1161, %v1186
        %v1200 = vmul.f32 %v1162, %v1186
        %v1201 = vmul.f32 %v1163, %v1186
        %v1202 = vmul.f32 %v1164, %v1186
        %v1203 = vmul.f32 %v1165, %v1186
        %v1204 = vmul.f32 %v1166, %v1186
        %v1205 = vmul.f32 %v1167, %v1186
        %v1206 = vmul.f32 %v1168, %v1186
        %v1207 = vmul.f32 %v1169, %v1186
        %v1208 = vmul.f32 %v1170, %v1186
        %v1209 = vmul.f32 %v1171, %v1186
        %v1210 = vmul.f32 %v1172, %v1186
        %v1211 = vmul.f32 %v1173, %v1186
        %v1212 = vmul.f32 %v1174, %v1186
        %v1213 = vmul.f32 %v1175, %v1186
        %v1214 = vmul.f32 %v1176, %v1186
        %v1215 = vmul.f32 %v1177, %v1186
        %v1216 = vmul.f32 %v1178, %v1186
        %v1217 = vmul.f32 %v1179, %v1186
        %v1218 = vmul.f32 %v1180, %v1186
        %v1219 = vmul.f32 %v1181, %v1186
        %v1221 = vlaneseq
        %v1222 = vshrl.u32 %v1221, 7
        %v1223 = vsub.s32 0, %v1222
        %v1224 = vrot.slane %v942, %v1223
        %v1226 = vadd.f32 %v1188, %v1224
        %v1227 = vadd.f32 %v1189, %v1224
        %v1228 = vadd.f32 %v1190, %v1224
        %v1229 = vadd.f32 %v1191, %v1224
        %v1230 = vadd.f32 %v1192, %v1224
        %v1231 = vadd.f32 %v1193, %v1224
        %v1232 = vadd.f32 %v1194, %v1224
        %v1233 = vadd.f32 %v1195, %v1224
        %v1234 = vadd.f32 %v1196, %v1224
        %v1235 = vadd.f32 %v1197, %v1224
        %v1236 = vadd.f32 %v1198, %v1224
        %v1237 = vadd.f32 %v1199, %v1224
        %v1238 = vadd.f32 %v1200, %v1224
        %v1239 = vadd.f32 %v1201, %v1224
        %v1240 = vadd.f32 %v1202, %v1224
        %v1241 = vadd.f32 %v1203, %v1224
        %v1242 = vadd.f32 %v1204, %v1224
        %v1243 = vadd.f32 %v1205, %v1224
        %v1244 = vadd.f32 %v1206, %v1224
        %v1245 = vadd.f32 %v1207, %v1224
        %v1246 = vadd.f32 %v1208, %v1224
        %v1247 = vadd.f32 %v1209, %v1224
        %v1248 = vadd.f32 %v1210, %v1224
        %v1249 = vadd.f32 %v1211, %v1224
        %v1250 = vadd.f32 %v1212, %v1224
        %v1251 = vadd.f32 %v1213, %v1224
        %v1252 = vadd.f32 %v1214, %v1224
        %v1253 = vadd.f32 %v1215, %v1224
        %v1254 = vadd.f32 %v1216, %v1224
        %v1255 = vadd.f32 %v1217, %v1224
        %v1256 = vadd.f32 %v1218, %v1224
        %v1257 = vadd.f32 %v1219, %v1224
        %v1258 = vmul.f32 %v1226, 0.5
        %v1259 = vmul.f32 %v1227, 0.5
        %v1260 = vmul.f32 %v1228, 0.5
        %v1261 = vmul.f32 %v1229, 0.5
        %v1262 = vmul.f32 %v1230, 0.5
        %v1263 = vmul.f32 %v1231, 0.5
        %v1264 = vmul.f32 %v1232, 0.5
        %v1265 = vmul.f32 %v1233, 0.5
        %v1266 = vmul.f32 %v1234, 0.5
        %v1267 = vmul.f32 %v1235, 0.5
        %v1268 = vmul.f32 %v1236, 0.5
        %v1269 = vmul.f32 %v1237, 0.5
        %v1270 = vmul.f32 %v1238, 0.5
        %v1271 = vmul.f32 %v1239, 0.5
        %v1272 = vmul.f32 %v1240, 0.5
        %v1273 = vmul.f32 %v1241, 0.5
        %v1274 = vmul.f32 %v1242, 0.5
        %v1275 = vmul.f32 %v1243, 0.5
        %v1276 = vmul.f32 %v1244, 0.5
        %v1277 = vmul.f32 %v1245, 0.5
        %v1278 = vmul.f32 %v1246, 0.5
        %v1279 = vmul.f32 %v1247, 0.5
        %v1280 = vmul.f32 %v1248, 0.5
        %v1281 = vmul.f32 %v1249, 0.5
        %v1282 = vmul.f32 %v1250, 0.5
        %v1283 = vmul.f32 %v1251, 0.5
        %v1284 = vmul.f32 %v1252, 0.5
        %v1285 = vmul.f32 %v1253, 0.5
        %v1286 = vmul.f32 %v1254, 0.5
        %v1287 = vmul.f32 %v1255, 0.5
        %v1288 = vmul.f32 %v1256, 0.5
        %v1289 = vmul.f32 %v1257, 0.5
        %v1290 = vtanh.pop %v1258
        %v1291 = vtanh.pop %v1259
        %v1292 = vtanh.pop %v1260
        %v1293 = vtanh.pop %v1261
        %v1294 = vtanh.pop %v1262
        %v1295 = vtanh.pop %v1263
        %v1296 = vtanh.pop %v1264
        %v1297 = vtanh.pop %v1265
        %v1298 = vtanh.pop %v1266
        %v1299 = vtanh.pop %v1267
        %v1300 = vtanh.pop %v1268
        %v1301 = vtanh.pop %v1269
        %v1302 = vtanh.pop %v1270
        %v1303 = vtanh.pop %v1271
        %v1304 = vtanh.pop %v1272
        %v1305 = vtanh.pop %v1273
        %v1306 = vtanh.pop %v1274
        %v1307 = vtanh.pop %v1275
        %v1308 = vtanh.pop %v1276
        %v1309 = vtanh.pop %v1277
        %v1310 = vtanh.pop %v1278
        %v1311 = vtanh.pop %v1279
        %v1312 = vtanh.pop %v1280
        %v1313 = vtanh.pop %v1281
        %v1314 = vtanh.pop %v1282
        %v1315 = vtanh.pop %v1283
        %v1316 = vtanh.pop %v1284
        %v1317 = vtanh.pop %v1285
        %v1318 = vtanh.pop %v1286
        %v1319 = vtanh.pop %v1287
        %v1320 = vtanh.pop %v1288
        %v1321 = vtanh.pop %v1289
        %v1322 = vadd.f32 %v1290, 1.0
        %v1323 = vadd.f32 %v1291, 1.0
        %v1324 = vadd.f32 %v1292, 1.0
        %v1325 = vadd.f32 %v1293, 1.0
        %v1326 = vadd.f32 %v1294, 1.0
        %v1327 = vadd.f32 %v1295, 1.0
        %v1328 = vadd.f32 %v1296, 1.0
        %v1329 = vadd.f32 %v1297, 1.0
        %v1330 = vadd.f32 %v1298, 1.0
        %v1331 = vadd.f32 %v1299, 1.0
        %v1332 = vadd.f32 %v1300, 1.0
        %v1333 = vadd.f32 %v1301, 1.0
        %v1334 = vadd.f32 %v1302, 1.0
        %v1335 = vadd.f32 %v1303, 1.0
        %v1336 = vadd.f32 %v1304, 1.0
        %v1337 = vadd.f32 %v1305, 1.0
        %v1338 = vadd.f32 %v1306, 1.0
        %v1339 = vadd.f32 %v1307, 1.0
        %v1340 = vadd.f32 %v1308, 1.0
        %v1341 = vadd.f32 %v1309, 1.0
        %v1342 = vadd.f32 %v1310, 1.0
        %v1343 = vadd.f32 %v1311, 1.0
        %v1344 = vadd.f32 %v1312, 1.0
        %v1345 = vadd.f32 %v1313, 1.0
        %v1346 = vadd.f32 %v1314, 1.0
        %v1347 = vadd.f32 %v1315, 1.0
        %v1348 = vadd.f32 %v1316, 1.0
        %v1349 = vadd.f32 %v1317, 1.0
        %v1350 = vadd.f32 %v1318, 1.0
        %v1351 = vadd.f32 %v1319, 1.0
        %v1352 = vadd.f32 %v1320, 1.0
        %v1353 = vadd.f32 %v1321, 1.0
        %v1354 = vmul.f32 %v1322, 0.5
        %v1355 = vmul.f32 %v1323, 0.5
        %v1356 = vmul.f32 %v1324, 0.5
        %v1357 = vmul.f32 %v1325, 0.5
        %v1358 = vmul.f32 %v1326, 0.5
        %v1359 = vmul.f32 %v1327, 0.5
        %v1360 = vmul.f32 %v1328, 0.5
        %v1361 = vmul.f32 %v1329, 0.5
        %v1362 = vmul.f32 %v1330, 0.5
        %v1363 = vmul.f32 %v1331, 0.5
        %v1364 = vmul.f32 %v1332, 0.5
        %v1365 = vmul.f32 %v1333, 0.5
        %v1366 = vmul.f32 %v1334, 0.5
        %v1367 = vmul.f32 %v1335, 0.5
        %v1368 = vmul.f32 %v1336, 0.5
        %v1369 = vmul.f32 %v1337, 0.5
        %v1370 = vmul.f32 %v1338, 0.5
        %v1371 = vmul.f32 %v1339, 0.5
        %v1372 = vmul.f32 %v1340, 0.5
        %v1373 = vmul.f32 %v1341, 0.5
        %v1374 = vmul.f32 %v1342, 0.5
        %v1375 = vmul.f32 %v1343, 0.5
        %v1376 = vmul.f32 %v1344, 0.5
        %v1377 = vmul.f32 %v1345, 0.5
        %v1378 = vmul.f32 %v1346, 0.5
        %v1379 = vmul.f32 %v1347, 0.5
        %v1380 = vmul.f32 %v1348, 0.5
        %v1381 = vmul.f32 %v1349, 0.5
        %v1382 = vmul.f32 %v1350, 0.5
        %v1383 = vmul.f32 %v1351, 0.5
        %v1384 = vmul.f32 %v1352, 0.5
        %v1385 = vmul.f32 %v1353, 0.5
        %v1386 = vmul.f32 %v1226, %v1354
        %v1387 = vmul.f32 %v1227, %v1355
        %v1388 = vmul.f32 %v1228, %v1356
        %v1389 = vmul.f32 %v1229, %v1357
        %v1390 = vmul.f32 %v1230, %v1358
        %v1391 = vmul.f32 %v1231, %v1359
        %v1392 = vmul.f32 %v1232, %v1360
        %v1393 = vmul.f32 %v1233, %v1361
        %v1394 = vmul.f32 %v1234, %v1362
        %v1395 = vmul.f32 %v1235, %v1363
        %v1396 = vmul.f32 %v1236, %v1364
        %v1397 = vmul.f32 %v1237, %v1365
        %v1398 = vmul.f32 %v1238, %v1366
        %v1399 = vmul.f32 %v1239, %v1367
        %v1400 = vmul.f32 %v1240, %v1368
        %v1401 = vmul.f32 %v1241, %v1369
        %v1402 = vmul.f32 %v1242, %v1370
        %v1403 = vmul.f32 %v1243, %v1371
        %v1404 = vmul.f32 %v1244, %v1372
        %v1405 = vmul.f32 %v1245, %v1373
        %v1406 = vmul.f32 %v1246, %v1374
        %v1407 = vmul.f32 %v1247, %v1375
        %v1408 = vmul.f32 %v1248, %v1376
        %v1409 = vmul.f32 %v1249, %v1377
        %v1410 = vmul.f32 %v1250, %v1378
        %v1411 = vmul.f32 %v1251, %v1379
        %v1412 = vmul.f32 %v1252, %v1380
        %v1413 = vmul.f32 %v1253, %v1381
        %v1414 = vmul.f32 %v1254, %v1382
        %v1415 = vmul.f32 %v1255, %v1383
        %v1416 = vmul.f32 %v1256, %v1384
        %v1417 = vmul.f32 %v1257, %v1385
        %v1418 = vld [vmem:[%s4] sm:$0x1]
        %v1419 = vpack.c.bf16 %v1387, %v1386
        %v1420 = vpack.c.bf16 %v1389, %v1388
        %v1421 = vpack.c.bf16 %v1391, %v1390
        %v1422 = vpack.c.bf16 %v1393, %v1392
        %v1423 = vpack.c.bf16 %v1395, %v1394
        %v1424 = vpack.c.bf16 %v1397, %v1396
        %v1425 = vpack.c.bf16 %v1399, %v1398
        %v1426 = vpack.c.bf16 %v1401, %v1400
        %v1427 = vpack.c.bf16 %v1403, %v1402
        %v1428 = vpack.c.bf16 %v1405, %v1404
        %v1429 = vpack.c.bf16 %v1407, %v1406
        %v1430 = vpack.c.bf16 %v1409, %v1408
        %v1431 = vpack.c.bf16 %v1411, %v1410
        %v1432 = vpack.c.bf16 %v1413, %v1412
        %v1433 = vpack.c.bf16 %v1415, %v1414
        %v1434 = vpack.c.bf16 %v1417, %v1416
        %1435 = vst [vmem:[#allocation2 + $0x28] sm:$0xf0] 0
        %vm1436 = vcmask 1044480
        %vm1437 = vsmask.f32 4352
        %vm1438 = vmand %vm1436, %vm1437
        %v1439 = vld [vmem:[#allocation2 + $0x50] sm:$0x1f]
        %v1440 = vsel %vm1438, 0, %v1439
        %1441 = vst [vmem:[#allocation2 + $0x50] sm:$0x1f] %v1440
        %vm1442 = vcmask 1047811
        %vm1443 = vsmask.f32 7950
        %vm1444 = vmand %vm1442, %vm1443
        %v1445 = vld [vmem:[#allocation2 + $0x288] sm:$0xf8]
        %v1446 = vsel %vm1444, 0, %v1445
        %1447 = vst [vmem:[#allocation2 + $0x288] sm:$0xf8] %v1446
        %vm1448 = vcmask 261123
        %vm1449 = vmand %vm1448, %vm1443
        %v1450 = vld [vmem:[#allocation2 + $0x290] sm:$0xf8]
        %v1451 = vsel %vm1449, 0, %v1450
        %1452 = vst [vmem:[#allocation2 + $0x290] sm:$0xf8] %v1451
        %vm1453 = vcmask 1043712
        %1454 = vst.msk [vmem:[#allocation2 + $0x2b0] sm:$0xf] %vm1453, 0
        %vm1455 = vcmask 257024
        %1456 = vst.msk [vmem:[#allocation2 + $0x2b8] sm:$0xf] %vm1455, 0
        %v1457 = vsel %vm877, 1, 0
        %v1458 = vsel %vm878, 1, 0
        %v1459 = vsel %vm879, 1, 0
        %v1460 = vsel %vm880, 1, 0
        %v1461 = vsel %vm881, 1, 0
        %v1462 = vsel %vm882, 1, 0
        %v1463 = vsel %vm883, 1, 0
        %v1464 = vsel %vm884, 1, 0
        %v1465 = vsel %vm885, 1, 0
        %v1466 = vsel %vm886, 1, 0
        %v1467 = vsel %vm887, 1, 0
        %v1468 = vsel %vm888, 1, 0
        %v1469 = vsel %vm889, 1, 0
        %v1470 = vsel %vm890, 1, 0
        %v1471 = vsel %vm891, 1, 0
        %v1472 = vsel %vm892, 1, 0
        %v1473 = vsel %vm893, 1, 0
        %v1474 = vsel %vm894, 1, 0
        %v1475 = vsel %vm895, 1, 0
        %v1476 = vsel %vm896, 1, 0
        %v1477 = vsel %vm897, 1, 0
        %v1478 = vsel %vm898, 1, 0
        %v1479 = vsel %vm899, 1, 0
        %v1480 = vsel %vm900, 1, 0
        %v1481 = vsel %vm901, 1, 0
        %v1482 = vsel %vm902, 1, 0
        %v1483 = vsel %vm903, 1, 0
        %v1484 = vsel %vm904, 1, 0
        %v1485 = vsel %vm905, 1, 0
        %v1486 = vsel %vm906, 1, 0
        %v1487 = vsel %vm907, 1, 0
        %v1488 = vsel %vm908, 1, 0
        %vm1489 = vcmp.eq.s32.totalorder %v1457, 1
        %vm1490 = vcmp.eq.s32.totalorder %v1458, 1
        %vm1491 = vcmp.eq.s32.totalorder %v1459, 1
        %vm1492 = vcmp.eq.s32.totalorder %v1460, 1
        %vm1493 = vcmp.eq.s32.totalorder %v1461, 1
        %vm1494 = vcmp.eq.s32.totalorder %v1462, 1
        %vm1495 = vcmp.eq.s32.totalorder %v1463, 1
        %vm1496 = vcmp.eq.s32.totalorder %v1464, 1
        %vm1497 = vcmp.eq.s32.totalorder %v1465, 1
        %vm1498 = vcmp.eq.s32.totalorder %v1466, 1
        %vm1499 = vcmp.eq.s32.totalorder %v1467, 1
        %vm1500 = vcmp.eq.s32.totalorder %v1468, 1
        %vm1501 = vcmp.eq.s32.totalorder %v1469, 1
        %vm1502 = vcmp.eq.s32.totalorder %v1470, 1
        %vm1503 = vcmp.eq.s32.totalorder %v1471, 1
        %vm1504 = vcmp.eq.s32.totalorder %v1472, 1
        %vm1505 = vcmp.eq.s32.totalorder %v1473, 1
        %vm1506 = vcmp.eq.s32.totalorder %v1474, 1
        %vm1507 = vcmp.eq.s32.totalorder %v1475, 1
        %vm1508 = vcmp.eq.s32.totalorder %v1476, 1
        %vm1509 = vcmp.eq.s32.totalorder %v1477, 1
        %vm1510 = vcmp.eq.s32.totalorder %v1478, 1
        %vm1511 = vcmp.eq.s32.totalorder %v1479, 1
        %vm1512 = vcmp.eq.s32.totalorder %v1480, 1
        %vm1513 = vcmp.eq.s32.totalorder %v1481, 1
        %vm1514 = vcmp.eq.s32.totalorder %v1482, 1
        %vm1515 = vcmp.eq.s32.totalorder %v1483, 1
        %vm1516 = vcmp.eq.s32.totalorder %v1484, 1
        %vm1517 = vcmp.eq.s32.totalorder %v1485, 1
        %vm1518 = vcmp.eq.s32.totalorder %v1486, 1
        %vm1519 = vcmp.eq.s32.totalorder %v1487, 1
        %vm1520 = vcmp.eq.s32.totalorder %v1488, 1
        %vm1521 = vmpackc.low %vm1489, %vm1489
        %vm1522 = vmpackc.low %vm1490, %vm1490
        %vm1523 = vmpackc.low %vm1491, %vm1491
        %vm1524 = vmpackc.low %vm1492, %vm1492
        %vm1525 = vmpackc.low %vm1493, %vm1493
        %vm1526 = vmpackc.low %vm1494, %vm1494
        %vm1527 = vmpackc.low %vm1495, %vm1495
        %vm1528 = vmpackc.low %vm1496, %vm1496
        %vm1529 = vmpackc.low %vm1497, %vm1497
        %vm1530 = vmpackc.low %vm1498, %vm1498
        %vm1531 = vmpackc.low %vm1499, %vm1499
        %vm1532 = vmpackc.low %vm1500, %vm1500
        %vm1533 = vmpackc.low %vm1501, %vm1501
        %vm1534 = vmpackc.low %vm1502, %vm1502
        %vm1535 = vmpackc.low %vm1503, %vm1503
        %vm1536 = vmpackc.low %vm1504, %vm1504
        %vm1537 = vmpackc.low %vm1505, %vm1505
        %vm1538 = vmpackc.low %vm1506, %vm1506
        %vm1539 = vmpackc.low %vm1507, %vm1507
        %vm1540 = vmpackc.low %vm1508, %vm1508
        %vm1541 = vmpackc.low %vm1509, %vm1509
        %vm1542 = vmpackc.low %vm1510, %vm1510
        %vm1543 = vmpackc.low %vm1511, %vm1511
        %vm1544 = vmpackc.low %vm1512, %vm1512
        %vm1545 = vmpackc.low %vm1513, %vm1513
        %vm1546 = vmpackc.low %vm1514, %vm1514
        %vm1547 = vmpackc.low %vm1515, %vm1515
        %vm1548 = vmpackc.low %vm1516, %vm1516
        %vm1549 = vmpackc.low %vm1517, %vm1517
        %vm1550 = vmpackc.low %vm1518, %vm1518
        %vm1551 = vmpackc.low %vm1519, %vm1519
        %vm1552 = vmpackc.low %vm1520, %vm1520
        %v1553 = vsel %vm1521, 65537, 0
        %v1554 = vsel %vm1522, 65537, 0
        %v1555 = vsel %vm1523, 65537, 0
        %v1556 = vsel %vm1524, 65537, 0
        %v1557 = vsel %vm1525, 65537, 0
        %v1558 = vsel %vm1526, 65537, 0
        %v1559 = vsel %vm1527, 65537, 0
        %v1560 = vsel %vm1528, 65537, 0
        %v1561 = vsel %vm1529, 65537, 0
        %v1562 = vsel %vm1530, 65537, 0
        %v1563 = vsel %vm1531, 65537, 0
        %v1564 = vsel %vm1532, 65537, 0
        %v1565 = vsel %vm1533, 65537, 0
        %v1566 = vsel %vm1534, 65537, 0
        %v1567 = vsel %vm1535, 65537, 0
        %v1568 = vsel %vm1536, 65537, 0
        %v1569 = vsel %vm1537, 65537, 0
        %v1570 = vsel %vm1538, 65537, 0
        %v1571 = vsel %vm1539, 65537, 0
        %v1572 = vsel %vm1540, 65537, 0
        %v1573 = vsel %vm1541, 65537, 0
        %v1574 = vsel %vm1542, 65537, 0
        %v1575 = vsel %vm1543, 65537, 0
        %v1576 = vsel %vm1544, 65537, 0
        %v1577 = vsel %vm1545, 65537, 0
        %v1578 = vsel %vm1546, 65537, 0
        %v1579 = vsel %vm1547, 65537, 0
        %v1580 = vsel %vm1548, 65537, 0
        %v1581 = vsel %vm1549, 65537, 0
        %v1582 = vsel %vm1550, 65537, 0
        %v1583 = vsel %vm1551, 65537, 0
        %v1584 = vsel %vm1552, 65537, 0
        %v1585 = vunpack.c.l.b16 %v1553
        %v1586 = vunpack.c.l.b16 %v1554
        %v1587 = vunpack.c.l.b16 %v1555
        %v1588 = vunpack.c.l.b16 %v1556
        %v1589 = vunpack.c.l.b16 %v1557
        %v1590 = vunpack.c.l.b16 %v1558
        %v1591 = vunpack.c.l.b16 %v1559
        %v1592 = vunpack.c.l.b16 %v1560
        %v1593 = vunpack.c.l.b16 %v1561
        %v1594 = vunpack.c.l.b16 %v1562
        %v1595 = vunpack.c.l.b16 %v1563
        %v1596 = vunpack.c.l.b16 %v1564
        %v1597 = vunpack.c.l.b16 %v1565
        %v1598 = vunpack.c.l.b16 %v1566
        %v1599 = vunpack.c.l.b16 %v1567
        %v1600 = vunpack.c.l.b16 %v1568
        %v1601 = vunpack.c.l.b16 %v1569
        %v1602 = vunpack.c.l.b16 %v1570
        %v1603 = vunpack.c.l.b16 %v1571
        %v1604 = vunpack.c.l.b16 %v1572
        %v1605 = vunpack.c.l.b16 %v1573
        %v1606 = vunpack.c.l.b16 %v1574
        %v1607 = vunpack.c.l.b16 %v1575
        %v1608 = vunpack.c.l.b16 %v1576
        %v1609 = vunpack.c.l.b16 %v1577
        %v1610 = vunpack.c.l.b16 %v1578
        %v1611 = vunpack.c.l.b16 %v1579
        %v1612 = vunpack.c.l.b16 %v1580
        %v1613 = vunpack.c.l.b16 %v1581
        %v1614 = vunpack.c.l.b16 %v1582
        %v1615 = vunpack.c.l.b16 %v1583
        %v1616 = vunpack.c.l.b16 %v1584
        %v1617 = vpack.c.b16 %v1586, %v1585
        %v1618 = vpack.c.b16 %v1588, %v1587
        %v1619 = vpack.c.b16 %v1590, %v1589
        %v1620 = vpack.c.b16 %v1592, %v1591
        %v1621 = vpack.c.b16 %v1594, %v1593
        %v1622 = vpack.c.b16 %v1596, %v1595
        %v1623 = vpack.c.b16 %v1598, %v1597
        %v1624 = vpack.c.b16 %v1600, %v1599
        %v1625 = vpack.c.b16 %v1602, %v1601
        %v1626 = vpack.c.b16 %v1604, %v1603
        %v1627 = vpack.c.b16 %v1606, %v1605
        %v1628 = vpack.c.b16 %v1608, %v1607
        %v1629 = vpack.c.b16 %v1610, %v1609
        %v1630 = vpack.c.b16 %v1612, %v1611
        %v1631 = vpack.c.b16 %v1614, %v1613
        %v1632 = vpack.c.b16 %v1616, %v1615
        %vm1633 = vcmp.ne.s16.totalorder %v1617, 0
        %vm1634 = vcmp.ne.s16.totalorder %v1618, 0
        %vm1635 = vcmp.ne.s16.totalorder %v1619, 0
        %vm1636 = vcmp.ne.s16.totalorder %v1620, 0
        %vm1637 = vcmp.ne.s16.totalorder %v1621, 0
        %vm1638 = vcmp.ne.s16.totalorder %v1622, 0
        %vm1639 = vcmp.ne.s16.totalorder %v1623, 0
        %vm1640 = vcmp.ne.s16.totalorder %v1624, 0
        %vm1641 = vcmp.ne.s16.totalorder %v1625, 0
        %vm1642 = vcmp.ne.s16.totalorder %v1626, 0
        %vm1643 = vcmp.ne.s16.totalorder %v1627, 0
        %vm1644 = vcmp.ne.s16.totalorder %v1628, 0
        %vm1645 = vcmp.ne.s16.totalorder %v1629, 0
        %vm1646 = vcmp.ne.s16.totalorder %v1630, 0
        %vm1647 = vcmp.ne.s16.totalorder %v1631, 0
        %vm1648 = vcmp.ne.s16.totalorder %v1632, 0
        %v1649 = vsel %vm1633, %v1419, 0
        %v1650 = vsel %vm1634, %v1420, 0
        %v1651 = vsel %vm1635, %v1421, 0
        %v1652 = vsel %vm1636, %v1422, 0
        %v1653 = vsel %vm1637, %v1423, 0
        %v1654 = vsel %vm1638, %v1424, 0
        %v1655 = vsel %vm1639, %v1425, 0
        %v1656 = vsel %vm1640, %v1426, 0
        %v1657 = vsel %vm1641, %v1427, 0
        %v1658 = vsel %vm1642, %v1428, 0
        %v1659 = vsel %vm1643, %v1429, 0
        %v1660 = vsel %vm1644, %v1430, 0
        %v1661 = vsel %vm1645, %v1431, 0
        %v1662 = vsel %vm1646, %v1432, 0
        %v1663 = vsel %vm1647, %v1433, 0
        %v1664 = vsel %vm1648, %v1434, 0
        %v1665 = vsel %vm909, 1, 0
        %v1666 = vsel %vm910, 1, 0
        %v1667 = vsel %vm911, 1, 0
        %v1668 = vsel %vm912, 1, 0
        %v1669 = vsel %vm913, 1, 0
        %v1670 = vsel %vm914, 1, 0
        %v1671 = vsel %vm915, 1, 0
        %v1672 = vsel %vm916, 1, 0
        %v1673 = vsel %vm917, 1, 0
        %v1674 = vsel %vm918, 1, 0
        %v1675 = vsel %vm919, 1, 0
        %v1676 = vsel %vm920, 1, 0
        %v1677 = vsel %vm921, 1, 0
        %v1678 = vsel %vm922, 1, 0
        %v1679 = vsel %vm923, 1, 0
        %v1680 = vsel %vm924, 1, 0
        %v1681 = vsel %vm925, 1, 0
        %v1682 = vsel %vm926, 1, 0
        %v1683 = vsel %vm927, 1, 0
        %v1684 = vsel %vm928, 1, 0
        %v1685 = vsel %vm929, 1, 0
        %v1686 = vsel %vm930, 1, 0
        %v1687 = vsel %vm931, 1, 0
        %v1688 = vsel %vm932, 1, 0
        %v1689 = vsel %vm933, 1, 0
        %v1690 = vsel %vm934, 1, 0
        %v1691 = vsel %vm935, 1, 0
        %v1692 = vsel %vm936, 1, 0
        %v1693 = vsel %vm937, 1, 0
        %v1694 = vsel %vm938, 1, 0
        %v1695 = vsel %vm939, 1, 0
        %v1696 = vsel %vm940, 1, 0
        %vm1697 = vcmp.eq.s32.totalorder %v1665, 1
        %vm1698 = vcmp.eq.s32.totalorder %v1666, 1
        %vm1699 = vcmp.eq.s32.totalorder %v1667, 1
        %vm1700 = vcmp.eq.s32.totalorder %v1668, 1
        %vm1701 = vcmp.eq.s32.totalorder %v1669, 1
        %vm1702 = vcmp.eq.s32.totalorder %v1670, 1
        %vm1703 = vcmp.eq.s32.totalorder %v1671, 1
        %vm1704 = vcmp.eq.s32.totalorder %v1672, 1
        %vm1705 = vcmp.eq.s32.totalorder %v1673, 1
        %vm1706 = vcmp.eq.s32.totalorder %v1674, 1
        %vm1707 = vcmp.eq.s32.totalorder %v1675, 1
        %vm1708 = vcmp.eq.s32.totalorder %v1676, 1
        %vm1709 = vcmp.eq.s32.totalorder %v1677, 1
        %vm1710 = vcmp.eq.s32.totalorder %v1678, 1
        %vm1711 = vcmp.eq.s32.totalorder %v1679, 1
        %vm1712 = vcmp.eq.s32.totalorder %v1680, 1
        %vm1713 = vcmp.eq.s32.totalorder %v1681, 1
        %vm1714 = vcmp.eq.s32.totalorder %v1682, 1
        %vm1715 = vcmp.eq.s32.totalorder %v1683, 1
        %vm1716 = vcmp.eq.s32.totalorder %v1684, 1
        %vm1717 = vcmp.eq.s32.totalorder %v1685, 1
        %vm1718 = vcmp.eq.s32.totalorder %v1686, 1
        %vm1719 = vcmp.eq.s32.totalorder %v1687, 1
        %vm1720 = vcmp.eq.s32.totalorder %v1688, 1
        %vm1721 = vcmp.eq.s32.totalorder %v1689, 1
        %vm1722 = vcmp.eq.s32.totalorder %v1690, 1
        %vm1723 = vcmp.eq.s32.totalorder %v1691, 1
        %vm1724 = vcmp.eq.s32.totalorder %v1692, 1
        %vm1725 = vcmp.eq.s32.totalorder %v1693, 1
        %vm1726 = vcmp.eq.s32.totalorder %v1694, 1
        %vm1727 = vcmp.eq.s32.totalorder %v1695, 1
        %vm1728 = vcmp.eq.s32.totalorder %v1696, 1
        %vm1729 = vmpackc.low %vm1697, %vm1697
        %vm1730 = vmpackc.low %vm1698, %vm1698
        %vm1731 = vmpackc.low %vm1699, %vm1699
        %vm1732 = vmpackc.low %vm1700, %vm1700
        %vm1733 = vmpackc.low %vm1701, %vm1701
        %vm1734 = vmpackc.low %vm1702, %vm1702
        %vm1735 = vmpackc.low %vm1703, %vm1703
        %vm1736 = vmpackc.low %vm1704, %vm1704
        %vm1737 = vmpackc.low %vm1705, %vm1705
        %vm1738 = vmpackc.low %vm1706, %vm1706
        %vm1739 = vmpackc.low %vm1707, %vm1707
        %vm1740 = vmpackc.low %vm1708, %vm1708
        %vm1741 = vmpackc.low %vm1709, %vm1709
        %vm1742 = vmpackc.low %vm1710, %vm1710
        %vm1743 = vmpackc.low %vm1711, %vm1711
        %vm1744 = vmpackc.low %vm1712, %vm1712
        %vm1745 = vmpackc.low %vm1713, %vm1713
        %vm1746 = vmpackc.low %vm1714, %vm1714
        %vm1747 = vmpackc.low %vm1715, %vm1715
        %vm1748 = vmpackc.low %vm1716, %vm1716
        %vm1749 = vmpackc.low %vm1717, %vm1717
        %vm1750 = vmpackc.low %vm1718, %vm1718
        %vm1751 = vmpackc.low %vm1719, %vm1719
        %vm1752 = vmpackc.low %vm1720, %vm1720
        %vm1753 = vmpackc.low %vm1721, %vm1721
        %vm1754 = vmpackc.low %vm1722, %vm1722
        %vm1755 = vmpackc.low %vm1723, %vm1723
        %vm1756 = vmpackc.low %vm1724, %vm1724
        %vm1757 = vmpackc.low %vm1725, %vm1725
        %vm1758 = vmpackc.low %vm1726, %vm1726
        %vm1759 = vmpackc.low %vm1727, %vm1727
        %vm1760 = vmpackc.low %vm1728, %vm1728
        %v1761 = vsel %vm1729, 65537, 0
        %v1762 = vsel %vm1730, 65537, 0
        %v1763 = vsel %vm1731, 65537, 0
        %v1764 = vsel %vm1732, 65537, 0
        %v1765 = vsel %vm1733, 65537, 0
        %v1766 = vsel %vm1734, 65537, 0
        %v1767 = vsel %vm1735, 65537, 0
        %v1768 = vsel %vm1736, 65537, 0
        %v1769 = vsel %vm1737, 65537, 0
        %v1770 = vsel %vm1738, 65537, 0
        %v1771 = vsel %vm1739, 65537, 0
        %v1772 = vsel %vm1740, 65537, 0
        %v1773 = vsel %vm1741, 65537, 0
        %v1774 = vsel %vm1742, 65537, 0
        %v1775 = vsel %vm1743, 65537, 0
        %v1776 = vsel %vm1744, 65537, 0
        %v1777 = vsel %vm1745, 65537, 0
        %v1778 = vsel %vm1746, 65537, 0
        %v1779 = vsel %vm1747, 65537, 0
        %v1780 = vsel %vm1748, 65537, 0
        %v1781 = vsel %vm1749, 65537, 0
        %v1782 = vsel %vm1750, 65537, 0
        %v1783 = vsel %vm1751, 65537, 0
        %v1784 = vsel %vm1752, 65537, 0
        %v1785 = vsel %vm1753, 65537, 0
        %v1786 = vsel %vm1754, 65537, 0
        %v1787 = vsel %vm1755, 65537, 0
        %v1788 = vsel %vm1756, 65537, 0
        %v1789 = vsel %vm1757, 65537, 0
        %v1790 = vsel %vm1758, 65537, 0
        %v1791 = vsel %vm1759, 65537, 0
        %v1792 = vsel %vm1760, 65537, 0
        %v1793 = vunpack.c.l.b16 %v1761
        %v1794 = vunpack.c.l.b16 %v1762
        %v1795 = vunpack.c.l.b16 %v1763
        %v1796 = vunpack.c.l.b16 %v1764
        %v1797 = vunpack.c.l.b16 %v1765
        %v1798 = vunpack.c.l.b16 %v1766
        %v1799 = vunpack.c.l.b16 %v1767
        %v1800 = vunpack.c.l.b16 %v1768
        %v1801 = vunpack.c.l.b16 %v1769
        %v1802 = vunpack.c.l.b16 %v1770
        %v1803 = vunpack.c.l.b16 %v1771
        %v1804 = vunpack.c.l.b16 %v1772
        %v1805 = vunpack.c.l.b16 %v1773
        %v1806 = vunpack.c.l.b16 %v1774
        %v1807 = vunpack.c.l.b16 %v1775
        %v1808 = vunpack.c.l.b16 %v1776
        %v1809 = vunpack.c.l.b16 %v1777
        %v1810 = vunpack.c.l.b16 %v1778
        %v1811 = vunpack.c.l.b16 %v1779
        %v1812 = vunpack.c.l.b16 %v1780
        %v1813 = vunpack.c.l.b16 %v1781
        %v1814 = vunpack.c.l.b16 %v1782
        %v1815 = vunpack.c.l.b16 %v1783
        %v1816 = vunpack.c.l.b16 %v1784
        %v1817 = vunpack.c.l.b16 %v1785
        %v1818 = vunpack.c.l.b16 %v1786
        %v1819 = vunpack.c.l.b16 %v1787
        %v1820 = vunpack.c.l.b16 %v1788
        %v1821 = vunpack.c.l.b16 %v1789
        %v1822 = vunpack.c.l.b16 %v1790
        %v1823 = vunpack.c.l.b16 %v1791
        %v1824 = vunpack.c.l.b16 %v1792
        %v1825 = vpack.c.b16 %v1794, %v1793
        %v1826 = vpack.c.b16 %v1796, %v1795
        %v1827 = vpack.c.b16 %v1798, %v1797
        %v1828 = vpack.c.b16 %v1800, %v1799
        %v1829 = vpack.c.b16 %v1802, %v1801
        %v1830 = vpack.c.b16 %v1804, %v1803
        %v1831 = vpack.c.b16 %v1806, %v1805
        %v1832 = vpack.c.b16 %v1808, %v1807
        %v1833 = vpack.c.b16 %v1810, %v1809
        %v1834 = vpack.c.b16 %v1812, %v1811
        %v1835 = vpack.c.b16 %v1814, %v1813
        %v1836 = vpack.c.b16 %v1816, %v1815
        %v1837 = vpack.c.b16 %v1818, %v1817
        %v1838 = vpack.c.b16 %v1820, %v1819
        %v1839 = vpack.c.b16 %v1822, %v1821
        %v1840 = vpack.c.b16 %v1824, %v1823
        %vm1841 = vcmp.ne.s16.totalorder %v1825, 0
        %vm1842 = vcmp.ne.s16.totalorder %v1826, 0
        %vm1843 = vcmp.ne.s16.totalorder %v1827, 0
        %vm1844 = vcmp.ne.s16.totalorder %v1828, 0
        %vm1845 = vcmp.ne.s16.totalorder %v1829, 0
        %vm1846 = vcmp.ne.s16.totalorder %v1830, 0
        %vm1847 = vcmp.ne.s16.totalorder %v1831, 0
        %vm1848 = vcmp.ne.s16.totalorder %v1832, 0
        %vm1849 = vcmp.ne.s16.totalorder %v1833, 0
        %vm1850 = vcmp.ne.s16.totalorder %v1834, 0
        %vm1851 = vcmp.ne.s16.totalorder %v1835, 0
        %vm1852 = vcmp.ne.s16.totalorder %v1836, 0
        %vm1853 = vcmp.ne.s16.totalorder %v1837, 0
        %vm1854 = vcmp.ne.s16.totalorder %v1838, 0
        %vm1855 = vcmp.ne.s16.totalorder %v1839, 0
        %vm1856 = vcmp.ne.s16.totalorder %v1840, 0
        %v1857 = vsel %vm1841, %v1419, 0
        %v1858 = vsel %vm1842, %v1420, 0
        %v1859 = vsel %vm1843, %v1421, 0
        %v1860 = vsel %vm1844, %v1422, 0
        %v1861 = vsel %vm1845, %v1423, 0
        %v1862 = vsel %vm1846, %v1424, 0
        %v1863 = vsel %vm1847, %v1425, 0
        %v1864 = vsel %vm1848, %v1426, 0
        %v1865 = vsel %vm1849, %v1427, 0
        %v1866 = vsel %vm1850, %v1428, 0
        %v1867 = vsel %vm1851, %v1429, 0
        %v1868 = vsel %vm1852, %v1430, 0
        %v1869 = vsel %vm1853, %v1431, 0
        %v1870 = vsel %vm1854, %v1432, 0
        %v1871 = vsel %vm1855, %v1433, 0
        %v1872 = vsel %vm1856, %v1434, 0
        %v1874 = vshrl.u32 %v1649, 16
        %v1876 = vrot.slane %v1874, 3
        %v1877 = vshll.u32 %v1649, 16
        %v1879 = vrot.slane %v1877, 4
        %v1880 = vor.u32 %v1876, %v1879
        %v1882 = vshrl.u32 %v1650, 16
        %v1884 = vrot.slane %v1882, 3
        %v1885 = vshll.u32 %v1650, 16
        %v1887 = vrot.slane %v1885, 4
        %v1888 = vor.u32 %v1884, %v1887
        %v1889 = vsel %vm1437, %v1880, %v1888
        %v1891 = vshrl.u32 %v1651, 16
        %v1893 = vrot.slane %v1891, 3
        %v1894 = vshll.u32 %v1651, 16
        %v1896 = vrot.slane %v1894, 4
        %v1897 = vor.u32 %v1893, %v1896
        %v1898 = vsel %vm1437, %v1888, %v1897
        %v1900 = vshrl.u32 %v1652, 16
        %v1902 = vrot.slane %v1900, 3
        %v1903 = vshll.u32 %v1652, 16
        %v1905 = vrot.slane %v1903, 4
        %v1906 = vor.u32 %v1902, %v1905
        %v1907 = vsel %vm1437, %v1897, %v1906
        %v1909 = vshrl.u32 %v1653, 16
        %v1911 = vrot.slane %v1909, 3
        %v1912 = vshll.u32 %v1653, 16
        %v1914 = vrot.slane %v1912, 4
        %v1915 = vor.u32 %v1911, %v1914
        %v1916 = vsel %vm1437, %v1906, %v1915
        %v1918 = vshrl.u32 %v1654, 16
        %v1920 = vrot.slane %v1918, 3
        %v1921 = vshll.u32 %v1654, 16
        %v1923 = vrot.slane %v1921, 4
        %v1924 = vor.u32 %v1920, %v1923
        %v1925 = vsel %vm1437, %v1915, %v1924
        %v1927 = vshrl.u32 %v1655, 16
        %v1929 = vrot.slane %v1927, 3
        %v1930 = vshll.u32 %v1655, 16
        %v1932 = vrot.slane %v1930, 4
        %v1933 = vor.u32 %v1929, %v1932
        %v1934 = vsel %vm1437, %v1924, %v1933
        %v1936 = vshrl.u32 %v1656, 16
        %v1938 = vrot.slane %v1936, 3
        %v1939 = vshll.u32 %v1656, 16
        %v1941 = vrot.slane %v1939, 4
        %v1942 = vor.u32 %v1938, %v1941
        %v1943 = vsel %vm1437, %v1933, %v1942
        %v1945 = vshrl.u32 %v1657, 16
        %v1947 = vrot.slane %v1945, 3
        %v1948 = vshll.u32 %v1657, 16
        %v1950 = vrot.slane %v1948, 4
        %v1951 = vor.u32 %v1947, %v1950
        %v1952 = vsel %vm1437, %v1942, %v1951
        %v1954 = vshrl.u32 %v1658, 16
        %v1956 = vrot.slane %v1954, 3
        %v1957 = vshll.u32 %v1658, 16
        %v1959 = vrot.slane %v1957, 4
        %v1960 = vor.u32 %v1956, %v1959
        %v1961 = vsel %vm1437, %v1951, %v1960
        %v1963 = vshrl.u32 %v1659, 16
        %v1965 = vrot.slane %v1963, 3
        %v1966 = vshll.u32 %v1659, 16
        %v1968 = vrot.slane %v1966, 4
        %v1969 = vor.u32 %v1965, %v1968
        %v1970 = vsel %vm1437, %v1960, %v1969
        %v1972 = vshrl.u32 %v1660, 16
        %v1974 = vrot.slane %v1972, 3
        %v1975 = vshll.u32 %v1660, 16
        %v1977 = vrot.slane %v1975, 4
        %v1978 = vor.u32 %v1974, %v1977
        %v1979 = vsel %vm1437, %v1969, %v1978
        %v1981 = vshrl.u32 %v1661, 16
        %v1983 = vrot.slane %v1981, 3
        %v1984 = vshll.u32 %v1661, 16
        %v1986 = vrot.slane %v1984, 4
        %v1987 = vor.u32 %v1983, %v1986
        %v1988 = vsel %vm1437, %v1978, %v1987
        %v1990 = vshrl.u32 %v1662, 16
        %v1992 = vrot.slane %v1990, 3
        %v1993 = vshll.u32 %v1662, 16
        %v1995 = vrot.slane %v1993, 4
        %v1996 = vor.u32 %v1992, %v1995
        %v1997 = vsel %vm1437, %v1987, %v1996
        %v1999 = vshrl.u32 %v1663, 16
        %v2001 = vrot.slane %v1999, 3
        %v2002 = vshll.u32 %v1663, 16
        %v2004 = vrot.slane %v2002, 4
        %v2005 = vor.u32 %v2001, %v2004
        %v2006 = vsel %vm1437, %v1996, %v2005
        %v2008 = vshrl.u32 %v1664, 16
        %v2010 = vrot.slane %v2008, 3
        %v2011 = vshll.u32 %v1664, 16
        %v2013 = vrot.slane %v2011, 4
        %v2014 = vor.u32 %v2010, %v2013
        %v2015 = vsel %vm1437, %v2005, %v2014
        %vm2033 = vcmask 261124
        %vm2034 = vsmask.f32 7954
        %vm2035 = vmand %vm2033, %vm2034
        %v2036 = vld [vmem:[#allocation2 + $0x50] sm:$0xf0]
        %v2037 = vsel %vm2035, %v1880, %v2036
        %2038 = vst [vmem:[#allocation2 + $0x50] sm:$0xf0] %v2037
        %2039 = vst.msk [vmem:[#allocation2 + $0x78] sm:$0xff] %vm943, %v1889
        %2040 = vst.msk [vmem:[#allocation2 + $0xa0] sm:$0xff] %vm943, %v1898
        %2041 = vst.msk [vmem:[#allocation2 + $0xc8] sm:$0xff] %vm943, %v1907
        %2042 = vst.msk [vmem:[#allocation2 + $0xf0] sm:$0xff] %vm943, %v1916
        %2043 = vst.msk [vmem:[#allocation2 + $0x118] sm:$0xff] %vm943, %v1925
        %2044 = vst.msk [vmem:[#allocation2 + $0x140] sm:$0xff] %vm943, %v1934
        %2045 = vst.msk [vmem:[#allocation2 + $0x168] sm:$0xff] %vm943, %v1943
        %2046 = vst.msk [vmem:[#allocation2 + $0x190] sm:$0xff] %vm943, %v1952
        %2047 = vst.msk [vmem:[#allocation2 + $0x1b8] sm:$0xff] %vm943, %v1961
        %2048 = vst.msk [vmem:[#allocation2 + $0x1e0] sm:$0xff] %vm943, %v1970
        %2049 = vst.msk [vmem:[#allocation2 + $0x208] sm:$0xff] %vm943, %v1979
        %2050 = vst.msk [vmem:[#allocation2 + $0x230] sm:$0xff] %vm943, %v1988
        %2051 = vst.msk [vmem:[#allocation2 + $0x258] sm:$0xff] %vm943, %v1997
        %2052 = vst.msk [vmem:[#allocation2 + $0x280] sm:$0xff] %vm943, %v2006
        %2053 = vst.msk [vmem:[#allocation2 + $0x2a8] sm:$0xff] %vm943, %v2015
        %vm2054 = vcmask 258048
        %vm2055 = vmand %vm2054, %vm1437
        %v2056 = vld [vmem:[#allocation2 + $0x2d0] sm:$0x1f]
        %v2057 = vsel %vm2055, %v2014, %v2056
        %2058 = vst [vmem:[#allocation2 + $0x2d0] sm:$0x1f] %v2057
        %vm2075 = vcmask 1043456
        %v2076 = vrot.slane %v1419, 4
        %v2077 = vrot.slane %v1420, 4
        %v2078 = vsel %vm2075, %v2076, %v2077
        %v2079 = vrot.slane %v1421, 4
        %v2080 = vsel %vm2075, %v2077, %v2079
        %v2081 = vrot.slane %v1422, 4
        %v2082 = vsel %vm2075, %v2079, %v2081
        %v2083 = vrot.slane %v1423, 4
        %v2084 = vsel %vm2075, %v2081, %v2083
        %v2085 = vrot.slane %v1424, 4
        %v2086 = vsel %vm2075, %v2083, %v2085
        %v2087 = vrot.slane %v1425, 4
        %v2088 = vsel %vm2075, %v2085, %v2087
        %v2089 = vrot.slane %v1426, 4
        %v2090 = vsel %vm2075, %v2087, %v2089
        %v2091 = vrot.slane %v1427, 4
        %v2092 = vsel %vm2075, %v2089, %v2091
        %v2093 = vrot.slane %v1428, 4
        %v2094 = vsel %vm2075, %v2091, %v2093
        %v2095 = vrot.slane %v1429, 4
        %v2096 = vsel %vm2075, %v2093, %v2095
        %v2097 = vrot.slane %v1430, 4
        %v2098 = vsel %vm2075, %v2095, %v2097
        %v2099 = vrot.slane %v1431, 4
        %v2100 = vsel %vm2075, %v2097, %v2099
        %v2101 = vrot.slane %v1432, 4
        %v2102 = vsel %vm2075, %v2099, %v2101
        %v2103 = vrot.slane %v1433, 4
        %v2104 = vsel %vm2075, %v2101, %v2103
        %v2105 = vrot.slane %v1434, 4
        %v2106 = vsel %vm2075, %v2103, %v2105
        %2107 = vrot.lane.b32.xlu0 %v2076, 32
        %v2108 = vpop.permute.xlu0 %2107
        %2109 = vrot.lane.b32.xlu0 %v2078, 32
        %v2110 = vpop.permute.xlu0 %2109
        %2111 = vrot.lane.b32.xlu0 %v2080, 32
        %v2112 = vpop.permute.xlu0 %2111
        %2113 = vrot.lane.b32.xlu0 %v2082, 32
        %v2114 = vpop.permute.xlu0 %2113
        %2115 = vrot.lane.b32.xlu0 %v2084, 32
        %v2116 = vpop.permute.xlu0 %2115
        %2117 = vrot.lane.b32.xlu0 %v2086, 32
        %v2118 = vpop.permute.xlu0 %2117
        %2119 = vrot.lane.b32.xlu0 %v2088, 32
        %v2120 = vpop.permute.xlu0 %2119
        %2121 = vrot.lane.b32.xlu0 %v2090, 32
        %v2122 = vpop.permute.xlu0 %2121
        %2123 = vrot.lane.b32.xlu0 %v2092, 32
        %v2124 = vpop.permute.xlu0 %2123
        %2125 = vrot.lane.b32.xlu0 %v2094, 32
        %v2126 = vpop.permute.xlu0 %2125
        %2127 = vrot.lane.b32.xlu0 %v2096, 32
        %v2128 = vpop.permute.xlu0 %2127
        %2129 = vrot.lane.b32.xlu0 %v2098, 32
        %v2130 = vpop.permute.xlu0 %2129
        %2131 = vrot.lane.b32.xlu0 %v2100, 32
        %v2132 = vpop.permute.xlu0 %2131
        %2133 = vrot.lane.b32.xlu0 %v2102, 32
        %v2134 = vpop.permute.xlu0 %2133
        %2135 = vrot.lane.b32.xlu0 %v2104, 32
        %v2136 = vpop.permute.xlu0 %2135
        %2137 = vrot.lane.b32.xlu0 %v2106, 32
        %v2138 = vpop.permute.xlu0 %2137
        %2139 = vrot.lane.b32.xlu0 %v2105, 32
        %v2140 = vpop.permute.xlu0 %2139
        %vm2158 = vcmask 523524
        %2159 = vst.msk [vmem:[#allocation2 + $0x50] sm:$0xf0] %vm2158, %v2108
        %vm2160 = vcmask 523520
        %2161 = vst.msk [vmem:[#allocation2 + $0x78] sm:$0xff] %vm2160, %v2110
        %2162 = vst.msk [vmem:[#allocation2 + $0xa0] sm:$0xff] %vm2160, %v2112
        %2163 = vst.msk [vmem:[#allocation2 + $0xc8] sm:$0xff] %vm2160, %v2114
        %2164 = vst.msk [vmem:[#allocation2 + $0xf0] sm:$0xff] %vm2160, %v2116
        %2165 = vst.msk [vmem:[#allocation2 + $0x118] sm:$0xff] %vm2160, %v2118
        %2166 = vst.msk [vmem:[#allocation2 + $0x140] sm:$0xff] %vm2160, %v2120
        %2167 = vst.msk [vmem:[#allocation2 + $0x168] sm:$0xff] %vm2160, %v2122
        %2168 = vst.msk [vmem:[#allocation2 + $0x190] sm:$0xff] %vm2160, %v2124
        %2169 = vst.msk [vmem:[#allocation2 + $0x1b8] sm:$0xff] %vm2160, %v2126
        %2170 = vst.msk [vmem:[#allocation2 + $0x1e0] sm:$0xff] %vm2160, %v2128
        %2171 = vst.msk [vmem:[#allocation2 + $0x208] sm:$0xff] %vm2160, %v2130
        %2172 = vst.msk [vmem:[#allocation2 + $0x230] sm:$0xff] %vm2160, %v2132
        %2173 = vst.msk [vmem:[#allocation2 + $0x258] sm:$0xff] %vm2160, %v2134
        %2174 = vst.msk [vmem:[#allocation2 + $0x280] sm:$0xff] %vm2160, %v2136
        %2175 = vst.msk [vmem:[#allocation2 + $0x2a8] sm:$0xff] %vm2160, %v2138
        %vm2176 = vcmask 519424
        %2177 = vst.msk [vmem:[#allocation2 + $0x2d0] sm:$0xf] %vm2176, %v2140
        %vm2178 = vsmask.f32 3328
        %v2180 = vshrl.u32 %v1857, 16
        %v2182 = vrot.slane %v2180, 4
        %v2183 = vshll.u32 %v1857, 16
        %v2185 = vrot.slane %v2183, 5
        %v2186 = vor.u32 %v2182, %v2185
        %v2188 = vshrl.u32 %v1858, 16
        %v2190 = vrot.slane %v2188, 4
        %v2191 = vshll.u32 %v1858, 16
        %v2193 = vrot.slane %v2191, 5
        %v2194 = vor.u32 %v2190, %v2193
        %v2195 = vsel %vm2178, %v2186, %v2194
        %v2197 = vshrl.u32 %v1859, 16
        %v2199 = vrot.slane %v2197, 4
        %v2200 = vshll.u32 %v1859, 16
        %v2202 = vrot.slane %v2200, 5
        %v2203 = vor.u32 %v2199, %v2202
        %v2204 = vsel %vm2178, %v2194, %v2203
        %v2206 = vshrl.u32 %v1860, 16
        %v2208 = vrot.slane %v2206, 4
        %v2209 = vshll.u32 %v1860, 16
        %v2211 = vrot.slane %v2209, 5
        %v2212 = vor.u32 %v2208, %v2211
        %v2213 = vsel %vm2178, %v2203, %v2212
        %v2215 = vshrl.u32 %v1861, 16
        %v2217 = vrot.slane %v2215, 4
        %v2218 = vshll.u32 %v1861, 16
        %v2220 = vrot.slane %v2218, 5
        %v2221 = vor.u32 %v2217, %v2220
        %v2222 = vsel %vm2178, %v2212, %v2221
        %v2224 = vshrl.u32 %v1862, 16
        %v2226 = vrot.slane %v2224, 4
        %v2227 = vshll.u32 %v1862, 16
        %v2229 = vrot.slane %v2227, 5
        %v2230 = vor.u32 %v2226, %v2229
        %v2231 = vsel %vm2178, %v2221, %v2230
        %v2233 = vshrl.u32 %v1863, 16
        %v2235 = vrot.slane %v2233, 4
        %v2236 = vshll.u32 %v1863, 16
        %v2238 = vrot.slane %v2236, 5
        %v2239 = vor.u32 %v2235, %v2238
        %v2240 = vsel %vm2178, %v2230, %v2239
        %v2242 = vshrl.u32 %v1864, 16
        %v2244 = vrot.slane %v2242, 4
        %v2245 = vshll.u32 %v1864, 16
        %v2247 = vrot.slane %v2245, 5
        %v2248 = vor.u32 %v2244, %v2247
        %v2249 = vsel %vm2178, %v2239, %v2248
        %v2251 = vshrl.u32 %v1865, 16
        %v2253 = vrot.slane %v2251, 4
        %v2254 = vshll.u32 %v1865, 16
        %v2256 = vrot.slane %v2254, 5
        %v2257 = vor.u32 %v2253, %v2256
        %v2258 = vsel %vm2178, %v2248, %v2257
        %v2260 = vshrl.u32 %v1866, 16
        %v2262 = vrot.slane %v2260, 4
        %v2263 = vshll.u32 %v1866, 16
        %v2265 = vrot.slane %v2263, 5
        %v2266 = vor.u32 %v2262, %v2265
        %v2267 = vsel %vm2178, %v2257, %v2266
        %v2269 = vshrl.u32 %v1867, 16
        %v2271 = vrot.slane %v2269, 4
        %v2272 = vshll.u32 %v1867, 16
        %v2274 = vrot.slane %v2272, 5
        %v2275 = vor.u32 %v2271, %v2274
        %v2276 = vsel %vm2178, %v2266, %v2275
        %v2278 = vshrl.u32 %v1868, 16
        %v2280 = vrot.slane %v2278, 4
        %v2281 = vshll.u32 %v1868, 16
        %v2283 = vrot.slane %v2281, 5
        %v2284 = vor.u32 %v2280, %v2283
        %v2285 = vsel %vm2178, %v2275, %v2284
        %v2287 = vshrl.u32 %v1869, 16
        %v2289 = vrot.slane %v2287, 4
        %v2290 = vshll.u32 %v1869, 16
        %v2292 = vrot.slane %v2290, 5
        %v2293 = vor.u32 %v2289, %v2292
        %v2294 = vsel %vm2178, %v2284, %v2293
        %v2296 = vshrl.u32 %v1870, 16
        %v2298 = vrot.slane %v2296, 4
        %v2299 = vshll.u32 %v1870, 16
        %v2301 = vrot.slane %v2299, 5
        %v2302 = vor.u32 %v2298, %v2301
        %v2303 = vsel %vm2178, %v2293, %v2302
        %v2305 = vshrl.u32 %v1871, 16
        %v2307 = vrot.slane %v2305, 4
        %v2308 = vshll.u32 %v1871, 16
        %v2310 = vrot.slane %v2308, 5
        %v2311 = vor.u32 %v2307, %v2310
        %v2312 = vsel %vm2178, %v2302, %v2311
        %v2314 = vshrl.u32 %v1872, 16
        %v2316 = vrot.slane %v2314, 4
        %v2317 = vshll.u32 %v1872, 16
        %v2319 = vrot.slane %v2317, 5
        %v2320 = vor.u32 %v2316, %v2319
        %v2321 = vsel %vm2178, %v2311, %v2320
        %2322 = vrot.lane.b32.xlu0 %v2186, 64
        %v2323 = vpop.permute.xlu0 %2322
        %2324 = vrot.lane.b32.xlu0 %v2195, 64
        %v2325 = vpop.permute.xlu0 %2324
        %2326 = vrot.lane.b32.xlu0 %v2204, 64
        %v2327 = vpop.permute.xlu0 %2326
        %2328 = vrot.lane.b32.xlu0 %v2213, 64
        %v2329 = vpop.permute.xlu0 %2328
        %2330 = vrot.lane.b32.xlu0 %v2222, 64
        %v2331 = vpop.permute.xlu0 %2330
        %2332 = vrot.lane.b32.xlu0 %v2231, 64
        %v2333 = vpop.permute.xlu0 %2332
        %2334 = vrot.lane.b32.xlu0 %v2240, 64
        %v2335 = vpop.permute.xlu0 %2334
        %2336 = vrot.lane.b32.xlu0 %v2249, 64
        %v2337 = vpop.permute.xlu0 %2336
        %2338 = vrot.lane.b32.xlu0 %v2258, 64
        %v2339 = vpop.permute.xlu0 %2338
        %2340 = vrot.lane.b32.xlu0 %v2267, 64
        %v2341 = vpop.permute.xlu0 %2340
        %2342 = vrot.lane.b32.xlu0 %v2276, 64
        %v2343 = vpop.permute.xlu0 %2342
        %2344 = vrot.lane.b32.xlu0 %v2285, 64
        %v2345 = vpop.permute.xlu0 %2344
        %2346 = vrot.lane.b32.xlu0 %v2294, 64
        %v2347 = vpop.permute.xlu0 %2346
        %2348 = vrot.lane.b32.xlu0 %v2303, 64
        %v2349 = vpop.permute.xlu0 %2348
        %2350 = vrot.lane.b32.xlu0 %v2312, 64
        %v2351 = vpop.permute.xlu0 %2350
        %2352 = vrot.lane.b32.xlu0 %v2321, 64
        %v2353 = vpop.permute.xlu0 %2352
        %2354 = vrot.lane.b32.xlu0 %v2320, 64
        %v2355 = vpop.permute.xlu0 %2354
        %vm2373 = vcmask 785923
        %vm2374 = vmand %vm2373, %vm1443
        %v2375 = vld [vmem:[#allocation2 + $0x50] sm:$0xf8]
        %v2376 = vsel %vm2374, %v2323, %v2375
        %2377 = vst [vmem:[#allocation2 + $0x50] sm:$0xf8] %v2376
        %vm2378 = vcmask 785920
        %2379 = vst.msk [vmem:[#allocation2 + $0x78] sm:$0xff] %vm2378, %v2325
        %2380 = vst.msk [vmem:[#allocation2 + $0xa0] sm:$0xff] %vm2378, %v2327
        %2381 = vst.msk [vmem:[#allocation2 + $0xc8] sm:$0xff] %vm2378, %v2329
        %2382 = vst.msk [vmem:[#allocation2 + $0xf0] sm:$0xff] %vm2378, %v2331
        %2383 = vst.msk [vmem:[#allocation2 + $0x118] sm:$0xff] %vm2378, %v2333
        %2384 = vst.msk [vmem:[#allocation2 + $0x140] sm:$0xff] %vm2378, %v2335
        %2385 = vst.msk [vmem:[#allocation2 + $0x168] sm:$0xff] %vm2378, %v2337
        %2386 = vst.msk [vmem:[#allocation2 + $0x190] sm:$0xff] %vm2378, %v2339
        %2387 = vst.msk [vmem:[#allocation2 + $0x1b8] sm:$0xff] %vm2378, %v2341
        %2388 = vst.msk [vmem:[#allocation2 + $0x1e0] sm:$0xff] %vm2378, %v2343
        %2389 = vst.msk [vmem:[#allocation2 + $0x208] sm:$0xff] %vm2378, %v2345
        %2390 = vst.msk [vmem:[#allocation2 + $0x230] sm:$0xff] %vm2378, %v2347
        %2391 = vst.msk [vmem:[#allocation2 + $0x258] sm:$0xff] %vm2378, %v2349
        %2392 = vst.msk [vmem:[#allocation2 + $0x280] sm:$0xff] %vm2378, %v2351
        %2393 = vst.msk [vmem:[#allocation2 + $0x2a8] sm:$0xff] %vm2378, %v2353
        %vm2394 = vcmask 781824
        %vm2395 = vmand %vm2394, %vm2178
        %v2396 = vld [vmem:[#allocation2 + $0x2d0] sm:$0xf]
        %v2397 = vsel %vm2395, %v2355, %v2396
        %2398 = vst [vmem:[#allocation2 + $0x2d0] sm:$0xf] %v2397
        %2399 = vrot.lane.b32.xlu0 %v1880, 96
        %v2400 = vpop.permute.xlu0 %2399
        %2401 = vrot.lane.b32.xlu0 %v1889, 96
        %v2402 = vpop.permute.xlu0 %2401
        %2403 = vrot.lane.b32.xlu0 %v1898, 96
        %v2404 = vpop.permute.xlu0 %2403
        %2405 = vrot.lane.b32.xlu0 %v1907, 96
        %v2406 = vpop.permute.xlu0 %2405
        %2407 = vrot.lane.b32.xlu0 %v1916, 96
        %v2408 = vpop.permute.xlu0 %2407
        %2409 = vrot.lane.b32.xlu0 %v1925, 96
        %v2410 = vpop.permute.xlu0 %2409
        %2411 = vrot.lane.b32.xlu0 %v1934, 96
        %v2412 = vpop.permute.xlu0 %2411
        %2413 = vrot.lane.b32.xlu0 %v1943, 96
        %v2414 = vpop.permute.xlu0 %2413
        %2415 = vrot.lane.b32.xlu0 %v1952, 96
        %v2416 = vpop.permute.xlu0 %2415
        %2417 = vrot.lane.b32.xlu0 %v1961, 96
        %v2418 = vpop.permute.xlu0 %2417
        %2419 = vrot.lane.b32.xlu0 %v1970, 96
        %v2420 = vpop.permute.xlu0 %2419
        %2421 = vrot.lane.b32.xlu0 %v1979, 96
        %v2422 = vpop.permute.xlu0 %2421
        %2423 = vrot.lane.b32.xlu0 %v1988, 96
        %v2424 = vpop.permute.xlu0 %2423
        %2425 = vrot.lane.b32.xlu0 %v1997, 96
        %v2426 = vpop.permute.xlu0 %2425
        %2427 = vrot.lane.b32.xlu0 %v2006, 96
        %v2428 = vpop.permute.xlu0 %2427
        %2429 = vrot.lane.b32.xlu0 %v2015, 96
        %v2430 = vpop.permute.xlu0 %2429
        %2431 = vrot.lane.b32.xlu0 %v2014, 96
        %v2432 = vpop.permute.xlu0 %2431
        %vm2450 = vcmask 1048324
        %vm2451 = vmand %vm2450, %vm2034
        %v2452 = vld [vmem:[#allocation2 + $0x28] sm:$0xf0]
        %v2453 = vsel %vm2451, %v2400, %v2452
        %2454 = vst [vmem:[#allocation2 + $0x28] sm:$0xf0] %v2453
        %vm2455 = vcmask 1048320
        %2456 = vst.msk [vmem:[#allocation2 + $0x50] sm:$0xff] %vm2455, %v2402
        %2457 = vst.msk [vmem:[#allocation2 + $0x78] sm:$0xff] %vm2455, %v2404
        %2458 = vst.msk [vmem:[#allocation2 + $0xa0] sm:$0xff] %vm2455, %v2406
        %2459 = vst.msk [vmem:[#allocation2 + $0xc8] sm:$0xff] %vm2455, %v2408
        %2460 = vst.msk [vmem:[#allocation2 + $0xf0] sm:$0xff] %vm2455, %v2410
        %2461 = vst.msk [vmem:[#allocation2 + $0x118] sm:$0xff] %vm2455, %v2412
        %2462 = vst.msk [vmem:[#allocation2 + $0x140] sm:$0xff] %vm2455, %v2414
        %2463 = vst.msk [vmem:[#allocation2 + $0x168] sm:$0xff] %vm2455, %v2416
        %2464 = vst.msk [vmem:[#allocation2 + $0x190] sm:$0xff] %vm2455, %v2418
        %2465 = vst.msk [vmem:[#allocation2 + $0x1b8] sm:$0xff] %vm2455, %v2420
        %2466 = vst.msk [vmem:[#allocation2 + $0x1e0] sm:$0xff] %vm2455, %v2422
        %2467 = vst.msk [vmem:[#allocation2 + $0x208] sm:$0xff] %vm2455, %v2424
        %2468 = vst.msk [vmem:[#allocation2 + $0x230] sm:$0xff] %vm2455, %v2426
        %2469 = vst.msk [vmem:[#allocation2 + $0x258] sm:$0xff] %vm2455, %v2428
        %2470 = vst.msk [vmem:[#allocation2 + $0x280] sm:$0xff] %vm2455, %v2430
        %vm2471 = vcmask 1045248
        %vm2472 = vmand %vm2471, %vm1437
        %v2473 = vld [vmem:[#allocation2 + $0x2a8] sm:$0x1f]
        %v2474 = vsel %vm2472, %v2432, %v2473
        %2475 = vst [vmem:[#allocation2 + $0x2a8] sm:$0x1f] %v2474
        %vm2493 = vcmask 261124
        %2494 = vst.msk [vmem:[#allocation2 + $0x30] sm:$0xf0] %vm2493, %v2076
        %2495 = vst.msk [vmem:[#allocation2 + $0x58] sm:$0xff] %vm943, %v2078
        %2496 = vst.msk [vmem:[#allocation2 + $0x80] sm:$0xff] %vm943, %v2080
        %2497 = vst.msk [vmem:[#allocation2 + $0xa8] sm:$0xff] %vm943, %v2082
        %2498 = vst.msk [vmem:[#allocation2 + $0xd0] sm:$0xff] %vm943, %v2084
        %2499 = vst.msk [vmem:[#allocation2 + $0xf8] sm:$0xff] %vm943, %v2086
        %2500 = vst.msk [vmem:[#allocation2 + $0x120] sm:$0xff] %vm943, %v2088
        %2501 = vst.msk [vmem:[#allocation2 + $0x148] sm:$0xff] %vm943, %v2090
        %2502 = vst.msk [vmem:[#allocation2 + $0x170] sm:$0xff] %vm943, %v2092
        %2503 = vst.msk [vmem:[#allocation2 + $0x198] sm:$0xff] %vm943, %v2094
        %2504 = vst.msk [vmem:[#allocation2 + $0x1c0] sm:$0xff] %vm943, %v2096
        %2505 = vst.msk [vmem:[#allocation2 + $0x1e8] sm:$0xff] %vm943, %v2098
        %2506 = vst.msk [vmem:[#allocation2 + $0x210] sm:$0xff] %vm943, %v2100
        %2507 = vst.msk [vmem:[#allocation2 + $0x238] sm:$0xff] %vm943, %v2102
        %2508 = vst.msk [vmem:[#allocation2 + $0x260] sm:$0xff] %vm943, %v2104
        %2509 = vst.msk [vmem:[#allocation2 + $0x288] sm:$0xff] %vm943, %v2106
        %2510 = vst.msk [vmem:[#allocation2 + $0x2b0] sm:$0xf] %vm1455, %v2105
        %2511 = vrot.lane.b32.xlu0 %v2186, 32
        %v2512 = vpop.permute.xlu0 %2511
        %2513 = vrot.lane.b32.xlu0 %v2195, 32
        %v2514 = vpop.permute.xlu0 %2513
        %2515 = vrot.lane.b32.xlu0 %v2204, 32
        %v2516 = vpop.permute.xlu0 %2515
        %2517 = vrot.lane.b32.xlu0 %v2213, 32
        %v2518 = vpop.permute.xlu0 %2517
        %2519 = vrot.lane.b32.xlu0 %v2222, 32
        %v2520 = vpop.permute.xlu0 %2519
        %2521 = vrot.lane.b32.xlu0 %v2231, 32
        %v2522 = vpop.permute.xlu0 %2521
        %2523 = vrot.lane.b32.xlu0 %v2240, 32
        %v2524 = vpop.permute.xlu0 %2523
        %2525 = vrot.lane.b32.xlu0 %v2249, 32
        %v2526 = vpop.permute.xlu0 %2525
        %2527 = vrot.lane.b32.xlu0 %v2258, 32
        %v2528 = vpop.permute.xlu0 %2527
        %2529 = vrot.lane.b32.xlu0 %v2267, 32
        %v2530 = vpop.permute.xlu0 %2529
        %2531 = vrot.lane.b32.xlu0 %v2276, 32
        %v2532 = vpop.permute.xlu0 %2531
        %2533 = vrot.lane.b32.xlu0 %v2285, 32
        %v2534 = vpop.permute.xlu0 %2533
        %2535 = vrot.lane.b32.xlu0 %v2294, 32
        %v2536 = vpop.permute.xlu0 %2535
        %2537 = vrot.lane.b32.xlu0 %v2303, 32
        %v2538 = vpop.permute.xlu0 %2537
        %2539 = vrot.lane.b32.xlu0 %v2312, 32
        %v2540 = vpop.permute.xlu0 %2539
        %2541 = vrot.lane.b32.xlu0 %v2321, 32
        %v2542 = vpop.permute.xlu0 %2541
        %2543 = vrot.lane.b32.xlu0 %v2320, 32
        %v2544 = vpop.permute.xlu0 %2543
        %vm2562 = vcmask 523523
        %vm2563 = vmand %vm2562, %vm1443
        %v2564 = vld [vmem:[#allocation2 + $0x30] sm:$0xf8]
        %v2565 = vsel %vm2563, %v2512, %v2564
        %2566 = vst [vmem:[#allocation2 + $0x30] sm:$0xf8] %v2565
        %2567 = vst.msk [vmem:[#allocation2 + $0x58] sm:$0xff] %vm2160, %v2514
        %2568 = vst.msk [vmem:[#allocation2 + $0x80] sm:$0xff] %vm2160, %v2516
        %2569 = vst.msk [vmem:[#allocation2 + $0xa8] sm:$0xff] %vm2160, %v2518
        %2570 = vst.msk [vmem:[#allocation2 + $0xd0] sm:$0xff] %vm2160, %v2520
        %2571 = vst.msk [vmem:[#allocation2 + $0xf8] sm:$0xff] %vm2160, %v2522
        %2572 = vst.msk [vmem:[#allocation2 + $0x120] sm:$0xff] %vm2160, %v2524
        %2573 = vst.msk [vmem:[#allocation2 + $0x148] sm:$0xff] %vm2160, %v2526
        %2574 = vst.msk [vmem:[#allocation2 + $0x170] sm:$0xff] %vm2160, %v2528
        %2575 = vst.msk [vmem:[#allocation2 + $0x198] sm:$0xff] %vm2160, %v2530
        %2576 = vst.msk [vmem:[#allocation2 + $0x1c0] sm:$0xff] %vm2160, %v2532
        %2577 = vst.msk [vmem:[#allocation2 + $0x1e8] sm:$0xff] %vm2160, %v2534
        %2578 = vst.msk [vmem:[#allocation2 + $0x210] sm:$0xff] %vm2160, %v2536
        %2579 = vst.msk [vmem:[#allocation2 + $0x238] sm:$0xff] %vm2160, %v2538
        %2580 = vst.msk [vmem:[#allocation2 + $0x260] sm:$0xff] %vm2160, %v2540
        %2581 = vst.msk [vmem:[#allocation2 + $0x288] sm:$0xff] %vm2160, %v2542
        %vm2582 = vcmask 519424
        %vm2583 = vmand %vm2582, %vm2178
        %v2584 = vld [vmem:[#allocation2 + $0x2b0] sm:$0xf]
        %v2585 = vsel %vm2583, %v2544, %v2584
        %2586 = vst [vmem:[#allocation2 + $0x2b0] sm:$0xf] %v2585
        %2587 = vrot.lane.b32.xlu0 %v1880, 64
        %v2588 = vpop.permute.xlu0 %2587
        %2589 = vrot.lane.b32.xlu0 %v1889, 64
        %v2590 = vpop.permute.xlu0 %2589
        %2591 = vrot.lane.b32.xlu0 %v1898, 64
        %v2592 = vpop.permute.xlu0 %2591
        %2593 = vrot.lane.b32.xlu0 %v1907, 64
        %v2594 = vpop.permute.xlu0 %2593
        %2595 = vrot.lane.b32.xlu0 %v1916, 64
        %v2596 = vpop.permute.xlu0 %2595
        %2597 = vrot.lane.b32.xlu0 %v1925, 64
        %v2598 = vpop.permute.xlu0 %2597
        %2599 = vrot.lane.b32.xlu0 %v1934, 64
        %v2600 = vpop.permute.xlu0 %2599
        %2601 = vrot.lane.b32.xlu0 %v1943, 64
        %v2602 = vpop.permute.xlu0 %2601
        %2603 = vrot.lane.b32.xlu0 %v1952, 64
        %v2604 = vpop.permute.xlu0 %2603
        %2605 = vrot.lane.b32.xlu0 %v1961, 64
        %v2606 = vpop.permute.xlu0 %2605
        %2607 = vrot.lane.b32.xlu0 %v1970, 64
        %v2608 = vpop.permute.xlu0 %2607
        %2609 = vrot.lane.b32.xlu0 %v1979, 64
        %v2610 = vpop.permute.xlu0 %2609
        %2611 = vrot.lane.b32.xlu0 %v1988, 64
        %v2612 = vpop.permute.xlu0 %2611
        %2613 = vrot.lane.b32.xlu0 %v1997, 64
        %v2614 = vpop.permute.xlu0 %2613
        %2615 = vrot.lane.b32.xlu0 %v2006, 64
        %v2616 = vpop.permute.xlu0 %2615
        %2617 = vrot.lane.b32.xlu0 %v2015, 64
        %v2618 = vpop.permute.xlu0 %2617
        %2619 = vrot.lane.b32.xlu0 %v2014, 64
        %v2620 = vpop.permute.xlu0 %2619
        %vm2638 = vcmask 785924
        %vm2639 = vmand %vm2638, %vm2034
        %v2640 = vld [vmem:[#allocation2 + $0x8] sm:$0xf0]
        %v2641 = vsel %vm2639, %v2588, %v2640
        %2642 = vst [vmem:[#allocation2 + $0x8] sm:$0xf0] %v2641
        %2643 = vst.msk [vmem:[#allocation2 + $0x30] sm:$0xff] %vm2378, %v2590
        %2644 = vst.msk [vmem:[#allocation2 + $0x58] sm:$0xff] %vm2378, %v2592
        %2645 = vst.msk [vmem:[#allocation2 + $0x80] sm:$0xff] %vm2378, %v2594
        %2646 = vst.msk [vmem:[#allocation2 + $0xa8] sm:$0xff] %vm2378, %v2596
        %2647 = vst.msk [vmem:[#allocation2 + $0xd0] sm:$0xff] %vm2378, %v2598
        %2648 = vst.msk [vmem:[#allocation2 + $0xf8] sm:$0xff] %vm2378, %v2600
        %2649 = vst.msk [vmem:[#allocation2 + $0x120] sm:$0xff] %vm2378, %v2602
        %2650 = vst.msk [vmem:[#allocation2 + $0x148] sm:$0xff] %vm2378, %v2604
        %2651 = vst.msk [vmem:[#allocation2 + $0x170] sm:$0xff] %vm2378, %v2606
        %2652 = vst.msk [vmem:[#allocation2 + $0x198] sm:$0xff] %vm2378, %v2608
        %2653 = vst.msk [vmem:[#allocation2 + $0x1c0] sm:$0xff] %vm2378, %v2610
        %2654 = vst.msk [vmem:[#allocation2 + $0x1e8] sm:$0xff] %vm2378, %v2612
        %2655 = vst.msk [vmem:[#allocation2 + $0x210] sm:$0xff] %vm2378, %v2614
        %2656 = vst.msk [vmem:[#allocation2 + $0x238] sm:$0xff] %vm2378, %v2616
        %2657 = vst.msk [vmem:[#allocation2 + $0x260] sm:$0xff] %vm2378, %v2618
        %vm2658 = vcmask 782848
        %vm2659 = vmand %vm2658, %vm1437
        %v2660 = vld [vmem:[#allocation2 + $0x288] sm:$0x1f]
        %v2661 = vsel %vm2659, %v2620, %v2660
        %2662 = vst [vmem:[#allocation2 + $0x288] sm:$0x1f] %v2661
        %2663 = vrot.lane.b32.xlu0 %v2076, 96
        %v2664 = vpop.permute.xlu0 %2663
        %2665 = vrot.lane.b32.xlu0 %v2078, 96
        %v2666 = vpop.permute.xlu0 %2665
        %2667 = vrot.lane.b32.xlu0 %v2080, 96
        %v2668 = vpop.permute.xlu0 %2667
        %2669 = vrot.lane.b32.xlu0 %v2082, 96
        %v2670 = vpop.permute.xlu0 %2669
        %2671 = vrot.lane.b32.xlu0 %v2084, 96
        %v2672 = vpop.permute.xlu0 %2671
        %2673 = vrot.lane.b32.xlu0 %v2086, 96
        %v2674 = vpop.permute.xlu0 %2673
        %2675 = vrot.lane.b32.xlu0 %v2088, 96
        %v2676 = vpop.permute.xlu0 %2675
        %2677 = vrot.lane.b32.xlu0 %v2090, 96
        %v2678 = vpop.permute.xlu0 %2677
        %2679 = vrot.lane.b32.xlu0 %v2092, 96
        %v2680 = vpop.permute.xlu0 %2679
        %2681 = vrot.lane.b32.xlu0 %v2094, 96
        %v2682 = vpop.permute.xlu0 %2681
        %2683 = vrot.lane.b32.xlu0 %v2096, 96
        %v2684 = vpop.permute.xlu0 %2683
        %2685 = vrot.lane.b32.xlu0 %v2098, 96
        %v2686 = vpop.permute.xlu0 %2685
        %2687 = vrot.lane.b32.xlu0 %v2100, 96
        %v2688 = vpop.permute.xlu0 %2687
        %2689 = vrot.lane.b32.xlu0 %v2102, 96
        %v2690 = vpop.permute.xlu0 %2689
        %2691 = vrot.lane.b32.xlu0 %v2104, 96
        %v2692 = vpop.permute.xlu0 %2691
        %2693 = vrot.lane.b32.xlu0 %v2106, 96
        %v2694 = vpop.permute.xlu0 %2693
        %2695 = vrot.lane.b32.xlu0 %v2105, 96
        %v2696 = vpop.permute.xlu0 %2695
        %vm2714 = vcmask 1048324
        %2715 = vst.msk [vmem:[#allocation2 + $0x8] sm:$0xf0] %vm2714, %v2664
        %2716 = vst.msk [vmem:[#allocation2 + $0x30] sm:$0xff] %vm2455, %v2666
        %2717 = vst.msk [vmem:[#allocation2 + $0x58] sm:$0xff] %vm2455, %v2668
        %2718 = vst.msk [vmem:[#allocation2 + $0x80] sm:$0xff] %vm2455, %v2670
        %2719 = vst.msk [vmem:[#allocation2 + $0xa8] sm:$0xff] %vm2455, %v2672
        %2720 = vst.msk [vmem:[#allocation2 + $0xd0] sm:$0xff] %vm2455, %v2674
        %2721 = vst.msk [vmem:[#allocation2 + $0xf8] sm:$0xff] %vm2455, %v2676
        %2722 = vst.msk [vmem:[#allocation2 + $0x120] sm:$0xff] %vm2455, %v2678
        %2723 = vst.msk [vmem:[#allocation2 + $0x148] sm:$0xff] %vm2455, %v2680
        %2724 = vst.msk [vmem:[#allocation2 + $0x170] sm:$0xff] %vm2455, %v2682
        %2725 = vst.msk [vmem:[#allocation2 + $0x198] sm:$0xff] %vm2455, %v2684
        %2726 = vst.msk [vmem:[#allocation2 + $0x1c0] sm:$0xff] %vm2455, %v2686
        %2727 = vst.msk [vmem:[#allocation2 + $0x1e8] sm:$0xff] %vm2455, %v2688
        %2728 = vst.msk [vmem:[#allocation2 + $0x210] sm:$0xff] %vm2455, %v2690
        %2729 = vst.msk [vmem:[#allocation2 + $0x238] sm:$0xff] %vm2455, %v2692
        %2730 = vst.msk [vmem:[#allocation2 + $0x260] sm:$0xff] %vm2455, %v2694
        %vm2731 = vcmask 1044224
        %2732 = vst.msk [vmem:[#allocation2 + $0x288] sm:$0xf] %vm2731, %v2696
        %v2750 = vld [vmem:[#allocation2 + $0x10] sm:$0xf8]
        %v2751 = vsel %vm1449, %v2186, %v2750
        %2752 = vst [vmem:[#allocation2 + $0x10] sm:$0xf8] %v2751
        %2753 = vst.msk [vmem:[#allocation2 + $0x38] sm:$0xff] %vm943, %v2195
        %2754 = vst.msk [vmem:[#allocation2 + $0x60] sm:$0xff] %vm943, %v2204
        %2755 = vst.msk [vmem:[#allocation2 + $0x88] sm:$0xff] %vm943, %v2213
        %2756 = vst.msk [vmem:[#allocation2 + $0xb0] sm:$0xff] %vm943, %v2222
        %2757 = vst.msk [vmem:[#allocation2 + $0xd8] sm:$0xff] %vm943, %v2231
        %2758 = vst.msk [vmem:[#allocation2 + $0x100] sm:$0xff] %vm943, %v2240
        %2759 = vst.msk [vmem:[#allocation2 + $0x128] sm:$0xff] %vm943, %v2249
        %2760 = vst.msk [vmem:[#allocation2 + $0x150] sm:$0xff] %vm943, %v2258
        %2761 = vst.msk [vmem:[#allocation2 + $0x178] sm:$0xff] %vm943, %v2267
        %2762 = vst.msk [vmem:[#allocation2 + $0x1a0] sm:$0xff] %vm943, %v2276
        %2763 = vst.msk [vmem:[#allocation2 + $0x1c8] sm:$0xff] %vm943, %v2285
        %2764 = vst.msk [vmem:[#allocation2 + $0x1f0] sm:$0xff] %vm943, %v2294
        %2765 = vst.msk [vmem:[#allocation2 + $0x218] sm:$0xff] %vm943, %v2303
        %2766 = vst.msk [vmem:[#allocation2 + $0x240] sm:$0xff] %vm943, %v2312
        %2767 = vst.msk [vmem:[#allocation2 + $0x268] sm:$0xff] %vm943, %v2321
        %vm2768 = vcmask 257024
        %vm2769 = vmand %vm2768, %vm2178
        %v2770 = vld [vmem:[#allocation2 + $0x290] sm:$0xf]
        %v2771 = vsel %vm2769, %v2320, %v2770
        %2772 = vst [vmem:[#allocation2 + $0x290] sm:$0xf] %v2771
        %v2773 = vld [vmem:[#allocation2 + $0x28] sm:$0xf0]
        %v2774 = vld [vmem:[#allocation2 + $0x30] sm:$0xf0]
        %v2775 = vld [vmem:[#allocation2 + $0x38] sm:$0xf0]
        %v2776 = vld [vmem:[#allocation2 + $0x50] sm:$0xff]
        %v2777 = vld [vmem:[#allocation2 + $0x58] sm:$0xff]
        %v2778 = vld [vmem:[#allocation2 + $0x60] sm:$0xff]
        %v2779 = vld [vmem:[#allocation2 + $0x78] sm:$0xff]
        %v2780 = vld [vmem:[#allocation2 + $0x80] sm:$0xff]
        %v2781 = vld [vmem:[#allocation2 + $0x88] sm:$0xff]
        %v2782 = vld [vmem:[#allocation2 + $0xa0] sm:$0xff]
        %v2783 = vld [vmem:[#allocation2 + $0xa8] sm:$0xff]
        %v2784 = vld [vmem:[#allocation2 + $0xb0] sm:$0xff]
        %v2785 = vld [vmem:[#allocation2 + $0xc8] sm:$0xff]
        %v2786 = vld [vmem:[#allocation2 + $0xd0] sm:$0xff]
        %v2787 = vld [vmem:[#allocation2 + $0xd8] sm:$0xff]
        %v2788 = vld [vmem:[#allocation2 + $0xf0] sm:$0xff]
        %v2789 = vld [vmem:[#allocation2 + $0xf8] sm:$0xff]
        %v2790 = vld [vmem:[#allocation2 + $0x100] sm:$0xff]
        %v2791 = vld [vmem:[#allocation2 + $0x118] sm:$0xff]
        %v2792 = vld [vmem:[#allocation2 + $0x120] sm:$0xff]
        %v2793 = vld [vmem:[#allocation2 + $0x128] sm:$0xff]
        %v2794 = vld [vmem:[#allocation2 + $0x140] sm:$0xff]
        %v2795 = vld [vmem:[#allocation2 + $0x148] sm:$0xff]
        %v2796 = vld [vmem:[#allocation2 + $0x150] sm:$0xff]
        %v2797 = vld [vmem:[#allocation2 + $0x168] sm:$0xff]
        %v2798 = vld [vmem:[#allocation2 + $0x170] sm:$0xff]
        %v2799 = vld [vmem:[#allocation2 + $0x178] sm:$0xff]
        %v2800 = vld [vmem:[#allocation2 + $0x190] sm:$0xff]
        %v2801 = vld [vmem:[#allocation2 + $0x198] sm:$0xff]
        %v2802 = vld [vmem:[#allocation2 + $0x1a0] sm:$0xff]
        %v2803 = vld [vmem:[#allocation2 + $0x1b8] sm:$0xff]
        %v2804 = vld [vmem:[#allocation2 + $0x1c0] sm:$0xff]
        %v2805 = vld [vmem:[#allocation2 + $0x1c8] sm:$0xff]
        %v2806 = vld [vmem:[#allocation2 + $0x1e0] sm:$0xff]
        %v2807 = vld [vmem:[#allocation2 + $0x1e8] sm:$0xff]
        %v2808 = vld [vmem:[#allocation2 + $0x1f0] sm:$0xff]
        %v2809 = vld [vmem:[#allocation2 + $0x208] sm:$0xff]
        %v2810 = vld [vmem:[#allocation2 + $0x210] sm:$0xff]
        %v2811 = vld [vmem:[#allocation2 + $0x218] sm:$0xff]
        %v2812 = vld [vmem:[#allocation2 + $0x230] sm:$0xff]
        %v2813 = vld [vmem:[#allocation2 + $0x238] sm:$0xff]
        %v2814 = vld [vmem:[#allocation2 + $0x240] sm:$0xff]
        %v2815 = vld [vmem:[#allocation2 + $0x258] sm:$0xff]
        %v2816 = vld [vmem:[#allocation2 + $0x260] sm:$0xff]
        %v2817 = vld [vmem:[#allocation2 + $0x268] sm:$0xff]
        %v2818 = vld [vmem:[#allocation2 + $0x280] sm:$0xff]
        %v2819 = vld [vmem:[#allocation2 + $0x288] sm:$0xff]
        %v2820 = vld [vmem:[#allocation2 + $0x290] sm:$0xff]
        %v2821 = vld [vmem:[#allocation2 + $0x2a8] sm:$0xf]
        %v2822 = vld [vmem:[#allocation2 + $0x2b0] sm:$0xf]
        %v2823 = vld [vmem:[#allocation2 + $0x2b8] sm:$0xf]
        %v2824 = vld [vmem:[%s3] sm:$0xf]
        %v2825 = vld [vmem:[%s3 + $0x4] sm:$0xf]
        %v2826 = vld [vmem:[%s3 + $0x8] sm:$0xf]
        %v2827 = vld [vmem:[%s3 + $0xc] sm:$0xf]
        %v2828 = vld [vmem:[%s3 + $0x10] sm:$0xf]
        %v2829 = vld [vmem:[%s3 + $0x14] sm:$0xf]
        %v2830 = vld [vmem:[%s3 + $0x18] sm:$0xf]
        %v2831 = vld [vmem:[%s3 + $0x1c] sm:$0xf]
        %v2832 = vld [vmem:[%s3 + $0x20] sm:$0xf]
        %v2833 = vld [vmem:[%s3 + $0x24] sm:$0xf]
        %v2834 = vld [vmem:[%s3 + $0x28] sm:$0xf]
        %v2835 = vld [vmem:[%s3 + $0x2c] sm:$0xf]
        %v2836 = vld [vmem:[%s3 + $0x30] sm:$0xf]
        %v2837 = vld [vmem:[%s3 + $0x34] sm:$0xf]
        %v2838 = vld [vmem:[%s3 + $0x38] sm:$0xf]
        %v2839 = vld [vmem:[%s3 + $0x3c] sm:$0xf]
        %v2840 = vld [vmem:[%s3 + $0x40] sm:$0xf]
        %v2841 = vld [vmem:[%s3 + $0x44] sm:$0xf]
        %v2842 = vld [vmem:[%s3 + $0x48] sm:$0xf]
        %v2843 = vld [vmem:[%s3 + $0x4c] sm:$0xf]
        %v2844 = vld [vmem:[%s3 + $0x50] sm:$0xf]
        %v2845 = vld [vmem:[%s3 + $0x54] sm:$0xf]
        %v2846 = vld [vmem:[%s3 + $0x58] sm:$0xf]
        %v2847 = vld [vmem:[%s3 + $0x5c] sm:$0xf]
        %v2848 = vld [vmem:[%s3 + $0x60] sm:$0xf]
        %v2849 = vld [vmem:[%s3 + $0x64] sm:$0xf]
        %v2850 = vld [vmem:[%s3 + $0x68] sm:$0xf]
        %v2851 = vld [vmem:[%s3 + $0x6c] sm:$0xf]
        %v2852 = vld [vmem:[%s3 + $0x70] sm:$0xf]
        %v2853 = vld [vmem:[%s3 + $0x74] sm:$0xf]
        %v2854 = vld [vmem:[%s3 + $0x78] sm:$0xf]
        %v2855 = vld [vmem:[%s3 + $0x7c] sm:$0xf]
        %v2856 = vld [vmem:[%s3 + $0x80] sm:$0xf]
        %v2857 = vld [vmem:[%s3 + $0x84] sm:$0xf]
        %v2858 = vld [vmem:[%s3 + $0x88] sm:$0xf]
        %v2859 = vld [vmem:[%s3 + $0x8c] sm:$0xf]
        %v2861 = vlaneseq
        %v2862 = vshrl.u32 %v2861, 7
        %v2863 = vsub.s32 0, %v2862
        %v2864 = vrot.slane %v1418, %v2863
        %v2917 = vrot.slane %v2773, 4
        %v2918 = vrot.slane %v2776, 4
        %v2919 = vsel %vm2075, %v2917, %v2918
        %v2920 = vrot.slane %v2774, 4
        %v2921 = vrot.slane %v2777, 4
        %v2922 = vsel %vm2075, %v2920, %v2921
        %v2923 = vrot.slane %v2775, 4
        %v2924 = vrot.slane %v2778, 4
        %v2925 = vsel %vm2075, %v2923, %v2924
        %v2926 = vrot.slane %v2779, 4
        %v2927 = vsel %vm2075, %v2918, %v2926
        %v2928 = vrot.slane %v2780, 4
        %v2929 = vsel %vm2075, %v2921, %v2928
        %v2930 = vrot.slane %v2781, 4
        %v2931 = vsel %vm2075, %v2924, %v2930
        %v2932 = vrot.slane %v2782, 4
        %v2933 = vsel %vm2075, %v2926, %v2932
        %v2934 = vrot.slane %v2783, 4
        %v2935 = vsel %vm2075, %v2928, %v2934
        %v2936 = vrot.slane %v2784, 4
        %v2937 = vsel %vm2075, %v2930, %v2936
        %v2938 = vrot.slane %v2785, 4
        %v2939 = vsel %vm2075, %v2932, %v2938
        %v2940 = vrot.slane %v2786, 4
        %v2941 = vsel %vm2075, %v2934, %v2940
        %v2942 = vrot.slane %v2787, 4
        %v2943 = vsel %vm2075, %v2936, %v2942
        %v2944 = vrot.slane %v2788, 4
        %v2945 = vsel %vm2075, %v2938, %v2944
        %v2946 = vrot.slane %v2789, 4
        %v2947 = vsel %vm2075, %v2940, %v2946
        %v2948 = vrot.slane %v2790, 4
        %v2949 = vsel %vm2075, %v2942, %v2948
        %v2950 = vrot.slane %v2791, 4
        %v2951 = vsel %vm2075, %v2944, %v2950
        %v2952 = vrot.slane %v2792, 4
        %v2953 = vsel %vm2075, %v2946, %v2952
        %v2954 = vrot.slane %v2793, 4
        %v2955 = vsel %vm2075, %v2948, %v2954
        %v2956 = vrot.slane %v2794, 4
        %v2957 = vsel %vm2075, %v2950, %v2956
        %v2958 = vrot.slane %v2795, 4
        %v2959 = vsel %vm2075, %v2952, %v2958
        %v2960 = vrot.slane %v2796, 4
        %v2961 = vsel %vm2075, %v2954, %v2960
        %v2962 = vrot.slane %v2797, 4
        %v2963 = vsel %vm2075, %v2956, %v2962
        %v2964 = vrot.slane %v2798, 4
        %v2965 = vsel %vm2075, %v2958, %v2964
        %v2966 = vrot.slane %v2799, 4
        %v2967 = vsel %vm2075, %v2960, %v2966
        %v2968 = vrot.slane %v2800, 4
        %v2969 = vsel %vm2075, %v2962, %v2968
        %v2970 = vrot.slane %v2801, 4
        %v2971 = vsel %vm2075, %v2964, %v2970
        %v2972 = vrot.slane %v2802, 4
        %v2973 = vsel %vm2075, %v2966, %v2972
        %v2974 = vrot.slane %v2803, 4
        %v2975 = vsel %vm2075, %v2968, %v2974
        %v2976 = vrot.slane %v2804, 4
        %v2977 = vsel %vm2075, %v2970, %v2976
        %v2978 = vrot.slane %v2805, 4
        %v2979 = vsel %vm2075, %v2972, %v2978
        %v2980 = vrot.slane %v2806, 4
        %v2981 = vsel %vm2075, %v2974, %v2980
        %v2982 = vrot.slane %v2807, 4
        %v2983 = vsel %vm2075, %v2976, %v2982
        %v2984 = vrot.slane %v2808, 4
        %v2985 = vsel %vm2075, %v2978, %v2984
        %v2986 = vrot.slane %v2809, 4
        %v2987 = vsel %vm2075, %v2980, %v2986
        %v2988 = vrot.slane %v2810, 4
        %v2989 = vsel %vm2075, %v2982, %v2988
        %v2990 = vrot.slane %v2811, 4
        %v2991 = vsel %vm2075, %v2984, %v2990
        %v2992 = vrot.slane %v2812, 4
        %v2993 = vsel %vm2075, %v2986, %v2992
        %v2994 = vrot.slane %v2813, 4
        %v2995 = vsel %vm2075, %v2988, %v2994
        %v2996 = vrot.slane %v2814, 4
        %v2997 = vsel %vm2075, %v2990, %v2996
        %v2998 = vrot.slane %v2815, 4
        %v2999 = vsel %vm2075, %v2992, %v2998
        %v3000 = vrot.slane %v2816, 4
        %v3001 = vsel %vm2075, %v2994, %v3000
        %v3002 = vrot.slane %v2817, 4
        %v3003 = vsel %vm2075, %v2996, %v3002
        %v3004 = vrot.slane %v2818, 4
        %v3005 = vsel %vm2075, %v2998, %v3004
        %v3006 = vrot.slane %v2819, 4
        %v3007 = vsel %vm2075, %v3000, %v3006
        %v3008 = vrot.slane %v2820, 4
        %v3009 = vsel %vm2075, %v3002, %v3008
        %v3010 = vrot.slane %v2821, 4
        %v3011 = vsel %vm2075, %v3004, %v3010
        %v3012 = vrot.slane %v2822, 4
        %v3013 = vsel %vm2075, %v3006, %v3012
        %v3014 = vrot.slane %v2823, 4
        %v3015 = vsel %vm2075, %v3008, %v3014
        %v3084 = vunpack.c.l.b16 %v2824
        %v3085 = vunpack.c.l.b16 %v2825
        %v3086 = vunpack.c.l.b16 %v2826
        %v3087 = vunpack.c.l.b16 %v2827
        %v3088 = vunpack.c.l.b16 %v2828
        %v3089 = vunpack.c.l.b16 %v2829
        %v3090 = vunpack.c.l.b16 %v2830
        %v3091 = vunpack.c.l.b16 %v2831
        %v3092 = vunpack.c.l.b16 %v2832
        %v3093 = vunpack.c.l.b16 %v2833
        %v3094 = vunpack.c.l.b16 %v2834
        %v3095 = vunpack.c.l.b16 %v2835
        %v3096 = vunpack.c.l.b16 %v2836
        %v3097 = vunpack.c.l.b16 %v2837
        %v3098 = vunpack.c.l.b16 %v2838
        %v3099 = vunpack.c.l.b16 %v2839
        %v3100 = vunpack.c.l.b16 %v2840
        %v3101 = vunpack.c.l.b16 %v2841
        %v3102 = vunpack.c.l.b16 %v2842
        %v3103 = vunpack.c.l.b16 %v2843
        %v3104 = vunpack.c.l.b16 %v2844
        %v3105 = vunpack.c.l.b16 %v2845
        %v3106 = vunpack.c.l.b16 %v2846
        %v3107 = vunpack.c.l.b16 %v2847
        %v3108 = vunpack.c.l.b16 %v2848
        %v3109 = vunpack.c.l.b16 %v2849
        %v3110 = vunpack.c.l.b16 %v2850
        %v3111 = vunpack.c.l.b16 %v2851
        %v3112 = vunpack.c.l.b16 %v2852
        %v3113 = vunpack.c.l.b16 %v2853
        %v3114 = vunpack.c.l.b16 %v2854
        %v3115 = vunpack.c.l.b16 %v2855
        %v3116 = vunpack.c.l.b16 %v2856
        %v3117 = vunpack.c.l.b16 %v2857
        %v3118 = vunpack.c.l.b16 %v2858
        %v3119 = vunpack.c.l.b16 %v2859
        %v3120 = vpack.c.b16 %v3085, %v3084
        %v3121 = vpack.c.b16 %v3087, %v3086
        %v3122 = vpack.c.b16 %v3089, %v3088
        %v3123 = vpack.c.b16 %v3091, %v3090
        %v3124 = vpack.c.b16 %v3093, %v3092
        %v3125 = vpack.c.b16 %v3095, %v3094
        %v3126 = vpack.c.b16 %v3097, %v3096
        %v3127 = vpack.c.b16 %v3099, %v3098
        %v3128 = vpack.c.b16 %v3101, %v3100
        %v3129 = vpack.c.b16 %v3103, %v3102
        %v3130 = vpack.c.b16 %v3105, %v3104
        %v3131 = vpack.c.b16 %v3107, %v3106
        %v3132 = vpack.c.b16 %v3109, %v3108
        %v3133 = vpack.c.b16 %v3111, %v3110
        %v3134 = vpack.c.b16 %v3113, %v3112
        %v3135 = vpack.c.b16 %v3115, %v3114
        %v3136 = vpack.c.b16 %v3117, %v3116
        %v3137 = vpack.c.b16 %v3119, %v3118
        %v3157 = vsel %vm943, %v2925, 0
        %v3160 = vsel %vm943, %v2931, 0
        %v3163 = vsel %vm943, %v2937, 0
        %v3166 = vsel %vm943, %v2943, 0
        %v3169 = vsel %vm943, %v2949, 0
        %v3172 = vsel %vm943, %v2955, 0
        %v3175 = vsel %vm943, %v2961, 0
        %v3178 = vsel %vm943, %v2967, 0
        %v3181 = vsel %vm943, %v2973, 0
        %v3184 = vsel %vm943, %v2979, 0
        %v3187 = vsel %vm943, %v2985, 0
        %v3190 = vsel %vm943, %v2991, 0
        %v3193 = vsel %vm943, %v2997, 0
        %v3196 = vsel %vm943, %v3003, 0
        %v3199 = vsel %vm943, %v3009, 0
        %v3202 = vsel %vm943, %v3015, 0
        %3204 = vmatprep.subr.bf16.mxu0 0
        %3205 = vmatpush1.bf16.msra.mxu0 %v3120
        %3206 = vmatprep.subr.bf16.mxu0 0
        %3207 = vmatpush1.bf16.msra.mxu0 %v3121
        %3208 = vmatprep.subr.bf16.mxu0 0
        %3209 = vmatpush1.bf16.msra.mxu0 %v3122
        %3210 = vmatprep.subr.bf16.mxu0 0
        %3211 = vmatpush1.bf16.msra.mxu0 %v3123
        %3212 = vmatprep.subr.bf16.mxu0 0
        %3213 = vmatpush1.bf16.msra.mxu0 %v3124
        %3214 = vmatprep.subr.bf16.mxu0 0
        %3215 = vmatpush1.bf16.msra.mxu0 %v3125
        %3216 = vmatprep.subr.bf16.mxu0 0
        %3217 = vmatpush1.bf16.msra.mxu0 %v3126
        %3218 = vmatprep.subr.bf16.mxu0 0
        %3219 = vmatpush1.bf16.msra.mxu0 %v3127
        %3220 = vmatprep.subr.bf16.mxu0 0
        %3221 = vmatpush1.bf16.msra.mxu0 %v3128
        %3222 = vmatprep.subr.bf16.mxu0 0
        %3223 = vmatpush1.bf16.msra.mxu0 %v3129
        %3224 = vmatprep.subr.bf16.mxu0 0
        %3225 = vmatpush1.bf16.msra.mxu0 %v3130
        %3226 = vmatprep.subr.bf16.mxu0 0
        %3227 = vmatpush1.bf16.msra.mxu0 %v3131
        %3228 = vmatprep.subr.bf16.mxu0 0
        %3229 = vmatpush1.bf16.msra.mxu0 %v3132
        %3230 = vmatprep.subr.bf16.mxu0 0
        %3231 = vmatpush1.bf16.msra.mxu0 %v3133
        %3232 = vmatprep.subr.bf16.mxu0 0
        %3233 = vmatpush1.bf16.msra.mxu0 %v3134
        %3234 = vmatprep.subr.bf16.mxu0 0
        %3235 = vmatpush1.bf16.msra.mxu0 %v3135
        %3236 = vmatprep.mubr.bf16.mxu0 %v2922
        %3237 = vmatmul.mubr.bf16.gmra.mrb[0].mxu0 %v2919
        %v3238 = vpop.f32.mrb[0].mxu0
        %v3239 = vadd.f32 %v2864, %v3238
        %v3240 = vpop.f32.mrb[0].mxu0
        %v3241 = vpop.f32.mrb[0].mxu0
        %v3242 = vadd.f32 %v2864, %v3241
        %v3243 = vpop.f32.mrb[0].mxu0
        %3244 = vmatprep.mubr.bf16.mxu0 %v2929
        %3245 = vmatmul.mubr.bf16.gmra.mrb[0].mxu0 %v2927
        %v3246 = vpop.f32.mrb[0].mxu0
        %v3247 = vadd.f32 %v2864, %v3246
        %v3248 = vpop.f32.mrb[0].mxu0
        %v3249 = vpop.f32.mrb[0].mxu0
        %v3250 = vadd.f32 %v2864, %v3249
        %v3251 = vpop.f32.mrb[0].mxu0
        %3252 = vmatprep.mubr.bf16.mxu0 %v2935
        %3253 = vmatmul.mubr.bf16.gmra.mrb[0].mxu0 %v2933
        %v3254 = vpop.f32.mrb[0].mxu0
        %v3255 = vadd.f32 %v2864, %v3254
        %v3256 = vpop.f32.mrb[0].mxu0
        %v3257 = vpop.f32.mrb[0].mxu0
        %v3258 = vadd.f32 %v2864, %v3257
        %v3259 = vpop.f32.mrb[0].mxu0
        %3260 = vmatprep.mubr.bf16.mxu0 %v2941
        %3261 = vmatmul.mubr.bf16.gmra.mrb[0].mxu0 %v2939
        %v3262 = vpop.f32.mrb[0].mxu0
        %v3263 = vadd.f32 %v2864, %v3262
        %v3264 = vpop.f32.mrb[0].mxu0
        %v3265 = vpop.f32.mrb[0].mxu0
        %v3266 = vadd.f32 %v2864, %v3265
        %v3267 = vpop.f32.mrb[0].mxu0
        %3268 = vmatprep.mubr.bf16.mxu0 %v2947
        %3269 = vmatmul.mubr.bf16.gmra.mrb[0].mxu0 %v2945
        %v3270 = vpop.f32.mrb[0].mxu0
        %v3271 = vadd.f32 %v2864, %v3270
        %v3272 = vpop.f32.mrb[0].mxu0
        %v3273 = vpop.f32.mrb[0].mxu0
        %v3274 = vadd.f32 %v2864, %v3273
        %v3275 = vpop.f32.mrb[0].mxu0
        %3276 = vmatprep.mubr.bf16.mxu0 %v2953
        %3277 = vmatmul.mubr.bf16.gmra.mrb[0].mxu0 %v2951
        %v3278 = vpop.f32.mrb[0].mxu0
        %v3279 = vadd.f32 %v2864, %v3278
        %v3280 = vpop.f32.mrb[0].mxu0
        %v3281 = vpop.f32.mrb[0].mxu0
        %v3282 = vadd.f32 %v2864, %v3281
        %v3283 = vpop.f32.mrb[0].mxu0
        %3284 = vmatprep.mubr.bf16.mxu0 %v2959
        %3285 = vmatmul.mubr.bf16.gmra.mrb[0].mxu0 %v2957
        %v3286 = vpop.f32.mrb[0].mxu0
        %v3287 = vadd.f32 %v2864, %v3286
        %v3288 = vpop.f32.mrb[0].mxu0
        %v3289 = vpop.f32.mrb[0].mxu0
        %v3290 = vadd.f32 %v2864, %v3289
        %v3291 = vpop.f32.mrb[0].mxu0
        %3292 = vmatprep.mubr.bf16.mxu0 %v2965
        %3293 = vmatmul.mubr.bf16.gmra.mrb[0].mxu0 %v2963
        %v3294 = vpop.f32.mrb[0].mxu0
        %v3295 = vadd.f32 %v2864, %v3294
        %v3296 = vpop.f32.mrb[0].mxu0
        %v3297 = vpop.f32.mrb[0].mxu0
        %v3298 = vadd.f32 %v2864, %v3297
        %v3299 = vpop.f32.mrb[0].mxu0
        %3300 = vmatprep.mubr.bf16.mxu0 %v2971
        %3301 = vmatmul.mubr.bf16.gmra.mrb[0].mxu0 %v2969
        %v3302 = vpop.f32.mrb[0].mxu0
        %v3303 = vadd.f32 %v2864, %v3302
        %v3304 = vpop.f32.mrb[0].mxu0
        %v3305 = vpop.f32.mrb[0].mxu0
        %v3306 = vadd.f32 %v2864, %v3305
        %v3307 = vpop.f32.mrb[0].mxu0
        %3308 = vmatprep.mubr.bf16.mxu0 %v2977
        %3309 = vmatmul.mubr.bf16.gmra.mrb[0].mxu0 %v2975
        %v3310 = vpop.f32.mrb[0].mxu0
        %v3311 = vadd.f32 %v2864, %v3310
        %v3312 = vpop.f32.mrb[0].mxu0
        %v3313 = vpop.f32.mrb[0].mxu0
        %v3314 = vadd.f32 %v2864, %v3313
        %v3315 = vpop.f32.mrb[0].mxu0
        %3316 = vmatprep.mubr.bf16.mxu0 %v2983
        %3317 = vmatmul.mubr.bf16.gmra.mrb[0].mxu0 %v2981
        %v3318 = vpop.f32.mrb[0].mxu0
        %v3319 = vadd.f32 %v2864, %v3318
        %v3320 = vpop.f32.mrb[0].mxu0
        %v3321 = vpop.f32.mrb[0].mxu0
        %v3322 = vadd.f32 %v2864, %v3321
        %v3323 = vpop.f32.mrb[0].mxu0
        %3324 = vmatprep.mubr.bf16.mxu0 %v2989
        %3325 = vmatmul.mubr.bf16.gmra.mrb[0].mxu0 %v2987
        %v3326 = vpop.f32.mrb[0].mxu0
        %v3327 = vadd.f32 %v2864, %v3326
        %v3328 = vpop.f32.mrb[0].mxu0
        %v3329 = vpop.f32.mrb[0].mxu0
        %v3330 = vadd.f32 %v2864, %v3329
        %v3331 = vpop.f32.mrb[0].mxu0
        %3332 = vmatprep.mubr.bf16.mxu0 %v2995
        %3333 = vmatmul.mubr.bf16.gmra.mrb[0].mxu0 %v2993
        %v3334 = vpop.f32.mrb[0].mxu0
        %v3335 = vadd.f32 %v2864, %v3334
        %v3336 = vpop.f32.mrb[0].mxu0
        %v3337 = vpop.f32.mrb[0].mxu0
        %v3338 = vadd.f32 %v2864, %v3337
        %v3339 = vpop.f32.mrb[0].mxu0
        %3340 = vmatprep.mubr.bf16.mxu0 %v3001
        %3341 = vmatmul.mubr.bf16.gmra.mrb[0].mxu0 %v2999
        %v3342 = vpop.f32.mrb[0].mxu0
        %v3343 = vadd.f32 %v2864, %v3342
        %v3344 = vpop.f32.mrb[0].mxu0
        %v3345 = vpop.f32.mrb[0].mxu0
        %v3346 = vadd.f32 %v2864, %v3345
        %v3347 = vpop.f32.mrb[0].mxu0
        %3348 = vmatprep.mubr.bf16.mxu0 %v3007
        %3349 = vmatmul.mubr.bf16.gmra.mrb[0].mxu0 %v3005
        %v3350 = vpop.f32.mrb[0].mxu0
        %v3351 = vadd.f32 %v2864, %v3350
        %v3352 = vpop.f32.mrb[0].mxu0
        %v3353 = vpop.f32.mrb[0].mxu0
        %v3354 = vadd.f32 %v2864, %v3353
        %v3355 = vpop.f32.mrb[0].mxu0
        %3356 = vmatprep.mubr.bf16.mxu0 %v3013
        %3357 = vmatmul.mubr.bf16.gmra.mrb[0].mxu0 %v3011
        %v3358 = vpop.f32.mrb[0].mxu0
        %v3359 = vadd.f32 %v2864, %v3358
        %v3360 = vpop.f32.mrb[0].mxu0
        %v3361 = vpop.f32.mrb[0].mxu0
        %v3362 = vadd.f32 %v2864, %v3361
        %v3363 = vpop.f32.mrb[0].mxu0
        %3364 = vdwg.mxu0
        %3365 = vmatprep.subr.bf16.mxu0 0
        %3366 = vmatpush1.bf16.msra.mxu0 %v3136
        %3367 = vmatprep.subr.bf16.mxu0 0
        %3368 = vmatpush1.bf16.msra.mxu0 %v3137
        %3369 = vmatprep.subr.bf16.mxu0 0
        %3370 = vmatpush1.bf16.msra.mxu0 0
        %3371 = vmatprep.subr.bf16.mxu0 0
        %3372 = vmatpush1.bf16.msra.mxu0 0
        %3373 = vmatprep.subr.bf16.mxu0 0
        %3374 = vmatpush1.bf16.msra.mxu0 0
        %3375 = vmatprep.subr.bf16.mxu0 0
        %3376 = vmatpush1.bf16.msra.mxu0 0
        %3377 = vmatprep.subr.bf16.mxu0 0
        %3378 = vmatpush1.bf16.msra.mxu0 0
        %3379 = vmatprep.subr.bf16.mxu0 0
        %3380 = vmatpush1.bf16.msra.mxu0 0
        %3381 = vmatprep.subr.bf16.mxu0 0
        %3382 = vmatpush1.bf16.msra.mxu0 0
        %3383 = vmatprep.subr.bf16.mxu0 0
        %3384 = vmatpush1.bf16.msra.mxu0 0
        %3385 = vmatprep.subr.bf16.mxu0 0
        %3386 = vmatpush1.bf16.msra.mxu0 0
        %3387 = vmatprep.subr.bf16.mxu0 0
        %3388 = vmatpush1.bf16.msra.mxu0 0
        %3389 = vmatprep.subr.bf16.mxu0 0
        %3390 = vmatpush1.bf16.msra.mxu0 0
        %3391 = vmatprep.subr.bf16.mxu0 0
        %3392 = vmatpush1.bf16.msra.mxu0 0
        %3393 = vmatprep.subr.bf16.mxu0 0
        %3394 = vmatpush1.bf16.msra.mxu0 0
        %3395 = vmatprep.subr.bf16.mxu0 0
        %3396 = vmatpush1.bf16.msra.mxu0 0
        %3397 = vmatprep.mubr.bf16.mxu0 0
        %3398 = vmatmul.mubr.bf16.gmra.mrb[0].mxu0 %v3157
        %v3399 = vpop.f32.mrb[0].mxu0
        %v3400 = vadd.f32 %v3239, %v3399
        %v3401 = vpop.f32.mrb[0].mxu0
        %v3402 = vpop.f32.mrb[0].mxu0
        %v3403 = vadd.f32 %v3242, %v3402
        %v3404 = vpop.f32.mrb[0].mxu0
        %3405 = vmatprep.mubr.bf16.mxu0 0
        %3406 = vmatmul.mubr.bf16.gmra.mrb[0].mxu0 %v3160
        %v3407 = vpop.f32.mrb[0].mxu0
        %v3408 = vadd.f32 %v3247, %v3407
        %v3409 = vpop.f32.mrb[0].mxu0
        %v3410 = vpop.f32.mrb[0].mxu0
        %v3411 = vadd.f32 %v3250, %v3410
        %v3412 = vpop.f32.mrb[0].mxu0
        %3413 = vmatprep.mubr.bf16.mxu0 0
        %3414 = vmatmul.mubr.bf16.gmra.mrb[0].mxu0 %v3163
        %v3415 = vpop.f32.mrb[0].mxu0
        %v3416 = vadd.f32 %v3255, %v3415
        %v3417 = vpop.f32.mrb[0].mxu0
        %v3418 = vpop.f32.mrb[0].mxu0
        %v3419 = vadd.f32 %v3258, %v3418
        %v3420 = vpop.f32.mrb[0].mxu0
        %3421 = vmatprep.mubr.bf16.mxu0 0
        %3422 = vmatmul.mubr.bf16.gmra.mrb[0].mxu0 %v3166
        %v3423 = vpop.f32.mrb[0].mxu0
        %v3424 = vadd.f32 %v3263, %v3423
        %v3425 = vpop.f32.mrb[0].mxu0
        %v3426 = vpop.f32.mrb[0].mxu0
        %v3427 = vadd.f32 %v3266, %v3426
        %v3428 = vpop.f32.mrb[0].mxu0
        %3429 = vmatprep.mubr.bf16.mxu0 0
        %3430 = vmatmul.mubr.bf16.gmra.mrb[0].mxu0 %v3169
        %v3431 = vpop.f32.mrb[0].mxu0
        %v3432 = vadd.f32 %v3271, %v3431
        %v3433 = vpop.f32.mrb[0].mxu0
        %v3434 = vpop.f32.mrb[0].mxu0
        %v3435 = vadd.f32 %v3274, %v3434
        %v3436 = vpop.f32.mrb[0].mxu0
        %3437 = vmatprep.mubr.bf16.mxu0 0
        %3438 = vmatmul.mubr.bf16.gmra.mrb[0].mxu0 %v3172
        %v3439 = vpop.f32.mrb[0].mxu0
        %v3440 = vadd.f32 %v3279, %v3439
        %v3441 = vpop.f32.mrb[0].mxu0
        %v3442 = vpop.f32.mrb[0].mxu0
        %v3443 = vadd.f32 %v3282, %v3442
        %v3444 = vpop.f32.mrb[0].mxu0
        %3445 = vmatprep.mubr.bf16.mxu0 0
        %3446 = vmatmul.mubr.bf16.gmra.mrb[0].mxu0 %v3175
        %v3447 = vpop.f32.mrb[0].mxu0
        %v3448 = vadd.f32 %v3287, %v3447
        %v3449 = vpop.f32.mrb[0].mxu0
        %v3450 = vpop.f32.mrb[0].mxu0
        %v3451 = vadd.f32 %v3290, %v3450
        %v3452 = vpop.f32.mrb[0].mxu0
        %3453 = vmatprep.mubr.bf16.mxu0 0
        %3454 = vmatmul.mubr.bf16.gmra.mrb[0].mxu0 %v3178
        %v3455 = vpop.f32.mrb[0].mxu0
        %v3456 = vadd.f32 %v3295, %v3455
        %v3457 = vpop.f32.mrb[0].mxu0
        %v3458 = vpop.f32.mrb[0].mxu0
        %v3459 = vadd.f32 %v3298, %v3458
        %v3460 = vpop.f32.mrb[0].mxu0
        %3461 = vmatprep.mubr.bf16.mxu0 0
        %3462 = vmatmul.mubr.bf16.gmra.mrb[0].mxu0 %v3181
        %v3463 = vpop.f32.mrb[0].mxu0
        %v3464 = vadd.f32 %v3303, %v3463
        %v3465 = vpop.f32.mrb[0].mxu0
        %v3466 = vpop.f32.mrb[0].mxu0
        %v3467 = vadd.f32 %v3306, %v3466
        %v3468 = vpop.f32.mrb[0].mxu0
        %3469 = vmatprep.mubr.bf16.mxu0 0
        %3470 = vmatmul.mubr.bf16.gmra.mrb[0].mxu0 %v3184
        %v3471 = vpop.f32.mrb[0].mxu0
        %v3472 = vadd.f32 %v3311, %v3471
        %v3473 = vpop.f32.mrb[0].mxu0
        %v3474 = vpop.f32.mrb[0].mxu0
        %v3475 = vadd.f32 %v3314, %v3474
        %v3476 = vpop.f32.mrb[0].mxu0
        %3477 = vmatprep.mubr.bf16.mxu0 0
        %3478 = vmatmul.mubr.bf16.gmra.mrb[0].mxu0 %v3187
        %v3479 = vpop.f32.mrb[0].mxu0
        %v3480 = vadd.f32 %v3319, %v3479
        %v3481 = vpop.f32.mrb[0].mxu0
        %v3482 = vpop.f32.mrb[0].mxu0
        %v3483 = vadd.f32 %v3322, %v3482
        %v3484 = vpop.f32.mrb[0].mxu0
        %3485 = vmatprep.mubr.bf16.mxu0 0
        %3486 = vmatmul.mubr.bf16.gmra.mrb[0].mxu0 %v3190
        %v3487 = vpop.f32.mrb[0].mxu0
        %v3488 = vadd.f32 %v3327, %v3487
        %v3489 = vpop.f32.mrb[0].mxu0
        %v3490 = vpop.f32.mrb[0].mxu0
        %v3491 = vadd.f32 %v3330, %v3490
        %v3492 = vpop.f32.mrb[0].mxu0
        %3493 = vmatprep.mubr.bf16.mxu0 0
        %3494 = vmatmul.mubr.bf16.gmra.mrb[0].mxu0 %v3193
        %v3495 = vpop.f32.mrb[0].mxu0
        %v3496 = vadd.f32 %v3335, %v3495
        %v3497 = vpop.f32.mrb[0].mxu0
        %v3498 = vpop.f32.mrb[0].mxu0
        %v3499 = vadd.f32 %v3338, %v3498
        %v3500 = vpop.f32.mrb[0].mxu0
        %3501 = vmatprep.mubr.bf16.mxu0 0
        %3502 = vmatmul.mubr.bf16.gmra.mrb[0].mxu0 %v3196
        %v3503 = vpop.f32.mrb[0].mxu0
        %v3504 = vadd.f32 %v3343, %v3503
        %v3505 = vpop.f32.mrb[0].mxu0
        %v3506 = vpop.f32.mrb[0].mxu0
        %v3507 = vadd.f32 %v3346, %v3506
        %v3508 = vpop.f32.mrb[0].mxu0
        %3509 = vmatprep.mubr.bf16.mxu0 0
        %3510 = vmatmul.mubr.bf16.gmra.mrb[0].mxu0 %v3199
        %v3511 = vpop.f32.mrb[0].mxu0
        %v3512 = vadd.f32 %v3351, %v3511
        %v3513 = vpop.f32.mrb[0].mxu0
        %v3514 = vpop.f32.mrb[0].mxu0
        %v3515 = vadd.f32 %v3354, %v3514
        %v3516 = vpop.f32.mrb[0].mxu0
        %3517 = vmatprep.mubr.bf16.mxu0 0
        %3518 = vmatmul.mubr.bf16.gmra.mrb[0].mxu0 %v3202
        %v3519 = vpop.f32.mrb[0].mxu0
        %v3520 = vadd.f32 %v3359, %v3519
        %v3521 = vpop.f32.mrb[0].mxu0
        %v3522 = vpop.f32.mrb[0].mxu0
        %v3523 = vadd.f32 %v3362, %v3522
        %v3524 = vpop.f32.mrb[0].mxu0
        %3525 = vdwg.mxu0
        %v3526 = vld [vmem:[%s5] sm:$0x1]
        %v3527 = vld [vmem:[%s6] sm:$0x1]
        %vm3528 = vcmask 523264
        %v3529 = vsel %vm3528, %v3400, 0.0
        %v3530 = vsel %vm3528, %v3403, 0.0
        %v3531 = vadd.f32 %v3529, %v3530
        %v3532 = vsel %vm3528, %v3408, 0.0
        %v3533 = vadd.f32 %v3531, %v3532
        %v3534 = vsel %vm3528, %v3411, 0.0
        %v3535 = vadd.f32 %v3533, %v3534
        %v3536 = vsel %vm3528, %v3416, 0.0
        %v3537 = vadd.f32 %v3535, %v3536
        %v3538 = vsel %vm3528, %v3419, 0.0
        %v3539 = vadd.f32 %v3537, %v3538
        %v3540 = vsel %vm3528, %v3424, 0.0
        %v3541 = vadd.f32 %v3539, %v3540
        %v3542 = vsel %vm3528, %v3427, 0.0
        %v3543 = vadd.f32 %v3541, %v3542
        %v3544 = vsel %vm3528, %v3432, 0.0
        %v3545 = vadd.f32 %v3543, %v3544
        %v3546 = vsel %vm3528, %v3435, 0.0
        %v3547 = vadd.f32 %v3545, %v3546
        %v3548 = vsel %vm3528, %v3440, 0.0
        %v3549 = vadd.f32 %v3547, %v3548
        %v3550 = vsel %vm3528, %v3443, 0.0
        %v3551 = vadd.f32 %v3549, %v3550
        %v3552 = vsel %vm3528, %v3448, 0.0
        %v3553 = vadd.f32 %v3551, %v3552
        %v3554 = vsel %vm3528, %v3451, 0.0
        %v3555 = vadd.f32 %v3553, %v3554
        %v3556 = vsel %vm3528, %v3456, 0.0
        %v3557 = vadd.f32 %v3555, %v3556
        %v3558 = vsel %vm3528, %v3459, 0.0
        %v3559 = vadd.f32 %v3557, %v3558
        %v3560 = vsel %vm3528, %v3464, 0.0
        %v3561 = vadd.f32 %v3559, %v3560
        %v3562 = vsel %vm3528, %v3467, 0.0
        %v3563 = vadd.f32 %v3561, %v3562
        %v3564 = vsel %vm3528, %v3472, 0.0
        %v3565 = vadd.f32 %v3563, %v3564
        %v3566 = vsel %vm3528, %v3475, 0.0
        %v3567 = vadd.f32 %v3565, %v3566
        %v3568 = vsel %vm3528, %v3480, 0.0
        %v3569 = vadd.f32 %v3567, %v3568
        %v3570 = vsel %vm3528, %v3483, 0.0
        %v3571 = vadd.f32 %v3569, %v3570
        %v3572 = vsel %vm3528, %v3488, 0.0
        %v3573 = vadd.f32 %v3571, %v3572
        %v3574 = vsel %vm3528, %v3491, 0.0
        %v3575 = vadd.f32 %v3573, %v3574
        %v3576 = vsel %vm3528, %v3496, 0.0
        %v3577 = vadd.f32 %v3575, %v3576
        %v3578 = vsel %vm3528, %v3499, 0.0
        %v3579 = vadd.f32 %v3577, %v3578
        %v3580 = vsel %vm3528, %v3504, 0.0
        %v3581 = vadd.f32 %v3579, %v3580
        %v3582 = vsel %vm3528, %v3507, 0.0
        %v3583 = vadd.f32 %v3581, %v3582
        %v3584 = vsel %vm3528, %v3512, 0.0
        %v3585 = vadd.f32 %v3583, %v3584
        %v3586 = vsel %vm3528, %v3515, 0.0
        %v3587 = vadd.f32 %v3585, %v3586
        %v3588 = vsel %vm3528, %v3520, 0.0
        %v3589 = vadd.f32 %v3587, %v3588
        %v3590 = vsel %vm3528, %v3523, 0.0
        %v3591 = vadd.f32 %v3589, %v3590
        %v3592 = vrot.slane %v3591, 4
        %v3593 = vadd.f32 %v3591, %v3592
        %v3594 = vrot.slane %v3593, 2
        %v3595 = vadd.f32 %v3593, %v3594
        %v3596 = vrot.slane %v3595, 1
        %v3597 = vadd.f32 %v3595, %v3596
        %vm3598 = vcmask 778240
        %3599 = vst.msk [vmem:[#allocation3] sm:$0x1] %vm3598, 0.0
        %3601 = vrot.lane.b32.xlu0 %v3597, 16
        %v3602 = vpop.permute.xlu0 %3601
        %vm3604 = vcmask 647296
        %3605 = vst.msk [vmem:[#allocation3] sm:$0x1] %vm3604, %v3602
        %v3606 = vlaneseq
        %v3607 = vand.u32 %v3606, 127
        %vm3608 = vcmp.lt.s32.totalorder %v3607, 0
        %v3609 = vsub.s32 0, %v3607
        %v3610 = vsel %vm3608, %v3609, %v3607
        %v3611 = vshrl.u32 %v3610, 1
        %v3612 = vand.u32 %v3610, 1
        %v3613 = vsub.s32 0, %v3612
        %v3614 = vsel %vm3608, %v3613, %v3612
        %vm3615 = vcmp.ne.s32.totalorder %v3614, 0
        %vm3616 = vcmp.lt.s32.totalorder %v3614, 0
        %vm3617 = vmand %vm3616, %vm3615
        %v3618 = vadd.s32 %v3614, 2
        %v3619 = vsel %vm3617, %v3618, %v3614
        %v3620 = vld [vmem:[#allocation3] sm:$0x1]
        %vm3621 = vcmp.lt.s32.totalorder %v3619, 1
        %v3623 = vlaneseq
        %v3624 = vshrl.u32 %v3623, 7
        %v3625 = vsub.s32 0, %v3624
        %v3626 = vrot.slane %v3620, %v3625
        %3627 = vrot.lane.b32.xlu0 %v3626, 111
        %v3628 = vpop.permute.xlu0 %3627
        %v3630 = vsel %vm3621, %v3628, 0.0
        %v3631 = vadd.f32 %v3597, %v3630
        %vm3632 = vcmp.ge.s32.totalorder %v3619, 1
        %3633 = vrot.lane.b32.xlu0 %v3626, 113
        %v3634 = vpop.permute.xlu0 %3633
        %v3636 = vsel %vm3632, %v3634, 0.0
        %v3637 = vadd.f32 %v3631, %v3636
        %v3638 = vmul.f32 %v3637, 0.001953125
        %v3639 = vlaneseq
        %v3640 = vshrl.u32 %v3639, 7
        %v3641 = vsub.s32 0, %v3640
        %v3642 = vrot.slane %v3638, %v3641
        %v3643 = vsub.f32 %v3400, %v3642
        %v3644 = vsub.f32 %v3403, %v3642
        %v3645 = vsub.f32 %v3408, %v3642
        %v3646 = vsub.f32 %v3411, %v3642
        %v3647 = vsub.f32 %v3416, %v3642
        %v3648 = vsub.f32 %v3419, %v3642
        %v3649 = vsub.f32 %v3424, %v3642
        %v3650 = vsub.f32 %v3427, %v3642
        %v3651 = vsub.f32 %v3432, %v3642
        %v3652 = vsub.f32 %v3435, %v3642
        %v3653 = vsub.f32 %v3440, %v3642
        %v3654 = vsub.f32 %v3443, %v3642
        %v3655 = vsub.f32 %v3448, %v3642
        %v3656 = vsub.f32 %v3451, %v3642
        %v3657 = vsub.f32 %v3456, %v3642
        %v3658 = vsub.f32 %v3459, %v3642
        %v3659 = vsub.f32 %v3464, %v3642
        %v3660 = vsub.f32 %v3467, %v3642
        %v3661 = vsub.f32 %v3472, %v3642
        %v3662 = vsub.f32 %v3475, %v3642
        %v3663 = vsub.f32 %v3480, %v3642
        %v3664 = vsub.f32 %v3483, %v3642
        %v3665 = vsub.f32 %v3488, %v3642
        %v3666 = vsub.f32 %v3491, %v3642
        %v3667 = vsub.f32 %v3496, %v3642
        %v3668 = vsub.f32 %v3499, %v3642
        %v3669 = vsub.f32 %v3504, %v3642
        %v3670 = vsub.f32 %v3507, %v3642
        %v3671 = vsub.f32 %v3512, %v3642
        %v3672 = vsub.f32 %v3515, %v3642
        %v3673 = vsub.f32 %v3520, %v3642
        %v3674 = vsub.f32 %v3523, %v3642
        %v3675 = vmul.f32 %v3643, %v3643
        %v3676 = vmul.f32 %v3644, %v3644
        %v3677 = vmul.f32 %v3645, %v3645
        %v3678 = vmul.f32 %v3646, %v3646
        %v3679 = vmul.f32 %v3647, %v3647
        %v3680 = vmul.f32 %v3648, %v3648
        %v3681 = vmul.f32 %v3649, %v3649
        %v3682 = vmul.f32 %v3650, %v3650
        %v3683 = vmul.f32 %v3651, %v3651
        %v3684 = vmul.f32 %v3652, %v3652
        %v3685 = vmul.f32 %v3653, %v3653
        %v3686 = vmul.f32 %v3654, %v3654
        %v3687 = vmul.f32 %v3655, %v3655
        %v3688 = vmul.f32 %v3656, %v3656
        %v3689 = vmul.f32 %v3657, %v3657
        %v3690 = vmul.f32 %v3658, %v3658
        %v3691 = vmul.f32 %v3659, %v3659
        %v3692 = vmul.f32 %v3660, %v3660
        %v3693 = vmul.f32 %v3661, %v3661
        %v3694 = vmul.f32 %v3662, %v3662
        %v3695 = vmul.f32 %v3663, %v3663
        %v3696 = vmul.f32 %v3664, %v3664
        %v3697 = vmul.f32 %v3665, %v3665
        %v3698 = vmul.f32 %v3666, %v3666
        %v3699 = vmul.f32 %v3667, %v3667
        %v3700 = vmul.f32 %v3668, %v3668
        %v3701 = vmul.f32 %v3669, %v3669
        %v3702 = vmul.f32 %v3670, %v3670
        %v3703 = vmul.f32 %v3671, %v3671
        %v3704 = vmul.f32 %v3672, %v3672
        %v3705 = vmul.f32 %v3673, %v3673
        %v3706 = vmul.f32 %v3674, %v3674
        %v3707 = vsel %vm3528, %v3675, 0.0
        %v3708 = vsel %vm3528, %v3676, 0.0
        %v3709 = vadd.f32 %v3707, %v3708
        %v3710 = vsel %vm3528, %v3677, 0.0
        %v3711 = vadd.f32 %v3709, %v3710
        %v3712 = vsel %vm3528, %v3678, 0.0
        %v3713 = vadd.f32 %v3711, %v3712
        %v3714 = vsel %vm3528, %v3679, 0.0
        %v3715 = vadd.f32 %v3713, %v3714
        %v3716 = vsel %vm3528, %v3680, 0.0
        %v3717 = vadd.f32 %v3715, %v3716
        %v3718 = vsel %vm3528, %v3681, 0.0
        %v3719 = vadd.f32 %v3717, %v3718
        %v3720 = vsel %vm3528, %v3682, 0.0
        %v3721 = vadd.f32 %v3719, %v3720
        %v3722 = vsel %vm3528, %v3683, 0.0
        %v3723 = vadd.f32 %v3721, %v3722
        %v3724 = vsel %vm3528, %v3684, 0.0
        %v3725 = vadd.f32 %v3723, %v3724
        %v3726 = vsel %vm3528, %v3685, 0.0
        %v3727 = vadd.f32 %v3725, %v3726
        %v3728 = vsel %vm3528, %v3686, 0.0
        %v3729 = vadd.f32 %v3727, %v3728
        %v3730 = vsel %vm3528, %v3687, 0.0
        %v3731 = vadd.f32 %v3729, %v3730
        %v3732 = vsel %vm3528, %v3688, 0.0
        %v3733 = vadd.f32 %v3731, %v3732
        %v3734 = vsel %vm3528, %v3689, 0.0
        %v3735 = vadd.f32 %v3733, %v3734
        %v3736 = vsel %vm3528, %v3690, 0.0
        %v3737 = vadd.f32 %v3735, %v3736
        %v3738 = vsel %vm3528, %v3691, 0.0
        %v3739 = vadd.f32 %v3737, %v3738
        %v3740 = vsel %vm3528, %v3692, 0.0
        %v3741 = vadd.f32 %v3739, %v3740
        %v3742 = vsel %vm3528, %v3693, 0.0
        %v3743 = vadd.f32 %v3741, %v3742
        %v3744 = vsel %vm3528, %v3694, 0.0
        %v3745 = vadd.f32 %v3743, %v3744
        %v3746 = vsel %vm3528, %v3695, 0.0
        %v3747 = vadd.f32 %v3745, %v3746
        %v3748 = vsel %vm3528, %v3696, 0.0
        %v3749 = vadd.f32 %v3747, %v3748
        %v3750 = vsel %vm3528, %v3697, 0.0
        %v3751 = vadd.f32 %v3749, %v3750
        %v3752 = vsel %vm3528, %v3698, 0.0
        %v3753 = vadd.f32 %v3751, %v3752
        %v3754 = vsel %vm3528, %v3699, 0.0
        %v3755 = vadd.f32 %v3753, %v3754
        %v3756 = vsel %vm3528, %v3700, 0.0
        %v3757 = vadd.f32 %v3755, %v3756
        %v3758 = vsel %vm3528, %v3701, 0.0
        %v3759 = vadd.f32 %v3757, %v3758
        %v3760 = vsel %vm3528, %v3702, 0.0
        %v3761 = vadd.f32 %v3759, %v3760
        %v3762 = vsel %vm3528, %v3703, 0.0
        %v3763 = vadd.f32 %v3761, %v3762
        %v3764 = vsel %vm3528, %v3704, 0.0
        %v3765 = vadd.f32 %v3763, %v3764
        %v3766 = vsel %vm3528, %v3705, 0.0
        %v3767 = vadd.f32 %v3765, %v3766
        %v3768 = vsel %vm3528, %v3706, 0.0
        %v3769 = vadd.f32 %v3767, %v3768
        %v3770 = vrot.slane %v3769, 4
        %v3771 = vadd.f32 %v3769, %v3770
        %v3772 = vrot.slane %v3771, 2
        %v3773 = vadd.f32 %v3771, %v3772
        %v3774 = vrot.slane %v3773, 1
        %v3775 = vadd.f32 %v3773, %v3774
        %3776 = vst.msk [vmem:[#allocation3] sm:$0x1] %vm3598, 0.0
        %3778 = vrot.lane.b32.xlu0 %v3775, 16
        %v3779 = vpop.permute.xlu0 %3778
        %3781 = vst.msk [vmem:[#allocation3] sm:$0x1] %vm3604, %v3779
        %v3782 = vld [vmem:[#allocation3] sm:$0x1]
        %v3784 = vlaneseq
        %v3785 = vshrl.u32 %v3784, 7
        %v3786 = vsub.s32 0, %v3785
        %v3787 = vrot.slane %v3782, %v3786
        %3788 = vrot.lane.b32.xlu0 %v3787, 111
        %v3789 = vpop.permute.xlu0 %3788
        %v3791 = vsel %vm3621, %v3789, 0.0
        %v3792 = vadd.f32 %v3775, %v3791
        %3793 = vrot.lane.b32.xlu0 %v3787, 113
        %v3794 = vpop.permute.xlu0 %3793
        %v3796 = vsel %vm3632, %v3794, 0.0
        %v3797 = vadd.f32 %v3792, %v3796
        %v3798 = vmul.f32 %v3797, 0.001953125
        %v3799 = vadd.f32 %v3798, 1e-06
        %v3800 = vrsqrt.pop %v3799
        %v3801 = vlaneseq
        %v3802 = vshrl.u32 %v3801, 7
        %v3803 = vsub.s32 0, %v3802
        %v3804 = vrot.slane %v3800, %v3803
        %v3805 = vmul.f32 %v3643, %v3804
        %v3806 = vmul.f32 %v3644, %v3804
        %v3807 = vmul.f32 %v3645, %v3804
        %v3808 = vmul.f32 %v3646, %v3804
        %v3809 = vmul.f32 %v3647, %v3804
        %v3810 = vmul.f32 %v3648, %v3804
        %v3811 = vmul.f32 %v3649, %v3804
        %v3812 = vmul.f32 %v3650, %v3804
        %v3813 = vmul.f32 %v3651, %v3804
        %v3814 = vmul.f32 %v3652, %v3804
        %v3815 = vmul.f32 %v3653, %v3804
        %v3816 = vmul.f32 %v3654, %v3804
        %v3817 = vmul.f32 %v3655, %v3804
        %v3818 = vmul.f32 %v3656, %v3804
        %v3819 = vmul.f32 %v3657, %v3804
        %v3820 = vmul.f32 %v3658, %v3804
        %v3821 = vmul.f32 %v3659, %v3804
        %v3822 = vmul.f32 %v3660, %v3804
        %v3823 = vmul.f32 %v3661, %v3804
        %v3824 = vmul.f32 %v3662, %v3804
        %v3825 = vmul.f32 %v3663, %v3804
        %v3826 = vmul.f32 %v3664, %v3804
        %v3827 = vmul.f32 %v3665, %v3804
        %v3828 = vmul.f32 %v3666, %v3804
        %v3829 = vmul.f32 %v3667, %v3804
        %v3830 = vmul.f32 %v3668, %v3804
        %v3831 = vmul.f32 %v3669, %v3804
        %v3832 = vmul.f32 %v3670, %v3804
        %v3833 = vmul.f32 %v3671, %v3804
        %v3834 = vmul.f32 %v3672, %v3804
        %v3835 = vmul.f32 %v3673, %v3804
        %v3836 = vmul.f32 %v3674, %v3804
        %v3838 = vlaneseq
        %v3839 = vshrl.u32 %v3838, 7
        %v3840 = vsub.s32 0, %v3839
        %v3841 = vrot.slane %v3526, %v3840
        %v3843 = vmul.f32 %v3805, %v3841
        %v3844 = vmul.f32 %v3806, %v3841
        %v3845 = vmul.f32 %v3807, %v3841
        %v3846 = vmul.f32 %v3808, %v3841
        %v3847 = vmul.f32 %v3809, %v3841
        %v3848 = vmul.f32 %v3810, %v3841
        %v3849 = vmul.f32 %v3811, %v3841
        %v3850 = vmul.f32 %v3812, %v3841
        %v3851 = vmul.f32 %v3813, %v3841
        %v3852 = vmul.f32 %v3814, %v3841
        %v3853 = vmul.f32 %v3815, %v3841
        %v3854 = vmul.f32 %v3816, %v3841
        %v3855 = vmul.f32 %v3817, %v3841
        %v3856 = vmul.f32 %v3818, %v3841
        %v3857 = vmul.f32 %v3819, %v3841
        %v3858 = vmul.f32 %v3820, %v3841
        %v3859 = vmul.f32 %v3821, %v3841
        %v3860 = vmul.f32 %v3822, %v3841
        %v3861 = vmul.f32 %v3823, %v3841
        %v3862 = vmul.f32 %v3824, %v3841
        %v3863 = vmul.f32 %v3825, %v3841
        %v3864 = vmul.f32 %v3826, %v3841
        %v3865 = vmul.f32 %v3827, %v3841
        %v3866 = vmul.f32 %v3828, %v3841
        %v3867 = vmul.f32 %v3829, %v3841
        %v3868 = vmul.f32 %v3830, %v3841
        %v3869 = vmul.f32 %v3831, %v3841
        %v3870 = vmul.f32 %v3832, %v3841
        %v3871 = vmul.f32 %v3833, %v3841
        %v3872 = vmul.f32 %v3834, %v3841
        %v3873 = vmul.f32 %v3835, %v3841
        %v3874 = vmul.f32 %v3836, %v3841
        %v3876 = vlaneseq
        %v3877 = vshrl.u32 %v3876, 7
        %v3878 = vsub.s32 0, %v3877
        %v3879 = vrot.slane %v3527, %v3878
        %v3881 = vadd.f32 %v3843, %v3879
        %v3882 = vadd.f32 %v3844, %v3879
        %v3883 = vadd.f32 %v3845, %v3879
        %v3884 = vadd.f32 %v3846, %v3879
        %v3885 = vadd.f32 %v3847, %v3879
        %v3886 = vadd.f32 %v3848, %v3879
        %v3887 = vadd.f32 %v3849, %v3879
        %v3888 = vadd.f32 %v3850, %v3879
        %v3889 = vadd.f32 %v3851, %v3879
        %v3890 = vadd.f32 %v3852, %v3879
        %v3891 = vadd.f32 %v3853, %v3879
        %v3892 = vadd.f32 %v3854, %v3879
        %v3893 = vadd.f32 %v3855, %v3879
        %v3894 = vadd.f32 %v3856, %v3879
        %v3895 = vadd.f32 %v3857, %v3879
        %v3896 = vadd.f32 %v3858, %v3879
        %v3897 = vadd.f32 %v3859, %v3879
        %v3898 = vadd.f32 %v3860, %v3879
        %v3899 = vadd.f32 %v3861, %v3879
        %v3900 = vadd.f32 %v3862, %v3879
        %v3901 = vadd.f32 %v3863, %v3879
        %v3902 = vadd.f32 %v3864, %v3879
        %v3903 = vadd.f32 %v3865, %v3879
        %v3904 = vadd.f32 %v3866, %v3879
        %v3905 = vadd.f32 %v3867, %v3879
        %v3906 = vadd.f32 %v3868, %v3879
        %v3907 = vadd.f32 %v3869, %v3879
        %v3908 = vadd.f32 %v3870, %v3879
        %v3909 = vadd.f32 %v3871, %v3879
        %v3910 = vadd.f32 %v3872, %v3879
        %v3911 = vadd.f32 %v3873, %v3879
        %v3912 = vadd.f32 %v3874, %v3879
        %v3913 = vmul.f32 %v3881, 0.5
        %v3914 = vmul.f32 %v3882, 0.5
        %v3915 = vmul.f32 %v3883, 0.5
        %v3916 = vmul.f32 %v3884, 0.5
        %v3917 = vmul.f32 %v3885, 0.5
        %v3918 = vmul.f32 %v3886, 0.5
        %v3919 = vmul.f32 %v3887, 0.5
        %v3920 = vmul.f32 %v3888, 0.5
        %v3921 = vmul.f32 %v3889, 0.5
        %v3922 = vmul.f32 %v3890, 0.5
        %v3923 = vmul.f32 %v3891, 0.5
        %v3924 = vmul.f32 %v3892, 0.5
        %v3925 = vmul.f32 %v3893, 0.5
        %v3926 = vmul.f32 %v3894, 0.5
        %v3927 = vmul.f32 %v3895, 0.5
        %v3928 = vmul.f32 %v3896, 0.5
        %v3929 = vmul.f32 %v3897, 0.5
        %v3930 = vmul.f32 %v3898, 0.5
        %v3931 = vmul.f32 %v3899, 0.5
        %v3932 = vmul.f32 %v3900, 0.5
        %v3933 = vmul.f32 %v3901, 0.5
        %v3934 = vmul.f32 %v3902, 0.5
        %v3935 = vmul.f32 %v3903, 0.5
        %v3936 = vmul.f32 %v3904, 0.5
        %v3937 = vmul.f32 %v3905, 0.5
        %v3938 = vmul.f32 %v3906, 0.5
        %v3939 = vmul.f32 %v3907, 0.5
        %v3940 = vmul.f32 %v3908, 0.5
        %v3941 = vmul.f32 %v3909, 0.5
        %v3942 = vmul.f32 %v3910, 0.5
        %v3943 = vmul.f32 %v3911, 0.5
        %v3944 = vmul.f32 %v3912, 0.5
        %v3945 = vtanh.pop %v3913
        %v3946 = vtanh.pop %v3914
        %v3947 = vtanh.pop %v3915
        %v3948 = vtanh.pop %v3916
        %v3949 = vtanh.pop %v3917
        %v3950 = vtanh.pop %v3918
        %v3951 = vtanh.pop %v3919
        %v3952 = vtanh.pop %v3920
        %v3953 = vtanh.pop %v3921
        %v3954 = vtanh.pop %v3922
        %v3955 = vtanh.pop %v3923
        %v3956 = vtanh.pop %v3924
        %v3957 = vtanh.pop %v3925
        %v3958 = vtanh.pop %v3926
        %v3959 = vtanh.pop %v3927
        %v3960 = vtanh.pop %v3928
        %v3961 = vtanh.pop %v3929
        %v3962 = vtanh.pop %v3930
        %v3963 = vtanh.pop %v3931
        %v3964 = vtanh.pop %v3932
        %v3965 = vtanh.pop %v3933
        %v3966 = vtanh.pop %v3934
        %v3967 = vtanh.pop %v3935
        %v3968 = vtanh.pop %v3936
        %v3969 = vtanh.pop %v3937
        %v3970 = vtanh.pop %v3938
        %v3971 = vtanh.pop %v3939
        %v3972 = vtanh.pop %v3940
        %v3973 = vtanh.pop %v3941
        %v3974 = vtanh.pop %v3942
        %v3975 = vtanh.pop %v3943
        %v3976 = vtanh.pop %v3944
        %v3977 = vadd.f32 %v3945, 1.0
        %v3978 = vadd.f32 %v3946, 1.0
        %v3979 = vadd.f32 %v3947, 1.0
        %v3980 = vadd.f32 %v3948, 1.0
        %v3981 = vadd.f32 %v3949, 1.0
        %v3982 = vadd.f32 %v3950, 1.0
        %v3983 = vadd.f32 %v3951, 1.0
        %v3984 = vadd.f32 %v3952, 1.0
        %v3985 = vadd.f32 %v3953, 1.0
        %v3986 = vadd.f32 %v3954, 1.0
        %v3987 = vadd.f32 %v3955, 1.0
        %v3988 = vadd.f32 %v3956, 1.0
        %v3989 = vadd.f32 %v3957, 1.0
        %v3990 = vadd.f32 %v3958, 1.0
        %v3991 = vadd.f32 %v3959, 1.0
        %v3992 = vadd.f32 %v3960, 1.0
        %v3993 = vadd.f32 %v3961, 1.0
        %v3994 = vadd.f32 %v3962, 1.0
        %v3995 = vadd.f32 %v3963, 1.0
        %v3996 = vadd.f32 %v3964, 1.0
        %v3997 = vadd.f32 %v3965, 1.0
        %v3998 = vadd.f32 %v3966, 1.0
        %v3999 = vadd.f32 %v3967, 1.0
        %v4000 = vadd.f32 %v3968, 1.0
        %v4001 = vadd.f32 %v3969, 1.0
        %v4002 = vadd.f32 %v3970, 1.0
        %v4003 = vadd.f32 %v3971, 1.0
        %v4004 = vadd.f32 %v3972, 1.0
        %v4005 = vadd.f32 %v3973, 1.0
        %v4006 = vadd.f32 %v3974, 1.0
        %v4007 = vadd.f32 %v3975, 1.0
        %v4008 = vadd.f32 %v3976, 1.0
        %v4009 = vmul.f32 %v3977, 0.5
        %v4010 = vmul.f32 %v3978, 0.5
        %v4011 = vmul.f32 %v3979, 0.5
        %v4012 = vmul.f32 %v3980, 0.5
        %v4013 = vmul.f32 %v3981, 0.5
        %v4014 = vmul.f32 %v3982, 0.5
        %v4015 = vmul.f32 %v3983, 0.5
        %v4016 = vmul.f32 %v3984, 0.5
        %v4017 = vmul.f32 %v3985, 0.5
        %v4018 = vmul.f32 %v3986, 0.5
        %v4019 = vmul.f32 %v3987, 0.5
        %v4020 = vmul.f32 %v3988, 0.5
        %v4021 = vmul.f32 %v3989, 0.5
        %v4022 = vmul.f32 %v3990, 0.5
        %v4023 = vmul.f32 %v3991, 0.5
        %v4024 = vmul.f32 %v3992, 0.5
        %v4025 = vmul.f32 %v3993, 0.5
        %v4026 = vmul.f32 %v3994, 0.5
        %v4027 = vmul.f32 %v3995, 0.5
        %v4028 = vmul.f32 %v3996, 0.5
        %v4029 = vmul.f32 %v3997, 0.5
        %v4030 = vmul.f32 %v3998, 0.5
        %v4031 = vmul.f32 %v3999, 0.5
        %v4032 = vmul.f32 %v4000, 0.5
        %v4033 = vmul.f32 %v4001, 0.5
        %v4034 = vmul.f32 %v4002, 0.5
        %v4035 = vmul.f32 %v4003, 0.5
        %v4036 = vmul.f32 %v4004, 0.5
        %v4037 = vmul.f32 %v4005, 0.5
        %v4038 = vmul.f32 %v4006, 0.5
        %v4039 = vmul.f32 %v4007, 0.5
        %v4040 = vmul.f32 %v4008, 0.5
        %v4041 = vmul.f32 %v3881, %v4009
        %v4042 = vmul.f32 %v3882, %v4010
        %v4043 = vmul.f32 %v3883, %v4011
        %v4044 = vmul.f32 %v3884, %v4012
        %v4045 = vmul.f32 %v3885, %v4013
        %v4046 = vmul.f32 %v3886, %v4014
        %v4047 = vmul.f32 %v3887, %v4015
        %v4048 = vmul.f32 %v3888, %v4016
        %v4049 = vmul.f32 %v3889, %v4017
        %v4050 = vmul.f32 %v3890, %v4018
        %v4051 = vmul.f32 %v3891, %v4019
        %v4052 = vmul.f32 %v3892, %v4020
        %v4053 = vmul.f32 %v3893, %v4021
        %v4054 = vmul.f32 %v3894, %v4022
        %v4055 = vmul.f32 %v3895, %v4023
        %v4056 = vmul.f32 %v3896, %v4024
        %v4057 = vmul.f32 %v3897, %v4025
        %v4058 = vmul.f32 %v3898, %v4026
        %v4059 = vmul.f32 %v3899, %v4027
        %v4060 = vmul.f32 %v3900, %v4028
        %v4061 = vmul.f32 %v3901, %v4029
        %v4062 = vmul.f32 %v3902, %v4030
        %v4063 = vmul.f32 %v3903, %v4031
        %v4064 = vmul.f32 %v3904, %v4032
        %v4065 = vmul.f32 %v3905, %v4033
        %v4066 = vmul.f32 %v3906, %v4034
        %v4067 = vmul.f32 %v3907, %v4035
        %v4068 = vmul.f32 %v3908, %v4036
        %v4069 = vmul.f32 %v3909, %v4037
        %v4070 = vmul.f32 %v3910, %v4038
        %v4071 = vmul.f32 %v3911, %v4039
        %v4072 = vmul.f32 %v3912, %v4040
        %v4073 = vld [vmem:[%s8] sm:$0x1]
        %v4074 = vpack.c.bf16 %v4042, %v4041
        %v4075 = vpack.c.bf16 %v4044, %v4043
        %v4076 = vpack.c.bf16 %v4046, %v4045
        %v4077 = vpack.c.bf16 %v4048, %v4047
        %v4078 = vpack.c.bf16 %v4050, %v4049
        %v4079 = vpack.c.bf16 %v4052, %v4051
        %v4080 = vpack.c.bf16 %v4054, %v4053
        %v4081 = vpack.c.bf16 %v4056, %v4055
        %v4082 = vpack.c.bf16 %v4058, %v4057
        %v4083 = vpack.c.bf16 %v4060, %v4059
        %v4084 = vpack.c.bf16 %v4062, %v4061
        %v4085 = vpack.c.bf16 %v4064, %v4063
        %v4086 = vpack.c.bf16 %v4066, %v4065
        %v4087 = vpack.c.bf16 %v4068, %v4067
        %v4088 = vpack.c.bf16 %v4070, %v4069
        %v4089 = vpack.c.bf16 %v4072, %v4071
        %4090 = vst [vmem:[#allocation2 + $0x28] sm:$0xf0] 0
        %4091 = vst [vmem:[#allocation2 + $0x30] sm:$0xf0] 0
        %v4092 = vld [vmem:[#allocation2 + $0x50] sm:$0x1f]
        %v4093 = vsel %vm1438, 0, %v4092
        %4094 = vst [vmem:[#allocation2 + $0x50] sm:$0x1f] %v4093
        %v4095 = vld [vmem:[#allocation2 + $0x58] sm:$0x1f]
        %v4096 = vsel %vm1438, 0, %v4095
        %4097 = vst [vmem:[#allocation2 + $0x58] sm:$0x1f] %v4096
        %vm4098 = vcmask 1048067
        %vm4099 = vmand %vm4098, %vm1443
        %v4100 = vld [vmem:[#allocation2 + $0x290] sm:$0xf8]
        %v4101 = vsel %vm4099, 0, %v4100
        %4102 = vst [vmem:[#allocation2 + $0x290] sm:$0xf8] %v4101
        %vm4103 = vcmask 1047555
        %vm4104 = vmand %vm4103, %vm1443
        %v4105 = vld [vmem:[#allocation2 + $0x298] sm:$0xf8]
        %v4106 = vsel %vm4104, 0, %v4105
        %4107 = vst [vmem:[#allocation2 + $0x298] sm:$0xf8] %v4106
        %vm4108 = vcmask 523267
        %vm4109 = vmand %vm4108, %vm1443
        %v4110 = vld [vmem:[#allocation2 + $0x2a0] sm:$0xf8]
        %v4111 = vsel %vm4109, 0, %v4110
        %4112 = vst [vmem:[#allocation2 + $0x2a0] sm:$0xf8] %v4111
        %vm4113 = vcmask 1043968
        %4114 = vst.msk [vmem:[#allocation2 + $0x2b8] sm:$0xf] %vm4113, 0
        %4115 = vst [vmem:[#allocation2 + $0x2c0] sm:$0xf] 0
        %vm4116 = vcmask 519168
        %4117 = vst.msk [vmem:[#allocation2 + $0x2c8] sm:$0xf] %vm4116, 0
        %v4118 = vsel %vm1633, %v4074, 0
        %v4119 = vsel %vm1634, %v4075, 0
        %v4120 = vsel %vm1635, %v4076, 0
        %v4121 = vsel %vm1636, %v4077, 0
        %v4122 = vsel %vm1637, %v4078, 0
        %v4123 = vsel %vm1638, %v4079, 0
        %v4124 = vsel %vm1639, %v4080, 0
        %v4125 = vsel %vm1640, %v4081, 0
        %v4126 = vsel %vm1641, %v4082, 0
        %v4127 = vsel %vm1642, %v4083, 0
        %v4128 = vsel %vm1643, %v4084, 0
        %v4129 = vsel %vm1644, %v4085, 0
        %v4130 = vsel %vm1645, %v4086, 0
        %v4131 = vsel %vm1646, %v4087, 0
        %v4132 = vsel %vm1647, %v4088, 0
        %v4133 = vsel %vm1648, %v4089, 0
        %v4134 = vsel %vm1841, %v4074, 0
        %v4135 = vsel %vm1842, %v4075, 0
        %v4136 = vsel %vm1843, %v4076, 0
        %v4137 = vsel %vm1844, %v4077, 0
        %v4138 = vsel %vm1845, %v4078, 0
        %v4139 = vsel %vm1846, %v4079, 0
        %v4140 = vsel %vm1847, %v4080, 0
        %v4141 = vsel %vm1848, %v4081, 0
        %v4142 = vsel %vm1849, %v4082, 0
        %v4143 = vsel %vm1850, %v4083, 0
        %v4144 = vsel %vm1851, %v4084, 0
        %v4145 = vsel %vm1852, %v4085, 0
        %v4146 = vsel %vm1853, %v4086, 0
        %v4147 = vsel %vm1854, %v4087, 0
        %v4148 = vsel %vm1855, %v4088, 0
        %v4149 = vsel %vm1856, %v4089, 0
        %v4151 = vshrl.u32 %v4118, 16
        %v4153 = vrot.slane %v4151, 3
        %v4154 = vshll.u32 %v4118, 16
        %v4156 = vrot.slane %v4154, 4
        %v4157 = vor.u32 %v4153, %v4156
        %v4159 = vshrl.u32 %v4119, 16
        %v4161 = vrot.slane %v4159, 3
        %v4162 = vshll.u32 %v4119, 16
        %v4164 = vrot.slane %v4162, 4
        %v4165 = vor.u32 %v4161, %v4164
        %v4166 = vsel %vm1437, %v4157, %v4165
        %v4168 = vshrl.u32 %v4120, 16
        %v4170 = vrot.slane %v4168, 3
        %v4171 = vshll.u32 %v4120, 16
        %v4173 = vrot.slane %v4171, 4
        %v4174 = vor.u32 %v4170, %v4173
        %v4175 = vsel %vm1437, %v4165, %v4174
        %v4177 = vshrl.u32 %v4121, 16
        %v4179 = vrot.slane %v4177, 3
        %v4180 = vshll.u32 %v4121, 16
        %v4182 = vrot.slane %v4180, 4
        %v4183 = vor.u32 %v4179, %v4182
        %v4184 = vsel %vm1437, %v4174, %v4183
        %v4186 = vshrl.u32 %v4122, 16
        %v4188 = vrot.slane %v4186, 3
        %v4189 = vshll.u32 %v4122, 16
        %v4191 = vrot.slane %v4189, 4
        %v4192 = vor.u32 %v4188, %v4191
        %v4193 = vsel %vm1437, %v4183, %v4192
        %v4195 = vshrl.u32 %v4123, 16
        %v4197 = vrot.slane %v4195, 3
        %v4198 = vshll.u32 %v4123, 16
        %v4200 = vrot.slane %v4198, 4
        %v4201 = vor.u32 %v4197, %v4200
        %v4202 = vsel %vm1437, %v4192, %v4201
        %v4204 = vshrl.u32 %v4124, 16
        %v4206 = vrot.slane %v4204, 3
        %v4207 = vshll.u32 %v4124, 16
        %v4209 = vrot.slane %v4207, 4
        %v4210 = vor.u32 %v4206, %v4209
        %v4211 = vsel %vm1437, %v4201, %v4210
        %v4213 = vshrl.u32 %v4125, 16
        %v4215 = vrot.slane %v4213, 3
        %v4216 = vshll.u32 %v4125, 16
        %v4218 = vrot.slane %v4216, 4
        %v4219 = vor.u32 %v4215, %v4218
        %v4220 = vsel %vm1437, %v4210, %v4219
        %v4222 = vshrl.u32 %v4126, 16
        %v4224 = vrot.slane %v4222, 3
        %v4225 = vshll.u32 %v4126, 16
        %v4227 = vrot.slane %v4225, 4
        %v4228 = vor.u32 %v4224, %v4227
        %v4229 = vsel %vm1437, %v4219, %v4228
        %v4231 = vshrl.u32 %v4127, 16
        %v4233 = vrot.slane %v4231, 3
        %v4234 = vshll.u32 %v4127, 16
        %v4236 = vrot.slane %v4234, 4
        %v4237 = vor.u32 %v4233, %v4236
        %v4238 = vsel %vm1437, %v4228, %v4237
        %v4240 = vshrl.u32 %v4128, 16
        %v4242 = vrot.slane %v4240, 3
        %v4243 = vshll.u32 %v4128, 16
        %v4245 = vrot.slane %v4243, 4
        %v4246 = vor.u32 %v4242, %v4245
        %v4247 = vsel %vm1437, %v4237, %v4246
        %v4249 = vshrl.u32 %v4129, 16
        %v4251 = vrot.slane %v4249, 3
        %v4252 = vshll.u32 %v4129, 16
        %v4254 = vrot.slane %v4252, 4
        %v4255 = vor.u32 %v4251, %v4254
        %v4256 = vsel %vm1437, %v4246, %v4255
        %v4258 = vshrl.u32 %v4130, 16
        %v4260 = vrot.slane %v4258, 3
        %v4261 = vshll.u32 %v4130, 16
        %v4263 = vrot.slane %v4261, 4
        %v4264 = vor.u32 %v4260, %v4263
        %v4265 = vsel %vm1437, %v4255, %v4264
        %v4267 = vshrl.u32 %v4131, 16
        %v4269 = vrot.slane %v4267, 3
        %v4270 = vshll.u32 %v4131, 16
        %v4272 = vrot.slane %v4270, 4
        %v4273 = vor.u32 %v4269, %v4272
        %v4274 = vsel %vm1437, %v4264, %v4273
        %v4276 = vshrl.u32 %v4132, 16
        %v4278 = vrot.slane %v4276, 3
        %v4279 = vshll.u32 %v4132, 16
        %v4281 = vrot.slane %v4279, 4
        %v4282 = vor.u32 %v4278, %v4281
        %v4283 = vsel %vm1437, %v4273, %v4282
        %v4285 = vshrl.u32 %v4133, 16
        %v4287 = vrot.slane %v4285, 3
        %v4288 = vshll.u32 %v4133, 16
        %v4290 = vrot.slane %v4288, 4
        %v4291 = vor.u32 %v4287, %v4290
        %v4292 = vsel %vm1437, %v4282, %v4291
        %vm4310 = vcmask 523268
        %vm4311 = vmand %vm4310, %vm2034
        %v4312 = vld [vmem:[#allocation2 + $0x50] sm:$0xf0]
        %v4313 = vsel %vm4311, %v4157, %v4312
        %4314 = vst [vmem:[#allocation2 + $0x50] sm:$0xf0] %v4313
        %4315 = vst.msk [vmem:[#allocation2 + $0x78] sm:$0xff] %vm3528, %v4166
        %4316 = vst.msk [vmem:[#allocation2 + $0xa0] sm:$0xff] %vm3528, %v4175
        %4317 = vst.msk [vmem:[#allocation2 + $0xc8] sm:$0xff] %vm3528, %v4184
        %4318 = vst.msk [vmem:[#allocation2 + $0xf0] sm:$0xff] %vm3528, %v4193
        %4319 = vst.msk [vmem:[#allocation2 + $0x118] sm:$0xff] %vm3528, %v4202
        %4320 = vst.msk [vmem:[#allocation2 + $0x140] sm:$0xff] %vm3528, %v4211
        %4321 = vst.msk [vmem:[#allocation2 + $0x168] sm:$0xff] %vm3528, %v4220
        %4322 = vst.msk [vmem:[#allocation2 + $0x190] sm:$0xff] %vm3528, %v4229
        %4323 = vst.msk [vmem:[#allocation2 + $0x1b8] sm:$0xff] %vm3528, %v4238
        %4324 = vst.msk [vmem:[#allocation2 + $0x1e0] sm:$0xff] %vm3528, %v4247
        %4325 = vst.msk [vmem:[#allocation2 + $0x208] sm:$0xff] %vm3528, %v4256
        %4326 = vst.msk [vmem:[#allocation2 + $0x230] sm:$0xff] %vm3528, %v4265
        %4327 = vst.msk [vmem:[#allocation2 + $0x258] sm:$0xff] %vm3528, %v4274
        %4328 = vst.msk [vmem:[#allocation2 + $0x280] sm:$0xff] %vm3528, %v4283
        %4329 = vst.msk [vmem:[#allocation2 + $0x2a8] sm:$0xff] %vm3528, %v4292
        %vm4330 = vcmask 520192
        %vm4331 = vmand %vm4330, %vm1437
        %v4332 = vld [vmem:[#allocation2 + $0x2d0] sm:$0x1f]
        %v4333 = vsel %vm4331, %v4291, %v4332
        %4334 = vst [vmem:[#allocation2 + $0x2d0] sm:$0x1f] %v4333
        %v4351 = vrot.slane %v4074, 4
        %v4352 = vrot.slane %v4075, 4
        %v4353 = vsel %vm2075, %v4351, %v4352
        %v4354 = vrot.slane %v4076, 4
        %v4355 = vsel %vm2075, %v4352, %v4354
        %v4356 = vrot.slane %v4077, 4
        %v4357 = vsel %vm2075, %v4354, %v4356
        %v4358 = vrot.slane %v4078, 4
        %v4359 = vsel %vm2075, %v4356, %v4358
        %v4360 = vrot.slane %v4079, 4
        %v4361 = vsel %vm2075, %v4358, %v4360
        %v4362 = vrot.slane %v4080, 4
        %v4363 = vsel %vm2075, %v4360, %v4362
        %v4364 = vrot.slane %v4081, 4
        %v4365 = vsel %vm2075, %v4362, %v4364
        %v4366 = vrot.slane %v4082, 4
        %v4367 = vsel %vm2075, %v4364, %v4366
        %v4368 = vrot.slane %v4083, 4
        %v4369 = vsel %vm2075, %v4366, %v4368
        %v4370 = vrot.slane %v4084, 4
        %v4371 = vsel %vm2075, %v4368, %v4370
        %v4372 = vrot.slane %v4085, 4
        %v4373 = vsel %vm2075, %v4370, %v4372
        %v4374 = vrot.slane %v4086, 4
        %v4375 = vsel %vm2075, %v4372, %v4374
        %v4376 = vrot.slane %v4087, 4
        %v4377 = vsel %vm2075, %v4374, %v4376
        %v4378 = vrot.slane %v4088, 4
        %v4379 = vsel %vm2075, %v4376, %v4378
        %v4380 = vrot.slane %v4089, 4
        %v4381 = vsel %vm2075, %v4378, %v4380
        %4382 = vrot.lane.b32.xlu0 %v4351, 64
        %v4383 = vpop.permute.xlu0 %4382
        %4384 = vrot.lane.b32.xlu0 %v4353, 64
        %v4385 = vpop.permute.xlu0 %4384
        %4386 = vrot.lane.b32.xlu0 %v4355, 64
        %v4387 = vpop.permute.xlu0 %4386
        %4388 = vrot.lane.b32.xlu0 %v4357, 64
        %v4389 = vpop.permute.xlu0 %4388
        %4390 = vrot.lane.b32.xlu0 %v4359, 64
        %v4391 = vpop.permute.xlu0 %4390
        %4392 = vrot.lane.b32.xlu0 %v4361, 64
        %v4393 = vpop.permute.xlu0 %4392
        %4394 = vrot.lane.b32.xlu0 %v4363, 64
        %v4395 = vpop.permute.xlu0 %4394
        %4396 = vrot.lane.b32.xlu0 %v4365, 64
        %v4397 = vpop.permute.xlu0 %4396
        %4398 = vrot.lane.b32.xlu0 %v4367, 64
        %v4399 = vpop.permute.xlu0 %4398
        %4400 = vrot.lane.b32.xlu0 %v4369, 64
        %v4401 = vpop.permute.xlu0 %4400
        %4402 = vrot.lane.b32.xlu0 %v4371, 64
        %v4403 = vpop.permute.xlu0 %4402
        %4404 = vrot.lane.b32.xlu0 %v4373, 64
        %v4405 = vpop.permute.xlu0 %4404
        %4406 = vrot.lane.b32.xlu0 %v4375, 64
        %v4407 = vpop.permute.xlu0 %4406
        %4408 = vrot.lane.b32.xlu0 %v4377, 64
        %v4409 = vpop.permute.xlu0 %4408
        %4410 = vrot.lane.b32.xlu0 %v4379, 64
        %v4411 = vpop.permute.xlu0 %4410
        %4412 = vrot.lane.b32.xlu0 %v4381, 64
        %v4413 = vpop.permute.xlu0 %4412
        %4414 = vrot.lane.b32.xlu0 %v4380, 64
        %v4415 = vpop.permute.xlu0 %4414
        %vm4433 = vcmask 1048068
        %4434 = vst.msk [vmem:[#allocation2 + $0x50] sm:$0xf0] %vm4433, %v4383
        %vm4435 = vcmask 1048064
        %4436 = vst.msk [vmem:[#allocation2 + $0x78] sm:$0xff] %vm4435, %v4385
        %4437 = vst.msk [vmem:[#allocation2 + $0xa0] sm:$0xff] %vm4435, %v4387
        %4438 = vst.msk [vmem:[#allocation2 + $0xc8] sm:$0xff] %vm4435, %v4389
        %4439 = vst.msk [vmem:[#allocation2 + $0xf0] sm:$0xff] %vm4435, %v4391
        %4440 = vst.msk [vmem:[#allocation2 + $0x118] sm:$0xff] %vm4435, %v4393
        %4441 = vst.msk [vmem:[#allocation2 + $0x140] sm:$0xff] %vm4435, %v4395
        %4442 = vst.msk [vmem:[#allocation2 + $0x168] sm:$0xff] %vm4435, %v4397
        %4443 = vst.msk [vmem:[#allocation2 + $0x190] sm:$0xff] %vm4435, %v4399
        %4444 = vst.msk [vmem:[#allocation2 + $0x1b8] sm:$0xff] %vm4435, %v4401
        %4445 = vst.msk [vmem:[#allocation2 + $0x1e0] sm:$0xff] %vm4435, %v4403
        %4446 = vst.msk [vmem:[#allocation2 + $0x208] sm:$0xff] %vm4435, %v4405
        %4447 = vst.msk [vmem:[#allocation2 + $0x230] sm:$0xff] %vm4435, %v4407
        %4448 = vst.msk [vmem:[#allocation2 + $0x258] sm:$0xff] %vm4435, %v4409
        %4449 = vst.msk [vmem:[#allocation2 + $0x280] sm:$0xff] %vm4435, %v4411
        %4450 = vst.msk [vmem:[#allocation2 + $0x2a8] sm:$0xff] %vm4435, %v4413
        %4451 = vst.msk [vmem:[#allocation2 + $0x2d0] sm:$0xf] %vm4113, %v4415
        %v4453 = vshrl.u32 %v4134, 16
        %v4455 = vrot.slane %v4453, 4
        %v4456 = vshll.u32 %v4134, 16
        %v4458 = vrot.slane %v4456, 5
        %v4459 = vor.u32 %v4455, %v4458
        %v4461 = vshrl.u32 %v4135, 16
        %v4463 = vrot.slane %v4461, 4
        %v4464 = vshll.u32 %v4135, 16
        %v4466 = vrot.slane %v4464, 5
        %v4467 = vor.u32 %v4463, %v4466
        %v4468 = vsel %vm2178, %v4459, %v4467
        %v4470 = vshrl.u32 %v4136, 16
        %v4472 = vrot.slane %v4470, 4
        %v4473 = vshll.u32 %v4136, 16
        %v4475 = vrot.slane %v4473, 5
        %v4476 = vor.u32 %v4472, %v4475
        %v4477 = vsel %vm2178, %v4467, %v4476
        %v4479 = vshrl.u32 %v4137, 16
        %v4481 = vrot.slane %v4479, 4
        %v4482 = vshll.u32 %v4137, 16
        %v4484 = vrot.slane %v4482, 5
        %v4485 = vor.u32 %v4481, %v4484
        %v4486 = vsel %vm2178, %v4476, %v4485
        %v4488 = vshrl.u32 %v4138, 16
        %v4490 = vrot.slane %v4488, 4
        %v4491 = vshll.u32 %v4138, 16
        %v4493 = vrot.slane %v4491, 5
        %v4494 = vor.u32 %v4490, %v4493
        %v4495 = vsel %vm2178, %v4485, %v4494
        %v4497 = vshrl.u32 %v4139, 16
        %v4499 = vrot.slane %v4497, 4
        %v4500 = vshll.u32 %v4139, 16
        %v4502 = vrot.slane %v4500, 5
        %v4503 = vor.u32 %v4499, %v4502
        %v4504 = vsel %vm2178, %v4494, %v4503
        %v4506 = vshrl.u32 %v4140, 16
        %v4508 = vrot.slane %v4506, 4
        %v4509 = vshll.u32 %v4140, 16
        %v4511 = vrot.slane %v4509, 5
        %v4512 = vor.u32 %v4508, %v4511
        %v4513 = vsel %vm2178, %v4503, %v4512
        %v4515 = vshrl.u32 %v4141, 16
        %v4517 = vrot.slane %v4515, 4
        %v4518 = vshll.u32 %v4141, 16
        %v4520 = vrot.slane %v4518, 5
        %v4521 = vor.u32 %v4517, %v4520
        %v4522 = vsel %vm2178, %v4512, %v4521
        %v4524 = vshrl.u32 %v4142, 16
        %v4526 = vrot.slane %v4524, 4
        %v4527 = vshll.u32 %v4142, 16
        %v4529 = vrot.slane %v4527, 5
        %v4530 = vor.u32 %v4526, %v4529
        %v4531 = vsel %vm2178, %v4521, %v4530
        %v4533 = vshrl.u32 %v4143, 16
        %v4535 = vrot.slane %v4533, 4
        %v4536 = vshll.u32 %v4143, 16
        %v4538 = vrot.slane %v4536, 5
        %v4539 = vor.u32 %v4535, %v4538
        %v4540 = vsel %vm2178, %v4530, %v4539
        %v4542 = vshrl.u32 %v4144, 16
        %v4544 = vrot.slane %v4542, 4
        %v4545 = vshll.u32 %v4144, 16
        %v4547 = vrot.slane %v4545, 5
        %v4548 = vor.u32 %v4544, %v4547
        %v4549 = vsel %vm2178, %v4539, %v4548
        %v4551 = vshrl.u32 %v4145, 16
        %v4553 = vrot.slane %v4551, 4
        %v4554 = vshll.u32 %v4145, 16
        %v4556 = vrot.slane %v4554, 5
        %v4557 = vor.u32 %v4553, %v4556
        %v4558 = vsel %vm2178, %v4548, %v4557
        %v4560 = vshrl.u32 %v4146, 16
        %v4562 = vrot.slane %v4560, 4
        %v4563 = vshll.u32 %v4146, 16
        %v4565 = vrot.slane %v4563, 5
        %v4566 = vor.u32 %v4562, %v4565
        %v4567 = vsel %vm2178, %v4557, %v4566
        %v4569 = vshrl.u32 %v4147, 16
        %v4571 = vrot.slane %v4569, 4
        %v4572 = vshll.u32 %v4147, 16
        %v4574 = vrot.slane %v4572, 5
        %v4575 = vor.u32 %v4571, %v4574
        %v4576 = vsel %vm2178, %v4566, %v4575
        %v4578 = vshrl.u32 %v4148, 16
        %v4580 = vrot.slane %v4578, 4
        %v4581 = vshll.u32 %v4148, 16
        %v4583 = vrot.slane %v4581, 5
        %v4584 = vor.u32 %v4580, %v4583
        %v4585 = vsel %vm2178, %v4575, %v4584
        %v4587 = vshrl.u32 %v4149, 16
        %v4589 = vrot.slane %v4587, 4
        %v4590 = vshll.u32 %v4149, 16
        %v4592 = vrot.slane %v4590, 5
        %v4593 = vor.u32 %v4589, %v4592
        %v4594 = vsel %vm2178, %v4584, %v4593
        %v4612 = vld [vmem:[#allocation2 + $0x58] sm:$0xf8]
        %v4613 = vsel %vm4109, %v4459, %v4612
        %4614 = vst [vmem:[#allocation2 + $0x58] sm:$0xf8] %v4613
        %4615 = vst.msk [vmem:[#allocation2 + $0x80] sm:$0xff] %vm3528, %v4468
        %4616 = vst.msk [vmem:[#allocation2 + $0xa8] sm:$0xff] %vm3528, %v4477
        %4617 = vst.msk [vmem:[#allocation2 + $0xd0] sm:$0xff] %vm3528, %v4486
        %4618 = vst.msk [vmem:[#allocation2 + $0xf8] sm:$0xff] %vm3528, %v4495
        %4619 = vst.msk [vmem:[#allocation2 + $0x120] sm:$0xff] %vm3528, %v4504
        %4620 = vst.msk [vmem:[#allocation2 + $0x148] sm:$0xff] %vm3528, %v4513
        %4621 = vst.msk [vmem:[#allocation2 + $0x170] sm:$0xff] %vm3528, %v4522
        %4622 = vst.msk [vmem:[#allocation2 + $0x198] sm:$0xff] %vm3528, %v4531
        %4623 = vst.msk [vmem:[#allocation2 + $0x1c0] sm:$0xff] %vm3528, %v4540
        %4624 = vst.msk [vmem:[#allocation2 + $0x1e8] sm:$0xff] %vm3528, %v4549
        %4625 = vst.msk [vmem:[#allocation2 + $0x210] sm:$0xff] %vm3528, %v4558
        %4626 = vst.msk [vmem:[#allocation2 + $0x238] sm:$0xff] %vm3528, %v4567
        %4627 = vst.msk [vmem:[#allocation2 + $0x260] sm:$0xff] %vm3528, %v4576
        %4628 = vst.msk [vmem:[#allocation2 + $0x288] sm:$0xff] %vm3528, %v4585
        %4629 = vst.msk [vmem:[#allocation2 + $0x2b0] sm:$0xff] %vm3528, %v4594
        %vm4630 = vcmask 519168
        %vm4631 = vmand %vm4630, %vm2178
        %v4632 = vld [vmem:[#allocation2 + $0x2d8] sm:$0xf]
        %v4633 = vsel %vm4631, %v4593, %v4632
        %4634 = vst [vmem:[#allocation2 + $0x2d8] sm:$0xf] %v4633
        %4635 = vrot.lane.b32.xlu0 %v4157, 64
        %v4636 = vpop.permute.xlu0 %4635
        %4637 = vrot.lane.b32.xlu0 %v4166, 64
        %v4638 = vpop.permute.xlu0 %4637
        %4639 = vrot.lane.b32.xlu0 %v4175, 64
        %v4640 = vpop.permute.xlu0 %4639
        %4641 = vrot.lane.b32.xlu0 %v4184, 64
        %v4642 = vpop.permute.xlu0 %4641
        %4643 = vrot.lane.b32.xlu0 %v4193, 64
        %v4644 = vpop.permute.xlu0 %4643
        %4645 = vrot.lane.b32.xlu0 %v4202, 64
        %v4646 = vpop.permute.xlu0 %4645
        %4647 = vrot.lane.b32.xlu0 %v4211, 64
        %v4648 = vpop.permute.xlu0 %4647
        %4649 = vrot.lane.b32.xlu0 %v4220, 64
        %v4650 = vpop.permute.xlu0 %4649
        %4651 = vrot.lane.b32.xlu0 %v4229, 64
        %v4652 = vpop.permute.xlu0 %4651
        %4653 = vrot.lane.b32.xlu0 %v4238, 64
        %v4654 = vpop.permute.xlu0 %4653
        %4655 = vrot.lane.b32.xlu0 %v4247, 64
        %v4656 = vpop.permute.xlu0 %4655
        %4657 = vrot.lane.b32.xlu0 %v4256, 64
        %v4658 = vpop.permute.xlu0 %4657
        %4659 = vrot.lane.b32.xlu0 %v4265, 64
        %v4660 = vpop.permute.xlu0 %4659
        %4661 = vrot.lane.b32.xlu0 %v4274, 64
        %v4662 = vpop.permute.xlu0 %4661
        %4663 = vrot.lane.b32.xlu0 %v4283, 64
        %v4664 = vpop.permute.xlu0 %4663
        %4665 = vrot.lane.b32.xlu0 %v4292, 64
        %v4666 = vpop.permute.xlu0 %4665
        %4667 = vrot.lane.b32.xlu0 %v4291, 64
        %v4668 = vpop.permute.xlu0 %4667
        %vm4686 = vcmask 1048068
        %vm4687 = vmand %vm4686, %vm2034
        %v4688 = vld [vmem:[#allocation2 + $0x30] sm:$0xf0]
        %v4689 = vsel %vm4687, %v4636, %v4688
        %4690 = vst [vmem:[#allocation2 + $0x30] sm:$0xf0] %v4689
        %4691 = vst.msk [vmem:[#allocation2 + $0x58] sm:$0xff] %vm4435, %v4638
        %4692 = vst.msk [vmem:[#allocation2 + $0x80] sm:$0xff] %vm4435, %v4640
        %4693 = vst.msk [vmem:[#allocation2 + $0xa8] sm:$0xff] %vm4435, %v4642
        %4694 = vst.msk [vmem:[#allocation2 + $0xd0] sm:$0xff] %vm4435, %v4644
        %4695 = vst.msk [vmem:[#allocation2 + $0xf8] sm:$0xff] %vm4435, %v4646
        %4696 = vst.msk [vmem:[#allocation2 + $0x120] sm:$0xff] %vm4435, %v4648
        %4697 = vst.msk [vmem:[#allocation2 + $0x148] sm:$0xff] %vm4435, %v4650
        %4698 = vst.msk [vmem:[#allocation2 + $0x170] sm:$0xff] %vm4435, %v4652
        %4699 = vst.msk [vmem:[#allocation2 + $0x198] sm:$0xff] %vm4435, %v4654
        %4700 = vst.msk [vmem:[#allocation2 + $0x1c0] sm:$0xff] %vm4435, %v4656
        %4701 = vst.msk [vmem:[#allocation2 + $0x1e8] sm:$0xff] %vm4435, %v4658
        %4702 = vst.msk [vmem:[#allocation2 + $0x210] sm:$0xff] %vm4435, %v4660
        %4703 = vst.msk [vmem:[#allocation2 + $0x238] sm:$0xff] %vm4435, %v4662
        %4704 = vst.msk [vmem:[#allocation2 + $0x260] sm:$0xff] %vm4435, %v4664
        %4705 = vst.msk [vmem:[#allocation2 + $0x288] sm:$0xff] %vm4435, %v4666
        %vm4706 = vcmask 1044992
        %vm4707 = vmand %vm4706, %vm1437
        %v4708 = vld [vmem:[#allocation2 + $0x2b0] sm:$0x1f]
        %v4709 = vsel %vm4707, %v4668, %v4708
        %4710 = vst [vmem:[#allocation2 + $0x2b0] sm:$0x1f] %v4709
        %vm4728 = vcmask 523268
        %4729 = vst.msk [vmem:[#allocation2 + $0x38] sm:$0xf0] %vm4728, %v4351
        %4730 = vst.msk [vmem:[#allocation2 + $0x60] sm:$0xff] %vm3528, %v4353
        %4731 = vst.msk [vmem:[#allocation2 + $0x88] sm:$0xff] %vm3528, %v4355
        %4732 = vst.msk [vmem:[#allocation2 + $0xb0] sm:$0xff] %vm3528, %v4357
        %4733 = vst.msk [vmem:[#allocation2 + $0xd8] sm:$0xff] %vm3528, %v4359
        %4734 = vst.msk [vmem:[#allocation2 + $0x100] sm:$0xff] %vm3528, %v4361
        %4735 = vst.msk [vmem:[#allocation2 + $0x128] sm:$0xff] %vm3528, %v4363
        %4736 = vst.msk [vmem:[#allocation2 + $0x150] sm:$0xff] %vm3528, %v4365
        %4737 = vst.msk [vmem:[#allocation2 + $0x178] sm:$0xff] %vm3528, %v4367
        %4738 = vst.msk [vmem:[#allocation2 + $0x1a0] sm:$0xff] %vm3528, %v4369
        %4739 = vst.msk [vmem:[#allocation2 + $0x1c8] sm:$0xff] %vm3528, %v4371
        %4740 = vst.msk [vmem:[#allocation2 + $0x1f0] sm:$0xff] %vm3528, %v4373
        %4741 = vst.msk [vmem:[#allocation2 + $0x218] sm:$0xff] %vm3528, %v4375
        %4742 = vst.msk [vmem:[#allocation2 + $0x240] sm:$0xff] %vm3528, %v4377
        %4743 = vst.msk [vmem:[#allocation2 + $0x268] sm:$0xff] %vm3528, %v4379
        %4744 = vst.msk [vmem:[#allocation2 + $0x290] sm:$0xff] %vm3528, %v4381
        %4745 = vst.msk [vmem:[#allocation2 + $0x2b8] sm:$0xf] %vm4116, %v4380
        %4746 = vrot.lane.b32.xlu0 %v4459, 64
        %v4747 = vpop.permute.xlu0 %4746
        %4748 = vrot.lane.b32.xlu0 %v4468, 64
        %v4749 = vpop.permute.xlu0 %4748
        %4750 = vrot.lane.b32.xlu0 %v4477, 64
        %v4751 = vpop.permute.xlu0 %4750
        %4752 = vrot.lane.b32.xlu0 %v4486, 64
        %v4753 = vpop.permute.xlu0 %4752
        %4754 = vrot.lane.b32.xlu0 %v4495, 64
        %v4755 = vpop.permute.xlu0 %4754
        %4756 = vrot.lane.b32.xlu0 %v4504, 64
        %v4757 = vpop.permute.xlu0 %4756
        %4758 = vrot.lane.b32.xlu0 %v4513, 64
        %v4759 = vpop.permute.xlu0 %4758
        %4760 = vrot.lane.b32.xlu0 %v4522, 64
        %v4761 = vpop.permute.xlu0 %4760
        %4762 = vrot.lane.b32.xlu0 %v4531, 64
        %v4763 = vpop.permute.xlu0 %4762
        %4764 = vrot.lane.b32.xlu0 %v4540, 64
        %v4765 = vpop.permute.xlu0 %4764
        %4766 = vrot.lane.b32.xlu0 %v4549, 64
        %v4767 = vpop.permute.xlu0 %4766
        %4768 = vrot.lane.b32.xlu0 %v4558, 64
        %v4769 = vpop.permute.xlu0 %4768
        %4770 = vrot.lane.b32.xlu0 %v4567, 64
        %v4771 = vpop.permute.xlu0 %4770
        %4772 = vrot.lane.b32.xlu0 %v4576, 64
        %v4773 = vpop.permute.xlu0 %4772
        %4774 = vrot.lane.b32.xlu0 %v4585, 64
        %v4775 = vpop.permute.xlu0 %4774
        %4776 = vrot.lane.b32.xlu0 %v4594, 64
        %v4777 = vpop.permute.xlu0 %4776
        %4778 = vrot.lane.b32.xlu0 %v4593, 64
        %v4779 = vpop.permute.xlu0 %4778
        %v4797 = vld [vmem:[#allocation2 + $0x38] sm:$0xf8]
        %v4798 = vsel %vm4099, %v4747, %v4797
        %4799 = vst [vmem:[#allocation2 + $0x38] sm:$0xf8] %v4798
        %4800 = vst.msk [vmem:[#allocation2 + $0x60] sm:$0xff] %vm4435, %v4749
        %4801 = vst.msk [vmem:[#allocation2 + $0x88] sm:$0xff] %vm4435, %v4751
        %4802 = vst.msk [vmem:[#allocation2 + $0xb0] sm:$0xff] %vm4435, %v4753
        %4803 = vst.msk [vmem:[#allocation2 + $0xd8] sm:$0xff] %vm4435, %v4755
        %4804 = vst.msk [vmem:[#allocation2 + $0x100] sm:$0xff] %vm4435, %v4757
        %4805 = vst.msk [vmem:[#allocation2 + $0x128] sm:$0xff] %vm4435, %v4759
        %4806 = vst.msk [vmem:[#allocation2 + $0x150] sm:$0xff] %vm4435, %v4761
        %4807 = vst.msk [vmem:[#allocation2 + $0x178] sm:$0xff] %vm4435, %v4763
        %4808 = vst.msk [vmem:[#allocation2 + $0x1a0] sm:$0xff] %vm4435, %v4765
        %4809 = vst.msk [vmem:[#allocation2 + $0x1c8] sm:$0xff] %vm4435, %v4767
        %4810 = vst.msk [vmem:[#allocation2 + $0x1f0] sm:$0xff] %vm4435, %v4769
        %4811 = vst.msk [vmem:[#allocation2 + $0x218] sm:$0xff] %vm4435, %v4771
        %4812 = vst.msk [vmem:[#allocation2 + $0x240] sm:$0xff] %vm4435, %v4773
        %4813 = vst.msk [vmem:[#allocation2 + $0x268] sm:$0xff] %vm4435, %v4775
        %4814 = vst.msk [vmem:[#allocation2 + $0x290] sm:$0xff] %vm4435, %v4777
        %vm4815 = vcmask 1043968
        %vm4816 = vmand %vm4815, %vm2178
        %v4817 = vld [vmem:[#allocation2 + $0x2b8] sm:$0xf]
        %v4818 = vsel %vm4816, %v4779, %v4817
        %4819 = vst [vmem:[#allocation2 + $0x2b8] sm:$0xf] %v4818
        %v4820 = vld [vmem:[#allocation2 + $0x18] sm:$0xf0]
        %v4821 = vsel %vm4311, %v4157, %v4820
        %4822 = vst [vmem:[#allocation2 + $0x18] sm:$0xf0] %v4821
        %4823 = vst.msk [vmem:[#allocation2 + $0x40] sm:$0xff] %vm3528, %v4166
        %4824 = vst.msk [vmem:[#allocation2 + $0x68] sm:$0xff] %vm3528, %v4175
        %4825 = vst.msk [vmem:[#allocation2 + $0x90] sm:$0xff] %vm3528, %v4184
        %4826 = vst.msk [vmem:[#allocation2 + $0xb8] sm:$0xff] %vm3528, %v4193
        %4827 = vst.msk [vmem:[#allocation2 + $0xe0] sm:$0xff] %vm3528, %v4202
        %4828 = vst.msk [vmem:[#allocation2 + $0x108] sm:$0xff] %vm3528, %v4211
        %4829 = vst.msk [vmem:[#allocation2 + $0x130] sm:$0xff] %vm3528, %v4220
        %4830 = vst.msk [vmem:[#allocation2 + $0x158] sm:$0xff] %vm3528, %v4229
        %4831 = vst.msk [vmem:[#allocation2 + $0x180] sm:$0xff] %vm3528, %v4238
        %4832 = vst.msk [vmem:[#allocation2 + $0x1a8] sm:$0xff] %vm3528, %v4247
        %4833 = vst.msk [vmem:[#allocation2 + $0x1d0] sm:$0xff] %vm3528, %v4256
        %4834 = vst.msk [vmem:[#allocation2 + $0x1f8] sm:$0xff] %vm3528, %v4265
        %4835 = vst.msk [vmem:[#allocation2 + $0x220] sm:$0xff] %vm3528, %v4274
        %4836 = vst.msk [vmem:[#allocation2 + $0x248] sm:$0xff] %vm3528, %v4283
        %4837 = vst.msk [vmem:[#allocation2 + $0x270] sm:$0xff] %vm3528, %v4292
        %v4838 = vld [vmem:[#allocation2 + $0x298] sm:$0x1f]
        %v4839 = vsel %vm4331, %v4291, %v4838
        %4840 = vst [vmem:[#allocation2 + $0x298] sm:$0x1f] %v4839
        %4841 = vst.msk [vmem:[#allocation2 + $0x18] sm:$0xf0] %vm4433, %v4383
        %4842 = vst.msk [vmem:[#allocation2 + $0x40] sm:$0xff] %vm4435, %v4385
        %4843 = vst.msk [vmem:[#allocation2 + $0x68] sm:$0xff] %vm4435, %v4387
        %4844 = vst.msk [vmem:[#allocation2 + $0x90] sm:$0xff] %vm4435, %v4389
        %4845 = vst.msk [vmem:[#allocation2 + $0xb8] sm:$0xff] %vm4435, %v4391
        %4846 = vst.msk [vmem:[#allocation2 + $0xe0] sm:$0xff] %vm4435, %v4393
        %4847 = vst.msk [vmem:[#allocation2 + $0x108] sm:$0xff] %vm4435, %v4395
        %4848 = vst.msk [vmem:[#allocation2 + $0x130] sm:$0xff] %vm4435, %v4397
        %4849 = vst.msk [vmem:[#allocation2 + $0x158] sm:$0xff] %vm4435, %v4399
        %4850 = vst.msk [vmem:[#allocation2 + $0x180] sm:$0xff] %vm4435, %v4401
        %4851 = vst.msk [vmem:[#allocation2 + $0x1a8] sm:$0xff] %vm4435, %v4403
        %4852 = vst.msk [vmem:[#allocation2 + $0x1d0] sm:$0xff] %vm4435, %v4405
        %4853 = vst.msk [vmem:[#allocation2 + $0x1f8] sm:$0xff] %vm4435, %v4407
        %4854 = vst.msk [vmem:[#allocation2 + $0x220] sm:$0xff] %vm4435, %v4409
        %4855 = vst.msk [vmem:[#allocation2 + $0x248] sm:$0xff] %vm4435, %v4411
        %4856 = vst.msk [vmem:[#allocation2 + $0x270] sm:$0xff] %vm4435, %v4413
        %4857 = vst.msk [vmem:[#allocation2 + $0x298] sm:$0xf] %vm4113, %v4415
        %v4858 = vld [vmem:[#allocation2 + $0x20] sm:$0xf8]
        %v4859 = vsel %vm4109, %v4459, %v4858
        %4860 = vst [vmem:[#allocation2 + $0x20] sm:$0xf8] %v4859
        %4861 = vst.msk [vmem:[#allocation2 + $0x48] sm:$0xff] %vm3528, %v4468
        %4862 = vst.msk [vmem:[#allocation2 + $0x70] sm:$0xff] %vm3528, %v4477
        %4863 = vst.msk [vmem:[#allocation2 + $0x98] sm:$0xff] %vm3528, %v4486
        %4864 = vst.msk [vmem:[#allocation2 + $0xc0] sm:$0xff] %vm3528, %v4495
        %4865 = vst.msk [vmem:[#allocation2 + $0xe8] sm:$0xff] %vm3528, %v4504
        %4866 = vst.msk [vmem:[#allocation2 + $0x110] sm:$0xff] %vm3528, %v4513
        %4867 = vst.msk [vmem:[#allocation2 + $0x138] sm:$0xff] %vm3528, %v4522
        %4868 = vst.msk [vmem:[#allocation2 + $0x160] sm:$0xff] %vm3528, %v4531
        %4869 = vst.msk [vmem:[#allocation2 + $0x188] sm:$0xff] %vm3528, %v4540
        %4870 = vst.msk [vmem:[#allocation2 + $0x1b0] sm:$0xff] %vm3528, %v4549
        %4871 = vst.msk [vmem:[#allocation2 + $0x1d8] sm:$0xff] %vm3528, %v4558
        %4872 = vst.msk [vmem:[#allocation2 + $0x200] sm:$0xff] %vm3528, %v4567
        %4873 = vst.msk [vmem:[#allocation2 + $0x228] sm:$0xff] %vm3528, %v4576
        %4874 = vst.msk [vmem:[#allocation2 + $0x250] sm:$0xff] %vm3528, %v4585
        %4875 = vst.msk [vmem:[#allocation2 + $0x278] sm:$0xff] %vm3528, %v4594
        %v4876 = vld [vmem:[#allocation2 + $0x2a0] sm:$0xf]
        %v4877 = vsel %vm4631, %v4593, %v4876
        %4878 = vst [vmem:[#allocation2 + $0x2a0] sm:$0xf] %v4877
        %v4879 = vld [vmem:[#allocation2 + $0x28] sm:$0xf0]
        %v4880 = vld [vmem:[#allocation2 + $0x30] sm:$0xf0]
        %v4881 = vld [vmem:[#allocation2 + $0x38] sm:$0xf0]
        %v4882 = vld [vmem:[#allocation2 + $0x40] sm:$0xf0]
        %v4883 = vld [vmem:[#allocation2 + $0x48] sm:$0xf0]
        %v4884 = vld [vmem:[#allocation2 + $0x50] sm:$0xff]
        %v4885 = vld [vmem:[#allocation2 + $0x58] sm:$0xff]
        %v4886 = vld [vmem:[#allocation2 + $0x60] sm:$0xff]
        %v4887 = vld [vmem:[#allocation2 + $0x68] sm:$0xff]
        %v4888 = vld [vmem:[#allocation2 + $0x70] sm:$0xff]
        %v4889 = vld [vmem:[#allocation2 + $0x78] sm:$0xff]
        %v4890 = vld [vmem:[#allocation2 + $0x80] sm:$0xff]
        %v4891 = vld [vmem:[#allocation2 + $0x88] sm:$0xff]
        %v4892 = vld [vmem:[#allocation2 + $0x90] sm:$0xff]
        %v4893 = vld [vmem:[#allocation2 + $0x98] sm:$0xff]
        %v4894 = vld [vmem:[#allocation2 + $0xa0] sm:$0xff]
        %v4895 = vld [vmem:[#allocation2 + $0xa8] sm:$0xff]
        %v4896 = vld [vmem:[#allocation2 + $0xb0] sm:$0xff]
        %v4897 = vld [vmem:[#allocation2 + $0xb8] sm:$0xff]
        %v4898 = vld [vmem:[#allocation2 + $0xc0] sm:$0xff]
        %v4899 = vld [vmem:[#allocation2 + $0xc8] sm:$0xff]
        %v4900 = vld [vmem:[#allocation2 + $0xd0] sm:$0xff]
        %v4901 = vld [vmem:[#allocation2 + $0xd8] sm:$0xff]
        %v4902 = vld [vmem:[#allocation2 + $0xe0] sm:$0xff]
        %v4903 = vld [vmem:[#allocation2 + $0xe8] sm:$0xff]
        %v4904 = vld [vmem:[#allocation2 + $0xf0] sm:$0xff]
        %v4905 = vld [vmem:[#allocation2 + $0xf8] sm:$0xff]
        %v4906 = vld [vmem:[#allocation2 + $0x100] sm:$0xff]
        %v4907 = vld [vmem:[#allocation2 + $0x108] sm:$0xff]
        %v4908 = vld [vmem:[#allocation2 + $0x110] sm:$0xff]
        %v4909 = vld [vmem:[#allocation2 + $0x118] sm:$0xff]
        %v4910 = vld [vmem:[#allocation2 + $0x120] sm:$0xff]
        %v4911 = vld [vmem:[#allocation2 + $0x128] sm:$0xff]
        %v4912 = vld [vmem:[#allocation2 + $0x130] sm:$0xff]
        %v4913 = vld [vmem:[#allocation2 + $0x138] sm:$0xff]
        %v4914 = vld [vmem:[#allocation2 + $0x140] sm:$0xff]
        %v4915 = vld [vmem:[#allocation2 + $0x148] sm:$0xff]
        %v4916 = vld [vmem:[#allocation2 + $0x150] sm:$0xff]
        %v4917 = vld [vmem:[#allocation2 + $0x158] sm:$0xff]
        %v4918 = vld [vmem:[#allocation2 + $0x160] sm:$0xff]
        %v4919 = vld [vmem:[#allocation2 + $0x168] sm:$0xff]
        %v4920 = vld [vmem:[#allocation2 + $0x170] sm:$0xff]
        %v4921 = vld [vmem:[#allocation2 + $0x178] sm:$0xff]
        %v4922 = vld [vmem:[#allocation2 + $0x180] sm:$0xff]
        %v4923 = vld [vmem:[#allocation2 + $0x188] sm:$0xff]
        %v4924 = vld [vmem:[#allocation2 + $0x190] sm:$0xff]
        %v4925 = vld [vmem:[#allocation2 + $0x198] sm:$0xff]
        %v4926 = vld [vmem:[#allocation2 + $0x1a0] sm:$0xff]
        %v4927 = vld [vmem:[#allocation2 + $0x1a8] sm:$0xff]
        %v4928 = vld [vmem:[#allocation2 + $0x1b0] sm:$0xff]
        %v4929 = vld [vmem:[#allocation2 + $0x1b8] sm:$0xff]
        %v4930 = vld [vmem:[#allocation2 + $0x1c0] sm:$0xff]
        %v4931 = vld [vmem:[#allocation2 + $0x1c8] sm:$0xff]
        %v4932 = vld [vmem:[#allocation2 + $0x1d0] sm:$0xff]
        %v4933 = vld [vmem:[#allocation2 + $0x1d8] sm:$0xff]
        %v4934 = vld [vmem:[#allocation2 + $0x1e0] sm:$0xff]
        %v4935 = vld [vmem:[#allocation2 + $0x1e8] sm:$0xff]
        %v4936 = vld [vmem:[#allocation2 + $0x1f0] sm:$0xff]
        %v4937 = vld [vmem:[#allocation2 + $0x1f8] sm:$0xff]
        %v4938 = vld [vmem:[#allocation2 + $0x200] sm:$0xff]
        %v4939 = vld [vmem:[#allocation2 + $0x208] sm:$0xff]
        %v4940 = vld [vmem:[#allocation2 + $0x210] sm:$0xff]
        %v4941 = vld [vmem:[#allocation2 + $0x218] sm:$0xff]
        %v4942 = vld [vmem:[#allocation2 + $0x220] sm:$0xff]
        %v4943 = vld [vmem:[#allocation2 + $0x228] sm:$0xff]
        %v4944 = vld [vmem:[#allocation2 + $0x230] sm:$0xff]
        %v4945 = vld [vmem:[#allocation2 + $0x238] sm:$0xff]
        %v4946 = vld [vmem:[#allocation2 + $0x240] sm:$0xff]
        %v4947 = vld [vmem:[#allocation2 + $0x248] sm:$0xff]
        %v4948 = vld [vmem:[#allocation2 + $0x250] sm:$0xff]
        %v4949 = vld [vmem:[#allocation2 + $0x258] sm:$0xff]
        %v4950 = vld [vmem:[#allocation2 + $0x260] sm:$0xff]
        %v4951 = vld [vmem:[#allocation2 + $0x268] sm:$0xff]
        %v4952 = vld [vmem:[#allocation2 + $0x270] sm:$0xff]
        %v4953 = vld [vmem:[#allocation2 + $0x278] sm:$0xff]
        %v4954 = vld [vmem:[#allocation2 + $0x280] sm:$0xff]
        %v4955 = vld [vmem:[#allocation2 + $0x288] sm:$0xff]
        %v4956 = vld [vmem:[#allocation2 + $0x290] sm:$0xff]
        %v4957 = vld [vmem:[#allocation2 + $0x298] sm:$0xff]
        %v4958 = vld [vmem:[#allocation2 + $0x2a0] sm:$0xff]
        %v4959 = vld [vmem:[#allocation2 + $0x2a8] sm:$0xf]
        %v4960 = vld [vmem:[#allocation2 + $0x2b0] sm:$0xf]
        %v4961 = vld [vmem:[#allocation2 + $0x2b8] sm:$0xf]
        %v4962 = vld [vmem:[#allocation2 + $0x2c0] sm:$0xf]
        %v4963 = vld [vmem:[#allocation2 + $0x2c8] sm:$0xf]
        %v4964 = vld [vmem:[%s7] sm:$0xf]
        %v4965 = vld [vmem:[%s7 + $0x4] sm:$0xf]
        %v4966 = vld [vmem:[%s7 + $0x8] sm:$0xf]
        %v4967 = vld [vmem:[%s7 + $0xc] sm:$0xf]
        %v4968 = vld [vmem:[%s7 + $0x10] sm:$0xf]
        %v4969 = vld [vmem:[%s7 + $0x14] sm:$0xf]
        %v4970 = vld [vmem:[%s7 + $0x18] sm:$0xf]
        %v4971 = vld [vmem:[%s7 + $0x1c] sm:$0xf]
        %v4972 = vld [vmem:[%s7 + $0x20] sm:$0xf]
        %v4973 = vld [vmem:[%s7 + $0x24] sm:$0xf]
        %v4974 = vld [vmem:[%s7 + $0x28] sm:$0xf]
        %v4975 = vld [vmem:[%s7 + $0x2c] sm:$0xf]
        %v4976 = vld [vmem:[%s7 + $0x30] sm:$0xf]
        %v4977 = vld [vmem:[%s7 + $0x34] sm:$0xf]
        %v4978 = vld [vmem:[%s7 + $0x38] sm:$0xf]
        %v4979 = vld [vmem:[%s7 + $0x3c] sm:$0xf]
        %v4980 = vld [vmem:[%s7 + $0x40] sm:$0xf]
        %v4981 = vld [vmem:[%s7 + $0x44] sm:$0xf]
        %v4982 = vld [vmem:[%s7 + $0x48] sm:$0xf]
        %v4983 = vld [vmem:[%s7 + $0x4c] sm:$0xf]
        %v4984 = vld [vmem:[%s7 + $0x50] sm:$0xf]
        %v4985 = vld [vmem:[%s7 + $0x54] sm:$0xf]
        %v4986 = vld [vmem:[%s7 + $0x58] sm:$0xf]
        %v4987 = vld [vmem:[%s7 + $0x5c] sm:$0xf]
        %v4988 = vld [vmem:[%s7 + $0x60] sm:$0xf]
        %v4989 = vld [vmem:[%s7 + $0x64] sm:$0xf]
        %v4990 = vld [vmem:[%s7 + $0x68] sm:$0xf]
        %v4991 = vld [vmem:[%s7 + $0x6c] sm:$0xf]
        %v4992 = vld [vmem:[%s7 + $0x70] sm:$0xf]
        %v4993 = vld [vmem:[%s7 + $0x74] sm:$0xf]
        %v4994 = vld [vmem:[%s7 + $0x78] sm:$0xf]
        %v4995 = vld [vmem:[%s7 + $0x7c] sm:$0xf]
        %v4996 = vld [vmem:[%s7 + $0x80] sm:$0xf]
        %v4997 = vld [vmem:[%s7 + $0x84] sm:$0xf]
        %v4998 = vld [vmem:[%s7 + $0x88] sm:$0xf]
        %v4999 = vld [vmem:[%s7 + $0x8c] sm:$0xf]
        %v5000 = vld [vmem:[%s7 + $0x90] sm:$0xf]
        %v5001 = vld [vmem:[%s7 + $0x94] sm:$0xf]
        %v5002 = vld [vmem:[%s7 + $0x98] sm:$0xf]
        %v5003 = vld [vmem:[%s7 + $0x9c] sm:$0xf]
        %v5004 = vld [vmem:[%s7 + $0xa0] sm:$0xf]
        %v5005 = vld [vmem:[%s7 + $0xa4] sm:$0xf]
        %v5006 = vld [vmem:[%s7 + $0xa8] sm:$0xf]
        %v5007 = vld [vmem:[%s7 + $0xac] sm:$0xf]
        %v5008 = vld [vmem:[%s7 + $0xb0] sm:$0xf]
        %v5009 = vld [vmem:[%s7 + $0xb4] sm:$0xf]
        %v5010 = vld [vmem:[%s7 + $0xb8] sm:$0xf]
        %v5011 = vld [vmem:[%s7 + $0xbc] sm:$0xf]
        %v5012 = vld [vmem:[%s7 + $0xc0] sm:$0xf]
        %v5013 = vld [vmem:[%s7 + $0xc4] sm:$0xf]
        %v5014 = vld [vmem:[%s7 + $0xc8] sm:$0xf]
        %v5015 = vld [vmem:[%s7 + $0xcc] sm:$0xf]
        %v5016 = vld [vmem:[%s7 + $0xd0] sm:$0xf]
        %v5017 = vld [vmem:[%s7 + $0xd4] sm:$0xf]
        %v5018 = vld [vmem:[%s7 + $0xd8] sm:$0xf]
        %v5019 = vld [vmem:[%s7 + $0xdc] sm:$0xf]
        %v5020 = vld [vmem:[%s7 + $0xe0] sm:$0xf]
        %v5021 = vld [vmem:[%s7 + $0xe4] sm:$0xf]
        %v5022 = vld [vmem:[%s7 + $0xe8] sm:$0xf]
        %v5023 = vld [vmem:[%s7 + $0xec] sm:$0xf]
        %v5024 = vld [vmem:[%s7 + $0xf0] sm:$0xf]
        %v5025 = vld [vmem:[%s7 + $0xf4] sm:$0xf]
        %v5026 = vld [vmem:[%s7 + $0xf8] sm:$0xf]
        %v5027 = vld [vmem:[%s7 + $0xfc] sm:$0xf]
        %v5028 = vld [vmem:[%s7 + $0x100] sm:$0xf]
        %v5029 = vld [vmem:[%s7 + $0x104] sm:$0xf]
        %v5030 = vld [vmem:[%s7 + $0x108] sm:$0xf]
        %v5031 = vld [vmem:[%s7 + $0x10c] sm:$0xf]
        %v5032 = vld [vmem:[%s7 + $0x110] sm:$0xf]
        %v5033 = vld [vmem:[%s7 + $0x114] sm:$0xf]
        %v5034 = vld [vmem:[%s7 + $0x118] sm:$0xf]
        %v5035 = vld [vmem:[%s7 + $0x11c] sm:$0xf]
        %v5037 = vlaneseq
        %v5038 = vshrl.u32 %v5037, 7
        %v5039 = vsub.s32 0, %v5038
        %v5040 = vrot.slane %v4073, %v5039
        %v5127 = vrot.slane %v4879, 4
        %v5128 = vrot.slane %v4884, 4
        %v5129 = vsel %vm2075, %v5127, %v5128
        %v5130 = vrot.slane %v4880, 4
        %v5131 = vrot.slane %v4885, 4
        %v5132 = vsel %vm2075, %v5130, %v5131
        %v5133 = vrot.slane %v4881, 4
        %v5134 = vrot.slane %v4886, 4
        %v5135 = vsel %vm2075, %v5133, %v5134
        %v5136 = vrot.slane %v4882, 4
        %v5137 = vrot.slane %v4887, 4
        %v5138 = vsel %vm2075, %v5136, %v5137
        %v5139 = vrot.slane %v4883, 4
        %v5140 = vrot.slane %v4888, 4
        %v5141 = vsel %vm2075, %v5139, %v5140
        %v5142 = vrot.slane %v4889, 4
        %v5143 = vsel %vm2075, %v5128, %v5142
        %v5144 = vrot.slane %v4890, 4
        %v5145 = vsel %vm2075, %v5131, %v5144
        %v5146 = vrot.slane %v4891, 4
        %v5147 = vsel %vm2075, %v5134, %v5146
        %v5148 = vrot.slane %v4892, 4
        %v5149 = vsel %vm2075, %v5137, %v5148
        %v5150 = vrot.slane %v4893, 4
        %v5151 = vsel %vm2075, %v5140, %v5150
        %v5152 = vrot.slane %v4894, 4
        %v5153 = vsel %vm2075, %v5142, %v5152
        %v5154 = vrot.slane %v4895, 4
        %v5155 = vsel %vm2075, %v5144, %v5154
        %v5156 = vrot.slane %v4896, 4
        %v5157 = vsel %vm2075, %v5146, %v5156
        %v5158 = vrot.slane %v4897, 4
        %v5159 = vsel %vm2075, %v5148, %v5158
        %v5160 = vrot.slane %v4898, 4
        %v5161 = vsel %vm2075, %v5150, %v5160
        %v5162 = vrot.slane %v4899, 4
        %v5163 = vsel %vm2075, %v5152, %v5162
        %v5164 = vrot.slane %v4900, 4
        %v5165 = vsel %vm2075, %v5154, %v5164
        %v5166 = vrot.slane %v4901, 4
        %v5167 = vsel %vm2075, %v5156, %v5166
        %v5168 = vrot.slane %v4902, 4
        %v5169 = vsel %vm2075, %v5158, %v5168
        %v5170 = vrot.slane %v4903, 4
        %v5171 = vsel %vm2075, %v5160, %v5170
        %v5172 = vrot.slane %v4904, 4
        %v5173 = vsel %vm2075, %v5162, %v5172
        %v5174 = vrot.slane %v4905, 4
        %v5175 = vsel %vm2075, %v5164, %v5174
        %v5176 = vrot.slane %v4906, 4
        %v5177 = vsel %vm2075, %v5166, %v5176
        %v5178 = vrot.slane %v4907, 4
        %v5179 = vsel %vm2075, %v5168, %v5178
        %v5180 = vrot.slane %v4908, 4
        %v5181 = vsel %vm2075, %v5170, %v5180
        %v5182 = vrot.slane %v4909, 4
        %v5183 = vsel %vm2075, %v5172, %v5182
        %v5184 = vrot.slane %v4910, 4
        %v5185 = vsel %vm2075, %v5174, %v5184
        %v5186 = vrot.slane %v4911, 4
        %v5187 = vsel %vm2075, %v5176, %v5186
        %v5188 = vrot.slane %v4912, 4
        %v5189 = vsel %vm2075, %v5178, %v5188
        %v5190 = vrot.slane %v4913, 4
        %v5191 = vsel %vm2075, %v5180, %v5190
        %v5192 = vrot.slane %v4914, 4
        %v5193 = vsel %vm2075, %v5182, %v5192
        %v5194 = vrot.slane %v4915, 4
        %v5195 = vsel %vm2075, %v5184, %v5194
        %v5196 = vrot.slane %v4916, 4
        %v5197 = vsel %vm2075, %v5186, %v5196
        %v5198 = vrot.slane %v4917, 4
        %v5199 = vsel %vm2075, %v5188, %v5198
        %v5200 = vrot.slane %v4918, 4
        %v5201 = vsel %vm2075, %v5190, %v5200
        %v5202 = vrot.slane %v4919, 4
        %v5203 = vsel %vm2075, %v5192, %v5202
        %v5204 = vrot.slane %v4920, 4
        %v5205 = vsel %vm2075, %v5194, %v5204
        %v5206 = vrot.slane %v4921, 4
        %v5207 = vsel %vm2075, %v5196, %v5206
        %v5208 = vrot.slane %v4922, 4
        %v5209 = vsel %vm2075, %v5198, %v5208
        %v5210 = vrot.slane %v4923, 4
        %v5211 = vsel %vm2075, %v5200, %v5210
        %v5212 = vrot.slane %v4924, 4
        %v5213 = vsel %vm2075, %v5202, %v5212
        %v5214 = vrot.slane %v4925, 4
        %v5215 = vsel %vm2075, %v5204, %v5214
        %v5216 = vrot.slane %v4926, 4
        %v5217 = vsel %vm2075, %v5206, %v5216
        %v5218 = vrot.slane %v4927, 4
        %v5219 = vsel %vm2075, %v5208, %v5218
        %v5220 = vrot.slane %v4928, 4
        %v5221 = vsel %vm2075, %v5210, %v5220
        %v5222 = vrot.slane %v4929, 4
        %v5223 = vsel %vm2075, %v5212, %v5222
        %v5224 = vrot.slane %v4930, 4
        %v5225 = vsel %vm2075, %v5214, %v5224
        %v5226 = vrot.slane %v4931, 4
        %v5227 = vsel %vm2075, %v5216, %v5226
        %v5228 = vrot.slane %v4932, 4
        %v5229 = vsel %vm2075, %v5218, %v5228
        %v5230 = vrot.slane %v4933, 4
        %v5231 = vsel %vm2075, %v5220, %v5230
        %v5232 = vrot.slane %v4934, 4
        %v5233 = vsel %vm2075, %v5222, %v5232
        %v5234 = vrot.slane %v4935, 4
        %v5235 = vsel %vm2075, %v5224, %v5234
        %v5236 = vrot.slane %v4936, 4
        %v5237 = vsel %vm2075, %v5226, %v5236
        %v5238 = vrot.slane %v4937, 4
        %v5239 = vsel %vm2075, %v5228, %v5238
        %v5240 = vrot.slane %v4938, 4
        %v5241 = vsel %vm2075, %v5230, %v5240
        %v5242 = vrot.slane %v4939, 4
        %v5243 = vsel %vm2075, %v5232, %v5242
        %v5244 = vrot.slane %v4940, 4
        %v5245 = vsel %vm2075, %v5234, %v5244
        %v5246 = vrot.slane %v4941, 4
        %v5247 = vsel %vm2075, %v5236, %v5246
        %v5248 = vrot.slane %v4942, 4
        %v5249 = vsel %vm2075, %v5238, %v5248
        %v5250 = vrot.slane %v4943, 4
        %v5251 = vsel %vm2075, %v5240, %v5250
        %v5252 = vrot.slane %v4944, 4
        %v5253 = vsel %vm2075, %v5242, %v5252
        %v5254 = vrot.slane %v4945, 4
        %v5255 = vsel %vm2075, %v5244, %v5254
        %v5256 = vrot.slane %v4946, 4
        %v5257 = vsel %vm2075, %v5246, %v5256
        %v5258 = vrot.slane %v4947, 4
        %v5259 = vsel %vm2075, %v5248, %v5258
        %v5260 = vrot.slane %v4948, 4
        %v5261 = vsel %vm2075, %v5250, %v5260
        %v5262 = vrot.slane %v4949, 4
        %v5263 = vsel %vm2075, %v5252, %v5262
        %v5264 = vrot.slane %v4950, 4
        %v5265 = vsel %vm2075, %v5254, %v5264
        %v5266 = vrot.slane %v4951, 4
        %v5267 = vsel %vm2075, %v5256, %v5266
        %v5268 = vrot.slane %v4952, 4
        %v5269 = vsel %vm2075, %v5258, %v5268
        %v5270 = vrot.slane %v4953, 4
        %v5271 = vsel %vm2075, %v5260, %v5270
        %v5272 = vrot.slane %v4954, 4
        %v5273 = vsel %vm2075, %v5262, %v5272
        %v5274 = vrot.slane %v4955, 4
        %v5275 = vsel %vm2075, %v5264, %v5274
        %v5276 = vrot.slane %v4956, 4
        %v5277 = vsel %vm2075, %v5266, %v5276
        %v5278 = vrot.slane %v4957, 4
        %v5279 = vsel %vm2075, %v5268, %v5278
        %v5280 = vrot.slane %v4958, 4
        %v5281 = vsel %vm2075, %v5270, %v5280
        %v5282 = vrot.slane %v4959, 4
        %v5283 = vsel %vm2075, %v5272, %v5282
        %v5284 = vrot.slane %v4960, 4
        %v5285 = vsel %vm2075, %v5274, %v5284
        %v5286 = vrot.slane %v4961, 4
        %v5287 = vsel %vm2075, %v5276, %v5286
        %v5288 = vrot.slane %v4962, 4
        %v5289 = vsel %vm2075, %v5278, %v5288
        %v5290 = vrot.slane %v4963, 4
        %v5291 = vsel %vm2075, %v5280, %v5290
        %v5428 = vunpack.c.l.b16 %v4964
        %v5429 = vunpack.c.l.b16 %v4965
        %v5430 = vunpack.c.l.b16 %v4966
        %v5431 = vunpack.c.l.b16 %v4967
        %v5432 = vunpack.c.l.b16 %v4968
        %v5433 = vunpack.c.l.b16 %v4969
        %v5434 = vunpack.c.l.b16 %v4970
        %v5435 = vunpack.c.l.b16 %v4971
        %v5436 = vunpack.c.l.b16 %v4972
        %v5437 = vunpack.c.l.b16 %v4973
        %v5438 = vunpack.c.l.b16 %v4974
        %v5439 = vunpack.c.l.b16 %v4975
        %v5440 = vunpack.c.l.b16 %v4976
        %v5441 = vunpack.c.l.b16 %v4977
        %v5442 = vunpack.c.l.b16 %v4978
        %v5443 = vunpack.c.l.b16 %v4979
        %v5444 = vunpack.c.l.b16 %v4980
        %v5445 = vunpack.c.l.b16 %v4981
        %v5446 = vunpack.c.l.b16 %v4982
        %v5447 = vunpack.c.l.b16 %v4983
        %v5448 = vunpack.c.l.b16 %v4984
        %v5449 = vunpack.c.l.b16 %v4985
        %v5450 = vunpack.c.l.b16 %v4986
        %v5451 = vunpack.c.l.b16 %v4987
        %v5452 = vunpack.c.l.b16 %v4988
        %v5453 = vunpack.c.l.b16 %v4989
        %v5454 = vunpack.c.l.b16 %v4990
        %v5455 = vunpack.c.l.b16 %v4991
        %v5456 = vunpack.c.l.b16 %v4992
        %v5457 = vunpack.c.l.b16 %v4993
        %v5458 = vunpack.c.l.b16 %v4994
        %v5459 = vunpack.c.l.b16 %v4995
        %v5460 = vunpack.c.l.b16 %v4996
        %v5461 = vunpack.c.l.b16 %v4997
        %v5462 = vunpack.c.l.b16 %v4998
        %v5463 = vunpack.c.l.b16 %v4999
        %v5464 = vunpack.c.l.b16 %v5000
        %v5465 = vunpack.c.l.b16 %v5001
        %v5466 = vunpack.c.l.b16 %v5002
        %v5467 = vunpack.c.l.b16 %v5003
        %v5468 = vunpack.c.l.b16 %v5004
        %v5469 = vunpack.c.l.b16 %v5005
        %v5470 = vunpack.c.l.b16 %v5006
        %v5471 = vunpack.c.l.b16 %v5007
        %v5472 = vunpack.c.l.b16 %v5008
        %v5473 = vunpack.c.l.b16 %v5009
        %v5474 = vunpack.c.l.b16 %v5010
        %v5475 = vunpack.c.l.b16 %v5011
        %v5476 = vunpack.c.l.b16 %v5012
        %v5477 = vunpack.c.l.b16 %v5013
        %v5478 = vunpack.c.l.b16 %v5014
        %v5479 = vunpack.c.l.b16 %v5015
        %v5480 = vunpack.c.l.b16 %v5016
        %v5481 = vunpack.c.l.b16 %v5017
        %v5482 = vunpack.c.l.b16 %v5018
        %v5483 = vunpack.c.l.b16 %v5019
        %v5484 = vunpack.c.l.b16 %v5020
        %v5485 = vunpack.c.l.b16 %v5021
        %v5486 = vunpack.c.l.b16 %v5022
        %v5487 = vunpack.c.l.b16 %v5023
        %v5488 = vunpack.c.l.b16 %v5024
        %v5489 = vunpack.c.l.b16 %v5025
        %v5490 = vunpack.c.l.b16 %v5026
        %v5491 = vunpack.c.l.b16 %v5027
        %v5492 = vunpack.c.l.b16 %v5028
        %v5493 = vunpack.c.l.b16 %v5029
        %v5494 = vunpack.c.l.b16 %v5030
        %v5495 = vunpack.c.l.b16 %v5031
        %v5496 = vunpack.c.l.b16 %v5032
        %v5497 = vunpack.c.l.b16 %v5033
        %v5498 = vunpack.c.l.b16 %v5034
        %v5499 = vunpack.c.l.b16 %v5035
        %v5500 = vpack.c.b16 %v5429, %v5428
        %v5501 = vpack.c.b16 %v5431, %v5430
        %v5502 = vpack.c.b16 %v5433, %v5432
        %v5503 = vpack.c.b16 %v5435, %v5434
        %v5504 = vpack.c.b16 %v5437, %v5436
        %v5505 = vpack.c.b16 %v5439, %v5438
        %v5506 = vpack.c.b16 %v5441, %v5440
        %v5507 = vpack.c.b16 %v5443, %v5442
        %v5508 = vpack.c.b16 %v5445, %v5444
        %v5509 = vpack.c.b16 %v5447, %v5446
        %v5510 = vpack.c.b16 %v5449, %v5448
        %v5511 = vpack.c.b16 %v5451, %v5450
        %v5512 = vpack.c.b16 %v5453, %v5452
        %v5513 = vpack.c.b16 %v5455, %v5454
        %v5514 = vpack.c.b16 %v5457, %v5456
        %v5515 = vpack.c.b16 %v5459, %v5458
        %v5516 = vpack.c.b16 %v5461, %v5460
        %v5517 = vpack.c.b16 %v5463, %v5462
        %v5518 = vpack.c.b16 %v5465, %v5464
        %v5519 = vpack.c.b16 %v5467, %v5466
        %v5520 = vpack.c.b16 %v5469, %v5468
        %v5521 = vpack.c.b16 %v5471, %v5470
        %v5522 = vpack.c.b16 %v5473, %v5472
        %v5523 = vpack.c.b16 %v5475, %v5474
        %v5524 = vpack.c.b16 %v5477, %v5476
        %v5525 = vpack.c.b16 %v5479, %v5478
        %v5526 = vpack.c.b16 %v5481, %v5480
        %v5527 = vpack.c.b16 %v5483, %v5482
        %v5528 = vpack.c.b16 %v5485, %v5484
        %v5529 = vpack.c.b16 %v5487, %v5486
        %v5530 = vpack.c.b16 %v5489, %v5488
        %v5531 = vpack.c.b16 %v5491, %v5490
        %v5532 = vpack.c.b16 %v5493, %v5492
        %v5533 = vpack.c.b16 %v5495, %v5494
        %v5534 = vpack.c.b16 %v5497, %v5496
        %v5535 = vpack.c.b16 %v5499, %v5498
        %v5573 = vsel %vm3528, %v5141, 0
        %v5576 = vsel %vm3528, %v5151, 0
        %v5579 = vsel %vm3528, %v5161, 0
        %v5582 = vsel %vm3528, %v5171, 0
        %v5585 = vsel %vm3528, %v5181, 0
        %v5588 = vsel %vm3528, %v5191, 0
        %v5591 = vsel %vm3528, %v5201, 0
        %v5594 = vsel %vm3528, %v5211, 0
        %v5597 = vsel %vm3528, %v5221, 0
        %v5600 = vsel %vm3528, %v5231, 0
        %v5603 = vsel %vm3528, %v5241, 0
        %v5606 = vsel %vm3528, %v5251, 0
        %v5609 = vsel %vm3528, %v5261, 0
        %v5612 = vsel %vm3528, %v5271, 0
        %v5615 = vsel %vm3528, %v5281, 0
        %v5618 = vsel %vm3528, %v5291, 0
        %5620 = vmatprep.subr.bf16.mxu0 0
        %5621 = vmatpush1.bf16.msra.mxu0 %v5500
        %5622 = vmatprep.subr.bf16.mxu0 0
        %5623 = vmatpush1.bf16.msra.mxu0 %v5501
        %5624 = vmatprep.subr.bf16.mxu0 0
        %5625 = vmatpush1.bf16.msra.mxu0 %v5502
        %5626 = vmatprep.subr.bf16.mxu0 0
        %5627 = vmatpush1.bf16.msra.mxu0 %v5503
        %5628 = vmatprep.subr.bf16.mxu0 0
        %5629 = vmatpush1.bf16.msra.mxu0 %v5504
        %5630 = vmatprep.subr.bf16.mxu0 0
        %5631 = vmatpush1.bf16.msra.mxu0 %v5505
        %5632 = vmatprep.subr.bf16.mxu0 0
        %5633 = vmatpush1.bf16.msra.mxu0 %v5506
        %5634 = vmatprep.subr.bf16.mxu0 0
        %5635 = vmatpush1.bf16.msra.mxu0 %v5507
        %5636 = vmatprep.subr.bf16.mxu0 0
        %5637 = vmatpush1.bf16.msra.mxu0 %v5508
        %5638 = vmatprep.subr.bf16.mxu0 0
        %5639 = vmatpush1.bf16.msra.mxu0 %v5509
        %5640 = vmatprep.subr.bf16.mxu0 0
        %5641 = vmatpush1.bf16.msra.mxu0 %v5510
        %5642 = vmatprep.subr.bf16.mxu0 0
        %5643 = vmatpush1.bf16.msra.mxu0 %v5511
        %5644 = vmatprep.subr.bf16.mxu0 0
        %5645 = vmatpush1.bf16.msra.mxu0 %v5512
        %5646 = vmatprep.subr.bf16.mxu0 0
        %5647 = vmatpush1.bf16.msra.mxu0 %v5513
        %5648 = vmatprep.subr.bf16.mxu0 0
        %5649 = vmatpush1.bf16.msra.mxu0 %v5514
        %5650 = vmatprep.subr.bf16.mxu0 0
        %5651 = vmatpush1.bf16.msra.mxu0 %v5515
        %5652 = vmatprep.mubr.bf16.mxu0 %v5132
        %5653 = vmatmul.mubr.bf16.gmra.mrb[0].mxu0 %v5129
        %v5654 = vpop.f32.mrb[0].mxu0
        %v5655 = vadd.f32 %v5040, %v5654
        %v5656 = vpop.f32.mrb[0].mxu0
        %v5657 = vpop.f32.mrb[0].mxu0
        %v5658 = vadd.f32 %v5040, %v5657
        %v5659 = vpop.f32.mrb[0].mxu0
        %5660 = vmatprep.mubr.bf16.mxu0 %v5145
        %5661 = vmatmul.mubr.bf16.gmra.mrb[0].mxu0 %v5143
        %v5662 = vpop.f32.mrb[0].mxu0
        %v5663 = vadd.f32 %v5040, %v5662
        %v5664 = vpop.f32.mrb[0].mxu0
        %v5665 = vpop.f32.mrb[0].mxu0
        %v5666 = vadd.f32 %v5040, %v5665
        %v5667 = vpop.f32.mrb[0].mxu0
        %5668 = vmatprep.mubr.bf16.mxu0 %v5155
        %5669 = vmatmul.mubr.bf16.gmra.mrb[0].mxu0 %v5153
        %v5670 = vpop.f32.mrb[0].mxu0
        %v5671 = vadd.f32 %v5040, %v5670
        %v5672 = vpop.f32.mrb[0].mxu0
        %v5673 = vpop.f32.mrb[0].mxu0
        %v5674 = vadd.f32 %v5040, %v5673
        %v5675 = vpop.f32.mrb[0].mxu0
        %5676 = vmatprep.mubr.bf16.mxu0 %v5165
        %5677 = vmatmul.mubr.bf16.gmra.mrb[0].mxu0 %v5163
        %v5678 = vpop.f32.mrb[0].mxu0
        %v5679 = vadd.f32 %v5040, %v5678
        %v5680 = vpop.f32.mrb[0].mxu0
        %v5681 = vpop.f32.mrb[0].mxu0
        %v5682 = vadd.f32 %v5040, %v5681
        %v5683 = vpop.f32.mrb[0].mxu0
        %5684 = vmatprep.mubr.bf16.mxu0 %v5175
        %5685 = vmatmul.mubr.bf16.gmra.mrb[0].mxu0 %v5173
        %v5686 = vpop.f32.mrb[0].mxu0
        %v5687 = vadd.f32 %v5040, %v5686
        %v5688 = vpop.f32.mrb[0].mxu0
        %v5689 = vpop.f32.mrb[0].mxu0
        %v5690 = vadd.f32 %v5040, %v5689
        %v5691 = vpop.f32.mrb[0].mxu0
        %5692 = vmatprep.mubr.bf16.mxu0 %v5185
        %5693 = vmatmul.mubr.bf16.gmra.mrb[0].mxu0 %v5183
        %v5694 = vpop.f32.mrb[0].mxu0
        %v5695 = vadd.f32 %v5040, %v5694
        %v5696 = vpop.f32.mrb[0].mxu0
        %v5697 = vpop.f32.mrb[0].mxu0
        %v5698 = vadd.f32 %v5040, %v5697
        %v5699 = vpop.f32.mrb[0].mxu0
        %5700 = vmatprep.mubr.bf16.mxu0 %v5195
        %5701 = vmatmul.mubr.bf16.gmra.mrb[0].mxu0 %v5193
        %v5702 = vpop.f32.mrb[0].mxu0
        %v5703 = vadd.f32 %v5040, %v5702
        %v5704 = vpop.f32.mrb[0].mxu0
        %v5705 = vpop.f32.mrb[0].mxu0
        %v5706 = vadd.f32 %v5040, %v5705
        %v5707 = vpop.f32.mrb[0].mxu0
        %5708 = vmatprep.mubr.bf16.mxu0 %v5205
        %5709 = vmatmul.mubr.bf16.gmra.mrb[0].mxu0 %v5203
        %v5710 = vpop.f32.mrb[0].mxu0
        %v5711 = vadd.f32 %v5040, %v5710
        %v5712 = vpop.f32.mrb[0].mxu0
        %v5713 = vpop.f32.mrb[0].mxu0
        %v5714 = vadd.f32 %v5040, %v5713
        %v5715 = vpop.f32.mrb[0].mxu0
        %5716 = vmatprep.mubr.bf16.mxu0 %v5215
        %5717 = vmatmul.mubr.bf16.gmra.mrb[0].mxu0 %v5213
        %v5718 = vpop.f32.mrb[0].mxu0
        %v5719 = vadd.f32 %v5040, %v5718
        %v5720 = vpop.f32.mrb[0].mxu0
        %v5721 = vpop.f32.mrb[0].mxu0
        %v5722 = vadd.f32 %v5040, %v5721
        %v5723 = vpop.f32.mrb[0].mxu0
        %5724 = vmatprep.mubr.bf16.mxu0 %v5225
        %5725 = vmatmul.mubr.bf16.gmra.mrb[0].mxu0 %v5223
        %v5726 = vpop.f32.mrb[0].mxu0
        %v5727 = vadd.f32 %v5040, %v5726
        %v5728 = vpop.f32.mrb[0].mxu0
        %v5729 = vpop.f32.mrb[0].mxu0
        %v5730 = vadd.f32 %v5040, %v5729
        %v5731 = vpop.f32.mrb[0].mxu0
        %5732 = vmatprep.mubr.bf16.mxu0 %v5235
        %5733 = vmatmul.mubr.bf16.gmra.mrb[0].mxu0 %v5233
        %v5734 = vpop.f32.mrb[0].mxu0
        %v5735 = vadd.f32 %v5040, %v5734
        %v5736 = vpop.f32.mrb[0].mxu0
        %v5737 = vpop.f32.mrb[0].mxu0
        %v5738 = vadd.f32 %v5040, %v5737
        %v5739 = vpop.f32.mrb[0].mxu0
        %5740 = vmatprep.mubr.bf16.mxu0 %v5245
        %5741 = vmatmul.mubr.bf16.gmra.mrb[0].mxu0 %v5243
        %v5742 = vpop.f32.mrb[0].mxu0
        %v5743 = vadd.f32 %v5040, %v5742
        %v5744 = vpop.f32.mrb[0].mxu0
        %v5745 = vpop.f32.mrb[0].mxu0
        %v5746 = vadd.f32 %v5040, %v5745
        %v5747 = vpop.f32.mrb[0].mxu0
        %5748 = vmatprep.mubr.bf16.mxu0 %v5255
        %5749 = vmatmul.mubr.bf16.gmra.mrb[0].mxu0 %v5253
        %v5750 = vpop.f32.mrb[0].mxu0
        %v5751 = vadd.f32 %v5040, %v5750
        %v5752 = vpop.f32.mrb[0].mxu0
        %v5753 = vpop.f32.mrb[0].mxu0
        %v5754 = vadd.f32 %v5040, %v5753
        %v5755 = vpop.f32.mrb[0].mxu0
        %5756 = vmatprep.mubr.bf16.mxu0 %v5265
        %5757 = vmatmul.mubr.bf16.gmra.mrb[0].mxu0 %v5263
        %v5758 = vpop.f32.mrb[0].mxu0
        %v5759 = vadd.f32 %v5040, %v5758
        %v5760 = vpop.f32.mrb[0].mxu0
        %v5761 = vpop.f32.mrb[0].mxu0
        %v5762 = vadd.f32 %v5040, %v5761
        %v5763 = vpop.f32.mrb[0].mxu0
        %5764 = vmatprep.mubr.bf16.mxu0 %v5275
        %5765 = vmatmul.mubr.bf16.gmra.mrb[0].mxu0 %v5273
        %v5766 = vpop.f32.mrb[0].mxu0
        %v5767 = vadd.f32 %v5040, %v5766
        %v5768 = vpop.f32.mrb[0].mxu0
        %v5769 = vpop.f32.mrb[0].mxu0
        %v5770 = vadd.f32 %v5040, %v5769
        %v5771 = vpop.f32.mrb[0].mxu0
        %5772 = vmatprep.mubr.bf16.mxu0 %v5285
        %5773 = vmatmul.mubr.bf16.gmra.mrb[0].mxu0 %v5283
        %v5774 = vpop.f32.mrb[0].mxu0
        %v5775 = vadd.f32 %v5040, %v5774
        %v5776 = vpop.f32.mrb[0].mxu0
        %v5777 = vpop.f32.mrb[0].mxu0
        %v5778 = vadd.f32 %v5040, %v5777
        %v5779 = vpop.f32.mrb[0].mxu0
        %5780 = vdwg.mxu0
        %5781 = vmatprep.subr.bf16.mxu0 0
        %5782 = vmatpush1.bf16.msra.mxu0 %v5516
        %5783 = vmatprep.subr.bf16.mxu0 0
        %5784 = vmatpush1.bf16.msra.mxu0 %v5517
        %5785 = vmatprep.subr.bf16.mxu0 0
        %5786 = vmatpush1.bf16.msra.mxu0 %v5518
        %5787 = vmatprep.subr.bf16.mxu0 0
        %5788 = vmatpush1.bf16.msra.mxu0 %v5519
        %5789 = vmatprep.subr.bf16.mxu0 0
        %5790 = vmatpush1.bf16.msra.mxu0 %v5520
        %5791 = vmatprep.subr.bf16.mxu0 0
        %5792 = vmatpush1.bf16.msra.mxu0 %v5521
        %5793 = vmatprep.subr.bf16.mxu0 0
        %5794 = vmatpush1.bf16.msra.mxu0 %v5522
        %5795 = vmatprep.subr.bf16.mxu0 0
        %5796 = vmatpush1.bf16.msra.mxu0 %v5523
        %5797 = vmatprep.subr.bf16.mxu0 0
        %5798 = vmatpush1.bf16.msra.mxu0 %v5524
        %5799 = vmatprep.subr.bf16.mxu0 0
        %5800 = vmatpush1.bf16.msra.mxu0 %v5525
        %5801 = vmatprep.subr.bf16.mxu0 0
        %5802 = vmatpush1.bf16.msra.mxu0 %v5526
        %5803 = vmatprep.subr.bf16.mxu0 0
        %5804 = vmatpush1.bf16.msra.mxu0 %v5527
        %5805 = vmatprep.subr.bf16.mxu0 0
        %5806 = vmatpush1.bf16.msra.mxu0 %v5528
        %5807 = vmatprep.subr.bf16.mxu0 0
        %5808 = vmatpush1.bf16.msra.mxu0 %v5529
        %5809 = vmatprep.subr.bf16.mxu0 0
        %5810 = vmatpush1.bf16.msra.mxu0 %v5530
        %5811 = vmatprep.subr.bf16.mxu0 0
        %5812 = vmatpush1.bf16.msra.mxu0 %v5531
        %5813 = vmatprep.mubr.bf16.mxu0 %v5138
        %5814 = vmatmul.mubr.bf16.gmra.mrb[0].mxu0 %v5135
        %v5815 = vpop.f32.mrb[0].mxu0
        %v5816 = vadd.f32 %v5655, %v5815
        %v5817 = vpop.f32.mrb[0].mxu0
        %v5818 = vpop.f32.mrb[0].mxu0
        %v5819 = vadd.f32 %v5658, %v5818
        %v5820 = vpop.f32.mrb[0].mxu0
        %5821 = vmatprep.mubr.bf16.mxu0 %v5149
        %5822 = vmatmul.mubr.bf16.gmra.mrb[0].mxu0 %v5147
        %v5823 = vpop.f32.mrb[0].mxu0
        %v5824 = vadd.f32 %v5663, %v5823
        %v5825 = vpop.f32.mrb[0].mxu0
        %v5826 = vpop.f32.mrb[0].mxu0
        %v5827 = vadd.f32 %v5666, %v5826
        %v5828 = vpop.f32.mrb[0].mxu0
        %5829 = vmatprep.mubr.bf16.mxu0 %v5159
        %5830 = vmatmul.mubr.bf16.gmra.mrb[0].mxu0 %v5157
        %v5831 = vpop.f32.mrb[0].mxu0
        %v5832 = vadd.f32 %v5671, %v5831
        %v5833 = vpop.f32.mrb[0].mxu0
        %v5834 = vpop.f32.mrb[0].mxu0
        %v5835 = vadd.f32 %v5674, %v5834
        %v5836 = vpop.f32.mrb[0].mxu0
        %5837 = vmatprep.mubr.bf16.mxu0 %v5169
        %5838 = vmatmul.mubr.bf16.gmra.mrb[0].mxu0 %v5167
        %v5839 = vpop.f32.mrb[0].mxu0
        %v5840 = vadd.f32 %v5679, %v5839
        %v5841 = vpop.f32.mrb[0].mxu0
        %v5842 = vpop.f32.mrb[0].mxu0
        %v5843 = vadd.f32 %v5682, %v5842
        %v5844 = vpop.f32.mrb[0].mxu0
        %5845 = vmatprep.mubr.bf16.mxu0 %v5179
        %5846 = vmatmul.mubr.bf16.gmra.mrb[0].mxu0 %v5177
        %v5847 = vpop.f32.mrb[0].mxu0
        %v5848 = vadd.f32 %v5687, %v5847
        %v5849 = vpop.f32.mrb[0].mxu0
        %v5850 = vpop.f32.mrb[0].mxu0
        %v5851 = vadd.f32 %v5690, %v5850
        %v5852 = vpop.f32.mrb[0].mxu0
        %5853 = vmatprep.mubr.bf16.mxu0 %v5189
        %5854 = vmatmul.mubr.bf16.gmra.mrb[0].mxu0 %v5187
        %v5855 = vpop.f32.mrb[0].mxu0
        %v5856 = vadd.f32 %v5695, %v5855
        %v5857 = vpop.f32.mrb[0].mxu0
        %v5858 = vpop.f32.mrb[0].mxu0
        %v5859 = vadd.f32 %v5698, %v5858
        %v5860 = vpop.f32.mrb[0].mxu0
        %5861 = vmatprep.mubr.bf16.mxu0 %v5199
        %5862 = vmatmul.mubr.bf16.gmra.mrb[0].mxu0 %v5197
        %v5863 = vpop.f32.mrb[0].mxu0
        %v5864 = vadd.f32 %v5703, %v5863
        %v5865 = vpop.f32.mrb[0].mxu0
        %v5866 = vpop.f32.mrb[0].mxu0
        %v5867 = vadd.f32 %v5706, %v5866
        %v5868 = vpop.f32.mrb[0].mxu0
        %5869 = vmatprep.mubr.bf16.mxu0 %v5209
        %5870 = vmatmul.mubr.bf16.gmra.mrb[0].mxu0 %v5207
        %v5871 = vpop.f32.mrb[0].mxu0
        %v5872 = vadd.f32 %v5711, %v5871
        %v5873 = vpop.f32.mrb[0].mxu0
        %v5874 = vpop.f32.mrb[0].mxu0
        %v5875 = vadd.f32 %v5714, %v5874
        %v5876 = vpop.f32.mrb[0].mxu0
        %5877 = vmatprep.mubr.bf16.mxu0 %v5219
        %5878 = vmatmul.mubr.bf16.gmra.mrb[0].mxu0 %v5217
        %v5879 = vpop.f32.mrb[0].mxu0
        %v5880 = vadd.f32 %v5719, %v5879
        %v5881 = vpop.f32.mrb[0].mxu0
        %v5882 = vpop.f32.mrb[0].mxu0
        %v5883 = vadd.f32 %v5722, %v5882
        %v5884 = vpop.f32.mrb[0].mxu0
        %5885 = vmatprep.mubr.bf16.mxu0 %v5229
        %5886 = vmatmul.mubr.bf16.gmra.mrb[0].mxu0 %v5227
        %v5887 = vpop.f32.mrb[0].mxu0
        %v5888 = vadd.f32 %v5727, %v5887
        %v5889 = vpop.f32.mrb[0].mxu0
        %v5890 = vpop.f32.mrb[0].mxu0
        %v5891 = vadd.f32 %v5730, %v5890
        %v5892 = vpop.f32.mrb[0].mxu0
        %5893 = vmatprep.mubr.bf16.mxu0 %v5239
        %5894 = vmatmul.mubr.bf16.gmra.mrb[0].mxu0 %v5237
        %v5895 = vpop.f32.mrb[0].mxu0
        %v5896 = vadd.f32 %v5735, %v5895
        %v5897 = vpop.f32.mrb[0].mxu0
        %v5898 = vpop.f32.mrb[0].mxu0
        %v5899 = vadd.f32 %v5738, %v5898
        %v5900 = vpop.f32.mrb[0].mxu0
        %5901 = vmatprep.mubr.bf16.mxu0 %v5249
        %5902 = vmatmul.mubr.bf16.gmra.mrb[0].mxu0 %v5247
        %v5903 = vpop.f32.mrb[0].mxu0
        %v5904 = vadd.f32 %v5743, %v5903
        %v5905 = vpop.f32.mrb[0].mxu0
        %v5906 = vpop.f32.mrb[0].mxu0
        %v5907 = vadd.f32 %v5746, %v5906
        %v5908 = vpop.f32.mrb[0].mxu0
        %5909 = vmatprep.mubr.bf16.mxu0 %v5259
        %5910 = vmatmul.mubr.bf16.gmra.mrb[0].mxu0 %v5257
        %v5911 = vpop.f32.mrb[0].mxu0
        %v5912 = vadd.f32 %v5751, %v5911
        %v5913 = vpop.f32.mrb[0].mxu0
        %v5914 = vpop.f32.mrb[0].mxu0
        %v5915 = vadd.f32 %v5754, %v5914
        %v5916 = vpop.f32.mrb[0].mxu0
        %5917 = vmatprep.mubr.bf16.mxu0 %v5269
        %5918 = vmatmul.mubr.bf16.gmra.mrb[0].mxu0 %v5267
        %v5919 = vpop.f32.mrb[0].mxu0
        %v5920 = vadd.f32 %v5759, %v5919
        %v5921 = vpop.f32.mrb[0].mxu0
        %v5922 = vpop.f32.mrb[0].mxu0
        %v5923 = vadd.f32 %v5762, %v5922
        %v5924 = vpop.f32.mrb[0].mxu0
        %5925 = vmatprep.mubr.bf16.mxu0 %v5279
        %5926 = vmatmul.mubr.bf16.gmra.mrb[0].mxu0 %v5277
        %v5927 = vpop.f32.mrb[0].mxu0
        %v5928 = vadd.f32 %v5767, %v5927
        %v5929 = vpop.f32.mrb[0].mxu0
        %v5930 = vpop.f32.mrb[0].mxu0
        %v5931 = vadd.f32 %v5770, %v5930
        %v5932 = vpop.f32.mrb[0].mxu0
        %5933 = vmatprep.mubr.bf16.mxu0 %v5289
        %5934 = vmatmul.mubr.bf16.gmra.mrb[0].mxu0 %v5287
        %v5935 = vpop.f32.mrb[0].mxu0
        %v5936 = vadd.f32 %v5775, %v5935
        %v5937 = vpop.f32.mrb[0].mxu0
        %v5938 = vpop.f32.mrb[0].mxu0
        %v5939 = vadd.f32 %v5778, %v5938
        %v5940 = vpop.f32.mrb[0].mxu0
        %5941 = vdwg.mxu0
        %5942 = vmatprep.subr.bf16.mxu0 0
        %5943 = vmatpush1.bf16.msra.mxu0 %v5532
        %5944 = vmatprep.subr.bf16.mxu0 0
        %5945 = vmatpush1.bf16.msra.mxu0 %v5533
        %5946 = vmatprep.subr.bf16.mxu0 0
        %5947 = vmatpush1.bf16.msra.mxu0 %v5534
        %5948 = vmatprep.subr.bf16.mxu0 0
        %5949 = vmatpush1.bf16.msra.mxu0 %v5535
        %5950 = vmatprep.subr.bf16.mxu0 0
        %5951 = vmatpush1.bf16.msra.mxu0 0
        %5952 = vmatprep.subr.bf16.mxu0 0
        %5953 = vmatpush1.bf16.msra.mxu0 0
        %5954 = vmatprep.subr.bf16.mxu0 0
        %5955 = vmatpush1.bf16.msra.mxu0 0
        %5956 = vmatprep.subr.bf16.mxu0 0
        %5957 = vmatpush1.bf16.msra.mxu0 0
        %5958 = vmatprep.subr.bf16.mxu0 0
        %5959 = vmatpush1.bf16.msra.mxu0 0
        %5960 = vmatprep.subr.bf16.mxu0 0
        %5961 = vmatpush1.bf16.msra.mxu0 0
        %5962 = vmatprep.subr.bf16.mxu0 0
        %5963 = vmatpush1.bf16.msra.mxu0 0
        %5964 = vmatprep.subr.bf16.mxu0 0
        %5965 = vmatpush1.bf16.msra.mxu0 0
        %5966 = vmatprep.subr.bf16.mxu0 0
        %5967 = vmatpush1.bf16.msra.mxu0 0
        %5968 = vmatprep.subr.bf16.mxu0 0
        %5969 = vmatpush1.bf16.msra.mxu0 0
        %5970 = vmatprep.subr.bf16.mxu0 0
        %5971 = vmatpush1.bf16.msra.mxu0 0
        %5972 = vmatprep.subr.bf16.mxu0 0
        %5973 = vmatpush1.bf16.msra.mxu0 0
        %5974 = vmatprep.mubr.bf16.mxu0 0
        %5975 = vmatmul.mubr.bf16.gmra.mrb[0].mxu0 %v5573
        %v5976 = vpop.f32.mrb[0].mxu0
        %v5977 = vadd.f32 %v5816, %v5976
        %v5978 = vpop.f32.mrb[0].mxu0
        %v5979 = vpop.f32.mrb[0].mxu0
        %v5980 = vadd.f32 %v5819, %v5979
        %v5981 = vpop.f32.mrb[0].mxu0
        %5982 = vmatprep.mubr.bf16.mxu0 0
        %5983 = vmatmul.mubr.bf16.gmra.mrb[0].mxu0 %v5576
        %v5984 = vpop.f32.mrb[0].mxu0
        %v5985 = vadd.f32 %v5824, %v5984
        %v5986 = vpop.f32.mrb[0].mxu0
        %v5987 = vpop.f32.mrb[0].mxu0
        %v5988 = vadd.f32 %v5827, %v5987
        %v5989 = vpop.f32.mrb[0].mxu0
        %5990 = vmatprep.mubr.bf16.mxu0 0
        %5991 = vmatmul.mubr.bf16.gmra.mrb[0].mxu0 %v5579
        %v5992 = vpop.f32.mrb[0].mxu0
        %v5993 = vadd.f32 %v5832, %v5992
        %v5994 = vpop.f32.mrb[0].mxu0
        %v5995 = vpop.f32.mrb[0].mxu0
        %v5996 = vadd.f32 %v5835, %v5995
        %v5997 = vpop.f32.mrb[0].mxu0
        %5998 = vmatprep.mubr.bf16.mxu0 0
        %5999 = vmatmul.mubr.bf16.gmra.mrb[0].mxu0 %v5582
        %v6000 = vpop.f32.mrb[0].mxu0
        %v6001 = vadd.f32 %v5840, %v6000
        %v6002 = vpop.f32.mrb[0].mxu0
        %v6003 = vpop.f32.mrb[0].mxu0
        %v6004 = vadd.f32 %v5843, %v6003
        %v6005 = vpop.f32.mrb[0].mxu0
        %6006 = vmatprep.mubr.bf16.mxu0 0
        %6007 = vmatmul.mubr.bf16.gmra.mrb[0].mxu0 %v5585
        %v6008 = vpop.f32.mrb[0].mxu0
        %v6009 = vadd.f32 %v5848, %v6008
        %v6010 = vpop.f32.mrb[0].mxu0
        %v6011 = vpop.f32.mrb[0].mxu0
        %v6012 = vadd.f32 %v5851, %v6011
        %v6013 = vpop.f32.mrb[0].mxu0
        %6014 = vmatprep.mubr.bf16.mxu0 0
        %6015 = vmatmul.mubr.bf16.gmra.mrb[0].mxu0 %v5588
        %v6016 = vpop.f32.mrb[0].mxu0
        %v6017 = vadd.f32 %v5856, %v6016
        %v6018 = vpop.f32.mrb[0].mxu0
        %v6019 = vpop.f32.mrb[0].mxu0
        %v6020 = vadd.f32 %v5859, %v6019
        %v6021 = vpop.f32.mrb[0].mxu0
        %6022 = vmatprep.mubr.bf16.mxu0 0
        %6023 = vmatmul.mubr.bf16.gmra.mrb[0].mxu0 %v5591
        %v6024 = vpop.f32.mrb[0].mxu0
        %v6025 = vadd.f32 %v5864, %v6024
        %v6026 = vpop.f32.mrb[0].mxu0
        %v6027 = vpop.f32.mrb[0].mxu0
        %v6028 = vadd.f32 %v5867, %v6027
        %v6029 = vpop.f32.mrb[0].mxu0
        %6030 = vmatprep.mubr.bf16.mxu0 0
        %6031 = vmatmul.mubr.bf16.gmra.mrb[0].mxu0 %v5594
        %v6032 = vpop.f32.mrb[0].mxu0
        %v6033 = vadd.f32 %v5872, %v6032
        %v6034 = vpop.f32.mrb[0].mxu0
        %v6035 = vpop.f32.mrb[0].mxu0
        %v6036 = vadd.f32 %v5875, %v6035
        %v6037 = vpop.f32.mrb[0].mxu0
        %6038 = vmatprep.mubr.bf16.mxu0 0
        %6039 = vmatmul.mubr.bf16.gmra.mrb[0].mxu0 %v5597
        %v6040 = vpop.f32.mrb[0].mxu0
        %v6041 = vadd.f32 %v5880, %v6040
        %v6042 = vpop.f32.mrb[0].mxu0
        %v6043 = vpop.f32.mrb[0].mxu0
        %v6044 = vadd.f32 %v5883, %v6043
        %v6045 = vpop.f32.mrb[0].mxu0
        %6046 = vmatprep.mubr.bf16.mxu0 0
        %6047 = vmatmul.mubr.bf16.gmra.mrb[0].mxu0 %v5600
        %v6048 = vpop.f32.mrb[0].mxu0
        %v6049 = vadd.f32 %v5888, %v6048
        %v6050 = vpop.f32.mrb[0].mxu0
        %v6051 = vpop.f32.mrb[0].mxu0
        %v6052 = vadd.f32 %v5891, %v6051
        %v6053 = vpop.f32.mrb[0].mxu0
        %6054 = vmatprep.mubr.bf16.mxu0 0
        %6055 = vmatmul.mubr.bf16.gmra.mrb[0].mxu0 %v5603
        %v6056 = vpop.f32.mrb[0].mxu0
        %v6057 = vadd.f32 %v5896, %v6056
        %v6058 = vpop.f32.mrb[0].mxu0
        %v6059 = vpop.f32.mrb[0].mxu0
        %v6060 = vadd.f32 %v5899, %v6059
        %v6061 = vpop.f32.mrb[0].mxu0
        %6062 = vmatprep.mubr.bf16.mxu0 0
        %6063 = vmatmul.mubr.bf16.gmra.mrb[0].mxu0 %v5606
        %v6064 = vpop.f32.mrb[0].mxu0
        %v6065 = vadd.f32 %v5904, %v6064
        %v6066 = vpop.f32.mrb[0].mxu0
        %v6067 = vpop.f32.mrb[0].mxu0
        %v6068 = vadd.f32 %v5907, %v6067
        %v6069 = vpop.f32.mrb[0].mxu0
        %6070 = vmatprep.mubr.bf16.mxu0 0
        %6071 = vmatmul.mubr.bf16.gmra.mrb[0].mxu0 %v5609
        %v6072 = vpop.f32.mrb[0].mxu0
        %v6073 = vadd.f32 %v5912, %v6072
        %v6074 = vpop.f32.mrb[0].mxu0
        %v6075 = vpop.f32.mrb[0].mxu0
        %v6076 = vadd.f32 %v5915, %v6075
        %v6077 = vpop.f32.mrb[0].mxu0
        %6078 = vmatprep.mubr.bf16.mxu0 0
        %6079 = vmatmul.mubr.bf16.gmra.mrb[0].mxu0 %v5612
        %v6080 = vpop.f32.mrb[0].mxu0
        %v6081 = vadd.f32 %v5920, %v6080
        %v6082 = vpop.f32.mrb[0].mxu0
        %v6083 = vpop.f32.mrb[0].mxu0
        %v6084 = vadd.f32 %v5923, %v6083
        %v6085 = vpop.f32.mrb[0].mxu0
        %6086 = vmatprep.mubr.bf16.mxu0 0
        %6087 = vmatmul.mubr.bf16.gmra.mrb[0].mxu0 %v5615
        %v6088 = vpop.f32.mrb[0].mxu0
        %v6089 = vadd.f32 %v5928, %v6088
        %v6090 = vpop.f32.mrb[0].mxu0
        %v6091 = vpop.f32.mrb[0].mxu0
        %v6092 = vadd.f32 %v5931, %v6091
        %v6093 = vpop.f32.mrb[0].mxu0
        %6094 = vmatprep.mubr.bf16.mxu0 0
        %6095 = vmatmul.mubr.bf16.gmra.mrb[0].mxu0 %v5618
        %v6096 = vpop.f32.mrb[0].mxu0
        %v6097 = vadd.f32 %v5936, %v6096
        %v6098 = vpop.f32.mrb[0].mxu0
        %v6099 = vpop.f32.mrb[0].mxu0
        %v6100 = vadd.f32 %v5939, %v6099
        %v6101 = vpop.f32.mrb[0].mxu0
        %6102 = vdwg.mxu0
        %v6103 = vpack.c.bf16 %v413, %v412
        %v6104 = vpack.c.bf16 %v415, %v414
        %v6105 = vpack.c.bf16 %v417, %v416
        %v6106 = vpack.c.bf16 %v419, %v418
        %v6107 = vpack.c.bf16 %v421, %v420
        %v6108 = vpack.c.bf16 %v423, %v422
        %v6109 = vpack.c.bf16 %v425, %v424
        %v6110 = vpack.c.bf16 %v427, %v426
        %v6111 = vpack.c.bf16 %v445, %v444
        %v6112 = vpack.c.bf16 %v447, %v446
        %v6113 = vpack.c.bf16 %v449, %v448
        %v6114 = vpack.c.bf16 %v451, %v450
        %v6115 = vpack.c.bf16 %v453, %v452
        %v6116 = vpack.c.bf16 %v455, %v454
        %v6117 = vpack.c.bf16 %v457, %v456
        %v6118 = vpack.c.bf16 %v459, %v458
        %v6119 = vld [vmem:[%s9] sm:$0xf]
        %v6120 = vld [vmem:[%s9 + $0x4] sm:$0xf]
        %v6121 = vld [vmem:[%s9 + $0x8] sm:$0xf]
        %v6122 = vld [vmem:[%s9 + $0xc] sm:$0xf]
        %v6123 = vld [vmem:[%s10] sm:$0x1]
        %v6125 = vlaneseq
        %v6126 = vshrl.u32 %v6125, 7
        %v6127 = vsub.s32 0, %v6126
        %v6128 = vrot.slane %v6123, %v6127
        %v6134 = vunpack.c.l.b16 %v6119
        %v6135 = vunpack.c.l.b16 %v6120
        %v6136 = vunpack.c.l.b16 %v6121
        %v6137 = vunpack.c.l.b16 %v6122
        %v6138 = vpack.c.b16 %v6135, %v6134
        %v6139 = vpack.c.b16 %v6137, %v6136
        %v6143 = vsel %vm943, %v6103, 0
        %v6146 = vsel %vm943, %v6104, 0
        %v6149 = vsel %vm943, %v6105, 0
        %v6152 = vsel %vm943, %v6106, 0
        %v6155 = vsel %vm943, %v6107, 0
        %v6158 = vsel %vm943, %v6108, 0
        %v6161 = vsel %vm943, %v6109, 0
        %v6164 = vsel %vm943, %v6110, 0
        %v6167 = vsel %vm943, %v6111, 0
        %v6170 = vsel %vm943, %v6112, 0
        %v6173 = vsel %vm943, %v6113, 0
        %v6176 = vsel %vm943, %v6114, 0
        %v6179 = vsel %vm943, %v6115, 0
        %v6182 = vsel %vm943, %v6116, 0
        %v6185 = vsel %vm943, %v6117, 0
        %v6188 = vsel %vm943, %v6118, 0
        %6190 = vmatprep.subr.bf16.mxu0 0
        %6191 = vmatpush1.bf16.msra.mxu0 %v6138
        %6192 = vmatprep.subr.bf16.mxu0 0
        %6193 = vmatpush1.bf16.msra.mxu0 %v6139
        %6194 = vmatprep.subr.bf16.mxu0 0
        %6195 = vmatpush1.bf16.msra.mxu0 0
        %6196 = vmatprep.subr.bf16.mxu0 0
        %6197 = vmatpush1.bf16.msra.mxu0 0
        %6198 = vmatprep.subr.bf16.mxu0 0
        %6199 = vmatpush1.bf16.msra.mxu0 0
        %6200 = vmatprep.subr.bf16.mxu0 0
        %6201 = vmatpush1.bf16.msra.mxu0 0
        %6202 = vmatprep.subr.bf16.mxu0 0
        %6203 = vmatpush1.bf16.msra.mxu0 0
        %6204 = vmatprep.subr.bf16.mxu0 0
        %6205 = vmatpush1.bf16.msra.mxu0 0
        %6206 = vmatprep.subr.bf16.mxu0 0
        %6207 = vmatpush1.bf16.msra.mxu0 0
        %6208 = vmatprep.subr.bf16.mxu0 0
        %6209 = vmatpush1.bf16.msra.mxu0 0
        %6210 = vmatprep.subr.bf16.mxu0 0
        %6211 = vmatpush1.bf16.msra.mxu0 0
        %6212 = vmatprep.subr.bf16.mxu0 0
        %6213 = vmatpush1.bf16.msra.mxu0 0
        %6214 = vmatprep.subr.bf16.mxu0 0
        %6215 = vmatpush1.bf16.msra.mxu0 0
        %6216 = vmatprep.subr.bf16.mxu0 0
        %6217 = vmatpush1.bf16.msra.mxu0 0
        %6218 = vmatprep.subr.bf16.mxu0 0
        %6219 = vmatpush1.bf16.msra.mxu0 0
        %6220 = vmatprep.subr.bf16.mxu0 0
        %6221 = vmatpush1.bf16.msra.mxu0 0
        %6222 = vmatprep.mubr.bf16.mxu0 0
        %6223 = vmatmul.mubr.bf16.gmra.mrb[0].mxu0 %v6143
        %v6224 = vpop.f32.mrb[0].mxu0
        %v6225 = vadd.f32 %v6128, %v6224
        %v6226 = vpop.f32.mrb[0].mxu0
        %v6227 = vpop.f32.mrb[0].mxu0
        %v6228 = vadd.f32 %v6128, %v6227
        %v6229 = vpop.f32.mrb[0].mxu0
        %6230 = vmatprep.mubr.bf16.mxu0 0
        %6231 = vmatmul.mubr.bf16.gmra.mrb[0].mxu0 %v6146
        %v6232 = vpop.f32.mrb[0].mxu0
        %v6233 = vadd.f32 %v6128, %v6232
        %v6234 = vpop.f32.mrb[0].mxu0
        %v6235 = vpop.f32.mrb[0].mxu0
        %v6236 = vadd.f32 %v6128, %v6235
        %v6237 = vpop.f32.mrb[0].mxu0
        %6238 = vmatprep.mubr.bf16.mxu0 0
        %6239 = vmatmul.mubr.bf16.gmra.mrb[0].mxu0 %v6149
        %v6240 = vpop.f32.mrb[0].mxu0
        %v6241 = vadd.f32 %v6128, %v6240
        %v6242 = vpop.f32.mrb[0].mxu0
        %v6243 = vpop.f32.mrb[0].mxu0
        %v6244 = vadd.f32 %v6128, %v6243
        %v6245 = vpop.f32.mrb[0].mxu0
        %6246 = vmatprep.mubr.bf16.mxu0 0
        %6247 = vmatmul.mubr.bf16.gmra.mrb[0].mxu0 %v6152
        %v6248 = vpop.f32.mrb[0].mxu0
        %v6249 = vadd.f32 %v6128, %v6248
        %v6250 = vpop.f32.mrb[0].mxu0
        %v6251 = vpop.f32.mrb[0].mxu0
        %v6252 = vadd.f32 %v6128, %v6251
        %v6253 = vpop.f32.mrb[0].mxu0
        %6254 = vmatprep.mubr.bf16.mxu0 0
        %6255 = vmatmul.mubr.bf16.gmra.mrb[0].mxu0 %v6155
        %v6256 = vpop.f32.mrb[0].mxu0
        %v6257 = vadd.f32 %v6128, %v6256
        %v6258 = vpop.f32.mrb[0].mxu0
        %v6259 = vpop.f32.mrb[0].mxu0
        %v6260 = vadd.f32 %v6128, %v6259
        %v6261 = vpop.f32.mrb[0].mxu0
        %6262 = vmatprep.mubr.bf16.mxu0 0
        %6263 = vmatmul.mubr.bf16.gmra.mrb[0].mxu0 %v6158
        %v6264 = vpop.f32.mrb[0].mxu0
        %v6265 = vadd.f32 %v6128, %v6264
        %v6266 = vpop.f32.mrb[0].mxu0
        %v6267 = vpop.f32.mrb[0].mxu0
        %v6268 = vadd.f32 %v6128, %v6267
        %v6269 = vpop.f32.mrb[0].mxu0
        %6270 = vmatprep.mubr.bf16.mxu0 0
        %6271 = vmatmul.mubr.bf16.gmra.mrb[0].mxu0 %v6161
        %v6272 = vpop.f32.mrb[0].mxu0
        %v6273 = vadd.f32 %v6128, %v6272
        %v6274 = vpop.f32.mrb[0].mxu0
        %v6275 = vpop.f32.mrb[0].mxu0
        %v6276 = vadd.f32 %v6128, %v6275
        %v6277 = vpop.f32.mrb[0].mxu0
        %6278 = vmatprep.mubr.bf16.mxu0 0
        %6279 = vmatmul.mubr.bf16.gmra.mrb[0].mxu0 %v6164
        %v6280 = vpop.f32.mrb[0].mxu0
        %v6281 = vadd.f32 %v6128, %v6280
        %v6282 = vpop.f32.mrb[0].mxu0
        %v6283 = vpop.f32.mrb[0].mxu0
        %v6284 = vadd.f32 %v6128, %v6283
        %v6285 = vpop.f32.mrb[0].mxu0
        %6286 = vmatprep.mubr.bf16.mxu0 0
        %6287 = vmatmul.mubr.bf16.gmra.mrb[0].mxu0 %v6167
        %v6288 = vpop.f32.mrb[0].mxu0
        %v6289 = vadd.f32 %v6128, %v6288
        %v6290 = vpop.f32.mrb[0].mxu0
        %v6291 = vpop.f32.mrb[0].mxu0
        %v6292 = vadd.f32 %v6128, %v6291
        %v6293 = vpop.f32.mrb[0].mxu0
        %6294 = vmatprep.mubr.bf16.mxu0 0
        %6295 = vmatmul.mubr.bf16.gmra.mrb[0].mxu0 %v6170
        %v6296 = vpop.f32.mrb[0].mxu0
        %v6297 = vadd.f32 %v6128, %v6296
        %v6298 = vpop.f32.mrb[0].mxu0
        %v6299 = vpop.f32.mrb[0].mxu0
        %v6300 = vadd.f32 %v6128, %v6299
        %v6301 = vpop.f32.mrb[0].mxu0
        %6302 = vmatprep.mubr.bf16.mxu0 0
        %6303 = vmatmul.mubr.bf16.gmra.mrb[0].mxu0 %v6173
        %v6304 = vpop.f32.mrb[0].mxu0
        %v6305 = vadd.f32 %v6128, %v6304
        %v6306 = vpop.f32.mrb[0].mxu0
        %v6307 = vpop.f32.mrb[0].mxu0
        %v6308 = vadd.f32 %v6128, %v6307
        %v6309 = vpop.f32.mrb[0].mxu0
        %6310 = vmatprep.mubr.bf16.mxu0 0
        %6311 = vmatmul.mubr.bf16.gmra.mrb[0].mxu0 %v6176
        %v6312 = vpop.f32.mrb[0].mxu0
        %v6313 = vadd.f32 %v6128, %v6312
        %v6314 = vpop.f32.mrb[0].mxu0
        %v6315 = vpop.f32.mrb[0].mxu0
        %v6316 = vadd.f32 %v6128, %v6315
        %v6317 = vpop.f32.mrb[0].mxu0
        %6318 = vmatprep.mubr.bf16.mxu0 0
        %6319 = vmatmul.mubr.bf16.gmra.mrb[0].mxu0 %v6179
        %v6320 = vpop.f32.mrb[0].mxu0
        %v6321 = vadd.f32 %v6128, %v6320
        %v6322 = vpop.f32.mrb[0].mxu0
        %v6323 = vpop.f32.mrb[0].mxu0
        %v6324 = vadd.f32 %v6128, %v6323
        %v6325 = vpop.f32.mrb[0].mxu0
        %6326 = vmatprep.mubr.bf16.mxu0 0
        %6327 = vmatmul.mubr.bf16.gmra.mrb[0].mxu0 %v6182
        %v6328 = vpop.f32.mrb[0].mxu0
        %v6329 = vadd.f32 %v6128, %v6328
        %v6330 = vpop.f32.mrb[0].mxu0
        %v6331 = vpop.f32.mrb[0].mxu0
        %v6332 = vadd.f32 %v6128, %v6331
        %v6333 = vpop.f32.mrb[0].mxu0
        %6334 = vmatprep.mubr.bf16.mxu0 0
        %6335 = vmatmul.mubr.bf16.gmra.mrb[0].mxu0 %v6185
        %v6336 = vpop.f32.mrb[0].mxu0
        %v6337 = vadd.f32 %v6128, %v6336
        %v6338 = vpop.f32.mrb[0].mxu0
        %v6339 = vpop.f32.mrb[0].mxu0
        %v6340 = vadd.f32 %v6128, %v6339
        %v6341 = vpop.f32.mrb[0].mxu0
        %6342 = vmatprep.mubr.bf16.mxu0 0
        %6343 = vmatmul.mubr.bf16.gmra.mrb[0].mxu0 %v6188
        %v6344 = vpop.f32.mrb[0].mxu0
        %v6345 = vadd.f32 %v6128, %v6344
        %v6346 = vpop.f32.mrb[0].mxu0
        %v6347 = vpop.f32.mrb[0].mxu0
        %v6348 = vadd.f32 %v6128, %v6347
        %v6349 = vpop.f32.mrb[0].mxu0
        %6350 = vdwg.mxu0
        %v6351 = vadd.f32 %v6225, %v5977
        %v6352 = vadd.f32 %v6228, %v5980
        %v6353 = vadd.f32 %v6233, %v5985
        %v6354 = vadd.f32 %v6236, %v5988
        %v6355 = vadd.f32 %v6241, %v5993
        %v6356 = vadd.f32 %v6244, %v5996
        %v6357 = vadd.f32 %v6249, %v6001
        %v6358 = vadd.f32 %v6252, %v6004
        %v6359 = vadd.f32 %v6257, %v6009
        %v6360 = vadd.f32 %v6260, %v6012
        %v6361 = vadd.f32 %v6265, %v6017
        %v6362 = vadd.f32 %v6268, %v6020
        %v6363 = vadd.f32 %v6273, %v6025
        %v6364 = vadd.f32 %v6276, %v6028
        %v6365 = vadd.f32 %v6281, %v6033
        %v6366 = vadd.f32 %v6284, %v6036
        %v6367 = vadd.f32 %v6289, %v6041
        %v6368 = vadd.f32 %v6292, %v6044
        %v6369 = vadd.f32 %v6297, %v6049
        %v6370 = vadd.f32 %v6300, %v6052
        %v6371 = vadd.f32 %v6305, %v6057
        %v6372 = vadd.f32 %v6308, %v6060
        %v6373 = vadd.f32 %v6313, %v6065
        %v6374 = vadd.f32 %v6316, %v6068
        %v6375 = vadd.f32 %v6321, %v6073
        %v6376 = vadd.f32 %v6324, %v6076
        %v6377 = vadd.f32 %v6329, %v6081
        %v6378 = vadd.f32 %v6332, %v6084
        %v6379 = vadd.f32 %v6337, %v6089
        %v6380 = vadd.f32 %v6340, %v6092
        %v6381 = vadd.f32 %v6345, %v6097
        %v6382 = vadd.f32 %v6348, %v6100
        %6383 = vxpose.xlu0.b32.start [1/16] %v6351, 128
        %6384 = vxpose.xlu0.b32.cont [2/16] %v6352, 128
        %6385 = vxpose.xlu0.b32.cont [3/16] %v6353, 128
        %6386 = vxpose.xlu0.b32.cont [4/16] %v6354, 128
        %6387 = vxpose.xlu0.b32.cont [5/16] %v6355, 128
        %6388 = vxpose.xlu0.b32.cont [6/16] %v6356, 128
        %6389 = vxpose.xlu0.b32.cont [7/16] %v6357, 128
        %6390 = vxpose.xlu0.b32.cont [8/16] %v6358, 128
        %6391 = vxpose.xlu0.b32.cont [9/16] %v6359, 128
        %6392 = vxpose.xlu0.b32.cont [10/16] %v6360, 128
        %6393 = vxpose.xlu0.b32.cont [11/16] %v6361, 128
        %6394 = vxpose.xlu0.b32.cont [12/16] %v6362, 128
        %6395 = vxpose.xlu0.b32.cont [13/16] %v6363, 128
        %6396 = vxpose.xlu0.b32.cont [14/16] %v6364, 128
        %6397 = vxpose.xlu0.b32.cont [15/16] %v6365, 128
        %6398 = vxpose.xlu0.b32.end [16/16] %v6366, 128
        %v6399 = vpop.trf.xlu0
        %v6400 = vpop.trf.xlu0
        %v6401 = vpop.trf.xlu0
        %v6402 = vpop.trf.xlu0
        %v6403 = vpop.trf.xlu0
        %v6404 = vpop.trf.xlu0
        %v6405 = vpop.trf.xlu0
        %v6406 = vpop.trf.xlu0
        %v6407 = vpop.trf.xlu0
        %v6408 = vpop.trf.xlu0
        %v6409 = vpop.trf.xlu0
        %v6410 = vpop.trf.xlu0
        %v6411 = vpop.trf.xlu0
        %v6412 = vpop.trf.xlu0
        %v6413 = vpop.trf.xlu0
        %v6414 = vpop.trf.xlu0
        %6415 = vxpose.xlu0.b32.start [1/16] %v6367, 128
        %6416 = vxpose.xlu0.b32.cont [2/16] %v6368, 128
        %6417 = vxpose.xlu0.b32.cont [3/16] %v6369, 128
        %6418 = vxpose.xlu0.b32.cont [4/16] %v6370, 128
        %6419 = vxpose.xlu0.b32.cont [5/16] %v6371, 128
        %6420 = vxpose.xlu0.b32.cont [6/16] %v6372, 128
        %6421 = vxpose.xlu0.b32.cont [7/16] %v6373, 128
        %6422 = vxpose.xlu0.b32.cont [8/16] %v6374, 128
        %6423 = vxpose.xlu0.b32.cont [9/16] %v6375, 128
        %6424 = vxpose.xlu0.b32.cont [10/16] %v6376, 128
        %6425 = vxpose.xlu0.b32.cont [11/16] %v6377, 128
        %6426 = vxpose.xlu0.b32.cont [12/16] %v6378, 128
        %6427 = vxpose.xlu0.b32.cont [13/16] %v6379, 128
        %6428 = vxpose.xlu0.b32.cont [14/16] %v6380, 128
        %6429 = vxpose.xlu0.b32.cont [15/16] %v6381, 128
        %6430 = vxpose.xlu0.b32.end [16/16] %v6382, 128
        %v6431 = vpop.trf.xlu0
        %v6432 = vpop.trf.xlu0
        %v6433 = vpop.trf.xlu0
        %v6434 = vpop.trf.xlu0
        %v6435 = vpop.trf.xlu0
        %v6436 = vpop.trf.xlu0
        %v6437 = vpop.trf.xlu0
        %v6438 = vpop.trf.xlu0
        %v6439 = vpop.trf.xlu0
        %v6440 = vpop.trf.xlu0
        %v6441 = vpop.trf.xlu0
        %v6442 = vpop.trf.xlu0
        %v6443 = vpop.trf.xlu0
        %v6444 = vpop.trf.xlu0
        %v6445 = vpop.trf.xlu0
        %v6446 = vpop.trf.xlu0
        %6447 = vst [vmem:[%s379] sm:$0xff] %v6399
        %6448 = vst [vmem:[%s379 + $0x8] sm:$0xff] %v6431
        %6449 = vst [vmem:[%s379 + $0x10] sm:$0xff] %v6400
        %6450 = vst [vmem:[%s379 + $0x18] sm:$0xff] %v6432
        %6451 = vst [vmem:[%s379 + $0x20] sm:$0xff] %v6401
        %6452 = vst [vmem:[%s379 + $0x28] sm:$0xff] %v6433
        %6453 = vst [vmem:[%s379 + $0x30] sm:$0xff] %v6402
        %6454 = vst [vmem:[%s379 + $0x38] sm:$0xff] %v6434
        %6455 = vst [vmem:[%s379 + $0x40] sm:$0xff] %v6403
        %6456 = vst [vmem:[%s379 + $0x48] sm:$0xff] %v6435
        %6457 = vst [vmem:[%s379 + $0x50] sm:$0xff] %v6404
        %6458 = vst [vmem:[%s379 + $0x58] sm:$0xff] %v6436
        %6459 = vst [vmem:[%s379 + $0x60] sm:$0xff] %v6405
        %6460 = vst [vmem:[%s379 + $0x68] sm:$0xff] %v6437
        %6461 = vst [vmem:[%s379 + $0x70] sm:$0xff] %v6406
        %6462 = vst [vmem:[%s379 + $0x78] sm:$0xff] %v6438
        %s6463 = sand.u32 %s269, 1
        %s6464 = scalar_lea.sflag [#allocation5], %s6463
        %s6465 = sand.u32 %s269, 1
        %s6466 = smul.addr %s6465, 128
        %s6467 = scalar_lea.vmem [#allocation4], %s6466
        // Predicated region
        $region65: #{tpu_custom_call.1} parent=63 // pred_check
          %p6468 = pneg %p279
        $region66: #{tpu_custom_call.1} parent=63 // pred_check_branch
          %6470 = sbr.rel (%p6468) target = $region68
        $region67: #{tpu_custom_call.1} parent=63 // pred_region
          %s6472 = ssub.s32 2048, 2048
          %6473 = vsyncadd %s6464, %s6472
          %s6474 = smul.addr %s25, 16
          %s6475 = smul.addr %s6474, 128
          %s6476 = scalar_lea.hbm %s11, %s6475
          %s6477 = sshll.u32 %s6467, 4
          %s6478 = int_to_ptr.vmem [resolvable:$true] %s6477
          %6483 = dma.vmem_to_hbm [thread:$0]  %s6478, 2048, %s6476, %s6464, 256, 256, 16
        $region68: #{tpu_custom_call.1} parent=63 // pred_fallthru
          _
      $region64: #{tpu_custom_call.1} parent=5 // pred_fallthru
        _
      %p6484 = scmp.le.s32.totalorder 2, %s20
      // Predicated region
      $region69: #{tpu_custom_call.1} parent=5 // pred_check
        %p6485 = pneg %p6484
      $region70: #{tpu_custom_call.1} parent=5 // pred_check_branch
        %6487 = sbr.rel (%p6485) target = $region72
      $region71: #{tpu_custom_call.1} parent=5 // pred_region
        %s6488 = ssub.s32 %s20, 2
        // Predicated region
        $region73: #{tpu_custom_call.1} parent=71 // pred_check
          %p6489 = pneg %p285
        $region74: #{tpu_custom_call.1} parent=71 // pred_check_branch
          %6491 = sbr.rel (%p6489) target = $region76
        $region75: #{tpu_custom_call.1} parent=71 // pred_region
          %s6492 = sand.u32 %s270, 1
          %s6493 = scalar_lea.sflag [#allocation5], %s6492
          %s6494 = sand.u32 %s270, 1
          %s6495 = smul.addr %s6494, 128
          %s6496 = scalar_lea.vmem [#allocation4], %s6495
          %6497 = dma.done %s6493, 2048
        $region76: #{tpu_custom_call.1} parent=71 // pred_fallthru
          _
      $region72: #{tpu_custom_call.1} parent=5 // pred_fallthru
        _
    $region6: #{tpu_custom_call.1} parent=1 // loop_footer
      %s24 = sadd.s32 1, %s20
    $region7: #{tpu_custom_call.1} parent=1 // loop_footer_branch
      %19 = sbr.rel target = $region3
    $region8: #{tpu_custom_call.1} parent=1 // loop_exit
      _
    %6498 = vsyncpa [#allocation5], 1
    %s6499 = scalar_lea.sflag [#allocation5], 1
    %6500 = vsyncpa %s6499, 1

</llo_original>
